<compile_context>
chip_gen: v7x
topology: tpu7x:2x2x1
jax: 0.10.0
libtpu: 0.0.40
codegen_flags: <defaults>
</compile_context>

<pallas_src>
import numpy as np

import jax
import jax.numpy as jnp
from jax.experimental import pallas as pl
from jax.experimental.pallas import tpu as pltpu


# --------------------------------- geometry ---------------------------------

B = 2
IN_CHANNELS = 4
INPUT_SIZE = 16
NEF = 8                       # encoder features
NDF = 8                       # decoder features
Z_DIM = 16
OUT_SIZE = INPUT_SIZE // 16   # == 1

PAD_SIDE = INPUT_SIZE + 2     # 18
PAD_AREA = PAD_SIDE * PAD_SIDE  # 324
X_OFF = PAD_SIDE + 1          # 19: shift between padded-x lanes and recon lanes

# Encoder: 4 x (Conv 4x4, stride 2, pad 1 -> LeakyReLU(0.2) -> BatchNorm)
ENC_P = [18, 10, 6, 4]        # padded grid side of each conv's input buffer
ENC_S = [8, 4, 2, 1]          # conv output spatial size
ENC_C = [(IN_CHANNELS, NEF), (NEF, NEF * 2), (NEF * 2, NEF * 4), (NEF * 4, NEF * 8)]

# Decoder: Linear+ReLU, then 4 x (Upsample2x -> Conv 3x3, stride 1, pad 1 [-> LeakyReLU])
DEC_P = [4, 6, 10, 18]        # padded grid side of each conv's (upsampled) input buffer
DEC_U = [2, 4, 8, 16]         # conv output spatial size
DEC_C = [(NDF * 8, NDF * 4), (NDF * 4, NDF * 2), (NDF * 2, NDF), (NDF, IN_CHANNELS)]
D4_MARGIN = 2 * DEC_P[3] + 2  # extra zero lanes so the last conv computes all 648 lanes

LOG_2PI = 1.8378770664093453


def _enc_L(P):
    # number of output lanes computed by a 4x4/stride-2 conv over a B*P*P buffer
    return B * P * P - 3 * (P + 1)


def _dec_L(P):
    # number of output lanes computed by a 3x3/stride-1 conv over a B*P*P buffer
    return B * P * P - 2 * (P + 1)


# lanes covering all real pixels of the final 16x16 reconstruction
NLL_L = (B - 1) * PAD_AREA + (INPUT_SIZE - 1) * PAD_SIDE + (INPUT_SIZE - 1) + 1  # 610


# -------------------- compile-time 0/1 transition matrices -------------------
# Lane convention for every padded buffer of side P: lane = b*P*P + row*P + col.
# A conv over such a buffer produces its "real" outputs at
#   encoder (stride 2): lane = b*P*P + 2*oh*P + 2*ow
#   decoder (stride 1): lane = b*P*P +   oh*P +   ow
# The 0/1 matrices below re-pack those real lanes into the next layer's
# zero-padded buffer (and, on the decoder side, do the 2x nearest upsample).
# 0/1 values are exact in bf16, so they are stored bf16 (halves the DMA bytes).

def build_constants():
    regular, deferred = [], []

    # encoder layer l -> encoder layer l+1 padded buffer (+ interior BN mask)
    for l in range(3):
        P_in, S = ENC_P[l], ENC_S[l]
        P_out = S + 2
        T = np.zeros((_enc_L(P_in), B * P_out * P_out), np.float32)
        for b in range(B):
            for r in range(S):
                for c in range(S):
                    src = b * P_in * P_in + 2 * r * P_in + 2 * c
                    dst = b * P_out * P_out + (r + 1) * P_out + (c + 1)
                    T[src, dst] = 1.0
        regular.append(jnp.asarray(T, jnp.bfloat16))                       # te_l
        regular.append(jnp.asarray(T.sum(0, keepdims=True), jnp.float32))  # m_l (interior mask)

    # decoder dense (C, B) -> stage-0 padded buffer (C, B*16): 1x1 -> 2x2 up + pad
    U0 = np.zeros((B, B * 16), np.float32)
    for b in range(B):
        for rp in (1, 2):
            for cp in (1, 2):
                U0[b, b * 16 + rp * 4 + cp] = 1.0
    regular.append(jnp.asarray(U0, jnp.bfloat16))                          # u0

    # mask of "real" reconstruction lanes for the per-batch NLL sums
    nmask = np.zeros((1, NLL_L), np.float32)
    for b in range(B):
        for r in range(INPUT_SIZE):
            for c in range(INPUT_SIZE):
                nmask[0, b * PAD_AREA + r * PAD_SIDE + c] = 1.0
    regular.append(jnp.asarray(nmask))                                     # nllmask

    # decoder stage s output -> stage s+1 padded buffer (2x nearest upsample + pad)
    for s in range(3):
        P_in, U = DEC_P[s], DEC_U[s]
        P_out = 2 * U + 2
        extra = D4_MARGIN if s == 2 else 0
        T = np.zeros((_dec_L(P_in), B * P_out * P_out + extra), np.float32)
        for b in range(B):
            for rp in range(1, 2 * U + 1):
                for cp in range(1, 2 * U + 1):
                    src = b * P_in * P_in + ((rp - 1) // 2) * P_in + ((cp - 1) // 2)
                    dst = b * P_out * P_out + rp * P_out + cp
                    T[src, dst] = 1.0
        deferred.append(jnp.asarray(T, jnp.bfloat16))                      # td_s

    return regular, deferred


# --------------------------------- parameters --------------------------------
# Conv weights are stored pre-fused as (cout, k*k*cin) bf16; column block
# t = i*k + j holds the (cout, cin) tap weight for spatial offset (i, j),
# matching the window-stacking order used by _conv_fused.

def init_params(key):
    ks = iter(jax.random.split(key, 24))

    def nrm(shape, dtype=jnp.float32):
        return (0.05 * jax.random.normal(next(ks), shape, dtype=jnp.float32)).astype(dtype)

    main = []
    for cin, cout in ENC_C:
        main += [nrm((cout, 16 * cin), jnp.bfloat16),          # fused 4x4 conv weight
                 nrm((cout, 1)),                               # conv bias
                 jnp.ones((cout, 1), jnp.float32),             # BN gamma
                 jnp.zeros((cout, 1), jnp.float32)]            # BN beta
    feat = NEF * 8 * OUT_SIZE * OUT_SIZE
    # merged mean|logvar head: (2Z, feat)
    main += [nrm((2 * Z_DIM, feat), jnp.bfloat16), nrm((2 * Z_DIM, 1))]
    # decoder dense: (ndf*8, Z)
    main += [nrm((NDF * 8 * OUT_SIZE * OUT_SIZE, Z_DIM), jnp.bfloat16),
             nrm((NDF * 8 * OUT_SIZE * OUT_SIZE, 1))]
    dec_w, dec_b = [], []
    for cin, cout in DEC_C:
        dec_w.append(nrm((cout, 9 * cin), jnp.bfloat16))       # fused 3x3 conv weight
        dec_b.append(nrm((cout, 1)))
    main += dec_b
    return main, dec_w


# ----------------------------------- kernel ----------------------------------

def _leaky(x):
    return jnp.where(x > 0, x, 0.2 * x)


def _conv_fused(buf, w_ref, k, P, L):
    """One MXU matmul per conv: stack the k*k shifted lane-windows of the padded
    activation buffer along the contraction (sublane) axis and multiply by the
    fused (cout, k*k*cin) weight.  bf16 operands, f32 accumulation."""
    windows = [buf[:, i * P + j: i * P + j + L] for i in range(k) for j in range(k)]
    stacked = jnp.concatenate(windows, axis=0).astype(jnp.bfloat16)
    return jnp.dot(w_ref[...], stacked, preferred_element_type=jnp.float32)


def _batchnorm_interior(raw, mask, g, bt, count):
    """Training-mode BatchNorm over the real (interior) lanes of `raw`.

    `raw` holds real values at interior lanes and exact zeros elsewhere (the 0/1
    repack matrix guarantees this), so plain lane sums give the batch statistics;
    the precomputed interior mask re-zeroes the padding border afterwards."""
    inv_n = 1.0 / count
    mean = jnp.sum(raw, axis=1, keepdims=True) * inv_n
    centered = (raw - mean) * mask
    var = jnp.sum(centered * centered, axis=1, keepdims=True) * inv_n
    return (centered * jax.lax.rsqrt(var + 1e-5) * g + bt) * mask


def vae_kernel(*refs):
    (x_ref, eps_ref,
     ew0, eb0, eg0, ez0, ew1, eb1, eg1, ez1,
     ew2, eb2, eg2, ez2, ew3, eb3, eg3, ez3,
     hw, hb, dw, db, cb0, cb1, cb2, cb3,
     te0, m0, te1, m1, te2, m2, u0, nllmask,
     cw0_h, cw1_h, cw2_h, cw3_h, td0_h, td1_h, td2_h,      # decoder-only (pl.ANY)
     recon_ref, stats_ref,
     cw0_v, cw1_v, cw2_v, cw3_v, td0_v, td1_v, td2_v, dma_sem) = refs

    # -- start prefetch of decoder-only operands; hidden behind encoder compute --
    prefetch = ((cw0_h, cw0_v), (cw1_h, cw1_v), (cw2_h, cw2_v), (cw3_h, cw3_v),
                (td0_h, td0_v), (td1_h, td1_v), (td2_h, td2_v))
    for i, (src, dst) in enumerate(prefetch):
        pltpu.make_async_copy(src, dst, dma_sem.at[i]).start()

    x_val = x_ref[...]                                     # (Cin, B*18*18) f32

    # ---- encoder: 4 x (conv 4x4 s2 p1 -> LeakyReLU(0.2) -> BatchNorm) ----
    enc_params = ((ew0, eb0, eg0, ez0), (ew1, eb1, eg1, ez1),
                  (ew2, eb2, eg2, ez2), (ew3, eb3, eg3, ez3))
    enc_T = ((te0, m0), (te1, m1), (te2, m2))
    buf = x_val
    enc_feat = None
    for l in range(4):
        P, S = ENC_P[l], ENC_S[l]
        w_ref, b_ref, g_ref, z_ref = enc_params[l]
        y = _leaky(_conv_fused(buf, w_ref, 4, P, _enc_L(P)) + b_ref[...])
        if l < 3:
            T_ref, m_ref = enc_T[l]
            raw = jnp.dot(y.astype(jnp.bfloat16), T_ref[...],
                          preferred_element_type=jnp.float32)
            buf = _batchnorm_interior(raw, m_ref[...], g_ref[...], z_ref[...],
                                      float(B * S * S))
        else:
            # 1x1 spatial output: pick lane b*P*P per sample -> (features, B),
            # then BatchNorm over the batch dimension.
            e = jnp.concatenate(
                [y[:, b * P * P: b * P * P + 1] for b in range(B)], axis=1)
            mean_e = jnp.sum(e, axis=1, keepdims=True) * (1.0 / B)
            cen = e - mean_e
            var_e = jnp.sum(cen * cen, axis=1, keepdims=True) * (1.0 / B)
            enc_feat = cen * jax.lax.rsqrt(var_e + 1e-5) * g_ref[...] + z_ref[...]

    # ---- posterior: merged mean/logvar head, reparameterized sample, KL ----
    heads = jnp.dot(hw[...], enc_feat.astype(jnp.bfloat16),
                    preferred_element_type=jnp.float32) + hb[...]
    mu = heads[:Z_DIM, :]                                  # (Z, B)
    logvar = jnp.clip(heads[Z_DIM:, :], -30.0, 20.0)
    std = jnp.exp(0.5 * logvar)
    var = jnp.exp(logvar)
    z = mu + std * eps_ref[...]
    kl = -0.5 * jnp.sum(1.0 + logvar - mu * mu - var, axis=0, keepdims=True)  # (1,B)

    # ---- decoder dense + ReLU, then 1x1 -> 2x2 nearest upsample + pad ----
    hid = jnp.maximum(
        jnp.dot(dw[...], z.astype(jnp.bfloat16),
                preferred_element_type=jnp.float32) + db[...], 0.0)
    dbuf = jnp.dot(hid.astype(jnp.bfloat16), u0[...],
                   preferred_element_type=jnp.float32)     # (ndf*8, B*16)

    # -- decoder operands must be resident now --
    for i, (src, dst) in enumerate(prefetch):
        pltpu.make_async_copy(src, dst, dma_sem.at[i]).wait()

    # ---- decoder: 4 x (up2x folded into td -> conv 3x3 p1 [-> LeakyReLU]) ----
    dec_params = ((cw0_v, cb0), (cw1_v, cb1), (cw2_v, cb2), (cw3_v, cb3))
    dec_T = (td0_v, td1_v, td2_v)
    recon = None
    for s in range(4):
        P = DEC_P[s]
        L = B * P * P if s == 3 else _dec_L(P)
        w_ref, b_ref = dec_params[s]
        y = _conv_fused(dbuf, w_ref, 3, P, L) + b_ref[...]
        if s < 3:
            dbuf = jnp.dot(_leaky(y).astype(jnp.bfloat16), dec_T[s][...],
                           preferred_element_type=jnp.float32)
        else:
            recon = y                                      # (Cin, B*18*18), no act.
    recon_ref[...] = recon

    # ---- recon NLL (decoder logvar = 0 -> unit variance) + KL, merged output ----
    # input x sits at lane (b*324 + (r+1)*18 + (c+1)); recon at (b*324 + r*18 + c).
    diff = x_val[:, X_OFF:X_OFF + NLL_L] - recon[:, :NLL_L]
    sq = jnp.sum(diff * diff, axis=0, keepdims=True) * nllmask[...]   # (1, NLL_L)
    per_b = jnp.concatenate(
        [jnp.sum(sq[:, b * PAD_AREA: min((b + 1) * PAD_AREA, NLL_L)],
                 axis=1, keepdims=True) for b in range(B)], axis=1)   # (1, B)
    n_el = IN_CHANNELS * INPUT_SIZE * INPUT_SIZE
    nll = 0.5 * (per_b + n_el * LOG_2PI)
    stats_ref[...] = jnp.concatenate([nll, kl], axis=0)               # (2, B)


# --------------------------------- wrapper ------------------------------------

def _full_spec(shape):
    nd = len(shape)
    return pl.BlockSpec(tuple(shape), lambda i, nd=nd: (0,) * nd)


@jax.jit
def vae_forward(params, consts, x_nchw, eps):
    main_params, dec_weights = params
    reg_consts, def_consts = consts
    bsz = x_nchw.shape[0]

    # pad the 16x16 input by 1 and lay it out as (channels, batch*18*18)
    x_pad = jnp.pad(x_nchw.astype(jnp.float32), ((0, 0), (0, 0), (1, 1), (1, 1)))
    x_buf = jnp.transpose(x_pad, (1, 0, 2, 3)).reshape(IN_CHANNELS, bsz * PAD_AREA)
    eps_t = jnp.transpose(eps.astype(jnp.float32), (1, 0))            # (Z, B)

    regular = [x_buf, eps_t] + list(main_params) + list(reg_consts)
    deferred = list(dec_weights) + list(def_consts)                   # manual-DMA group
    inputs = regular + deferred

    out_shape = (jax.ShapeDtypeStruct((IN_CHANNELS, bsz * PAD_AREA), jnp.float32),
                 jax.ShapeDtypeStruct((2, bsz), jnp.float32))         # row0=nll, row1=kl

    recon_buf, stats = pl.pallas_call(
        vae_kernel,
        grid=(1,),
        in_specs=[_full_spec(a.shape) for a in regular]
                + [pl.BlockSpec(memory_space=pl.ANY)] * len(deferred),
        out_specs=tuple(_full_spec(o.shape) for o in out_shape),
        out_shape=out_shape,
        scratch_shapes=[pltpu.VMEM(a.shape, a.dtype) for a in deferred]
                      + [pltpu.SemaphoreType.DMA((len(deferred),))],
        compiler_params=pltpu.CompilerParams(
            dimension_semantics=("arbitrary",),
            vmem_limit_bytes=32 * 1024 * 1024),
        cost_estimate=pl.CostEstimate(flops=12_000_000, transcendentals=256,
                                      bytes_accessed=700_000),
    )(*inputs)

    # un-pad: lane b*324 + r*18 + c -> (b, channel, r, c) for r, c < 16
    recon = jnp.transpose(
        recon_buf.reshape(IN_CHANNELS, bsz, PAD_SIDE, PAD_SIDE)[:, :, :INPUT_SIZE,
                                                                :INPUT_SIZE],
        (1, 0, 2, 3))
    return recon, stats[0], stats[1]


# ----------------------------------- main -------------------------------------

if __name__ == "__main__":
    key = jax.random.PRNGKey(0)
    kx, keps, kp = jax.random.split(key, 3)
    x = jax.random.normal(kx, (B, IN_CHANNELS, INPUT_SIZE, INPUT_SIZE),
                          dtype=jnp.float32)
    eps = jax.random.normal(keps, (B, Z_DIM), dtype=jnp.float32)  # reparam. noise

    params = init_params(kp)
    consts = build_constants()

    recon, nll, kl = vae_forward(params, consts, x, eps)
    jax.block_until_ready((recon, nll, kl))

    assert recon.shape == (B, IN_CHANNELS, INPUT_SIZE, INPUT_SIZE)
    assert nll.shape == (B,) and kl.shape == (B,)
    assert bool(jnp.all(jnp.isfinite(recon)))
    assert bool(jnp.all(jnp.isfinite(nll))) and bool(jnp.all(jnp.isfinite(kl)))
    print("KERNEL_OK")
</pallas_src>

<mosaic_0001>
module attributes {stable_mosaic.version = 11 : i64} {
  func.func @vae_kernel(%arg0: i32, %arg1: memref<4x648xf32, #tpu.memory_space<vmem>>, %arg2: memref<16x2xf32, #tpu.memory_space<vmem>>, %arg3: memref<8x64xbf16, #tpu.memory_space<vmem>>, %arg4: memref<8x1xf32, #tpu.memory_space<vmem>>, %arg5: memref<8x1xf32, #tpu.memory_space<vmem>>, %arg6: memref<8x1xf32, #tpu.memory_space<vmem>>, %arg7: memref<16x128xbf16, #tpu.memory_space<vmem>>, %arg8: memref<16x1xf32, #tpu.memory_space<vmem>>, %arg9: memref<16x1xf32, #tpu.memory_space<vmem>>, %arg10: memref<16x1xf32, #tpu.memory_space<vmem>>, %arg11: memref<32x256xbf16, #tpu.memory_space<vmem>>, %arg12: memref<32x1xf32, #tpu.memory_space<vmem>>, %arg13: memref<32x1xf32, #tpu.memory_space<vmem>>, %arg14: memref<32x1xf32, #tpu.memory_space<vmem>>, %arg15: memref<64x512xbf16, #tpu.memory_space<vmem>>, %arg16: memref<64x1xf32, #tpu.memory_space<vmem>>, %arg17: memref<64x1xf32, #tpu.memory_space<vmem>>, %arg18: memref<64x1xf32, #tpu.memory_space<vmem>>, %arg19: memref<32x64xbf16, #tpu.memory_space<vmem>>, %arg20: memref<32x1xf32, #tpu.memory_space<vmem>>, %arg21: memref<64x16xbf16, #tpu.memory_space<vmem>>, %arg22: memref<64x1xf32, #tpu.memory_space<vmem>>, %arg23: memref<32x1xf32, #tpu.memory_space<vmem>>, %arg24: memref<16x1xf32, #tpu.memory_space<vmem>>, %arg25: memref<8x1xf32, #tpu.memory_space<vmem>>, %arg26: memref<4x1xf32, #tpu.memory_space<vmem>>, %arg27: memref<591x200xbf16, #tpu.memory_space<vmem>>, %arg28: memref<1x200xf32, #tpu.memory_space<vmem>>, %arg29: memref<167x72xbf16, #tpu.memory_space<vmem>>, %arg30: memref<1x72xf32, #tpu.memory_space<vmem>>, %arg31: memref<51x32xbf16, #tpu.memory_space<vmem>>, %arg32: memref<1x32xf32, #tpu.memory_space<vmem>>, %arg33: memref<2x32xbf16, #tpu.memory_space<vmem>>, %arg34: memref<1x610xf32, #tpu.memory_space<vmem>>, %arg35: memref<32x576xbf16, #tpu.memory_space<any>>, %arg36: memref<16x288xbf16, #tpu.memory_space<any>>, %arg37: memref<8x144xbf16, #tpu.memory_space<any>>, %arg38: memref<4x72xbf16, #tpu.memory_space<any>>, %arg39: memref<22x72xbf16, #tpu.memory_space<any>>, %arg40: memref<58x200xbf16, #tpu.memory_space<any>>, %arg41: memref<178x686xbf16, #tpu.memory_space<any>>, %arg42: memref<4x648xf32, #tpu.memory_space<vmem>>, %arg43: memref<2x2xf32, #tpu.memory_space<vmem>>, %arg44: memref<32x576xbf16, #tpu.memory_space<vmem>>, %arg45: memref<16x288xbf16, #tpu.memory_space<vmem>>, %arg46: memref<8x144xbf16, #tpu.memory_space<vmem>>, %arg47: memref<4x72xbf16, #tpu.memory_space<vmem>>, %arg48: memref<22x72xbf16, #tpu.memory_space<vmem>>, %arg49: memref<58x200xbf16, #tpu.memory_space<vmem>>, %arg50: memref<178x686xbf16, #tpu.memory_space<vmem>>, %arg51: memref<7x!tpu.dma_semaphore, #tpu.memory_space<semaphore_mem>>) attributes {dimension_semantics = [#tpu.dimension_semantics<arbitrary>], iteration_bounds = array<i64: 1>, scalar_prefetch = 0 : i64, scratch_operands = 8 : i64, tpu.core_type = #tpu.core_type<tc>, window_params = [{pipeline_mode = #tpu.pipeline_mode<synchronous>, transform_indices = @transform_0, window_bounds = array<i64: 4, 648>}, {pipeline_mode = #tpu.pipeline_mode<synchronous>, transform_indices = @transform_1, window_bounds = array<i64: 16, 2>}, {pipeline_mode = #tpu.pipeline_mode<synchronous>, transform_indices = @transform_2, window_bounds = array<i64: 8, 64>}, {pipeline_mode = #tpu.pipeline_mode<synchronous>, transform_indices = @transform_3, window_bounds = array<i64: 8, 1>}, {pipeline_mode = #tpu.pipeline_mode<synchronous>, transform_indices = @transform_4, window_bounds = array<i64: 8, 1>}, {pipeline_mode = #tpu.pipeline_mode<synchronous>, transform_indices = @transform_5, window_bounds = array<i64: 8, 1>}, {pipeline_mode = #tpu.pipeline_mode<synchronous>, transform_indices = @transform_6, window_bounds = array<i64: 16, 128>}, {pipeline_mode = #tpu.pipeline_mode<synchronous>, transform_indices = @transform_7, window_bounds = array<i64: 16, 1>}, {pipeline_mode = #tpu.pipeline_mode<synchronous>, transform_indices = @transform_8, window_bounds = array<i64: 16, 1>}, {pipeline_mode = #tpu.pipeline_mode<synchronous>, transform_indices = @transform_9, window_bounds = array<i64: 16, 1>}, {pipeline_mode = #tpu.pipeline_mode<synchronous>, transform_indices = @transform_10, window_bounds = array<i64: 32, 256>}, {pipeline_mode = #tpu.pipeline_mode<synchronous>, transform_indices = @transform_11, window_bounds = array<i64: 32, 1>}, {pipeline_mode = #tpu.pipeline_mode<synchronous>, transform_indices = @transform_12, window_bounds = array<i64: 32, 1>}, {pipeline_mode = #tpu.pipeline_mode<synchronous>, transform_indices = @transform_13, window_bounds = array<i64: 32, 1>}, {pipeline_mode = #tpu.pipeline_mode<synchronous>, transform_indices = @transform_14, window_bounds = array<i64: 64, 512>}, {pipeline_mode = #tpu.pipeline_mode<synchronous>, transform_indices = @transform_15, window_bounds = array<i64: 64, 1>}, {pipeline_mode = #tpu.pipeline_mode<synchronous>, transform_indices = @transform_16, window_bounds = array<i64: 64, 1>}, {pipeline_mode = #tpu.pipeline_mode<synchronous>, transform_indices = @transform_17, window_bounds = array<i64: 64, 1>}, {pipeline_mode = #tpu.pipeline_mode<synchronous>, transform_indices = @transform_18, window_bounds = array<i64: 32, 64>}, {pipeline_mode = #tpu.pipeline_mode<synchronous>, transform_indices = @transform_19, window_bounds = array<i64: 32, 1>}, {pipeline_mode = #tpu.pipeline_mode<synchronous>, transform_indices = @transform_20, window_bounds = array<i64: 64, 16>}, {pipeline_mode = #tpu.pipeline_mode<synchronous>, transform_indices = @transform_21, window_bounds = array<i64: 64, 1>}, {pipeline_mode = #tpu.pipeline_mode<synchronous>, transform_indices = @transform_22, window_bounds = array<i64: 32, 1>}, {pipeline_mode = #tpu.pipeline_mode<synchronous>, transform_indices = @transform_23, window_bounds = array<i64: 16, 1>}, {pipeline_mode = #tpu.pipeline_mode<synchronous>, transform_indices = @transform_24, window_bounds = array<i64: 8, 1>}, {pipeline_mode = #tpu.pipeline_mode<synchronous>, transform_indices = @transform_25, window_bounds = array<i64: 4, 1>}, {pipeline_mode = #tpu.pipeline_mode<synchronous>, transform_indices = @transform_26, window_bounds = array<i64: 591, 200>}, {pipeline_mode = #tpu.pipeline_mode<synchronous>, transform_indices = @transform_27, window_bounds = array<i64: 1, 200>}, {pipeline_mode = #tpu.pipeline_mode<synchronous>, transform_indices = @transform_28, window_bounds = array<i64: 167, 72>}, {pipeline_mode = #tpu.pipeline_mode<synchronous>, transform_indices = @transform_29, window_bounds = array<i64: 1, 72>}, {pipeline_mode = #tpu.pipeline_mode<synchronous>, transform_indices = @transform_30, window_bounds = array<i64: 51, 32>}, {pipeline_mode = #tpu.pipeline_mode<synchronous>, transform_indices = @transform_31, window_bounds = array<i64: 1, 32>}, {pipeline_mode = #tpu.pipeline_mode<synchronous>, transform_indices = @transform_32, window_bounds = array<i64: 2, 32>}, {pipeline_mode = #tpu.pipeline_mode<synchronous>, transform_indices = @transform_33, window_bounds = array<i64: 1, 610>}, {}, {}, {}, {}, {}, {}, {}, {pipeline_mode = #tpu.pipeline_mode<synchronous>, transform_indices = @transform_41, window_bounds = array<i64: 4, 648>}, {pipeline_mode = #tpu.pipeline_mode<synchronous>, transform_indices = @transform_42, window_bounds = array<i64: 2, 2>}]} {
    %c0_i32 = arith.constant 0 : i32
    %0 = tpu.memref_slice %arg51[%c0_i32] : memref<7x!tpu.dma_semaphore, #tpu.memory_space<semaphore_mem>> -> memref<1x!tpu.dma_semaphore, #tpu.memory_space<semaphore_mem>>
    %1 = tpu.memref_squeeze %0 : memref<1x!tpu.dma_semaphore, #tpu.memory_space<semaphore_mem>> -> memref<!tpu.dma_semaphore, #tpu.memory_space<semaphore_mem>>
    tpu.enqueue_dma source(%arg35 : memref<32x576xbf16, #tpu.memory_space<any>>) target(%arg44 : memref<32x576xbf16, #tpu.memory_space<vmem>>) target_semaphore(%1 : memref<!tpu.dma_semaphore, #tpu.memory_space<semaphore_mem>>)
    %c1_i32 = arith.constant 1 : i32
    %2 = tpu.memref_slice %arg51[%c1_i32] : memref<7x!tpu.dma_semaphore, #tpu.memory_space<semaphore_mem>> -> memref<1x!tpu.dma_semaphore, #tpu.memory_space<semaphore_mem>>
    %3 = tpu.memref_squeeze %2 : memref<1x!tpu.dma_semaphore, #tpu.memory_space<semaphore_mem>> -> memref<!tpu.dma_semaphore, #tpu.memory_space<semaphore_mem>>
    tpu.enqueue_dma source(%arg36 : memref<16x288xbf16, #tpu.memory_space<any>>) target(%arg45 : memref<16x288xbf16, #tpu.memory_space<vmem>>) target_semaphore(%3 : memref<!tpu.dma_semaphore, #tpu.memory_space<semaphore_mem>>)
    %c2_i32 = arith.constant 2 : i32
    %4 = tpu.memref_slice %arg51[%c2_i32] : memref<7x!tpu.dma_semaphore, #tpu.memory_space<semaphore_mem>> -> memref<1x!tpu.dma_semaphore, #tpu.memory_space<semaphore_mem>>
    %5 = tpu.memref_squeeze %4 : memref<1x!tpu.dma_semaphore, #tpu.memory_space<semaphore_mem>> -> memref<!tpu.dma_semaphore, #tpu.memory_space<semaphore_mem>>
    tpu.enqueue_dma source(%arg37 : memref<8x144xbf16, #tpu.memory_space<any>>) target(%arg46 : memref<8x144xbf16, #tpu.memory_space<vmem>>) target_semaphore(%5 : memref<!tpu.dma_semaphore, #tpu.memory_space<semaphore_mem>>)
    %c3_i32 = arith.constant 3 : i32
    %6 = tpu.memref_slice %arg51[%c3_i32] : memref<7x!tpu.dma_semaphore, #tpu.memory_space<semaphore_mem>> -> memref<1x!tpu.dma_semaphore, #tpu.memory_space<semaphore_mem>>
    %7 = tpu.memref_squeeze %6 : memref<1x!tpu.dma_semaphore, #tpu.memory_space<semaphore_mem>> -> memref<!tpu.dma_semaphore, #tpu.memory_space<semaphore_mem>>
    tpu.enqueue_dma source(%arg38 : memref<4x72xbf16, #tpu.memory_space<any>>) target(%arg47 : memref<4x72xbf16, #tpu.memory_space<vmem>>) target_semaphore(%7 : memref<!tpu.dma_semaphore, #tpu.memory_space<semaphore_mem>>)
    %c4_i32 = arith.constant 4 : i32
    %8 = tpu.memref_slice %arg51[%c4_i32] : memref<7x!tpu.dma_semaphore, #tpu.memory_space<semaphore_mem>> -> memref<1x!tpu.dma_semaphore, #tpu.memory_space<semaphore_mem>>
    %9 = tpu.memref_squeeze %8 : memref<1x!tpu.dma_semaphore, #tpu.memory_space<semaphore_mem>> -> memref<!tpu.dma_semaphore, #tpu.memory_space<semaphore_mem>>
    tpu.enqueue_dma source(%arg39 : memref<22x72xbf16, #tpu.memory_space<any>>) target(%arg48 : memref<22x72xbf16, #tpu.memory_space<vmem>>) target_semaphore(%9 : memref<!tpu.dma_semaphore, #tpu.memory_space<semaphore_mem>>)
    %c5_i32 = arith.constant 5 : i32
    %10 = tpu.memref_slice %arg51[%c5_i32] : memref<7x!tpu.dma_semaphore, #tpu.memory_space<semaphore_mem>> -> memref<1x!tpu.dma_semaphore, #tpu.memory_space<semaphore_mem>>
    %11 = tpu.memref_squeeze %10 : memref<1x!tpu.dma_semaphore, #tpu.memory_space<semaphore_mem>> -> memref<!tpu.dma_semaphore, #tpu.memory_space<semaphore_mem>>
    tpu.enqueue_dma source(%arg40 : memref<58x200xbf16, #tpu.memory_space<any>>) target(%arg49 : memref<58x200xbf16, #tpu.memory_space<vmem>>) target_semaphore(%11 : memref<!tpu.dma_semaphore, #tpu.memory_space<semaphore_mem>>)
    %c6_i32 = arith.constant 6 : i32
    %12 = tpu.memref_slice %arg51[%c6_i32] : memref<7x!tpu.dma_semaphore, #tpu.memory_space<semaphore_mem>> -> memref<1x!tpu.dma_semaphore, #tpu.memory_space<semaphore_mem>>
    %13 = tpu.memref_squeeze %12 : memref<1x!tpu.dma_semaphore, #tpu.memory_space<semaphore_mem>> -> memref<!tpu.dma_semaphore, #tpu.memory_space<semaphore_mem>>
    tpu.enqueue_dma source(%arg41 : memref<178x686xbf16, #tpu.memory_space<any>>) target(%arg50 : memref<178x686xbf16, #tpu.memory_space<vmem>>) target_semaphore(%13 : memref<!tpu.dma_semaphore, #tpu.memory_space<semaphore_mem>>)
    %c0 = arith.constant 0 : index
    %c0_0 = arith.constant 0 : index
    %14 = vector.load %arg1[%c0, %c0_0] : memref<4x648xf32, #tpu.memory_space<vmem>>, vector<4x648xf32>
    %15 = vector.extract_strided_slice %14 {offsets = [0, 0], sizes = [4, 591], strides = [1, 1]} : vector<4x648xf32> to vector<4x591xf32>
    %16 = vector.extract_strided_slice %14 {offsets = [0, 1], sizes = [4, 591], strides = [1, 1]} : vector<4x648xf32> to vector<4x591xf32>
    %17 = vector.extract_strided_slice %14 {offsets = [0, 2], sizes = [4, 591], strides = [1, 1]} : vector<4x648xf32> to vector<4x591xf32>
    %18 = vector.extract_strided_slice %14 {offsets = [0, 3], sizes = [4, 591], strides = [1, 1]} : vector<4x648xf32> to vector<4x591xf32>
    %19 = vector.extract_strided_slice %14 {offsets = [0, 18], sizes = [4, 591], strides = [1, 1]} : vector<4x648xf32> to vector<4x591xf32>
    %20 = vector.extract_strided_slice %14 {offsets = [0, 19], sizes = [4, 591], strides = [1, 1]} : vector<4x648xf32> to vector<4x591xf32>
    %21 = vector.extract_strided_slice %14 {offsets = [0, 20], sizes = [4, 591], strides = [1, 1]} : vector<4x648xf32> to vector<4x591xf32>
    %22 = vector.extract_strided_slice %14 {offsets = [0, 21], sizes = [4, 591], strides = [1, 1]} : vector<4x648xf32> to vector<4x591xf32>
    %23 = vector.extract_strided_slice %14 {offsets = [0, 36], sizes = [4, 591], strides = [1, 1]} : vector<4x648xf32> to vector<4x591xf32>
    %24 = vector.extract_strided_slice %14 {offsets = [0, 37], sizes = [4, 591], strides = [1, 1]} : vector<4x648xf32> to vector<4x591xf32>
    %25 = vector.extract_strided_slice %14 {offsets = [0, 38], sizes = [4, 591], strides = [1, 1]} : vector<4x648xf32> to vector<4x591xf32>
    %26 = vector.extract_strided_slice %14 {offsets = [0, 39], sizes = [4, 591], strides = [1, 1]} : vector<4x648xf32> to vector<4x591xf32>
    %27 = vector.extract_strided_slice %14 {offsets = [0, 54], sizes = [4, 591], strides = [1, 1]} : vector<4x648xf32> to vector<4x591xf32>
    %28 = vector.extract_strided_slice %14 {offsets = [0, 55], sizes = [4, 591], strides = [1, 1]} : vector<4x648xf32> to vector<4x591xf32>
    %29 = vector.extract_strided_slice %14 {offsets = [0, 56], sizes = [4, 591], strides = [1, 1]} : vector<4x648xf32> to vector<4x591xf32>
    %30 = vector.extract_strided_slice %14 {offsets = [0, 57], sizes = [4, 591], strides = [1, 1]} : vector<4x648xf32> to vector<4x591xf32>
    %31 = tpu.concatenate %15, %16, %17, %18, %19, %20, %21, %22, %23, %24, %25, %26, %27, %28, %29, %30 in 0 : vector<4x591xf32>, vector<4x591xf32>, vector<4x591xf32>, vector<4x591xf32>, vector<4x591xf32>, vector<4x591xf32>, vector<4x591xf32>, vector<4x591xf32>, vector<4x591xf32>, vector<4x591xf32>, vector<4x591xf32>, vector<4x591xf32>, vector<4x591xf32>, vector<4x591xf32>, vector<4x591xf32>, vector<4x591xf32> -> vector<64x591xf32>
    %32 = arith.truncf %31 : vector<64x591xf32> to vector<64x591xbf16>
    %c0_1 = arith.constant 0 : index
    %c0_2 = arith.constant 0 : index
    %33 = vector.load %arg3[%c0_1, %c0_2] : memref<8x64xbf16, #tpu.memory_space<vmem>>, vector<8x64xbf16>
    %cst = arith.constant dense<0.000000e+00> : vector<8x591xf32>
    %34 = tpu.matmul %33, %32, %cst {dimension_numbers = #tpu.dot_dimension_numbers<[1], [0], [0], [1], [0, 0, 1, 1], [], []>} : vector<8x64xbf16>, vector<64x591xbf16>, vector<8x591xf32> -> vector<8x591xf32>
    %c0_3 = arith.constant 0 : index
    %c0_4 = arith.constant 0 : index
    %35 = vector.load %arg4[%c0_3, %c0_4] : memref<8x1xf32, #tpu.memory_space<vmem>>, vector<8x1xf32>
    %36 = vector.broadcast %35 : vector<8x1xf32> to vector<8x591xf32>
    %37 = arith.addf %34, %36 : vector<8x591xf32>
    %cst_5 = arith.constant 0.000000e+00 : f32
    %38 = vector.broadcast %cst_5 : f32 to vector<8x591xf32>
    %39 = arith.cmpf ogt, %37, %38 : vector<8x591xf32>
    %cst_6 = arith.constant 2.000000e-01 : f32
    %40 = vector.broadcast %cst_6 : f32 to vector<8x591xf32>
    %41 = arith.mulf %40, %37 : vector<8x591xf32>
    %42 = arith.select %39, %37, %41 : vector<8x591xi1>, vector<8x591xf32>
    %43 = arith.truncf %42 : vector<8x591xf32> to vector<8x591xbf16>
    %c0_7 = arith.constant 0 : index
    %c0_8 = arith.constant 0 : index
    %44 = vector.load %arg27[%c0_7, %c0_8] : memref<591x200xbf16, #tpu.memory_space<vmem>>, vector<591x200xbf16>
    %cst_9 = arith.constant dense<0.000000e+00> : vector<8x200xf32>
    %45 = tpu.matmul %43, %44, %cst_9 {dimension_numbers = #tpu.dot_dimension_numbers<[1], [0], [0], [1], [0, 0, 1, 1], [], []>} : vector<8x591xbf16>, vector<591x200xbf16>, vector<8x200xf32> -> vector<8x200xf32>
    %c0_10 = arith.constant 0 : index
    %c0_11 = arith.constant 0 : index
    %46 = vector.load %arg28[%c0_10, %c0_11] : memref<1x200xf32, #tpu.memory_space<vmem>>, vector<1x200xf32>
    %c0_12 = arith.constant 0 : index
    %c0_13 = arith.constant 0 : index
    %47 = vector.load %arg5[%c0_12, %c0_13] : memref<8x1xf32, #tpu.memory_space<vmem>>, vector<8x1xf32>
    %c0_14 = arith.constant 0 : index
    %c0_15 = arith.constant 0 : index
    %48 = vector.load %arg6[%c0_14, %c0_15] : memref<8x1xf32, #tpu.memory_space<vmem>>, vector<8x1xf32>
    %cst_16 = arith.constant dense<0.000000e+00> : vector<8xf32>
    %49 = vector.multi_reduction <add>, %45, %cst_16 [1] : vector<8x200xf32> to vector<8xf32>
    %50 = vector.shape_cast %49 : vector<8xf32> to vector<8x1xf32>
    %cst_17 = arith.constant 7.812500e-03 : f32
    %51 = vector.broadcast %cst_17 : f32 to vector<8x1xf32>
    %52 = arith.mulf %50, %51 : vector<8x1xf32>
    %53 = vector.broadcast %52 : vector<8x1xf32> to vector<8x200xf32>
    %54 = arith.subf %45, %53 : vector<8x200xf32>
    %55 = vector.broadcast %46 : vector<1x200xf32> to vector<8x200xf32>
    %56 = arith.mulf %54, %55 : vector<8x200xf32>
    %57 = arith.mulf %56, %56 : vector<8x200xf32>
    %cst_18 = arith.constant dense<0.000000e+00> : vector<8xf32>
    %58 = vector.multi_reduction <add>, %57, %cst_18 [1] : vector<8x200xf32> to vector<8xf32>
    %59 = vector.shape_cast %58 : vector<8xf32> to vector<8x1xf32>
    %cst_19 = arith.constant 7.812500e-03 : f32
    %60 = vector.broadcast %cst_19 : f32 to vector<8x1xf32>
    %61 = arith.mulf %59, %60 : vector<8x1xf32>
    %cst_20 = arith.constant 9.99999974E-6 : f32
    %62 = vector.broadcast %cst_20 : f32 to vector<8x1xf32>
    %63 = arith.addf %61, %62 : vector<8x1xf32>
    %64 = math.rsqrt %63 : vector<8x1xf32>
    %65 = vector.broadcast %64 : vector<8x1xf32> to vector<8x200xf32>
    %66 = arith.mulf %56, %65 : vector<8x200xf32>
    %67 = vector.broadcast %47 : vector<8x1xf32> to vector<8x200xf32>
    %68 = arith.mulf %66, %67 : vector<8x200xf32>
    %69 = vector.broadcast %48 : vector<8x1xf32> to vector<8x200xf32>
    %70 = arith.addf %68, %69 : vector<8x200xf32>
    %71 = vector.broadcast %46 : vector<1x200xf32> to vector<8x200xf32>
    %72 = arith.mulf %70, %71 : vector<8x200xf32>
    %73 = vector.extract_strided_slice %72 {offsets = [0, 0], sizes = [8, 167], strides = [1, 1]} : vector<8x200xf32> to vector<8x167xf32>
    %74 = vector.extract_strided_slice %72 {offsets = [0, 1], sizes = [8, 167], strides = [1, 1]} : vector<8x200xf32> to vector<8x167xf32>
    %75 = vector.extract_strided_slice %72 {offsets = [0, 2], sizes = [8, 167], strides = [1, 1]} : vector<8x200xf32> to vector<8x167xf32>
    %76 = vector.extract_strided_slice %72 {offsets = [0, 3], sizes = [8, 167], strides = [1, 1]} : vector<8x200xf32> to vector<8x167xf32>
    %77 = vector.extract_strided_slice %72 {offsets = [0, 10], sizes = [8, 167], strides = [1, 1]} : vector<8x200xf32> to vector<8x167xf32>
    %78 = vector.extract_strided_slice %72 {offsets = [0, 11], sizes = [8, 167], strides = [1, 1]} : vector<8x200xf32> to vector<8x167xf32>
    %79 = vector.extract_strided_slice %72 {offsets = [0, 12], sizes = [8, 167], strides = [1, 1]} : vector<8x200xf32> to vector<8x167xf32>
    %80 = vector.extract_strided_slice %72 {offsets = [0, 13], sizes = [8, 167], strides = [1, 1]} : vector<8x200xf32> to vector<8x167xf32>
    %81 = vector.extract_strided_slice %72 {offsets = [0, 20], sizes = [8, 167], strides = [1, 1]} : vector<8x200xf32> to vector<8x167xf32>
    %82 = vector.extract_strided_slice %72 {offsets = [0, 21], sizes = [8, 167], strides = [1, 1]} : vector<8x200xf32> to vector<8x167xf32>
    %83 = vector.extract_strided_slice %72 {offsets = [0, 22], sizes = [8, 167], strides = [1, 1]} : vector<8x200xf32> to vector<8x167xf32>
    %84 = vector.extract_strided_slice %72 {offsets = [0, 23], sizes = [8, 167], strides = [1, 1]} : vector<8x200xf32> to vector<8x167xf32>
    %85 = vector.extract_strided_slice %72 {offsets = [0, 30], sizes = [8, 167], strides = [1, 1]} : vector<8x200xf32> to vector<8x167xf32>
    %86 = vector.extract_strided_slice %72 {offsets = [0, 31], sizes = [8, 167], strides = [1, 1]} : vector<8x200xf32> to vector<8x167xf32>
    %87 = vector.extract_strided_slice %72 {offsets = [0, 32], sizes = [8, 167], strides = [1, 1]} : vector<8x200xf32> to vector<8x167xf32>
    %88 = vector.extract_strided_slice %72 {offsets = [0, 33], sizes = [8, 167], strides = [1, 1]} : vector<8x200xf32> to vector<8x167xf32>
    %89 = tpu.concatenate %73, %74, %75, %76, %77, %78, %79, %80, %81, %82, %83, %84, %85, %86, %87, %88 in 0 : vector<8x167xf32>, vector<8x167xf32>, vector<8x167xf32>, vector<8x167xf32>, vector<8x167xf32>, vector<8x167xf32>, vector<8x167xf32>, vector<8x167xf32>, vector<8x167xf32>, vector<8x167xf32>, vector<8x167xf32>, vector<8x167xf32>, vector<8x167xf32>, vector<8x167xf32>, vector<8x167xf32>, vector<8x167xf32> -> vector<128x167xf32>
    %90 = arith.truncf %89 : vector<128x167xf32> to vector<128x167xbf16>
    %c0_21 = arith.constant 0 : index
    %c0_22 = arith.constant 0 : index
    %91 = vector.load %arg7[%c0_21, %c0_22] : memref<16x128xbf16, #tpu.memory_space<vmem>>, vector<16x128xbf16>
    %cst_23 = arith.constant dense<0.000000e+00> : vector<16x167xf32>
    %92 = tpu.matmul %91, %90, %cst_23 {dimension_numbers = #tpu.dot_dimension_numbers<[1], [0], [0], [1], [0, 0, 1, 1], [], []>} : vector<16x128xbf16>, vector<128x167xbf16>, vector<16x167xf32> -> vector<16x167xf32>
    %c0_24 = arith.constant 0 : index
    %c0_25 = arith.constant 0 : index
    %93 = vector.load %arg8[%c0_24, %c0_25] : memref<16x1xf32, #tpu.memory_space<vmem>>, vector<16x1xf32>
    %94 = vector.broadcast %93 : vector<16x1xf32> to vector<16x167xf32>
    %95 = arith.addf %92, %94 : vector<16x167xf32>
    %cst_26 = arith.constant 0.000000e+00 : f32
    %96 = vector.broadcast %cst_26 : f32 to vector<16x167xf32>
    %97 = arith.cmpf ogt, %95, %96 : vector<16x167xf32>
    %cst_27 = arith.constant 2.000000e-01 : f32
    %98 = vector.broadcast %cst_27 : f32 to vector<16x167xf32>
    %99 = arith.mulf %98, %95 : vector<16x167xf32>
    %100 = arith.select %97, %95, %99 : vector<16x167xi1>, vector<16x167xf32>
    %101 = arith.truncf %100 : vector<16x167xf32> to vector<16x167xbf16>
    %c0_28 = arith.constant 0 : index
    %c0_29 = arith.constant 0 : index
    %102 = vector.load %arg29[%c0_28, %c0_29] : memref<167x72xbf16, #tpu.memory_space<vmem>>, vector<167x72xbf16>
    %cst_30 = arith.constant dense<0.000000e+00> : vector<16x72xf32>
    %103 = tpu.matmul %101, %102, %cst_30 {dimension_numbers = #tpu.dot_dimension_numbers<[1], [0], [0], [1], [0, 0, 1, 1], [], []>} : vector<16x167xbf16>, vector<167x72xbf16>, vector<16x72xf32> -> vector<16x72xf32>
    %c0_31 = arith.constant 0 : index
    %c0_32 = arith.constant 0 : index
    %104 = vector.load %arg30[%c0_31, %c0_32] : memref<1x72xf32, #tpu.memory_space<vmem>>, vector<1x72xf32>
    %c0_33 = arith.constant 0 : index
    %c0_34 = arith.constant 0 : index
    %105 = vector.load %arg9[%c0_33, %c0_34] : memref<16x1xf32, #tpu.memory_space<vmem>>, vector<16x1xf32>
    %c0_35 = arith.constant 0 : index
    %c0_36 = arith.constant 0 : index
    %106 = vector.load %arg10[%c0_35, %c0_36] : memref<16x1xf32, #tpu.memory_space<vmem>>, vector<16x1xf32>
    %cst_37 = arith.constant dense<0.000000e+00> : vector<16xf32>
    %107 = vector.multi_reduction <add>, %103, %cst_37 [1] : vector<16x72xf32> to vector<16xf32>
    %108 = vector.shape_cast %107 : vector<16xf32> to vector<16x1xf32>
    %cst_38 = arith.constant 3.125000e-02 : f32
    %109 = vector.broadcast %cst_38 : f32 to vector<16x1xf32>
    %110 = arith.mulf %108, %109 : vector<16x1xf32>
    %111 = vector.broadcast %110 : vector<16x1xf32> to vector<16x72xf32>
    %112 = arith.subf %103, %111 : vector<16x72xf32>
    %113 = vector.broadcast %104 : vector<1x72xf32> to vector<16x72xf32>
    %114 = arith.mulf %112, %113 : vector<16x72xf32>
    %115 = arith.mulf %114, %114 : vector<16x72xf32>
    %cst_39 = arith.constant dense<0.000000e+00> : vector<16xf32>
    %116 = vector.multi_reduction <add>, %115, %cst_39 [1] : vector<16x72xf32> to vector<16xf32>
    %117 = vector.shape_cast %116 : vector<16xf32> to vector<16x1xf32>
    %cst_40 = arith.constant 3.125000e-02 : f32
    %118 = vector.broadcast %cst_40 : f32 to vector<16x1xf32>
    %119 = arith.mulf %117, %118 : vector<16x1xf32>
    %cst_41 = arith.constant 9.99999974E-6 : f32
    %120 = vector.broadcast %cst_41 : f32 to vector<16x1xf32>
    %121 = arith.addf %119, %120 : vector<16x1xf32>
    %122 = math.rsqrt %121 : vector<16x1xf32>
    %123 = vector.broadcast %122 : vector<16x1xf32> to vector<16x72xf32>
    %124 = arith.mulf %114, %123 : vector<16x72xf32>
    %125 = vector.broadcast %105 : vector<16x1xf32> to vector<16x72xf32>
    %126 = arith.mulf %124, %125 : vector<16x72xf32>
    %127 = vector.broadcast %106 : vector<16x1xf32> to vector<16x72xf32>
    %128 = arith.addf %126, %127 : vector<16x72xf32>
    %129 = vector.broadcast %104 : vector<1x72xf32> to vector<16x72xf32>
    %130 = arith.mulf %128, %129 : vector<16x72xf32>
    %131 = vector.extract_strided_slice %130 {offsets = [0, 0], sizes = [16, 51], strides = [1, 1]} : vector<16x72xf32> to vector<16x51xf32>
    %132 = vector.extract_strided_slice %130 {offsets = [0, 1], sizes = [16, 51], strides = [1, 1]} : vector<16x72xf32> to vector<16x51xf32>
    %133 = vector.extract_strided_slice %130 {offsets = [0, 2], sizes = [16, 51], strides = [1, 1]} : vector<16x72xf32> to vector<16x51xf32>
    %134 = vector.extract_strided_slice %130 {offsets = [0, 3], sizes = [16, 51], strides = [1, 1]} : vector<16x72xf32> to vector<16x51xf32>
    %135 = vector.extract_strided_slice %130 {offsets = [0, 6], sizes = [16, 51], strides = [1, 1]} : vector<16x72xf32> to vector<16x51xf32>
    %136 = vector.extract_strided_slice %130 {offsets = [0, 7], sizes = [16, 51], strides = [1, 1]} : vector<16x72xf32> to vector<16x51xf32>
    %137 = vector.extract_strided_slice %130 {offsets = [0, 8], sizes = [16, 51], strides = [1, 1]} : vector<16x72xf32> to vector<16x51xf32>
    %138 = vector.extract_strided_slice %130 {offsets = [0, 9], sizes = [16, 51], strides = [1, 1]} : vector<16x72xf32> to vector<16x51xf32>
    %139 = vector.extract_strided_slice %130 {offsets = [0, 12], sizes = [16, 51], strides = [1, 1]} : vector<16x72xf32> to vector<16x51xf32>
    %140 = vector.extract_strided_slice %130 {offsets = [0, 13], sizes = [16, 51], strides = [1, 1]} : vector<16x72xf32> to vector<16x51xf32>
    %141 = vector.extract_strided_slice %130 {offsets = [0, 14], sizes = [16, 51], strides = [1, 1]} : vector<16x72xf32> to vector<16x51xf32>
    %142 = vector.extract_strided_slice %130 {offsets = [0, 15], sizes = [16, 51], strides = [1, 1]} : vector<16x72xf32> to vector<16x51xf32>
    %143 = vector.extract_strided_slice %130 {offsets = [0, 18], sizes = [16, 51], strides = [1, 1]} : vector<16x72xf32> to vector<16x51xf32>
    %144 = vector.extract_strided_slice %130 {offsets = [0, 19], sizes = [16, 51], strides = [1, 1]} : vector<16x72xf32> to vector<16x51xf32>
    %145 = vector.extract_strided_slice %130 {offsets = [0, 20], sizes = [16, 51], strides = [1, 1]} : vector<16x72xf32> to vector<16x51xf32>
    %146 = vector.extract_strided_slice %130 {offsets = [0, 21], sizes = [16, 51], strides = [1, 1]} : vector<16x72xf32> to vector<16x51xf32>
    %147 = tpu.concatenate %131, %132, %133, %134, %135, %136, %137, %138, %139, %140, %141, %142, %143, %144, %145, %146 in 0 : vector<16x51xf32>, vector<16x51xf32>, vector<16x51xf32>, vector<16x51xf32>, vector<16x51xf32>, vector<16x51xf32>, vector<16x51xf32>, vector<16x51xf32>, vector<16x51xf32>, vector<16x51xf32>, vector<16x51xf32>, vector<16x51xf32>, vector<16x51xf32>, vector<16x51xf32>, vector<16x51xf32>, vector<16x51xf32> -> vector<256x51xf32>
    %148 = arith.truncf %147 : vector<256x51xf32> to vector<256x51xbf16>
    %c0_42 = arith.constant 0 : index
    %c0_43 = arith.constant 0 : index
    %149 = vector.load %arg11[%c0_42, %c0_43] : memref<32x256xbf16, #tpu.memory_space<vmem>>, vector<32x256xbf16>
    %cst_44 = arith.constant dense<0.000000e+00> : vector<32x51xf32>
    %150 = tpu.matmul %149, %148, %cst_44 {dimension_numbers = #tpu.dot_dimension_numbers<[1], [0], [0], [1], [0, 0, 1, 1], [], []>} : vector<32x256xbf16>, vector<256x51xbf16>, vector<32x51xf32> -> vector<32x51xf32>
    %c0_45 = arith.constant 0 : index
    %c0_46 = arith.constant 0 : index
    %151 = vector.load %arg12[%c0_45, %c0_46] : memref<32x1xf32, #tpu.memory_space<vmem>>, vector<32x1xf32>
    %152 = vector.broadcast %151 : vector<32x1xf32> to vector<32x51xf32>
    %153 = arith.addf %150, %152 : vector<32x51xf32>
    %cst_47 = arith.constant 0.000000e+00 : f32
    %154 = vector.broadcast %cst_47 : f32 to vector<32x51xf32>
    %155 = arith.cmpf ogt, %153, %154 : vector<32x51xf32>
    %cst_48 = arith.constant 2.000000e-01 : f32
    %156 = vector.broadcast %cst_48 : f32 to vector<32x51xf32>
    %157 = arith.mulf %156, %153 : vector<32x51xf32>
    %158 = arith.select %155, %153, %157 : vector<32x51xi1>, vector<32x51xf32>
    %159 = arith.truncf %158 : vector<32x51xf32> to vector<32x51xbf16>
    %c0_49 = arith.constant 0 : index
    %c0_50 = arith.constant 0 : index
    %160 = vector.load %arg31[%c0_49, %c0_50] : memref<51x32xbf16, #tpu.memory_space<vmem>>, vector<51x32xbf16>
    %cst_51 = arith.constant dense<0.000000e+00> : vector<32x32xf32>
    %161 = tpu.matmul %159, %160, %cst_51 {dimension_numbers = #tpu.dot_dimension_numbers<[1], [0], [0], [1], [0, 0, 1, 1], [], []>} : vector<32x51xbf16>, vector<51x32xbf16>, vector<32x32xf32> -> vector<32x32xf32>
    %c0_52 = arith.constant 0 : index
    %c0_53 = arith.constant 0 : index
    %162 = vector.load %arg32[%c0_52, %c0_53] : memref<1x32xf32, #tpu.memory_space<vmem>>, vector<1x32xf32>
    %c0_54 = arith.constant 0 : index
    %c0_55 = arith.constant 0 : index
    %163 = vector.load %arg13[%c0_54, %c0_55] : memref<32x1xf32, #tpu.memory_space<vmem>>, vector<32x1xf32>
    %c0_56 = arith.constant 0 : index
    %c0_57 = arith.constant 0 : index
    %164 = vector.load %arg14[%c0_56, %c0_57] : memref<32x1xf32, #tpu.memory_space<vmem>>, vector<32x1xf32>
    %cst_58 = arith.constant dense<0.000000e+00> : vector<32xf32>
    %165 = vector.multi_reduction <add>, %161, %cst_58 [1] : vector<32x32xf32> to vector<32xf32>
    %166 = vector.shape_cast %165 : vector<32xf32> to vector<32x1xf32>
    %cst_59 = arith.constant 1.250000e-01 : f32
    %167 = vector.broadcast %cst_59 : f32 to vector<32x1xf32>
    %168 = arith.mulf %166, %167 : vector<32x1xf32>
    %169 = vector.broadcast %168 : vector<32x1xf32> to vector<32x32xf32>
    %170 = arith.subf %161, %169 : vector<32x32xf32>
    %171 = vector.broadcast %162 : vector<1x32xf32> to vector<32x32xf32>
    %172 = arith.mulf %170, %171 : vector<32x32xf32>
    %173 = arith.mulf %172, %172 : vector<32x32xf32>
    %cst_60 = arith.constant dense<0.000000e+00> : vector<32xf32>
    %174 = vector.multi_reduction <add>, %173, %cst_60 [1] : vector<32x32xf32> to vector<32xf32>
    %175 = vector.shape_cast %174 : vector<32xf32> to vector<32x1xf32>
    %cst_61 = arith.constant 1.250000e-01 : f32
    %176 = vector.broadcast %cst_61 : f32 to vector<32x1xf32>
    %177 = arith.mulf %175, %176 : vector<32x1xf32>
    %cst_62 = arith.constant 9.99999974E-6 : f32
    %178 = vector.broadcast %cst_62 : f32 to vector<32x1xf32>
    %179 = arith.addf %177, %178 : vector<32x1xf32>
    %180 = math.rsqrt %179 : vector<32x1xf32>
    %181 = vector.broadcast %180 : vector<32x1xf32> to vector<32x32xf32>
    %182 = arith.mulf %172, %181 : vector<32x32xf32>
    %183 = vector.broadcast %163 : vector<32x1xf32> to vector<32x32xf32>
    %184 = arith.mulf %182, %183 : vector<32x32xf32>
    %185 = vector.broadcast %164 : vector<32x1xf32> to vector<32x32xf32>
    %186 = arith.addf %184, %185 : vector<32x32xf32>
    %187 = vector.broadcast %162 : vector<1x32xf32> to vector<32x32xf32>
    %188 = arith.mulf %186, %187 : vector<32x32xf32>
    %189 = vector.extract_strided_slice %188 {offsets = [0, 0], sizes = [32, 17], strides = [1, 1]} : vector<32x32xf32> to vector<32x17xf32>
    %190 = vector.extract_strided_slice %188 {offsets = [0, 1], sizes = [32, 17], strides = [1, 1]} : vector<32x32xf32> to vector<32x17xf32>
    %191 = vector.extract_strided_slice %188 {offsets = [0, 2], sizes = [32, 17], strides = [1, 1]} : vector<32x32xf32> to vector<32x17xf32>
    %192 = vector.extract_strided_slice %188 {offsets = [0, 3], sizes = [32, 17], strides = [1, 1]} : vector<32x32xf32> to vector<32x17xf32>
    %193 = vector.extract_strided_slice %188 {offsets = [0, 4], sizes = [32, 17], strides = [1, 1]} : vector<32x32xf32> to vector<32x17xf32>
    %194 = vector.extract_strided_slice %188 {offsets = [0, 5], sizes = [32, 17], strides = [1, 1]} : vector<32x32xf32> to vector<32x17xf32>
    %195 = vector.extract_strided_slice %188 {offsets = [0, 6], sizes = [32, 17], strides = [1, 1]} : vector<32x32xf32> to vector<32x17xf32>
    %196 = vector.extract_strided_slice %188 {offsets = [0, 7], sizes = [32, 17], strides = [1, 1]} : vector<32x32xf32> to vector<32x17xf32>
    %197 = vector.extract_strided_slice %188 {offsets = [0, 8], sizes = [32, 17], strides = [1, 1]} : vector<32x32xf32> to vector<32x17xf32>
    %198 = vector.extract_strided_slice %188 {offsets = [0, 9], sizes = [32, 17], strides = [1, 1]} : vector<32x32xf32> to vector<32x17xf32>
    %199 = vector.extract_strided_slice %188 {offsets = [0, 10], sizes = [32, 17], strides = [1, 1]} : vector<32x32xf32> to vector<32x17xf32>
    %200 = vector.extract_strided_slice %188 {offsets = [0, 11], sizes = [32, 17], strides = [1, 1]} : vector<32x32xf32> to vector<32x17xf32>
    %201 = vector.extract_strided_slice %188 {offsets = [0, 12], sizes = [32, 17], strides = [1, 1]} : vector<32x32xf32> to vector<32x17xf32>
    %202 = vector.extract_strided_slice %188 {offsets = [0, 13], sizes = [32, 17], strides = [1, 1]} : vector<32x32xf32> to vector<32x17xf32>
    %203 = vector.extract_strided_slice %188 {offsets = [0, 14], sizes = [32, 17], strides = [1, 1]} : vector<32x32xf32> to vector<32x17xf32>
    %204 = vector.extract_strided_slice %188 {offsets = [0, 15], sizes = [32, 17], strides = [1, 1]} : vector<32x32xf32> to vector<32x17xf32>
    %205 = tpu.concatenate %189, %190, %191, %192, %193, %194, %195, %196, %197, %198, %199, %200, %201, %202, %203, %204 in 0 : vector<32x17xf32>, vector<32x17xf32>, vector<32x17xf32>, vector<32x17xf32>, vector<32x17xf32>, vector<32x17xf32>, vector<32x17xf32>, vector<32x17xf32>, vector<32x17xf32>, vector<32x17xf32>, vector<32x17xf32>, vector<32x17xf32>, vector<32x17xf32>, vector<32x17xf32>, vector<32x17xf32>, vector<32x17xf32> -> vector<512x17xf32>
    %206 = arith.truncf %205 : vector<512x17xf32> to vector<512x17xbf16>
    %c0_63 = arith.constant 0 : index
    %c0_64 = arith.constant 0 : index
    %207 = vector.load %arg15[%c0_63, %c0_64] : memref<64x512xbf16, #tpu.memory_space<vmem>>, vector<64x512xbf16>
    %cst_65 = arith.constant dense<0.000000e+00> : vector<64x17xf32>
    %208 = tpu.matmul %207, %206, %cst_65 {dimension_numbers = #tpu.dot_dimension_numbers<[1], [0], [0], [1], [0, 0, 1, 1], [], []>} : vector<64x512xbf16>, vector<512x17xbf16>, vector<64x17xf32> -> vector<64x17xf32>
    %c0_66 = arith.constant 0 : index
    %c0_67 = arith.constant 0 : index
    %209 = vector.load %arg16[%c0_66, %c0_67] : memref<64x1xf32, #tpu.memory_space<vmem>>, vector<64x1xf32>
    %210 = vector.broadcast %209 : vector<64x1xf32> to vector<64x17xf32>
    %211 = arith.addf %208, %210 : vector<64x17xf32>
    %cst_68 = arith.constant 0.000000e+00 : f32
    %212 = vector.broadcast %cst_68 : f32 to vector<64x17xf32>
    %213 = arith.cmpf ogt, %211, %212 : vector<64x17xf32>
    %cst_69 = arith.constant 2.000000e-01 : f32
    %214 = vector.broadcast %cst_69 : f32 to vector<64x17xf32>
    %215 = arith.mulf %214, %211 : vector<64x17xf32>
    %216 = arith.select %213, %211, %215 : vector<64x17xi1>, vector<64x17xf32>
    %217 = vector.extract_strided_slice %216 {offsets = [0, 0], sizes = [64, 1], strides = [1, 1]} : vector<64x17xf32> to vector<64x1xf32>
    %218 = vector.extract_strided_slice %216 {offsets = [0, 16], sizes = [64, 1], strides = [1, 1]} : vector<64x17xf32> to vector<64x1xf32>
    %219 = tpu.concatenate %217, %218 in 1 : vector<64x1xf32>, vector<64x1xf32> -> vector<64x2xf32>
    %cst_70 = arith.constant dense<0.000000e+00> : vector<64xf32>
    %220 = vector.multi_reduction <add>, %219, %cst_70 [1] : vector<64x2xf32> to vector<64xf32>
    %221 = vector.shape_cast %220 : vector<64xf32> to vector<64x1xf32>
    %cst_71 = arith.constant 5.000000e-01 : f32
    %222 = vector.broadcast %cst_71 : f32 to vector<64x1xf32>
    %223 = arith.mulf %221, %222 : vector<64x1xf32>
    %224 = vector.broadcast %223 : vector<64x1xf32> to vector<64x2xf32>
    %225 = arith.subf %219, %224 : vector<64x2xf32>
    %226 = arith.mulf %225, %225 : vector<64x2xf32>
    %cst_72 = arith.constant dense<0.000000e+00> : vector<64xf32>
    %227 = vector.multi_reduction <add>, %226, %cst_72 [1] : vector<64x2xf32> to vector<64xf32>
    %228 = vector.shape_cast %227 : vector<64xf32> to vector<64x1xf32>
    %cst_73 = arith.constant 5.000000e-01 : f32
    %229 = vector.broadcast %cst_73 : f32 to vector<64x1xf32>
    %230 = arith.mulf %228, %229 : vector<64x1xf32>
    %cst_74 = arith.constant 9.99999974E-6 : f32
    %231 = vector.broadcast %cst_74 : f32 to vector<64x1xf32>
    %232 = arith.addf %230, %231 : vector<64x1xf32>
    %233 = math.rsqrt %232 : vector<64x1xf32>
    %234 = vector.broadcast %233 : vector<64x1xf32> to vector<64x2xf32>
    %235 = arith.mulf %225, %234 : vector<64x2xf32>
    %c0_75 = arith.constant 0 : index
    %c0_76 = arith.constant 0 : index
    %236 = vector.load %arg17[%c0_75, %c0_76] : memref<64x1xf32, #tpu.memory_space<vmem>>, vector<64x1xf32>
    %237 = vector.broadcast %236 : vector<64x1xf32> to vector<64x2xf32>
    %238 = arith.mulf %235, %237 : vector<64x2xf32>
    %c0_77 = arith.constant 0 : index
    %c0_78 = arith.constant 0 : index
    %239 = vector.load %arg18[%c0_77, %c0_78] : memref<64x1xf32, #tpu.memory_space<vmem>>, vector<64x1xf32>
    %240 = vector.broadcast %239 : vector<64x1xf32> to vector<64x2xf32>
    %241 = arith.addf %238, %240 : vector<64x2xf32>
    %c0_79 = arith.constant 0 : index
    %c0_80 = arith.constant 0 : index
    %242 = vector.load %arg19[%c0_79, %c0_80] : memref<32x64xbf16, #tpu.memory_space<vmem>>, vector<32x64xbf16>
    %243 = arith.truncf %241 : vector<64x2xf32> to vector<64x2xbf16>
    %cst_81 = arith.constant dense<0.000000e+00> : vector<32x2xf32>
    %244 = tpu.matmul %242, %243, %cst_81 {dimension_numbers = #tpu.dot_dimension_numbers<[1], [0], [0], [1], [0, 0, 1, 1], [], []>} : vector<32x64xbf16>, vector<64x2xbf16>, vector<32x2xf32> -> vector<32x2xf32>
    %c0_82 = arith.constant 0 : index
    %c0_83 = arith.constant 0 : index
    %245 = vector.load %arg20[%c0_82, %c0_83] : memref<32x1xf32, #tpu.memory_space<vmem>>, vector<32x1xf32>
    %246 = vector.broadcast %245 : vector<32x1xf32> to vector<32x2xf32>
    %247 = arith.addf %244, %246 : vector<32x2xf32>
    %248 = vector.extract_strided_slice %247 {offsets = [0, 0], sizes = [16, 2], strides = [1, 1]} : vector<32x2xf32> to vector<16x2xf32>
    %249 = vector.extract_strided_slice %247 {offsets = [16, 0], sizes = [16, 2], strides = [1, 1]} : vector<32x2xf32> to vector<16x2xf32>
    %cst_84 = arith.constant -3.000000e+01 : f32
    %cst_85 = arith.constant 2.000000e+01 : f32
    %250 = vector.broadcast %cst_84 : f32 to vector<16x2xf32>
    %251 = arith.maximumf %250, %249 : vector<16x2xf32>
    %252 = vector.broadcast %cst_85 : f32 to vector<16x2xf32>
    %253 = arith.minimumf %252, %251 : vector<16x2xf32>
    %cst_86 = arith.constant 5.000000e-01 : f32
    %254 = vector.broadcast %cst_86 : f32 to vector<16x2xf32>
    %255 = arith.mulf %254, %253 : vector<16x2xf32>
    %256 = math.exp %255 : vector<16x2xf32>
    %257 = math.exp %253 : vector<16x2xf32>
    %c0_87 = arith.constant 0 : index
    %c0_88 = arith.constant 0 : index
    %258 = vector.load %arg2[%c0_87, %c0_88] : memref<16x2xf32, #tpu.memory_space<vmem>>, vector<16x2xf32>
    %259 = arith.mulf %256, %258 : vector<16x2xf32>
    %260 = arith.addf %248, %259 : vector<16x2xf32>
    %cst_89 = arith.constant 1.000000e+00 : f32
    %261 = vector.broadcast %cst_89 : f32 to vector<16x2xf32>
    %262 = arith.addf %261, %253 : vector<16x2xf32>
    %263 = arith.mulf %248, %248 : vector<16x2xf32>
    %264 = arith.subf %262, %263 : vector<16x2xf32>
    %265 = arith.subf %264, %257 : vector<16x2xf32>
    %cst_90 = arith.constant dense<0.000000e+00> : vector<2xf32>
    %266 = vector.multi_reduction <add>, %265, %cst_90 [0] : vector<16x2xf32> to vector<2xf32>
    %267 = vector.shape_cast %266 : vector<2xf32> to vector<1x2xf32>
    %cst_91 = arith.constant -5.000000e-01 : f32
    %268 = vector.broadcast %cst_91 : f32 to vector<1x2xf32>
    %269 = arith.mulf %268, %267 : vector<1x2xf32>
    %c0_92 = arith.constant 0 : index
    %c0_93 = arith.constant 0 : index
    %270 = vector.load %arg21[%c0_92, %c0_93] : memref<64x16xbf16, #tpu.memory_space<vmem>>, vector<64x16xbf16>
    %271 = arith.truncf %260 : vector<16x2xf32> to vector<16x2xbf16>
    %cst_94 = arith.constant dense<0.000000e+00> : vector<64x2xf32>
    %272 = tpu.matmul %270, %271, %cst_94 {dimension_numbers = #tpu.dot_dimension_numbers<[1], [0], [0], [1], [0, 0, 1, 1], [], []>} : vector<64x16xbf16>, vector<16x2xbf16>, vector<64x2xf32> -> vector<64x2xf32>
    %c0_95 = arith.constant 0 : index
    %c0_96 = arith.constant 0 : index
    %273 = vector.load %arg22[%c0_95, %c0_96] : memref<64x1xf32, #tpu.memory_space<vmem>>, vector<64x1xf32>
    %274 = vector.broadcast %273 : vector<64x1xf32> to vector<64x2xf32>
    %275 = arith.addf %272, %274 : vector<64x2xf32>
    %cst_97 = arith.constant 0.000000e+00 : f32
    %276 = vector.broadcast %cst_97 : f32 to vector<64x2xf32>
    %277 = arith.maximumf %275, %276 : vector<64x2xf32>
    %278 = arith.truncf %277 : vector<64x2xf32> to vector<64x2xbf16>
    %c0_98 = arith.constant 0 : index
    %c0_99 = arith.constant 0 : index
    %279 = vector.load %arg33[%c0_98, %c0_99] : memref<2x32xbf16, #tpu.memory_space<vmem>>, vector<2x32xbf16>
    %cst_100 = arith.constant dense<0.000000e+00> : vector<64x32xf32>
    %280 = tpu.matmul %278, %279, %cst_100 {dimension_numbers = #tpu.dot_dimension_numbers<[1], [0], [0], [1], [0, 0, 1, 1], [], []>} : vector<64x2xbf16>, vector<2x32xbf16>, vector<64x32xf32> -> vector<64x32xf32>
    %c0_i32_101 = arith.constant 0 : i32
    %281 = tpu.memref_slice %arg51[%c0_i32_101] : memref<7x!tpu.dma_semaphore, #tpu.memory_space<semaphore_mem>> -> memref<1x!tpu.dma_semaphore, #tpu.memory_space<semaphore_mem>>
    %282 = tpu.memref_squeeze %281 : memref<1x!tpu.dma_semaphore, #tpu.memory_space<semaphore_mem>> -> memref<!tpu.dma_semaphore, #tpu.memory_space<semaphore_mem>>
    tpu.wait_dma2 semaphore(%282 : memref<!tpu.dma_semaphore, #tpu.memory_space<semaphore_mem>>) src(%arg35 : memref<32x576xbf16, #tpu.memory_space<any>>) dst(%arg44 : memref<32x576xbf16, #tpu.memory_space<vmem>>)
    %c1_i32_102 = arith.constant 1 : i32
    %283 = tpu.memref_slice %arg51[%c1_i32_102] : memref<7x!tpu.dma_semaphore, #tpu.memory_space<semaphore_mem>> -> memref<1x!tpu.dma_semaphore, #tpu.memory_space<semaphore_mem>>
    %284 = tpu.memref_squeeze %283 : memref<1x!tpu.dma_semaphore, #tpu.memory_space<semaphore_mem>> -> memref<!tpu.dma_semaphore, #tpu.memory_space<semaphore_mem>>
    tpu.wait_dma2 semaphore(%284 : memref<!tpu.dma_semaphore, #tpu.memory_space<semaphore_mem>>) src(%arg36 : memref<16x288xbf16, #tpu.memory_space<any>>) dst(%arg45 : memref<16x288xbf16, #tpu.memory_space<vmem>>)
    %c2_i32_103 = arith.constant 2 : i32
    %285 = tpu.memref_slice %arg51[%c2_i32_103] : memref<7x!tpu.dma_semaphore, #tpu.memory_space<semaphore_mem>> -> memref<1x!tpu.dma_semaphore, #tpu.memory_space<semaphore_mem>>
    %286 = tpu.memref_squeeze %285 : memref<1x!tpu.dma_semaphore, #tpu.memory_space<semaphore_mem>> -> memref<!tpu.dma_semaphore, #tpu.memory_space<semaphore_mem>>
    tpu.wait_dma2 semaphore(%286 : memref<!tpu.dma_semaphore, #tpu.memory_space<semaphore_mem>>) src(%arg37 : memref<8x144xbf16, #tpu.memory_space<any>>) dst(%arg46 : memref<8x144xbf16, #tpu.memory_space<vmem>>)
    %c3_i32_104 = arith.constant 3 : i32
    %287 = tpu.memref_slice %arg51[%c3_i32_104] : memref<7x!tpu.dma_semaphore, #tpu.memory_space<semaphore_mem>> -> memref<1x!tpu.dma_semaphore, #tpu.memory_space<semaphore_mem>>
    %288 = tpu.memref_squeeze %287 : memref<1x!tpu.dma_semaphore, #tpu.memory_space<semaphore_mem>> -> memref<!tpu.dma_semaphore, #tpu.memory_space<semaphore_mem>>
    tpu.wait_dma2 semaphore(%288 : memref<!tpu.dma_semaphore, #tpu.memory_space<semaphore_mem>>) src(%arg38 : memref<4x72xbf16, #tpu.memory_space<any>>) dst(%arg47 : memref<4x72xbf16, #tpu.memory_space<vmem>>)
    %c4_i32_105 = arith.constant 4 : i32
    %289 = tpu.memref_slice %arg51[%c4_i32_105] : memref<7x!tpu.dma_semaphore, #tpu.memory_space<semaphore_mem>> -> memref<1x!tpu.dma_semaphore, #tpu.memory_space<semaphore_mem>>
    %290 = tpu.memref_squeeze %289 : memref<1x!tpu.dma_semaphore, #tpu.memory_space<semaphore_mem>> -> memref<!tpu.dma_semaphore, #tpu.memory_space<semaphore_mem>>
    tpu.wait_dma2 semaphore(%290 : memref<!tpu.dma_semaphore, #tpu.memory_space<semaphore_mem>>) src(%arg39 : memref<22x72xbf16, #tpu.memory_space<any>>) dst(%arg48 : memref<22x72xbf16, #tpu.memory_space<vmem>>)
    %c5_i32_106 = arith.constant 5 : i32
    %291 = tpu.memref_slice %arg51[%c5_i32_106] : memref<7x!tpu.dma_semaphore, #tpu.memory_space<semaphore_mem>> -> memref<1x!tpu.dma_semaphore, #tpu.memory_space<semaphore_mem>>
    %292 = tpu.memref_squeeze %291 : memref<1x!tpu.dma_semaphore, #tpu.memory_space<semaphore_mem>> -> memref<!tpu.dma_semaphore, #tpu.memory_space<semaphore_mem>>
    tpu.wait_dma2 semaphore(%292 : memref<!tpu.dma_semaphore, #tpu.memory_space<semaphore_mem>>) src(%arg40 : memref<58x200xbf16, #tpu.memory_space<any>>) dst(%arg49 : memref<58x200xbf16, #tpu.memory_space<vmem>>)
    %c6_i32_107 = arith.constant 6 : i32
    %293 = tpu.memref_slice %arg51[%c6_i32_107] : memref<7x!tpu.dma_semaphore, #tpu.memory_space<semaphore_mem>> -> memref<1x!tpu.dma_semaphore, #tpu.memory_space<semaphore_mem>>
    %294 = tpu.memref_squeeze %293 : memref<1x!tpu.dma_semaphore, #tpu.memory_space<semaphore_mem>> -> memref<!tpu.dma_semaphore, #tpu.memory_space<semaphore_mem>>
    tpu.wait_dma2 semaphore(%294 : memref<!tpu.dma_semaphore, #tpu.memory_space<semaphore_mem>>) src(%arg41 : memref<178x686xbf16, #tpu.memory_space<any>>) dst(%arg50 : memref<178x686xbf16, #tpu.memory_space<vmem>>)
    %295 = vector.extract_strided_slice %280 {offsets = [0, 0], sizes = [64, 22], strides = [1, 1]} : vector<64x32xf32> to vector<64x22xf32>
    %296 = vector.extract_strided_slice %280 {offsets = [0, 1], sizes = [64, 22], strides = [1, 1]} : vector<64x32xf32> to vector<64x22xf32>
    %297 = vector.extract_strided_slice %280 {offsets = [0, 2], sizes = [64, 22], strides = [1, 1]} : vector<64x32xf32> to vector<64x22xf32>
    %298 = vector.extract_strided_slice %280 {offsets = [0, 4], sizes = [64, 22], strides = [1, 1]} : vector<64x32xf32> to vector<64x22xf32>
    %299 = vector.extract_strided_slice %280 {offsets = [0, 5], sizes = [64, 22], strides = [1, 1]} : vector<64x32xf32> to vector<64x22xf32>
    %300 = vector.extract_strided_slice %280 {offsets = [0, 6], sizes = [64, 22], strides = [1, 1]} : vector<64x32xf32> to vector<64x22xf32>
    %301 = vector.extract_strided_slice %280 {offsets = [0, 8], sizes = [64, 22], strides = [1, 1]} : vector<64x32xf32> to vector<64x22xf32>
    %302 = vector.extract_strided_slice %280 {offsets = [0, 9], sizes = [64, 22], strides = [1, 1]} : vector<64x32xf32> to vector<64x22xf32>
    %303 = vector.extract_strided_slice %280 {offsets = [0, 10], sizes = [64, 22], strides = [1, 1]} : vector<64x32xf32> to vector<64x22xf32>
    %304 = tpu.concatenate %295, %296, %297, %298, %299, %300, %301, %302, %303 in 0 : vector<64x22xf32>, vector<64x22xf32>, vector<64x22xf32>, vector<64x22xf32>, vector<64x22xf32>, vector<64x22xf32>, vector<64x22xf32>, vector<64x22xf32>, vector<64x22xf32> -> vector<576x22xf32>
    %305 = arith.truncf %304 : vector<576x22xf32> to vector<576x22xbf16>
    %c0_108 = arith.constant 0 : index
    %c0_109 = arith.constant 0 : index
    %306 = vector.load %arg44[%c0_108, %c0_109] : memref<32x576xbf16, #tpu.memory_space<vmem>>, vector<32x576xbf16>
    %cst_110 = arith.constant dense<0.000000e+00> : vector<32x22xf32>
    %307 = tpu.matmul %306, %305, %cst_110 {dimension_numbers = #tpu.dot_dimension_numbers<[1], [0], [0], [1], [0, 0, 1, 1], [], []>} : vector<32x576xbf16>, vector<576x22xbf16>, vector<32x22xf32> -> vector<32x22xf32>
    %c0_111 = arith.constant 0 : index
    %c0_112 = arith.constant 0 : index
    %308 = vector.load %arg23[%c0_111, %c0_112] : memref<32x1xf32, #tpu.memory_space<vmem>>, vector<32x1xf32>
    %309 = vector.broadcast %308 : vector<32x1xf32> to vector<32x22xf32>
    %310 = arith.addf %307, %309 : vector<32x22xf32>
    %cst_113 = arith.constant 0.000000e+00 : f32
    %311 = vector.broadcast %cst_113 : f32 to vector<32x22xf32>
    %312 = arith.cmpf ogt, %310, %311 : vector<32x22xf32>
    %cst_114 = arith.constant 2.000000e-01 : f32
    %313 = vector.broadcast %cst_114 : f32 to vector<32x22xf32>
    %314 = arith.mulf %313, %310 : vector<32x22xf32>
    %315 = arith.select %312, %310, %314 : vector<32x22xi1>, vector<32x22xf32>
    %316 = arith.truncf %315 : vector<32x22xf32> to vector<32x22xbf16>
    %c0_115 = arith.constant 0 : index
    %c0_116 = arith.constant 0 : index
    %317 = vector.load %arg48[%c0_115, %c0_116] : memref<22x72xbf16, #tpu.memory_space<vmem>>, vector<22x72xbf16>
    %cst_117 = arith.constant dense<0.000000e+00> : vector<32x72xf32>
    %318 = tpu.matmul %316, %317, %cst_117 {dimension_numbers = #tpu.dot_dimension_numbers<[1], [0], [0], [1], [0, 0, 1, 1], [], []>} : vector<32x22xbf16>, vector<22x72xbf16>, vector<32x72xf32> -> vector<32x72xf32>
    %319 = vector.extract_strided_slice %318 {offsets = [0, 0], sizes = [32, 58], strides = [1, 1]} : vector<32x72xf32> to vector<32x58xf32>
    %320 = vector.extract_strided_slice %318 {offsets = [0, 1], sizes = [32, 58], strides = [1, 1]} : vector<32x72xf32> to vector<32x58xf32>
    %321 = vector.extract_strided_slice %318 {offsets = [0, 2], sizes = [32, 58], strides = [1, 1]} : vector<32x72xf32> to vector<32x58xf32>
    %322 = vector.extract_strided_slice %318 {offsets = [0, 6], sizes = [32, 58], strides = [1, 1]} : vector<32x72xf32> to vector<32x58xf32>
    %323 = vector.extract_strided_slice %318 {offsets = [0, 7], sizes = [32, 58], strides = [1, 1]} : vector<32x72xf32> to vector<32x58xf32>
    %324 = vector.extract_strided_slice %318 {offsets = [0, 8], sizes = [32, 58], strides = [1, 1]} : vector<32x72xf32> to vector<32x58xf32>
    %325 = vector.extract_strided_slice %318 {offsets = [0, 12], sizes = [32, 58], strides = [1, 1]} : vector<32x72xf32> to vector<32x58xf32>
    %326 = vector.extract_strided_slice %318 {offsets = [0, 13], sizes = [32, 58], strides = [1, 1]} : vector<32x72xf32> to vector<32x58xf32>
    %327 = vector.extract_strided_slice %318 {offsets = [0, 14], sizes = [32, 58], strides = [1, 1]} : vector<32x72xf32> to vector<32x58xf32>
    %328 = tpu.concatenate %319, %320, %321, %322, %323, %324, %325, %326, %327 in 0 : vector<32x58xf32>, vector<32x58xf32>, vector<32x58xf32>, vector<32x58xf32>, vector<32x58xf32>, vector<32x58xf32>, vector<32x58xf32>, vector<32x58xf32>, vector<32x58xf32> -> vector<288x58xf32>
    %329 = arith.truncf %328 : vector<288x58xf32> to vector<288x58xbf16>
    %c0_118 = arith.constant 0 : index
    %c0_119 = arith.constant 0 : index
    %330 = vector.load %arg45[%c0_118, %c0_119] : memref<16x288xbf16, #tpu.memory_space<vmem>>, vector<16x288xbf16>
    %cst_120 = arith.constant dense<0.000000e+00> : vector<16x58xf32>
    %331 = tpu.matmul %330, %329, %cst_120 {dimension_numbers = #tpu.dot_dimension_numbers<[1], [0], [0], [1], [0, 0, 1, 1], [], []>} : vector<16x288xbf16>, vector<288x58xbf16>, vector<16x58xf32> -> vector<16x58xf32>
    %c0_121 = arith.constant 0 : index
    %c0_122 = arith.constant 0 : index
    %332 = vector.load %arg24[%c0_121, %c0_122] : memref<16x1xf32, #tpu.memory_space<vmem>>, vector<16x1xf32>
    %333 = vector.broadcast %332 : vector<16x1xf32> to vector<16x58xf32>
    %334 = arith.addf %331, %333 : vector<16x58xf32>
    %cst_123 = arith.constant 0.000000e+00 : f32
    %335 = vector.broadcast %cst_123 : f32 to vector<16x58xf32>
    %336 = arith.cmpf ogt, %334, %335 : vector<16x58xf32>
    %cst_124 = arith.constant 2.000000e-01 : f32
    %337 = vector.broadcast %cst_124 : f32 to vector<16x58xf32>
    %338 = arith.mulf %337, %334 : vector<16x58xf32>
    %339 = arith.select %336, %334, %338 : vector<16x58xi1>, vector<16x58xf32>
    %340 = arith.truncf %339 : vector<16x58xf32> to vector<16x58xbf16>
    %c0_125 = arith.constant 0 : index
    %c0_126 = arith.constant 0 : index
    %341 = vector.load %arg49[%c0_125, %c0_126] : memref<58x200xbf16, #tpu.memory_space<vmem>>, vector<58x200xbf16>
    %cst_127 = arith.constant dense<0.000000e+00> : vector<16x200xf32>
    %342 = tpu.matmul %340, %341, %cst_127 {dimension_numbers = #tpu.dot_dimension_numbers<[1], [0], [0], [1], [0, 0, 1, 1], [], []>} : vector<16x58xbf16>, vector<58x200xbf16>, vector<16x200xf32> -> vector<16x200xf32>
    %343 = vector.extract_strided_slice %342 {offsets = [0, 0], sizes = [16, 178], strides = [1, 1]} : vector<16x200xf32> to vector<16x178xf32>
    %344 = vector.extract_strided_slice %342 {offsets = [0, 1], sizes = [16, 178], strides = [1, 1]} : vector<16x200xf32> to vector<16x178xf32>
    %345 = vector.extract_strided_slice %342 {offsets = [0, 2], sizes = [16, 178], strides = [1, 1]} : vector<16x200xf32> to vector<16x178xf32>
    %346 = vector.extract_strided_slice %342 {offsets = [0, 10], sizes = [16, 178], strides = [1, 1]} : vector<16x200xf32> to vector<16x178xf32>
    %347 = vector.extract_strided_slice %342 {offsets = [0, 11], sizes = [16, 178], strides = [1, 1]} : vector<16x200xf32> to vector<16x178xf32>
    %348 = vector.extract_strided_slice %342 {offsets = [0, 12], sizes = [16, 178], strides = [1, 1]} : vector<16x200xf32> to vector<16x178xf32>
    %349 = vector.extract_strided_slice %342 {offsets = [0, 20], sizes = [16, 178], strides = [1, 1]} : vector<16x200xf32> to vector<16x178xf32>
    %350 = vector.extract_strided_slice %342 {offsets = [0, 21], sizes = [16, 178], strides = [1, 1]} : vector<16x200xf32> to vector<16x178xf32>
    %351 = vector.extract_strided_slice %342 {offsets = [0, 22], sizes = [16, 178], strides = [1, 1]} : vector<16x200xf32> to vector<16x178xf32>
    %352 = tpu.concatenate %343, %344, %345, %346, %347, %348, %349, %350, %351 in 0 : vector<16x178xf32>, vector<16x178xf32>, vector<16x178xf32>, vector<16x178xf32>, vector<16x178xf32>, vector<16x178xf32>, vector<16x178xf32>, vector<16x178xf32>, vector<16x178xf32> -> vector<144x178xf32>
    %353 = arith.truncf %352 : vector<144x178xf32> to vector<144x178xbf16>
    %c0_128 = arith.constant 0 : index
    %c0_129 = arith.constant 0 : index
    %354 = vector.load %arg46[%c0_128, %c0_129] : memref<8x144xbf16, #tpu.memory_space<vmem>>, vector<8x144xbf16>
    %cst_130 = arith.constant dense<0.000000e+00> : vector<8x178xf32>
    %355 = tpu.matmul %354, %353, %cst_130 {dimension_numbers = #tpu.dot_dimension_numbers<[1], [0], [0], [1], [0, 0, 1, 1], [], []>} : vector<8x144xbf16>, vector<144x178xbf16>, vector<8x178xf32> -> vector<8x178xf32>
    %c0_131 = arith.constant 0 : index
    %c0_132 = arith.constant 0 : index
    %356 = vector.load %arg25[%c0_131, %c0_132] : memref<8x1xf32, #tpu.memory_space<vmem>>, vector<8x1xf32>
    %357 = vector.broadcast %356 : vector<8x1xf32> to vector<8x178xf32>
    %358 = arith.addf %355, %357 : vector<8x178xf32>
    %cst_133 = arith.constant 0.000000e+00 : f32
    %359 = vector.broadcast %cst_133 : f32 to vector<8x178xf32>
    %360 = arith.cmpf ogt, %358, %359 : vector<8x178xf32>
    %cst_134 = arith.constant 2.000000e-01 : f32
    %361 = vector.broadcast %cst_134 : f32 to vector<8x178xf32>
    %362 = arith.mulf %361, %358 : vector<8x178xf32>
    %363 = arith.select %360, %358, %362 : vector<8x178xi1>, vector<8x178xf32>
    %364 = arith.truncf %363 : vector<8x178xf32> to vector<8x178xbf16>
    %c0_135 = arith.constant 0 : index
    %c0_136 = arith.constant 0 : index
    %365 = vector.load %arg50[%c0_135, %c0_136] : memref<178x686xbf16, #tpu.memory_space<vmem>>, vector<178x686xbf16>
    %cst_137 = arith.constant dense<0.000000e+00> : vector<8x686xf32>
    %366 = tpu.matmul %364, %365, %cst_137 {dimension_numbers = #tpu.dot_dimension_numbers<[1], [0], [0], [1], [0, 0, 1, 1], [], []>} : vector<8x178xbf16>, vector<178x686xbf16>, vector<8x686xf32> -> vector<8x686xf32>
    %367 = vector.extract_strided_slice %366 {offsets = [0, 0], sizes = [8, 648], strides = [1, 1]} : vector<8x686xf32> to vector<8x648xf32>
    %368 = vector.extract_strided_slice %366 {offsets = [0, 1], sizes = [8, 648], strides = [1, 1]} : vector<8x686xf32> to vector<8x648xf32>
    %369 = vector.extract_strided_slice %366 {offsets = [0, 2], sizes = [8, 648], strides = [1, 1]} : vector<8x686xf32> to vector<8x648xf32>
    %370 = vector.extract_strided_slice %366 {offsets = [0, 18], sizes = [8, 648], strides = [1, 1]} : vector<8x686xf32> to vector<8x648xf32>
    %371 = vector.extract_strided_slice %366 {offsets = [0, 19], sizes = [8, 648], strides = [1, 1]} : vector<8x686xf32> to vector<8x648xf32>
    %372 = vector.extract_strided_slice %366 {offsets = [0, 20], sizes = [8, 648], strides = [1, 1]} : vector<8x686xf32> to vector<8x648xf32>
    %373 = vector.extract_strided_slice %366 {offsets = [0, 36], sizes = [8, 648], strides = [1, 1]} : vector<8x686xf32> to vector<8x648xf32>
    %374 = vector.extract_strided_slice %366 {offsets = [0, 37], sizes = [8, 648], strides = [1, 1]} : vector<8x686xf32> to vector<8x648xf32>
    %375 = vector.extract_strided_slice %366 {offsets = [0, 38], sizes = [8, 648], strides = [1, 1]} : vector<8x686xf32> to vector<8x648xf32>
    %376 = tpu.concatenate %367, %368, %369, %370, %371, %372, %373, %374, %375 in 0 : vector<8x648xf32>, vector<8x648xf32>, vector<8x648xf32>, vector<8x648xf32>, vector<8x648xf32>, vector<8x648xf32>, vector<8x648xf32>, vector<8x648xf32>, vector<8x648xf32> -> vector<72x648xf32>
    %377 = arith.truncf %376 : vector<72x648xf32> to vector<72x648xbf16>
    %c0_138 = arith.constant 0 : index
    %c0_139 = arith.constant 0 : index
    %378 = vector.load %arg47[%c0_138, %c0_139] : memref<4x72xbf16, #tpu.memory_space<vmem>>, vector<4x72xbf16>
    %cst_140 = arith.constant dense<0.000000e+00> : vector<4x648xf32>
    %379 = tpu.matmul %378, %377, %cst_140 {dimension_numbers = #tpu.dot_dimension_numbers<[1], [0], [0], [1], [0, 0, 1, 1], [], []>} : vector<4x72xbf16>, vector<72x648xbf16>, vector<4x648xf32> -> vector<4x648xf32>
    %c0_141 = arith.constant 0 : index
    %c0_142 = arith.constant 0 : index
    %380 = vector.load %arg26[%c0_141, %c0_142] : memref<4x1xf32, #tpu.memory_space<vmem>>, vector<4x1xf32>
    %381 = vector.broadcast %380 : vector<4x1xf32> to vector<4x648xf32>
    %382 = arith.addf %379, %381 : vector<4x648xf32>
    %c0_143 = arith.constant 0 : index
    %c0_144 = arith.constant 0 : index
    %383 = vector.load %arg42[%c0_143, %c0_144] : memref<4x648xf32, #tpu.memory_space<vmem>>, vector<4x648xf32>
    tpu.vector_store %arg42[%c0_143, %c0_144], %382 {strides = array<i32>} : memref<4x648xf32, #tpu.memory_space<vmem>>, vector<4x648xf32>,
    %384 = vector.extract_strided_slice %14 {offsets = [0, 19], sizes = [4, 610], strides = [1, 1]} : vector<4x648xf32> to vector<4x610xf32>
    %385 = vector.extract_strided_slice %382 {offsets = [0, 0], sizes = [4, 610], strides = [1, 1]} : vector<4x648xf32> to vector<4x610xf32>
    %386 = arith.subf %384, %385 : vector<4x610xf32>
    %387 = arith.mulf %386, %386 : vector<4x610xf32>
    %cst_145 = arith.constant dense<0.000000e+00> : vector<610xf32>
    %388 = vector.multi_reduction <add>, %387, %cst_145 [0] : vector<4x610xf32> to vector<610xf32>
    %389 = vector.shape_cast %388 : vector<610xf32> to vector<1x610xf32>
    %c0_146 = arith.constant 0 : index
    %c0_147 = arith.constant 0 : index
    %390 = vector.load %arg34[%c0_146, %c0_147] : memref<1x610xf32, #tpu.memory_space<vmem>>, vector<1x610xf32>
    %391 = arith.mulf %389, %390 : vector<1x610xf32>
    %392 = vector.extract_strided_slice %391 {offsets = [0, 0], sizes = [1, 324], strides = [1, 1]} : vector<1x610xf32> to vector<1x324xf32>
    %cst_148 = arith.constant dense<0.000000e+00> : vector<1xf32>
    %393 = vector.multi_reduction <add>, %392, %cst_148 [1] : vector<1x324xf32> to vector<1xf32>
    %394 = vector.shape_cast %393 : vector<1xf32> to vector<1x1xf32>
    %395 = vector.extract_strided_slice %391 {offsets = [0, 324], sizes = [1, 286], strides = [1, 1]} : vector<1x610xf32> to vector<1x286xf32>
    %cst_149 = arith.constant dense<0.000000e+00> : vector<1xf32>
    %396 = vector.multi_reduction <add>, %395, %cst_149 [1] : vector<1x286xf32> to vector<1xf32>
    %397 = vector.shape_cast %396 : vector<1xf32> to vector<1x1xf32>
    %398 = tpu.concatenate %394, %397 in 1 : vector<1x1xf32>, vector<1x1xf32> -> vector<1x2xf32>
    %cst_150 = arith.constant 1881.98608 : f32
    %399 = vector.broadcast %cst_150 : f32 to vector<1x2xf32>
    %400 = arith.addf %398, %399 : vector<1x2xf32>
    %cst_151 = arith.constant 5.000000e-01 : f32
    %401 = vector.broadcast %cst_151 : f32 to vector<1x2xf32>
    %402 = arith.mulf %401, %400 : vector<1x2xf32>
    %403 = tpu.concatenate %402, %269 in 0 : vector<1x2xf32>, vector<1x2xf32> -> vector<2x2xf32>
    %c0_152 = arith.constant 0 : index
    %c0_153 = arith.constant 0 : index
    %404 = vector.load %arg43[%c0_152, %c0_153] : memref<2x2xf32, #tpu.memory_space<vmem>>, vector<2x2xf32>
    tpu.vector_store %arg43[%c0_152, %c0_153], %403 {strides = array<i32>} : memref<2x2xf32, #tpu.memory_space<vmem>>, vector<2x2xf32>,
    return
  }
  func.func @transform_0(%arg0: i32) -> (i32, i32) {
    %c0_i32 = arith.constant 0 : i32
    %c0_i32_0 = arith.constant 0 : i32
    %c0_i32_1 = arith.constant 0 : i32
    return %c0_i32, %c0_i32_0 : i32, i32
  }
  func.func @transform_1(%arg0: i32) -> (i32, i32) {
    %c0_i32 = arith.constant 0 : i32
    %c0_i32_0 = arith.constant 0 : i32
    %c0_i32_1 = arith.constant 0 : i32
    return %c0_i32, %c0_i32_0 : i32, i32
  }
  func.func @transform_2(%arg0: i32) -> (i32, i32) {
    %c0_i32 = arith.constant 0 : i32
    %c0_i32_0 = arith.constant 0 : i32
    %c0_i32_1 = arith.constant 0 : i32
    return %c0_i32, %c0_i32_0 : i32, i32
  }
  func.func @transform_3(%arg0: i32) -> (i32, i32) {
    %c0_i32 = arith.constant 0 : i32
    %c0_i32_0 = arith.constant 0 : i32
    %c0_i32_1 = arith.constant 0 : i32
    return %c0_i32, %c0_i32_0 : i32, i32
  }
  func.func @transform_4(%arg0: i32) -> (i32, i32) {
    %c0_i32 = arith.constant 0 : i32
    %c0_i32_0 = arith.constant 0 : i32
    %c0_i32_1 = arith.constant 0 : i32
    return %c0_i32, %c0_i32_0 : i32, i32
  }
  func.func @transform_5(%arg0: i32) -> (i32, i32) {
    %c0_i32 = arith.constant 0 : i32
    %c0_i32_0 = arith.constant 0 : i32
    %c0_i32_1 = arith.constant 0 : i32
    return %c0_i32, %c0_i32_0 : i32, i32
  }
  func.func @transform_6(%arg0: i32) -> (i32, i32) {
    %c0_i32 = arith.constant 0 : i32
    %c0_i32_0 = arith.constant 0 : i32
    %c0_i32_1 = arith.constant 0 : i32
    return %c0_i32, %c0_i32_0 : i32, i32
  }
  func.func @transform_7(%arg0: i32) -> (i32, i32) {
    %c0_i32 = arith.constant 0 : i32
    %c0_i32_0 = arith.constant 0 : i32
    %c0_i32_1 = arith.constant 0 : i32
    return %c0_i32, %c0_i32_0 : i32, i32
  }
  func.func @transform_8(%arg0: i32) -> (i32, i32) {
    %c0_i32 = arith.constant 0 : i32
    %c0_i32_0 = arith.constant 0 : i32
    %c0_i32_1 = arith.constant 0 : i32
    return %c0_i32, %c0_i32_0 : i32, i32
  }
  func.func @transform_9(%arg0: i32) -> (i32, i32) {
    %c0_i32 = arith.constant 0 : i32
    %c0_i32_0 = arith.constant 0 : i32
    %c0_i32_1 = arith.constant 0 : i32
    return %c0_i32, %c0_i32_0 : i32, i32
  }
  func.func @transform_10(%arg0: i32) -> (i32, i32) {
    %c0_i32 = arith.constant 0 : i32
    %c0_i32_0 = arith.constant 0 : i32
    %c0_i32_1 = arith.constant 0 : i32
    return %c0_i32, %c0_i32_0 : i32, i32
  }
  func.func @transform_11(%arg0: i32) -> (i32, i32) {
    %c0_i32 = arith.constant 0 : i32
    %c0_i32_0 = arith.constant 0 : i32
    %c0_i32_1 = arith.constant 0 : i32
    return %c0_i32, %c0_i32_0 : i32, i32
  }
  func.func @transform_12(%arg0: i32) -> (i32, i32) {
    %c0_i32 = arith.constant 0 : i32
    %c0_i32_0 = arith.constant 0 : i32
    %c0_i32_1 = arith.constant 0 : i32
    return %c0_i32, %c0_i32_0 : i32, i32
  }
  func.func @transform_13(%arg0: i32) -> (i32, i32) {
    %c0_i32 = arith.constant 0 : i32
    %c0_i32_0 = arith.constant 0 : i32
    %c0_i32_1 = arith.constant 0 : i32
    return %c0_i32, %c0_i32_0 : i32, i32
  }
  func.func @transform_14(%arg0: i32) -> (i32, i32) {
    %c0_i32 = arith.constant 0 : i32
    %c0_i32_0 = arith.constant 0 : i32
    %c0_i32_1 = arith.constant 0 : i32
    return %c0_i32, %c0_i32_0 : i32, i32
  }
  func.func @transform_15(%arg0: i32) -> (i32, i32) {
    %c0_i32 = arith.constant 0 : i32
    %c0_i32_0 = arith.constant 0 : i32
    %c0_i32_1 = arith.constant 0 : i32
    return %c0_i32, %c0_i32_0 : i32, i32
  }
  func.func @transform_16(%arg0: i32) -> (i32, i32) {
    %c0_i32 = arith.constant 0 : i32
    %c0_i32_0 = arith.constant 0 : i32
    %c0_i32_1 = arith.constant 0 : i32
    return %c0_i32, %c0_i32_0 : i32, i32
  }
  func.func @transform_17(%arg0: i32) -> (i32, i32) {
    %c0_i32 = arith.constant 0 : i32
    %c0_i32_0 = arith.constant 0 : i32
    %c0_i32_1 = arith.constant 0 : i32
    return %c0_i32, %c0_i32_0 : i32, i32
  }
  func.func @transform_18(%arg0: i32) -> (i32, i32) {
    %c0_i32 = arith.constant 0 : i32
    %c0_i32_0 = arith.constant 0 : i32
    %c0_i32_1 = arith.constant 0 : i32
    return %c0_i32, %c0_i32_0 : i32, i32
  }
  func.func @transform_19(%arg0: i32) -> (i32, i32) {
    %c0_i32 = arith.constant 0 : i32
    %c0_i32_0 = arith.constant 0 : i32
    %c0_i32_1 = arith.constant 0 : i32
    return %c0_i32, %c0_i32_0 : i32, i32
  }
  func.func @transform_20(%arg0: i32) -> (i32, i32) {
    %c0_i32 = arith.constant 0 : i32
    %c0_i32_0 = arith.constant 0 : i32
    %c0_i32_1 = arith.constant 0 : i32
    return %c0_i32, %c0_i32_0 : i32, i32
  }
  func.func @transform_21(%arg0: i32) -> (i32, i32) {
    %c0_i32 = arith.constant 0 : i32
    %c0_i32_0 = arith.constant 0 : i32
    %c0_i32_1 = arith.constant 0 : i32
    return %c0_i32, %c0_i32_0 : i32, i32
  }
  func.func @transform_22(%arg0: i32) -> (i32, i32) {
    %c0_i32 = arith.constant 0 : i32
    %c0_i32_0 = arith.constant 0 : i32
    %c0_i32_1 = arith.constant 0 : i32
    return %c0_i32, %c0_i32_0 : i32, i32
  }
  func.func @transform_23(%arg0: i32) -> (i32, i32) {
    %c0_i32 = arith.constant 0 : i32
    %c0_i32_0 = arith.constant 0 : i32
    %c0_i32_1 = arith.constant 0 : i32
    return %c0_i32, %c0_i32_0 : i32, i32
  }
  func.func @transform_24(%arg0: i32) -> (i32, i32) {
    %c0_i32 = arith.constant 0 : i32
    %c0_i32_0 = arith.constant 0 : i32
    %c0_i32_1 = arith.constant 0 : i32
    return %c0_i32, %c0_i32_0 : i32, i32
  }
  func.func @transform_25(%arg0: i32) -> (i32, i32) {
    %c0_i32 = arith.constant 0 : i32
    %c0_i32_0 = arith.constant 0 : i32
    %c0_i32_1 = arith.constant 0 : i32
    return %c0_i32, %c0_i32_0 : i32, i32
  }
  func.func @transform_26(%arg0: i32) -> (i32, i32) {
    %c0_i32 = arith.constant 0 : i32
    %c0_i32_0 = arith.constant 0 : i32
    %c0_i32_1 = arith.constant 0 : i32
    return %c0_i32, %c0_i32_0 : i32, i32
  }
  func.func @transform_27(%arg0: i32) -> (i32, i32) {
    %c0_i32 = arith.constant 0 : i32
    %c0_i32_0 = arith.constant 0 : i32
    %c0_i32_1 = arith.constant 0 : i32
    return %c0_i32, %c0_i32_0 : i32, i32
  }
  func.func @transform_28(%arg0: i32) -> (i32, i32) {
    %c0_i32 = arith.constant 0 : i32
    %c0_i32_0 = arith.constant 0 : i32
    %c0_i32_1 = arith.constant 0 : i32
    return %c0_i32, %c0_i32_0 : i32, i32
  }
  func.func @transform_29(%arg0: i32) -> (i32, i32) {
    %c0_i32 = arith.constant 0 : i32
    %c0_i32_0 = arith.constant 0 : i32
    %c0_i32_1 = arith.constant 0 : i32
    return %c0_i32, %c0_i32_0 : i32, i32
  }
  func.func @transform_30(%arg0: i32) -> (i32, i32) {
    %c0_i32 = arith.constant 0 : i32
    %c0_i32_0 = arith.constant 0 : i32
    %c0_i32_1 = arith.constant 0 : i32
    return %c0_i32, %c0_i32_0 : i32, i32
  }
  func.func @transform_31(%arg0: i32) -> (i32, i32) {
    %c0_i32 = arith.constant 0 : i32
    %c0_i32_0 = arith.constant 0 : i32
    %c0_i32_1 = arith.constant 0 : i32
    return %c0_i32, %c0_i32_0 : i32, i32
  }
  func.func @transform_32(%arg0: i32) -> (i32, i32) {
    %c0_i32 = arith.constant 0 : i32
    %c0_i32_0 = arith.constant 0 : i32
    %c0_i32_1 = arith.constant 0 : i32
    return %c0_i32, %c0_i32_0 : i32, i32
  }
  func.func @transform_33(%arg0: i32) -> (i32, i32) {
    %c0_i32 = arith.constant 0 : i32
    %c0_i32_0 = arith.constant 0 : i32
    %c0_i32_1 = arith.constant 0 : i32
    return %c0_i32, %c0_i32_0 : i32, i32
  }
  func.func @transform_41(%arg0: i32) -> (i32, i32) {
    %c0_i32 = arith.constant 0 : i32
    %c0_i32_0 = arith.constant 0 : i32
    %c0_i32_1 = arith.constant 0 : i32
    return %c0_i32, %c0_i32_0 : i32, i32
  }
  func.func @transform_42(%arg0: i32) -> (i32, i32) {
    %c0_i32 = arith.constant 0 : i32
    %c0_i32_0 = arith.constant 0 : i32
    %c0_i32_1 = arith.constant 0 : i32
    return %c0_i32, %c0_i32_0 : i32, i32
  }
}

</mosaic_0001>

<llo_original>
// kernel: vae_forward.1
$region0: #{vae_forward.1}
  #allocation0 [shape = 'u32[]', space=smem, size = 0x4, offset = 0x4, fixed_abs, tag = 'smem constant byte address 0x4 - core index']
  #allocation1 [shape = 'u32[144,128]{1,0:T(1,128)}', space=vmem, size = 0x12000, scoped, tag = 'internal scratch']
  #allocation2 [shape = 'bf16[32,576]{1,0:T(16,128)(2,1)}', space=vmem, size = 0xa000, scoped, tag = 'scratch operand']
  #allocation3 [shape = 'bf16[16,288]{1,0:T(16,128)(2,1)}', space=vmem, size = 0x3000, scoped, tag = 'scratch operand']
  #allocation4 [shape = 'bf16[8,144]{1,0:T(8,128)(2,1)}', space=vmem, size = 0x1000, scoped, tag = 'scratch operand']
  #allocation5 [shape = 'bf16[4,72]{1,0:T(4,128)(2,1)}', space=vmem, size = 0x400, scoped, tag = 'scratch operand']
  #allocation6 [shape = 'bf16[22,72]{1,0:T(8,128)(2,1)}', space=vmem, size = 0x1800, scoped, tag = 'scratch operand']
  #allocation7 [shape = 'bf16[58,200]{1,0:T(8,128)(2,1)}', space=vmem, size = 0x8000, scoped, tag = 'scratch operand']
  #allocation8 [shape = 'bf16[178,686]{1,0:T(8,128)(2,1)}', space=vmem, size = 0x45000, scoped, tag = 'scratch operand']
  #allocation9 [shape = 's32[7]{0}', space=sflag, size = 0x1c, scoped, tag = 'scratch operand']
  #allocation10 [shape = 's32[]', space=sflag, size = 0x4, offset = 0, fixed_abs, tag = 'sflag constant byte address 0x0 - dummy sync flag']
  #allocation11 [shape = 's32[]', space=sflag, size = 0x4, offset = 0, fixed_abs, tag = 'sflag constant byte address 0x0 - dummy sync flag']
  #allocation12 [shape = 's32[]', space=sflag, size = 0x4, offset = 0, fixed_abs, tag = 'sflag constant byte address 0x0 - dummy sync flag']
  #allocation13 [shape = 's32[]', space=sflag, size = 0x4, offset = 0, fixed_abs, tag = 'sflag constant byte address 0x0 - dummy sync flag']
  #allocation14 [shape = 's32[]', space=sflag, size = 0x4, offset = 0, fixed_abs, tag = 'sflag constant byte address 0x0 - dummy sync flag']
  #allocation15 [shape = 's32[]', space=sflag, size = 0x4, offset = 0, fixed_abs, tag = 'sflag constant byte address 0x0 - dummy sync flag']
  #allocation16 [shape = 's32[]', space=sflag, size = 0x4, offset = 0, fixed_abs, tag = 'sflag constant byte address 0x0 - dummy sync flag']
  %s0 = inlined_call_operand.smem [shape: u32[43], index: -1, kind: input, shape index: {}]
  %s1 = sld [smem:[%s0]]
  %s2 = scalar_lea.smem %s0, 1
  %s3 = sld [smem:[%s2]]
  %s4 = scalar_lea.smem %s0, 2
  %s5 = sld [smem:[%s4]]
  %s6 = scalar_lea.smem %s0, 3
  %s7 = sld [smem:[%s6]]
  %s8 = scalar_lea.smem %s0, 4
  %s9 = sld [smem:[%s8]]
  %s10 = scalar_lea.smem %s0, 5
  %s11 = sld [smem:[%s10]]
  %s12 = scalar_lea.smem %s0, 6
  %s13 = sld [smem:[%s12]]
  %s14 = scalar_lea.smem %s0, 7
  %s15 = sld [smem:[%s14]]
  %s16 = scalar_lea.smem %s0, 8
  %s17 = sld [smem:[%s16]]
  %s18 = scalar_lea.smem %s0, 9
  %s19 = sld [smem:[%s18]]
  %s20 = scalar_lea.smem %s0, 10
  %s21 = sld [smem:[%s20]]
  %s22 = scalar_lea.smem %s0, 11
  %s23 = sld [smem:[%s22]]
  %s24 = scalar_lea.smem %s0, 12
  %s25 = sld [smem:[%s24]]
  %s26 = scalar_lea.smem %s0, 13
  %s27 = sld [smem:[%s26]]
  %s28 = scalar_lea.smem %s0, 14
  %s29 = sld [smem:[%s28]]
  %s30 = scalar_lea.smem %s0, 15
  %s31 = sld [smem:[%s30]]
  %s32 = scalar_lea.smem %s0, 16
  %s33 = sld [smem:[%s32]]
  %s34 = scalar_lea.smem %s0, 17
  %s35 = sld [smem:[%s34]]
  %s36 = scalar_lea.smem %s0, 18
  %s37 = sld [smem:[%s36]]
  %s38 = scalar_lea.smem %s0, 19
  %s39 = sld [smem:[%s38]]
  %s40 = scalar_lea.smem %s0, 20
  %s41 = sld [smem:[%s40]]
  %s42 = scalar_lea.smem %s0, 21
  %s43 = sld [smem:[%s42]]
  %s44 = scalar_lea.smem %s0, 22
  %s45 = sld [smem:[%s44]]
  %s46 = scalar_lea.smem %s0, 23
  %s47 = sld [smem:[%s46]]
  %s48 = scalar_lea.smem %s0, 24
  %s49 = sld [smem:[%s48]]
  %s50 = scalar_lea.smem %s0, 25
  %s51 = sld [smem:[%s50]]
  %s52 = scalar_lea.smem %s0, 26
  %s53 = sld [smem:[%s52]]
  %s54 = scalar_lea.smem %s0, 27
  %s55 = sld [smem:[%s54]]
  %s56 = scalar_lea.smem %s0, 28
  %s57 = sld [smem:[%s56]]
  %s58 = scalar_lea.smem %s0, 29
  %s59 = sld [smem:[%s58]]
  %s60 = scalar_lea.smem %s0, 30
  %s61 = sld [smem:[%s60]]
  %s62 = scalar_lea.smem %s0, 31
  %s63 = sld [smem:[%s62]]
  %s64 = scalar_lea.smem %s0, 32
  %s65 = sld [smem:[%s64]]
  %s66 = scalar_lea.smem %s0, 33
  %s67 = sld [smem:[%s66]]
  %s68 = scalar_lea.smem %s0, 34
  %s69 = sld [smem:[%s68]]
  %s70 = scalar_lea.smem %s0, 35
  %s71 = sld [smem:[%s70]]
  %s72 = scalar_lea.smem %s0, 36
  %s73 = sld [smem:[%s72]]
  %s74 = scalar_lea.smem %s0, 37
  %s75 = sld [smem:[%s74]]
  %s76 = scalar_lea.smem %s0, 38
  %s77 = sld [smem:[%s76]]
  %s78 = scalar_lea.smem %s0, 39
  %s79 = sld [smem:[%s78]]
  %s80 = scalar_lea.smem %s0, 40
  %s81 = sld [smem:[%s80]]
  %s82 = scalar_lea.smem %s0, 41
  %s83 = sld [smem:[%s82]]
  %s84 = scalar_lea.smem %s0, 42
  %s85 = sld [smem:[%s84]]
  %86 = xla_tuple %s83, %s85
  %s87 = sld [smem:[#allocation0]]
  $region397: #{vae_forward.1} parent=0
    _
  %s89 = ssub.s32 1, %s87
  %s90 = scalar_select 0, %s89, %s87
  // Predicated region
  $region2: #{vae_forward.1} parent=0 // pred_check
    _
  $region3: #{vae_forward.1} parent=0 // pred_check_branch
    %92 = sbr.rel (0) target = $region5
  $region4: #{vae_forward.1} parent=0 // pred_region
    _
  $region5: #{vae_forward.1} parent=0 // pred_fallthru
    _
  // Predicated region
  $region6: #{vae_forward.1} parent=0 // pred_check
    _
  $region7: #{vae_forward.1} parent=0 // pred_check_branch
    %94 = sbr.rel (0) target = $region9
  $region8: #{vae_forward.1} parent=0 // pred_region
    _
  $region9: #{vae_forward.1} parent=0 // pred_fallthru
    _
  // Predicated region
  $region10: #{vae_forward.1} parent=0 // pred_check
    _
  $region11: #{vae_forward.1} parent=0 // pred_check_branch
    %96 = sbr.rel (0) target = $region13
  $region12: #{vae_forward.1} parent=0 // pred_region
    _
  $region13: #{vae_forward.1} parent=0 // pred_fallthru
    _
  // Predicated region
  $region14: #{vae_forward.1} parent=0 // pred_check
    _
  $region15: #{vae_forward.1} parent=0 // pred_check_branch
    %98 = sbr.rel (0) target = $region17
  $region16: #{vae_forward.1} parent=0 // pred_region
    _
  $region17: #{vae_forward.1} parent=0 // pred_fallthru
    _
  // Predicated region
  $region18: #{vae_forward.1} parent=0 // pred_check
    _
  $region19: #{vae_forward.1} parent=0 // pred_check_branch
    %100 = sbr.rel (0) target = $region21
  $region20: #{vae_forward.1} parent=0 // pred_region
    _
  $region21: #{vae_forward.1} parent=0 // pred_fallthru
    _
  // Predicated region
  $region22: #{vae_forward.1} parent=0 // pred_check
    _
  $region23: #{vae_forward.1} parent=0 // pred_check_branch
    %102 = sbr.rel (0) target = $region25
  $region24: #{vae_forward.1} parent=0 // pred_region
    _
  $region25: #{vae_forward.1} parent=0 // pred_fallthru
    _
  // Predicated region
  $region26: #{vae_forward.1} parent=0 // pred_check
    _
  $region27: #{vae_forward.1} parent=0 // pred_check_branch
    %104 = sbr.rel (0) target = $region29
  $region28: #{vae_forward.1} parent=0 // pred_region
    _
  $region29: #{vae_forward.1} parent=0 // pred_fallthru
    _
  // Predicated region
  $region30: #{vae_forward.1} parent=0 // pred_check
    _
  $region31: #{vae_forward.1} parent=0 // pred_check_branch
    %106 = sbr.rel (0) target = $region33
  $region32: #{vae_forward.1} parent=0 // pred_region
    _
  $region33: #{vae_forward.1} parent=0 // pred_fallthru
    _
  // Predicated region
  $region34: #{vae_forward.1} parent=0 // pred_check
    _
  $region35: #{vae_forward.1} parent=0 // pred_check_branch
    %108 = sbr.rel (0) target = $region37
  $region36: #{vae_forward.1} parent=0 // pred_region
    _
  $region37: #{vae_forward.1} parent=0 // pred_fallthru
    _
  // Predicated region
  $region38: #{vae_forward.1} parent=0 // pred_check
    _
  $region39: #{vae_forward.1} parent=0 // pred_check_branch
    %110 = sbr.rel (0) target = $region41
  $region40: #{vae_forward.1} parent=0 // pred_region
    _
  $region41: #{vae_forward.1} parent=0 // pred_fallthru
    _
  // Predicated region
  $region42: #{vae_forward.1} parent=0 // pred_check
    _
  $region43: #{vae_forward.1} parent=0 // pred_check_branch
    %112 = sbr.rel (0) target = $region45
  $region44: #{vae_forward.1} parent=0 // pred_region
    _
  $region45: #{vae_forward.1} parent=0 // pred_fallthru
    _
  // Predicated region
  $region46: #{vae_forward.1} parent=0 // pred_check
    _
  $region47: #{vae_forward.1} parent=0 // pred_check_branch
    %114 = sbr.rel (0) target = $region49
  $region48: #{vae_forward.1} parent=0 // pred_region
    _
  $region49: #{vae_forward.1} parent=0 // pred_fallthru
    _
  // Predicated region
  $region50: #{vae_forward.1} parent=0 // pred_check
    _
  $region51: #{vae_forward.1} parent=0 // pred_check_branch
    %116 = sbr.rel (0) target = $region53
  $region52: #{vae_forward.1} parent=0 // pred_region
    _
  $region53: #{vae_forward.1} parent=0 // pred_fallthru
    _
  // Predicated region
  $region54: #{vae_forward.1} parent=0 // pred_check
    _
  $region55: #{vae_forward.1} parent=0 // pred_check_branch
    %118 = sbr.rel (0) target = $region57
  $region56: #{vae_forward.1} parent=0 // pred_region
    _
  $region57: #{vae_forward.1} parent=0 // pred_fallthru
    _
  // Predicated region
  $region58: #{vae_forward.1} parent=0 // pred_check
    _
  $region59: #{vae_forward.1} parent=0 // pred_check_branch
    %120 = sbr.rel (0) target = $region61
  $region60: #{vae_forward.1} parent=0 // pred_region
    _
  $region61: #{vae_forward.1} parent=0 // pred_fallthru
    _
  // Predicated region
  $region62: #{vae_forward.1} parent=0 // pred_check
    _
  $region63: #{vae_forward.1} parent=0 // pred_check_branch
    %122 = sbr.rel (0) target = $region65
  $region64: #{vae_forward.1} parent=0 // pred_region
    _
  $region65: #{vae_forward.1} parent=0 // pred_fallthru
    _
  // Predicated region
  $region66: #{vae_forward.1} parent=0 // pred_check
    _
  $region67: #{vae_forward.1} parent=0 // pred_check_branch
    %124 = sbr.rel (0) target = $region69
  $region68: #{vae_forward.1} parent=0 // pred_region
    _
  $region69: #{vae_forward.1} parent=0 // pred_fallthru
    _
  // Predicated region
  $region70: #{vae_forward.1} parent=0 // pred_check
    _
  $region71: #{vae_forward.1} parent=0 // pred_check_branch
    %126 = sbr.rel (0) target = $region73
  $region72: #{vae_forward.1} parent=0 // pred_region
    _
  $region73: #{vae_forward.1} parent=0 // pred_fallthru
    _
  // Predicated region
  $region74: #{vae_forward.1} parent=0 // pred_check
    _
  $region75: #{vae_forward.1} parent=0 // pred_check_branch
    %128 = sbr.rel (0) target = $region77
  $region76: #{vae_forward.1} parent=0 // pred_region
    _
  $region77: #{vae_forward.1} parent=0 // pred_fallthru
    _
  // Predicated region
  $region78: #{vae_forward.1} parent=0 // pred_check
    _
  $region79: #{vae_forward.1} parent=0 // pred_check_branch
    %130 = sbr.rel (0) target = $region81
  $region80: #{vae_forward.1} parent=0 // pred_region
    _
  $region81: #{vae_forward.1} parent=0 // pred_fallthru
    _
  // Predicated region
  $region82: #{vae_forward.1} parent=0 // pred_check
    _
  $region83: #{vae_forward.1} parent=0 // pred_check_branch
    %132 = sbr.rel (0) target = $region85
  $region84: #{vae_forward.1} parent=0 // pred_region
    _
  $region85: #{vae_forward.1} parent=0 // pred_fallthru
    _
  // Predicated region
  $region86: #{vae_forward.1} parent=0 // pred_check
    _
  $region87: #{vae_forward.1} parent=0 // pred_check_branch
    %134 = sbr.rel (0) target = $region89
  $region88: #{vae_forward.1} parent=0 // pred_region
    _
  $region89: #{vae_forward.1} parent=0 // pred_fallthru
    _
  // Predicated region
  $region90: #{vae_forward.1} parent=0 // pred_check
    _
  $region91: #{vae_forward.1} parent=0 // pred_check_branch
    %136 = sbr.rel (0) target = $region93
  $region92: #{vae_forward.1} parent=0 // pred_region
    _
  $region93: #{vae_forward.1} parent=0 // pred_fallthru
    _
  // Predicated region
  $region94: #{vae_forward.1} parent=0 // pred_check
    _
  $region95: #{vae_forward.1} parent=0 // pred_check_branch
    %138 = sbr.rel (0) target = $region97
  $region96: #{vae_forward.1} parent=0 // pred_region
    _
  $region97: #{vae_forward.1} parent=0 // pred_fallthru
    _
  // Predicated region
  $region98: #{vae_forward.1} parent=0 // pred_check
    _
  $region99: #{vae_forward.1} parent=0 // pred_check_branch
    %140 = sbr.rel (0) target = $region101
  $region100: #{vae_forward.1} parent=0 // pred_region
    _
  $region101: #{vae_forward.1} parent=0 // pred_fallthru
    _
  // Predicated region
  $region102: #{vae_forward.1} parent=0 // pred_check
    _
  $region103: #{vae_forward.1} parent=0 // pred_check_branch
    %142 = sbr.rel (0) target = $region105
  $region104: #{vae_forward.1} parent=0 // pred_region
    _
  $region105: #{vae_forward.1} parent=0 // pred_fallthru
    _
  // Predicated region
  $region106: #{vae_forward.1} parent=0 // pred_check
    _
  $region107: #{vae_forward.1} parent=0 // pred_check_branch
    %144 = sbr.rel (0) target = $region109
  $region108: #{vae_forward.1} parent=0 // pred_region
    _
  $region109: #{vae_forward.1} parent=0 // pred_fallthru
    _
  // Predicated region
  $region110: #{vae_forward.1} parent=0 // pred_check
    _
  $region111: #{vae_forward.1} parent=0 // pred_check_branch
    %146 = sbr.rel (0) target = $region113
  $region112: #{vae_forward.1} parent=0 // pred_region
    _
  $region113: #{vae_forward.1} parent=0 // pred_fallthru
    _
  // Predicated region
  $region114: #{vae_forward.1} parent=0 // pred_check
    _
  $region115: #{vae_forward.1} parent=0 // pred_check_branch
    %148 = sbr.rel (0) target = $region117
  $region116: #{vae_forward.1} parent=0 // pred_region
    _
  $region117: #{vae_forward.1} parent=0 // pred_fallthru
    _
  // Predicated region
  $region118: #{vae_forward.1} parent=0 // pred_check
    _
  $region119: #{vae_forward.1} parent=0 // pred_check_branch
    %150 = sbr.rel (0) target = $region121
  $region120: #{vae_forward.1} parent=0 // pred_region
    _
  $region121: #{vae_forward.1} parent=0 // pred_fallthru
    _
  // Predicated region
  $region122: #{vae_forward.1} parent=0 // pred_check
    _
  $region123: #{vae_forward.1} parent=0 // pred_check_branch
    %152 = sbr.rel (0) target = $region125
  $region124: #{vae_forward.1} parent=0 // pred_region
    _
  $region125: #{vae_forward.1} parent=0 // pred_fallthru
    _
  // Predicated region
  $region126: #{vae_forward.1} parent=0 // pred_check
    _
  $region127: #{vae_forward.1} parent=0 // pred_check_branch
    %154 = sbr.rel (0) target = $region129
  $region128: #{vae_forward.1} parent=0 // pred_region
    _
  $region129: #{vae_forward.1} parent=0 // pred_fallthru
    _
  // Predicated region
  $region130: #{vae_forward.1} parent=0 // pred_check
    _
  $region131: #{vae_forward.1} parent=0 // pred_check_branch
    %156 = sbr.rel (0) target = $region133
  $region132: #{vae_forward.1} parent=0 // pred_region
    _
  $region133: #{vae_forward.1} parent=0 // pred_fallthru
    _
  // Predicated region
  $region134: #{vae_forward.1} parent=0 // pred_check
    _
  $region135: #{vae_forward.1} parent=0 // pred_check_branch
    %158 = sbr.rel (0) target = $region137
  $region136: #{vae_forward.1} parent=0 // pred_region
    _
  $region137: #{vae_forward.1} parent=0 // pred_fallthru
    _
  %p161 = scmp.lt.u32.totalorder 4, 8
  %p162 = pneg %p161
  // Predicated region
  $region138: #{vae_forward.1} parent=0 // pred_check
    _
  $region139: #{vae_forward.1} parent=0 // pred_check_branch
    %164 = sbr.rel (%p161) target = $region141
  $region140: #{vae_forward.1} parent=0 // pred_region
    %s217 = sand.u32 4, 7
    %p218 = scmp.eq.s32.totalorder %s217, 0
    %p219 = pneg %p218
    // Predicated region
    $region153: #{vae_forward.1} parent=140 // pred_check
      _
    $region154: #{vae_forward.1} parent=140 // pred_check_branch
      %221 = sbr.rel (%p218) target = $region156
    $region155: #{vae_forward.1} parent=140 // pred_region
      %s222 = sand.u32 4, 7
      %s223 = ssub.s32 4, %s222
      %s224 = scalar_lea.vmem %s69, %s223
      %s225 = ssub.s32 4, %s222
      %s226 = scalar_lea.vmem [#allocation2], %s225
      loop: start=0, step=1, limit=1
      $region157: #{vae_forward.1} parent=155 // loop_pre_header
        _
      $region158: #{vae_forward.1} parent=155 // loop_header
        %s228 = sphi 0, %s232
        %p229 = scmp.ge.s32.totalorder %s228, 1
        %s233 = sphi %s69, %s69
        %s234 = sphi [#allocation2], [#allocation2]
      $region159: #{vae_forward.1} parent=155 // loop_header_branch
        %231 = sbr.rel (%p229) target = $region163
      $region160: #{vae_forward.1} parent=155 // loop_body
        _
      $region161: #{vae_forward.1} parent=155 // loop_footer
        %s232 = sadd.s32 1, %s228
      $region162: #{vae_forward.1} parent=155 // loop_footer_branch
        %227 = sbr.rel target = $region158
      $region163: #{vae_forward.1} parent=155 // loop_exit
        _
      %s235 = sshllo.u32 0, %s222
      loop: start=0, step=1, limit=1
      $region164: #{vae_forward.1} parent=155 // loop_pre_header
        _
      $region165: #{vae_forward.1} parent=155 // loop_header
        %s237 = sphi 0, %s241
        %p238 = scmp.ge.s32.totalorder %s237, 1
        %s242 = sphi %s224, %s224
        %s243 = sphi %s226, %s226
      $region166: #{vae_forward.1} parent=155 // loop_header_branch
        %240 = sbr.rel (%p238) target = $region170
      $region167: #{vae_forward.1} parent=155 // loop_body
        %v244 = vld [vmem:[%s242] sm:%s235]
        %245 = vst [vmem:[%s243] sm:%s235] %v244
        %v246 = vld [vmem:[%s242 + $0x14] sm:%s235]
        %247 = vst [vmem:[%s243 + $0x4] sm:%s235] %v246
        %v248 = vld [vmem:[%s242 + $0x4] sm:%s235]
        %249 = vst [vmem:[%s243 + $0x8] sm:%s235] %v248
        %v250 = vld [vmem:[%s242 + $0x18] sm:%s235]
        %251 = vst [vmem:[%s243 + $0xc] sm:%s235] %v250
        %v252 = vld [vmem:[%s242 + $0x8] sm:%s235]
        %253 = vst [vmem:[%s243 + $0x10] sm:%s235] %v252
        %v254 = vld [vmem:[%s242 + $0x1c] sm:%s235]
        %255 = vst [vmem:[%s243 + $0x14] sm:%s235] %v254
        %v256 = vld [vmem:[%s242 + $0xc] sm:%s235]
        %257 = vst [vmem:[%s243 + $0x18] sm:%s235] %v256
        %v258 = vld [vmem:[%s242 + $0x20] sm:%s235]
        %259 = vst [vmem:[%s243 + $0x1c] sm:%s235] %v258
        %v260 = vld [vmem:[%s242 + $0x10] sm:%s235]
        %261 = vst [vmem:[%s243 + $0x20] sm:%s235] %v260
        %v262 = vld [vmem:[%s242 + $0x24] sm:%s235]
        %263 = vst [vmem:[%s243 + $0x24] sm:%s235] %v262
        %v264 = vld [vmem:[%s242 + $0x28] sm:%s235]
        %265 = vst [vmem:[%s243 + $0x28] sm:%s235] %v264
        %v266 = vld [vmem:[%s242 + $0x3c] sm:%s235]
        %267 = vst [vmem:[%s243 + $0x2c] sm:%s235] %v266
        %v268 = vld [vmem:[%s242 + $0x2c] sm:%s235]
        %269 = vst [vmem:[%s243 + $0x30] sm:%s235] %v268
        %v270 = vld [vmem:[%s242 + $0x40] sm:%s235]
        %271 = vst [vmem:[%s243 + $0x34] sm:%s235] %v270
        %v272 = vld [vmem:[%s242 + $0x30] sm:%s235]
        %273 = vst [vmem:[%s243 + $0x38] sm:%s235] %v272
        %v274 = vld [vmem:[%s242 + $0x44] sm:%s235]
        %275 = vst [vmem:[%s243 + $0x3c] sm:%s235] %v274
        %v276 = vld [vmem:[%s242 + $0x34] sm:%s235]
        %277 = vst [vmem:[%s243 + $0x40] sm:%s235] %v276
        %v278 = vld [vmem:[%s242 + $0x48] sm:%s235]
        %279 = vst [vmem:[%s243 + $0x44] sm:%s235] %v278
        %v280 = vld [vmem:[%s242 + $0x38] sm:%s235]
        %281 = vst [vmem:[%s243 + $0x48] sm:%s235] %v280
        %v282 = vld [vmem:[%s242 + $0x4c] sm:%s235]
        %283 = vst [vmem:[%s243 + $0x4c] sm:%s235] %v282
      $region168: #{vae_forward.1} parent=155 // loop_footer
        %s241 = sadd.s32 1, %s237
      $region169: #{vae_forward.1} parent=155 // loop_footer_branch
        %236 = sbr.rel target = $region165
      $region170: #{vae_forward.1} parent=155 // loop_exit
        _
    $region156: #{vae_forward.1} parent=140 // pred_fallthru
      _
  $region141: #{vae_forward.1} parent=0 // pred_fallthru
    _
  // Predicated region
  $region142: #{vae_forward.1} parent=0 // pred_check
    %p165 = pneg %p161
  $region143: #{vae_forward.1} parent=0 // pred_check_branch
    %167 = sbr.rel (%p165) target = $region145
  $region144: #{vae_forward.1} parent=0 // pred_region
    %s168 = sshllo.u32 0, 4
    loop: start=0, step=1, limit=1
    $region146: #{vae_forward.1} parent=144 // loop_pre_header
      _
    $region147: #{vae_forward.1} parent=144 // loop_header
      %s170 = sphi 0, %s174
      %p171 = scmp.ge.s32.totalorder %s170, 1
      %s175 = sphi %s69, %s69
      %s176 = sphi [#allocation2], [#allocation2]
    $region148: #{vae_forward.1} parent=144 // loop_header_branch
      %173 = sbr.rel (%p171) target = $region152
    $region149: #{vae_forward.1} parent=144 // loop_body
      %v177 = vld [vmem:[%s175] sm:%s168]
      %178 = vst [vmem:[%s176] sm:%s168] %v177
      %v179 = vld [vmem:[%s175 + $0x14] sm:%s168]
      %180 = vst [vmem:[%s176 + $0x4] sm:%s168] %v179
      %v181 = vld [vmem:[%s175 + $0x4] sm:%s168]
      %182 = vst [vmem:[%s176 + $0x8] sm:%s168] %v181
      %v183 = vld [vmem:[%s175 + $0x18] sm:%s168]
      %184 = vst [vmem:[%s176 + $0xc] sm:%s168] %v183
      %v185 = vld [vmem:[%s175 + $0x8] sm:%s168]
      %186 = vst [vmem:[%s176 + $0x10] sm:%s168] %v185
      %v187 = vld [vmem:[%s175 + $0x1c] sm:%s168]
      %188 = vst [vmem:[%s176 + $0x14] sm:%s168] %v187
      %v189 = vld [vmem:[%s175 + $0xc] sm:%s168]
      %190 = vst [vmem:[%s176 + $0x18] sm:%s168] %v189
      %v191 = vld [vmem:[%s175 + $0x20] sm:%s168]
      %192 = vst [vmem:[%s176 + $0x1c] sm:%s168] %v191
      %v193 = vld [vmem:[%s175 + $0x10] sm:%s168]
      %194 = vst [vmem:[%s176 + $0x20] sm:%s168] %v193
      %v195 = vld [vmem:[%s175 + $0x24] sm:%s168]
      %196 = vst [vmem:[%s176 + $0x24] sm:%s168] %v195
      %v197 = vld [vmem:[%s175 + $0x28] sm:%s168]
      %198 = vst [vmem:[%s176 + $0x28] sm:%s168] %v197
      %v199 = vld [vmem:[%s175 + $0x3c] sm:%s168]
      %200 = vst [vmem:[%s176 + $0x2c] sm:%s168] %v199
      %v201 = vld [vmem:[%s175 + $0x2c] sm:%s168]
      %202 = vst [vmem:[%s176 + $0x30] sm:%s168] %v201
      %v203 = vld [vmem:[%s175 + $0x40] sm:%s168]
      %204 = vst [vmem:[%s176 + $0x34] sm:%s168] %v203
      %v205 = vld [vmem:[%s175 + $0x30] sm:%s168]
      %206 = vst [vmem:[%s176 + $0x38] sm:%s168] %v205
      %v207 = vld [vmem:[%s175 + $0x44] sm:%s168]
      %208 = vst [vmem:[%s176 + $0x3c] sm:%s168] %v207
      %v209 = vld [vmem:[%s175 + $0x34] sm:%s168]
      %210 = vst [vmem:[%s176 + $0x40] sm:%s168] %v209
      %v211 = vld [vmem:[%s175 + $0x48] sm:%s168]
      %212 = vst [vmem:[%s176 + $0x44] sm:%s168] %v211
      %v213 = vld [vmem:[%s175 + $0x38] sm:%s168]
      %214 = vst [vmem:[%s176 + $0x48] sm:%s168] %v213
      %v215 = vld [vmem:[%s175 + $0x4c] sm:%s168]
      %216 = vst [vmem:[%s176 + $0x4c] sm:%s168] %v215
    $region150: #{vae_forward.1} parent=144 // loop_footer
      %s174 = sadd.s32 1, %s170
    $region151: #{vae_forward.1} parent=144 // loop_footer_branch
      %169 = sbr.rel target = $region147
    $region152: #{vae_forward.1} parent=144 // loop_exit
      _
  $region145: #{vae_forward.1} parent=0 // pred_fallthru
    _
  // Predicated region
  $region171: #{vae_forward.1} parent=0 // pred_check
    _
  $region172: #{vae_forward.1} parent=0 // pred_check_branch
    %286 = sbr.rel (0) target = $region174
  $region173: #{vae_forward.1} parent=0 // pred_region
    %287 = vsyncadd [#allocation9], 1280
  $region174: #{vae_forward.1} parent=0 // pred_fallthru
    _
  %s288 = scalar_lea.sflag [#allocation9], 1
  %p290 = scmp.lt.u32.totalorder 4, 8
  %p291 = pneg %p290
  // Predicated region
  $region175: #{vae_forward.1} parent=0 // pred_check
    _
  $region176: #{vae_forward.1} parent=0 // pred_check_branch
    %293 = sbr.rel (%p290) target = $region178
  $region177: #{vae_forward.1} parent=0 // pred_region
    %s318 = sand.u32 4, 7
    %p319 = scmp.eq.s32.totalorder %s318, 0
    %p320 = pneg %p319
    // Predicated region
    $region190: #{vae_forward.1} parent=177 // pred_check
      _
    $region191: #{vae_forward.1} parent=177 // pred_check_branch
      %322 = sbr.rel (%p319) target = $region193
    $region192: #{vae_forward.1} parent=177 // pred_region
      %s323 = sand.u32 4, 7
      %s324 = ssub.s32 4, %s323
      %s325 = scalar_lea.vmem %s71, %s324
      %s326 = ssub.s32 4, %s323
      %s327 = scalar_lea.vmem [#allocation3], %s326
      loop: start=0, step=1, limit=1
      $region194: #{vae_forward.1} parent=192 // loop_pre_header
        _
      $region195: #{vae_forward.1} parent=192 // loop_header
        %s329 = sphi 0, %s333
        %p330 = scmp.ge.s32.totalorder %s329, 1
        %s334 = sphi %s71, %s71
        %s335 = sphi [#allocation3], [#allocation3]
      $region196: #{vae_forward.1} parent=192 // loop_header_branch
        %332 = sbr.rel (%p330) target = $region200
      $region197: #{vae_forward.1} parent=192 // loop_body
        _
      $region198: #{vae_forward.1} parent=192 // loop_footer
        %s333 = sadd.s32 1, %s329
      $region199: #{vae_forward.1} parent=192 // loop_footer_branch
        %328 = sbr.rel target = $region195
      $region200: #{vae_forward.1} parent=192 // loop_exit
        _
      %s336 = sshllo.u32 0, %s323
      loop: start=0, step=1, limit=1
      $region201: #{vae_forward.1} parent=192 // loop_pre_header
        _
      $region202: #{vae_forward.1} parent=192 // loop_header
        %s338 = sphi 0, %s342
        %p339 = scmp.ge.s32.totalorder %s338, 1
        %s343 = sphi %s325, %s325
        %s344 = sphi %s327, %s327
      $region203: #{vae_forward.1} parent=192 // loop_header_branch
        %341 = sbr.rel (%p339) target = $region207
      $region204: #{vae_forward.1} parent=192 // loop_body
        %v345 = vld [vmem:[%s343] sm:%s336]
        %346 = vst [vmem:[%s344] sm:%s336] %v345
        %v347 = vld [vmem:[%s343 + $0xc] sm:%s336]
        %348 = vst [vmem:[%s344 + $0x4] sm:%s336] %v347
        %v349 = vld [vmem:[%s343 + $0x4] sm:%s336]
        %350 = vst [vmem:[%s344 + $0x8] sm:%s336] %v349
        %v351 = vld [vmem:[%s343 + $0x10] sm:%s336]
        %352 = vst [vmem:[%s344 + $0xc] sm:%s336] %v351
        %v353 = vld [vmem:[%s343 + $0x8] sm:%s336]
        %354 = vst [vmem:[%s344 + $0x10] sm:%s336] %v353
        %v355 = vld [vmem:[%s343 + $0x14] sm:%s336]
        %356 = vst [vmem:[%s344 + $0x14] sm:%s336] %v355
      $region205: #{vae_forward.1} parent=192 // loop_footer
        %s342 = sadd.s32 1, %s338
      $region206: #{vae_forward.1} parent=192 // loop_footer_branch
        %337 = sbr.rel target = $region202
      $region207: #{vae_forward.1} parent=192 // loop_exit
        _
    $region193: #{vae_forward.1} parent=177 // pred_fallthru
      _
  $region178: #{vae_forward.1} parent=0 // pred_fallthru
    _
  // Predicated region
  $region179: #{vae_forward.1} parent=0 // pred_check
    %p294 = pneg %p290
  $region180: #{vae_forward.1} parent=0 // pred_check_branch
    %296 = sbr.rel (%p294) target = $region182
  $region181: #{vae_forward.1} parent=0 // pred_region
    %s297 = sshllo.u32 0, 4
    loop: start=0, step=1, limit=1
    $region183: #{vae_forward.1} parent=181 // loop_pre_header
      _
    $region184: #{vae_forward.1} parent=181 // loop_header
      %s299 = sphi 0, %s303
      %p300 = scmp.ge.s32.totalorder %s299, 1
      %s304 = sphi %s71, %s71
      %s305 = sphi [#allocation3], [#allocation3]
    $region185: #{vae_forward.1} parent=181 // loop_header_branch
      %302 = sbr.rel (%p300) target = $region189
    $region186: #{vae_forward.1} parent=181 // loop_body
      %v306 = vld [vmem:[%s304] sm:%s297]
      %307 = vst [vmem:[%s305] sm:%s297] %v306
      %v308 = vld [vmem:[%s304 + $0xc] sm:%s297]
      %309 = vst [vmem:[%s305 + $0x4] sm:%s297] %v308
      %v310 = vld [vmem:[%s304 + $0x4] sm:%s297]
      %311 = vst [vmem:[%s305 + $0x8] sm:%s297] %v310
      %v312 = vld [vmem:[%s304 + $0x10] sm:%s297]
      %313 = vst [vmem:[%s305 + $0xc] sm:%s297] %v312
      %v314 = vld [vmem:[%s304 + $0x8] sm:%s297]
      %315 = vst [vmem:[%s305 + $0x10] sm:%s297] %v314
      %v316 = vld [vmem:[%s304 + $0x14] sm:%s297]
      %317 = vst [vmem:[%s305 + $0x14] sm:%s297] %v316
    $region187: #{vae_forward.1} parent=181 // loop_footer
      %s303 = sadd.s32 1, %s299
    $region188: #{vae_forward.1} parent=181 // loop_footer_branch
      %298 = sbr.rel target = $region184
    $region189: #{vae_forward.1} parent=181 // loop_exit
      _
  $region182: #{vae_forward.1} parent=0 // pred_fallthru
    _
  // Predicated region
  $region208: #{vae_forward.1} parent=0 // pred_check
    _
  $region209: #{vae_forward.1} parent=0 // pred_check_branch
    %359 = sbr.rel (0) target = $region211
  $region210: #{vae_forward.1} parent=0 // pred_region
    %360 = vsyncadd %s288, 384
  $region211: #{vae_forward.1} parent=0 // pred_fallthru
    _
  %s361 = scalar_lea.sflag [#allocation9], 2
  %p363 = scmp.lt.u32.totalorder 8, 8
  %p364 = pneg %p363
  // Predicated region
  $region212: #{vae_forward.1} parent=0 // pred_check
    _
  $region213: #{vae_forward.1} parent=0 // pred_check_branch
    %366 = sbr.rel (%p363) target = $region215
  $region214: #{vae_forward.1} parent=0 // pred_region
    %s381 = sand.u32 8, 7
    %p382 = scmp.eq.s32.totalorder %s381, 0
    // Predicated region
    $region227: #{vae_forward.1} parent=214 // pred_check
      %p383 = pneg %p382
    $region228: #{vae_forward.1} parent=214 // pred_check_branch
      %385 = sbr.rel (%p383) target = $region230
    $region229: #{vae_forward.1} parent=214 // pred_region
      loop: start=0, step=1, limit=1
      $region231: #{vae_forward.1} parent=229 // loop_pre_header
        _
      $region232: #{vae_forward.1} parent=229 // loop_header
        %s387 = sphi 0, %s391
        %p388 = scmp.ge.s32.totalorder %s387, 1
        %s392 = sphi %s73, %s73
        %s393 = sphi [#allocation4], [#allocation4]
      $region233: #{vae_forward.1} parent=229 // loop_header_branch
        %390 = sbr.rel (%p388) target = $region237
      $region234: #{vae_forward.1} parent=229 // loop_body
        %v394 = vld [vmem:[%s392] sm:$0xff]
        %395 = vst [vmem:[%s393] sm:$0xff] %v394
      $region235: #{vae_forward.1} parent=229 // loop_footer
        %s391 = sadd.s32 1, %s387
      $region236: #{vae_forward.1} parent=229 // loop_footer_branch
        %386 = sbr.rel target = $region232
      $region237: #{vae_forward.1} parent=229 // loop_exit
        _
    $region230: #{vae_forward.1} parent=214 // pred_fallthru
      _
    %p396 = pneg %p382
    // Predicated region
    $region238: #{vae_forward.1} parent=214 // pred_check
      _
    $region239: #{vae_forward.1} parent=214 // pred_check_branch
      %398 = sbr.rel (%p382) target = $region241
    $region240: #{vae_forward.1} parent=214 // pred_region
      %s399 = sand.u32 8, 7
    $region241: #{vae_forward.1} parent=214 // pred_fallthru
      _
  $region215: #{vae_forward.1} parent=0 // pred_fallthru
    _
  // Predicated region
  $region216: #{vae_forward.1} parent=0 // pred_check
    %p367 = pneg %p363
  $region217: #{vae_forward.1} parent=0 // pred_check_branch
    %369 = sbr.rel (%p367) target = $region219
  $region218: #{vae_forward.1} parent=0 // pred_region
    %s370 = sshllo.u32 0, 8
    loop: start=0, step=1, limit=1
    $region220: #{vae_forward.1} parent=218 // loop_pre_header
      _
    $region221: #{vae_forward.1} parent=218 // loop_header
      %s372 = sphi 0, %s376
      %p373 = scmp.ge.s32.totalorder %s372, 1
      %s377 = sphi %s73, %s73
      %s378 = sphi [#allocation4], [#allocation4]
    $region222: #{vae_forward.1} parent=218 // loop_header_branch
      %375 = sbr.rel (%p373) target = $region226
    $region223: #{vae_forward.1} parent=218 // loop_body
      %v379 = vld [vmem:[%s377] sm:%s370]
      %380 = vst [vmem:[%s378] sm:%s370] %v379
    $region224: #{vae_forward.1} parent=218 // loop_footer
      %s376 = sadd.s32 1, %s372
    $region225: #{vae_forward.1} parent=218 // loop_footer_branch
      %371 = sbr.rel target = $region221
    $region226: #{vae_forward.1} parent=218 // loop_exit
      _
  $region219: #{vae_forward.1} parent=0 // pred_fallthru
    _
  // Predicated region
  $region242: #{vae_forward.1} parent=0 // pred_check
    _
  $region243: #{vae_forward.1} parent=0 // pred_check_branch
    %402 = sbr.rel (0) target = $region245
  $region244: #{vae_forward.1} parent=0 // pred_region
    %403 = vsyncadd %s361, 128
  $region245: #{vae_forward.1} parent=0 // pred_fallthru
    _
  %s404 = scalar_lea.sflag [#allocation9], 3
  %p406 = scmp.lt.u32.totalorder 2, 8
  %p407 = pneg %p406
  // Predicated region
  $region246: #{vae_forward.1} parent=0 // pred_check
    _
  $region247: #{vae_forward.1} parent=0 // pred_check_branch
    %409 = sbr.rel (%p406) target = $region249
  $region248: #{vae_forward.1} parent=0 // pred_region
    %s424 = sand.u32 2, 7
    %p425 = scmp.eq.s32.totalorder %s424, 0
    %p426 = pneg %p425
    // Predicated region
    $region261: #{vae_forward.1} parent=248 // pred_check
      _
    $region262: #{vae_forward.1} parent=248 // pred_check_branch
      %428 = sbr.rel (%p425) target = $region264
    $region263: #{vae_forward.1} parent=248 // pred_region
      %s429 = sand.u32 2, 7
      %s430 = ssub.s32 2, %s429
      %s431 = scalar_lea.vmem %s75, %s430
      %s432 = ssub.s32 2, %s429
      %s433 = scalar_lea.vmem [#allocation5], %s432
      %s434 = sshllo.u32 0, %s429
      loop: start=0, step=1, limit=1
      $region265: #{vae_forward.1} parent=263 // loop_pre_header
        _
      $region266: #{vae_forward.1} parent=263 // loop_header
        %s436 = sphi 0, %s440
        %p437 = scmp.ge.s32.totalorder %s436, 1
        %s441 = sphi %s431, %s431
        %s442 = sphi %s433, %s433
      $region267: #{vae_forward.1} parent=263 // loop_header_branch
        %439 = sbr.rel (%p437) target = $region271
      $region268: #{vae_forward.1} parent=263 // loop_body
        %v443 = vld [vmem:[%s441] sm:%s434]
        %444 = vst [vmem:[%s442] sm:%s434] %v443
      $region269: #{vae_forward.1} parent=263 // loop_footer
        %s440 = sadd.s32 1, %s436
      $region270: #{vae_forward.1} parent=263 // loop_footer_branch
        %435 = sbr.rel target = $region266
      $region271: #{vae_forward.1} parent=263 // loop_exit
        _
    $region264: #{vae_forward.1} parent=248 // pred_fallthru
      _
  $region249: #{vae_forward.1} parent=0 // pred_fallthru
    _
  // Predicated region
  $region250: #{vae_forward.1} parent=0 // pred_check
    %p410 = pneg %p406
  $region251: #{vae_forward.1} parent=0 // pred_check_branch
    %412 = sbr.rel (%p410) target = $region253
  $region252: #{vae_forward.1} parent=0 // pred_region
    %s413 = sshllo.u32 0, 2
    loop: start=0, step=1, limit=1
    $region254: #{vae_forward.1} parent=252 // loop_pre_header
      _
    $region255: #{vae_forward.1} parent=252 // loop_header
      %s415 = sphi 0, %s419
      %p416 = scmp.ge.s32.totalorder %s415, 1
      %s420 = sphi %s75, %s75
      %s421 = sphi [#allocation5], [#allocation5]
    $region256: #{vae_forward.1} parent=252 // loop_header_branch
      %418 = sbr.rel (%p416) target = $region260
    $region257: #{vae_forward.1} parent=252 // loop_body
      %v422 = vld [vmem:[%s420] sm:%s413]
      %423 = vst [vmem:[%s421] sm:%s413] %v422
    $region258: #{vae_forward.1} parent=252 // loop_footer
      %s419 = sadd.s32 1, %s415
    $region259: #{vae_forward.1} parent=252 // loop_footer_branch
      %414 = sbr.rel target = $region255
    $region260: #{vae_forward.1} parent=252 // loop_exit
      _
  $region253: #{vae_forward.1} parent=0 // pred_fallthru
    _
  // Predicated region
  $region272: #{vae_forward.1} parent=0 // pred_check
    _
  $region273: #{vae_forward.1} parent=0 // pred_check_branch
    %447 = sbr.rel (0) target = $region275
  $region274: #{vae_forward.1} parent=0 // pred_region
    %448 = vsyncadd %s404, 32
  $region275: #{vae_forward.1} parent=0 // pred_fallthru
    _
  %s449 = scalar_lea.sflag [#allocation9], 4
  %p451 = scmp.lt.u32.totalorder 12, 8
  %p452 = pneg %p451
  // Predicated region
  $region276: #{vae_forward.1} parent=0 // pred_check
    _
  $region277: #{vae_forward.1} parent=0 // pred_check_branch
    %454 = sbr.rel (%p451) target = $region279
  $region278: #{vae_forward.1} parent=0 // pred_region
    %s469 = sand.u32 12, 7
    %p470 = scmp.eq.s32.totalorder %s469, 0
    %p471 = pneg %p470
    // Predicated region
    $region291: #{vae_forward.1} parent=278 // pred_check
      _
    $region292: #{vae_forward.1} parent=278 // pred_check_branch
      %473 = sbr.rel (%p470) target = $region294
    $region293: #{vae_forward.1} parent=278 // pred_region
      %s474 = sand.u32 12, 7
      %s475 = ssub.s32 12, %s474
      %s476 = scalar_lea.vmem %s77, %s475
      %s477 = ssub.s32 12, %s474
      %s478 = scalar_lea.vmem [#allocation6], %s477
      loop: start=0, step=1, limit=1
      $region295: #{vae_forward.1} parent=293 // loop_pre_header
        _
      $region296: #{vae_forward.1} parent=293 // loop_header
        %s480 = sphi 0, %s484
        %p481 = scmp.ge.s32.totalorder %s480, 1
        %s485 = sphi %s77, %s77
        %s486 = sphi [#allocation6], [#allocation6]
      $region297: #{vae_forward.1} parent=293 // loop_header_branch
        %483 = sbr.rel (%p481) target = $region301
      $region298: #{vae_forward.1} parent=293 // loop_body
        %v487 = vld [vmem:[%s485] sm:$0xff]
        %488 = vst [vmem:[%s486] sm:$0xff] %v487
      $region299: #{vae_forward.1} parent=293 // loop_footer
        %s484 = sadd.s32 1, %s480
      $region300: #{vae_forward.1} parent=293 // loop_footer_branch
        %479 = sbr.rel target = $region296
      $region301: #{vae_forward.1} parent=293 // loop_exit
        _
      %s489 = sshllo.u32 0, %s474
      loop: start=0, step=1, limit=1
      $region302: #{vae_forward.1} parent=293 // loop_pre_header
        _
      $region303: #{vae_forward.1} parent=293 // loop_header
        %s491 = sphi 0, %s495
        %p492 = scmp.ge.s32.totalorder %s491, 1
        %s496 = sphi %s476, %s476
        %s497 = sphi %s478, %s478
      $region304: #{vae_forward.1} parent=293 // loop_header_branch
        %494 = sbr.rel (%p492) target = $region308
      $region305: #{vae_forward.1} parent=293 // loop_body
        %v498 = vld [vmem:[%s496] sm:%s489]
        %499 = vst [vmem:[%s497] sm:%s489] %v498
      $region306: #{vae_forward.1} parent=293 // loop_footer
        %s495 = sadd.s32 1, %s491
      $region307: #{vae_forward.1} parent=293 // loop_footer_branch
        %490 = sbr.rel target = $region303
      $region308: #{vae_forward.1} parent=293 // loop_exit
        _
    $region294: #{vae_forward.1} parent=278 // pred_fallthru
      _
  $region279: #{vae_forward.1} parent=0 // pred_fallthru
    _
  // Predicated region
  $region280: #{vae_forward.1} parent=0 // pred_check
    %p455 = pneg %p451
  $region281: #{vae_forward.1} parent=0 // pred_check_branch
    %457 = sbr.rel (%p455) target = $region283
  $region282: #{vae_forward.1} parent=0 // pred_region
    %s458 = sshllo.u32 0, 12
    loop: start=0, step=1, limit=1
    $region284: #{vae_forward.1} parent=282 // loop_pre_header
      _
    $region285: #{vae_forward.1} parent=282 // loop_header
      %s460 = sphi 0, %s464
      %p461 = scmp.ge.s32.totalorder %s460, 1
      %s465 = sphi %s77, %s77
      %s466 = sphi [#allocation6], [#allocation6]
    $region286: #{vae_forward.1} parent=282 // loop_header_branch
      %463 = sbr.rel (%p461) target = $region290
    $region287: #{vae_forward.1} parent=282 // loop_body
      %v467 = vld [vmem:[%s465] sm:%s458]
      %468 = vst [vmem:[%s466] sm:%s458] %v467
    $region288: #{vae_forward.1} parent=282 // loop_footer
      %s464 = sadd.s32 1, %s460
    $region289: #{vae_forward.1} parent=282 // loop_footer_branch
      %459 = sbr.rel target = $region285
    $region290: #{vae_forward.1} parent=282 // loop_exit
      _
  $region283: #{vae_forward.1} parent=0 // pred_fallthru
    _
  // Predicated region
  $region309: #{vae_forward.1} parent=0 // pred_check
    _
  $region310: #{vae_forward.1} parent=0 // pred_check_branch
    %502 = sbr.rel (0) target = $region312
  $region311: #{vae_forward.1} parent=0 // pred_region
    %503 = vsyncadd %s449, 192
  $region312: #{vae_forward.1} parent=0 // pred_fallthru
    _
  %s504 = scalar_lea.sflag [#allocation9], 5
  %p506 = scmp.lt.u32.totalorder 64, 8
  %p507 = pneg %p506
  // Predicated region
  $region313: #{vae_forward.1} parent=0 // pred_check
    _
  $region314: #{vae_forward.1} parent=0 // pred_check_branch
    %509 = sbr.rel (%p506) target = $region316
  $region315: #{vae_forward.1} parent=0 // pred_region
    %s524 = sand.u32 64, 7
    %p525 = scmp.eq.s32.totalorder %s524, 0
    // Predicated region
    $region328: #{vae_forward.1} parent=315 // pred_check
      %p526 = pneg %p525
    $region329: #{vae_forward.1} parent=315 // pred_check_branch
      %528 = sbr.rel (%p526) target = $region331
    $region330: #{vae_forward.1} parent=315 // pred_region
      loop: start=0, step=1, limit=1
      $region332: #{vae_forward.1} parent=330 // loop_pre_header
        _
      $region333: #{vae_forward.1} parent=330 // loop_header
        %s530 = sphi 0, %s534
        %p531 = scmp.ge.s32.totalorder %s530, 1
        %s535 = sphi %s79, %s79
        %s536 = sphi [#allocation7], [#allocation7]
      $region334: #{vae_forward.1} parent=330 // loop_header_branch
        %533 = sbr.rel (%p531) target = $region338
      $region335: #{vae_forward.1} parent=330 // loop_body
        %v537 = vld [vmem:[%s535] sm:$0xff]
        %538 = vst [vmem:[%s536] sm:$0xff] %v537
        %v539 = vld [vmem:[%s535 + $0x8] sm:$0xff]
        %540 = vst [vmem:[%s536 + $0x8] sm:$0xff] %v539
        %v541 = vld [vmem:[%s535 + $0x10] sm:$0xff]
        %542 = vst [vmem:[%s536 + $0x10] sm:$0xff] %v541
        %v543 = vld [vmem:[%s535 + $0x18] sm:$0xff]
        %544 = vst [vmem:[%s536 + $0x18] sm:$0xff] %v543
        %v545 = vld [vmem:[%s535 + $0x20] sm:$0xff]
        %546 = vst [vmem:[%s536 + $0x20] sm:$0xff] %v545
        %v547 = vld [vmem:[%s535 + $0x28] sm:$0xff]
        %548 = vst [vmem:[%s536 + $0x28] sm:$0xff] %v547
        %v549 = vld [vmem:[%s535 + $0x30] sm:$0xff]
        %550 = vst [vmem:[%s536 + $0x30] sm:$0xff] %v549
        %v551 = vld [vmem:[%s535 + $0x38] sm:$0xff]
        %552 = vst [vmem:[%s536 + $0x38] sm:$0xff] %v551
      $region336: #{vae_forward.1} parent=330 // loop_footer
        %s534 = sadd.s32 1, %s530
      $region337: #{vae_forward.1} parent=330 // loop_footer_branch
        %529 = sbr.rel target = $region333
      $region338: #{vae_forward.1} parent=330 // loop_exit
        _
    $region331: #{vae_forward.1} parent=315 // pred_fallthru
      _
    %p553 = pneg %p525
    // Predicated region
    $region339: #{vae_forward.1} parent=315 // pred_check
      _
    $region340: #{vae_forward.1} parent=315 // pred_check_branch
      %555 = sbr.rel (%p525) target = $region342
    $region341: #{vae_forward.1} parent=315 // pred_region
      %s556 = sand.u32 64, 7
    $region342: #{vae_forward.1} parent=315 // pred_fallthru
      _
  $region316: #{vae_forward.1} parent=0 // pred_fallthru
    _
  // Predicated region
  $region317: #{vae_forward.1} parent=0 // pred_check
    %p510 = pneg %p506
  $region318: #{vae_forward.1} parent=0 // pred_check_branch
    %512 = sbr.rel (%p510) target = $region320
  $region319: #{vae_forward.1} parent=0 // pred_region
    %s513 = sshllo.u32 0, 64
    loop: start=0, step=1, limit=1
    $region321: #{vae_forward.1} parent=319 // loop_pre_header
      _
    $region322: #{vae_forward.1} parent=319 // loop_header
      %s515 = sphi 0, %s519
      %p516 = scmp.ge.s32.totalorder %s515, 1
      %s520 = sphi %s79, %s79
      %s521 = sphi [#allocation7], [#allocation7]
    $region323: #{vae_forward.1} parent=319 // loop_header_branch
      %518 = sbr.rel (%p516) target = $region327
    $region324: #{vae_forward.1} parent=319 // loop_body
      %v522 = vld [vmem:[%s520] sm:%s513]
      %523 = vst [vmem:[%s521] sm:%s513] %v522
    $region325: #{vae_forward.1} parent=319 // loop_footer
      %s519 = sadd.s32 1, %s515
    $region326: #{vae_forward.1} parent=319 // loop_footer_branch
      %514 = sbr.rel target = $region322
    $region327: #{vae_forward.1} parent=319 // loop_exit
      _
  $region320: #{vae_forward.1} parent=0 // pred_fallthru
    _
  // Predicated region
  $region343: #{vae_forward.1} parent=0 // pred_check
    _
  $region344: #{vae_forward.1} parent=0 // pred_check_branch
    %559 = sbr.rel (0) target = $region346
  $region345: #{vae_forward.1} parent=0 // pred_region
    %560 = vsyncadd %s504, 1024
  $region346: #{vae_forward.1} parent=0 // pred_fallthru
    _
  %s561 = scalar_lea.sflag [#allocation9], 6
  %p563 = scmp.lt.u32.totalorder 552, 8
  %p564 = pneg %p563
  // Predicated region
  $region347: #{vae_forward.1} parent=0 // pred_check
    _
  $region348: #{vae_forward.1} parent=0 // pred_check_branch
    %566 = sbr.rel (%p563) target = $region350
  $region349: #{vae_forward.1} parent=0 // pred_region
    %s581 = sand.u32 552, 7
    %p582 = scmp.eq.s32.totalorder %s581, 0
    // Predicated region
    $region362: #{vae_forward.1} parent=349 // pred_check
      %p583 = pneg %p582
    $region363: #{vae_forward.1} parent=349 // pred_check_branch
      %585 = sbr.rel (%p583) target = $region365
    $region364: #{vae_forward.1} parent=349 // pred_region
      loop: start=0, step=1, limit=1
      $region366: #{vae_forward.1} parent=364 // loop_pre_header
        _
      $region367: #{vae_forward.1} parent=364 // loop_header
        %s587 = sphi 0, %s591
        %p588 = scmp.ge.s32.totalorder %s587, 1
        %s592 = sphi %s81, %s81
        %s593 = sphi [#allocation8], [#allocation8]
      $region368: #{vae_forward.1} parent=364 // loop_header_branch
        %590 = sbr.rel (%p588) target = $region372
      $region369: #{vae_forward.1} parent=364 // loop_body
        %v594 = vld [vmem:[%s592] sm:$0xff]
        %595 = vst [vmem:[%s593] sm:$0xff] %v594
        %v596 = vld [vmem:[%s592 + $0x8] sm:$0xff]
        %597 = vst [vmem:[%s593 + $0x8] sm:$0xff] %v596
        %v598 = vld [vmem:[%s592 + $0x10] sm:$0xff]
        %599 = vst [vmem:[%s593 + $0x10] sm:$0xff] %v598
        %v600 = vld [vmem:[%s592 + $0x18] sm:$0xff]
        %601 = vst [vmem:[%s593 + $0x18] sm:$0xff] %v600
        %v602 = vld [vmem:[%s592 + $0x20] sm:$0xff]
        %603 = vst [vmem:[%s593 + $0x20] sm:$0xff] %v602
        %v604 = vld [vmem:[%s592 + $0x28] sm:$0xff]
        %605 = vst [vmem:[%s593 + $0x28] sm:$0xff] %v604
        %v606 = vld [vmem:[%s592 + $0x30] sm:$0xff]
        %607 = vst [vmem:[%s593 + $0x30] sm:$0xff] %v606
        %v608 = vld [vmem:[%s592 + $0x38] sm:$0xff]
        %609 = vst [vmem:[%s593 + $0x38] sm:$0xff] %v608
        %v610 = vld [vmem:[%s592 + $0x40] sm:$0xff]
        %611 = vst [vmem:[%s593 + $0x40] sm:$0xff] %v610
        %v612 = vld [vmem:[%s592 + $0x48] sm:$0xff]
        %613 = vst [vmem:[%s593 + $0x48] sm:$0xff] %v612
        %v614 = vld [vmem:[%s592 + $0x50] sm:$0xff]
        %615 = vst [vmem:[%s593 + $0x50] sm:$0xff] %v614
        %v616 = vld [vmem:[%s592 + $0x58] sm:$0xff]
        %617 = vst [vmem:[%s593 + $0x58] sm:$0xff] %v616
        %v618 = vld [vmem:[%s592 + $0x60] sm:$0xff]
        %619 = vst [vmem:[%s593 + $0x60] sm:$0xff] %v618
        %v620 = vld [vmem:[%s592 + $0x68] sm:$0xff]
        %621 = vst [vmem:[%s593 + $0x68] sm:$0xff] %v620
        %v622 = vld [vmem:[%s592 + $0x70] sm:$0xff]
        %623 = vst [vmem:[%s593 + $0x70] sm:$0xff] %v622
        %v624 = vld [vmem:[%s592 + $0x78] sm:$0xff]
        %625 = vst [vmem:[%s593 + $0x78] sm:$0xff] %v624
        %v626 = vld [vmem:[%s592 + $0x80] sm:$0xff]
        %627 = vst [vmem:[%s593 + $0x80] sm:$0xff] %v626
        %v628 = vld [vmem:[%s592 + $0x88] sm:$0xff]
        %629 = vst [vmem:[%s593 + $0x88] sm:$0xff] %v628
        %v630 = vld [vmem:[%s592 + $0x90] sm:$0xff]
        %631 = vst [vmem:[%s593 + $0x90] sm:$0xff] %v630
        %v632 = vld [vmem:[%s592 + $0x98] sm:$0xff]
        %633 = vst [vmem:[%s593 + $0x98] sm:$0xff] %v632
        %v634 = vld [vmem:[%s592 + $0xa0] sm:$0xff]
        %635 = vst [vmem:[%s593 + $0xa0] sm:$0xff] %v634
        %v636 = vld [vmem:[%s592 + $0xa8] sm:$0xff]
        %637 = vst [vmem:[%s593 + $0xa8] sm:$0xff] %v636
        %v638 = vld [vmem:[%s592 + $0xb0] sm:$0xff]
        %639 = vst [vmem:[%s593 + $0xb0] sm:$0xff] %v638
        %v640 = vld [vmem:[%s592 + $0xb8] sm:$0xff]
        %641 = vst [vmem:[%s593 + $0xb8] sm:$0xff] %v640
        %v642 = vld [vmem:[%s592 + $0xc0] sm:$0xff]
        %643 = vst [vmem:[%s593 + $0xc0] sm:$0xff] %v642
        %v644 = vld [vmem:[%s592 + $0xc8] sm:$0xff]
        %645 = vst [vmem:[%s593 + $0xc8] sm:$0xff] %v644
        %v646 = vld [vmem:[%s592 + $0xd0] sm:$0xff]
        %647 = vst [vmem:[%s593 + $0xd0] sm:$0xff] %v646
        %v648 = vld [vmem:[%s592 + $0xd8] sm:$0xff]
        %649 = vst [vmem:[%s593 + $0xd8] sm:$0xff] %v648
        %v650 = vld [vmem:[%s592 + $0xe0] sm:$0xff]
        %651 = vst [vmem:[%s593 + $0xe0] sm:$0xff] %v650
        %v652 = vld [vmem:[%s592 + $0xe8] sm:$0xff]
        %653 = vst [vmem:[%s593 + $0xe8] sm:$0xff] %v652
        %v654 = vld [vmem:[%s592 + $0xf0] sm:$0xff]
        %655 = vst [vmem:[%s593 + $0xf0] sm:$0xff] %v654
        %v656 = vld [vmem:[%s592 + $0xf8] sm:$0xff]
        %657 = vst [vmem:[%s593 + $0xf8] sm:$0xff] %v656
        %v658 = vld [vmem:[%s592 + $0x100] sm:$0xff]
        %659 = vst [vmem:[%s593 + $0x100] sm:$0xff] %v658
        %v660 = vld [vmem:[%s592 + $0x108] sm:$0xff]
        %661 = vst [vmem:[%s593 + $0x108] sm:$0xff] %v660
        %v662 = vld [vmem:[%s592 + $0x110] sm:$0xff]
        %663 = vst [vmem:[%s593 + $0x110] sm:$0xff] %v662
        %v664 = vld [vmem:[%s592 + $0x118] sm:$0xff]
        %665 = vst [vmem:[%s593 + $0x118] sm:$0xff] %v664
        %v666 = vld [vmem:[%s592 + $0x120] sm:$0xff]
        %667 = vst [vmem:[%s593 + $0x120] sm:$0xff] %v666
        %v668 = vld [vmem:[%s592 + $0x128] sm:$0xff]
        %669 = vst [vmem:[%s593 + $0x128] sm:$0xff] %v668
        %v670 = vld [vmem:[%s592 + $0x130] sm:$0xff]
        %671 = vst [vmem:[%s593 + $0x130] sm:$0xff] %v670
        %v672 = vld [vmem:[%s592 + $0x138] sm:$0xff]
        %673 = vst [vmem:[%s593 + $0x138] sm:$0xff] %v672
        %v674 = vld [vmem:[%s592 + $0x140] sm:$0xff]
        %675 = vst [vmem:[%s593 + $0x140] sm:$0xff] %v674
        %v676 = vld [vmem:[%s592 + $0x148] sm:$0xff]
        %677 = vst [vmem:[%s593 + $0x148] sm:$0xff] %v676
        %v678 = vld [vmem:[%s592 + $0x150] sm:$0xff]
        %679 = vst [vmem:[%s593 + $0x150] sm:$0xff] %v678
        %v680 = vld [vmem:[%s592 + $0x158] sm:$0xff]
        %681 = vst [vmem:[%s593 + $0x158] sm:$0xff] %v680
        %v682 = vld [vmem:[%s592 + $0x160] sm:$0xff]
        %683 = vst [vmem:[%s593 + $0x160] sm:$0xff] %v682
        %v684 = vld [vmem:[%s592 + $0x168] sm:$0xff]
        %685 = vst [vmem:[%s593 + $0x168] sm:$0xff] %v684
        %v686 = vld [vmem:[%s592 + $0x170] sm:$0xff]
        %687 = vst [vmem:[%s593 + $0x170] sm:$0xff] %v686
        %v688 = vld [vmem:[%s592 + $0x178] sm:$0xff]
        %689 = vst [vmem:[%s593 + $0x178] sm:$0xff] %v688
        %v690 = vld [vmem:[%s592 + $0x180] sm:$0xff]
        %691 = vst [vmem:[%s593 + $0x180] sm:$0xff] %v690
        %v692 = vld [vmem:[%s592 + $0x188] sm:$0xff]
        %693 = vst [vmem:[%s593 + $0x188] sm:$0xff] %v692
        %v694 = vld [vmem:[%s592 + $0x190] sm:$0xff]
        %695 = vst [vmem:[%s593 + $0x190] sm:$0xff] %v694
        %v696 = vld [vmem:[%s592 + $0x198] sm:$0xff]
        %697 = vst [vmem:[%s593 + $0x198] sm:$0xff] %v696
        %v698 = vld [vmem:[%s592 + $0x1a0] sm:$0xff]
        %699 = vst [vmem:[%s593 + $0x1a0] sm:$0xff] %v698
        %v700 = vld [vmem:[%s592 + $0x1a8] sm:$0xff]
        %701 = vst [vmem:[%s593 + $0x1a8] sm:$0xff] %v700
        %v702 = vld [vmem:[%s592 + $0x1b0] sm:$0xff]
        %703 = vst [vmem:[%s593 + $0x1b0] sm:$0xff] %v702
        %v704 = vld [vmem:[%s592 + $0x1b8] sm:$0xff]
        %705 = vst [vmem:[%s593 + $0x1b8] sm:$0xff] %v704
        %v706 = vld [vmem:[%s592 + $0x1c0] sm:$0xff]
        %707 = vst [vmem:[%s593 + $0x1c0] sm:$0xff] %v706
        %v708 = vld [vmem:[%s592 + $0x1c8] sm:$0xff]
        %709 = vst [vmem:[%s593 + $0x1c8] sm:$0xff] %v708
        %v710 = vld [vmem:[%s592 + $0x1d0] sm:$0xff]
        %711 = vst [vmem:[%s593 + $0x1d0] sm:$0xff] %v710
        %v712 = vld [vmem:[%s592 + $0x1d8] sm:$0xff]
        %713 = vst [vmem:[%s593 + $0x1d8] sm:$0xff] %v712
        %v714 = vld [vmem:[%s592 + $0x1e0] sm:$0xff]
        %715 = vst [vmem:[%s593 + $0x1e0] sm:$0xff] %v714
        %v716 = vld [vmem:[%s592 + $0x1e8] sm:$0xff]
        %717 = vst [vmem:[%s593 + $0x1e8] sm:$0xff] %v716
        %v718 = vld [vmem:[%s592 + $0x1f0] sm:$0xff]
        %719 = vst [vmem:[%s593 + $0x1f0] sm:$0xff] %v718
        %v720 = vld [vmem:[%s592 + $0x1f8] sm:$0xff]
        %721 = vst [vmem:[%s593 + $0x1f8] sm:$0xff] %v720
        %v722 = vld [vmem:[%s592 + $0x200] sm:$0xff]
        %723 = vst [vmem:[%s593 + $0x200] sm:$0xff] %v722
        %v724 = vld [vmem:[%s592 + $0x208] sm:$0xff]
        %725 = vst [vmem:[%s593 + $0x208] sm:$0xff] %v724
        %v726 = vld [vmem:[%s592 + $0x210] sm:$0xff]
        %727 = vst [vmem:[%s593 + $0x210] sm:$0xff] %v726
        %v728 = vld [vmem:[%s592 + $0x218] sm:$0xff]
        %729 = vst [vmem:[%s593 + $0x218] sm:$0xff] %v728
        %v730 = vld [vmem:[%s592 + $0x220] sm:$0xff]
        %731 = vst [vmem:[%s593 + $0x220] sm:$0xff] %v730
      $region370: #{vae_forward.1} parent=364 // loop_footer
        %s591 = sadd.s32 1, %s587
      $region371: #{vae_forward.1} parent=364 // loop_footer_branch
        %586 = sbr.rel target = $region367
      $region372: #{vae_forward.1} parent=364 // loop_exit
        _
    $region365: #{vae_forward.1} parent=349 // pred_fallthru
      _
    %p732 = pneg %p582
    // Predicated region
    $region373: #{vae_forward.1} parent=349 // pred_check
      _
    $region374: #{vae_forward.1} parent=349 // pred_check_branch
      %734 = sbr.rel (%p582) target = $region376
    $region375: #{vae_forward.1} parent=349 // pred_region
      %s735 = sand.u32 552, 7
    $region376: #{vae_forward.1} parent=349 // pred_fallthru
      _
  $region350: #{vae_forward.1} parent=0 // pred_fallthru
    _
  // Predicated region
  $region351: #{vae_forward.1} parent=0 // pred_check
    %p567 = pneg %p563
  $region352: #{vae_forward.1} parent=0 // pred_check_branch
    %569 = sbr.rel (%p567) target = $region354
  $region353: #{vae_forward.1} parent=0 // pred_region
    %s570 = sshllo.u32 0, 552
    loop: start=0, step=1, limit=1
    $region355: #{vae_forward.1} parent=353 // loop_pre_header
      _
    $region356: #{vae_forward.1} parent=353 // loop_header
      %s572 = sphi 0, %s576
      %p573 = scmp.ge.s32.totalorder %s572, 1
      %s577 = sphi %s81, %s81
      %s578 = sphi [#allocation8], [#allocation8]
    $region357: #{vae_forward.1} parent=353 // loop_header_branch
      %575 = sbr.rel (%p573) target = $region361
    $region358: #{vae_forward.1} parent=353 // loop_body
      %v579 = vld [vmem:[%s577] sm:%s570]
      %580 = vst [vmem:[%s578] sm:%s570] %v579
    $region359: #{vae_forward.1} parent=353 // loop_footer
      %s576 = sadd.s32 1, %s572
    $region360: #{vae_forward.1} parent=353 // loop_footer_branch
      %571 = sbr.rel target = $region356
    $region361: #{vae_forward.1} parent=353 // loop_exit
      _
  $region354: #{vae_forward.1} parent=0 // pred_fallthru
    _
  // Predicated region
  $region377: #{vae_forward.1} parent=0 // pred_check
    _
  $region378: #{vae_forward.1} parent=0 // pred_check_branch
    %738 = sbr.rel (0) target = $region380
  $region379: #{vae_forward.1} parent=0 // pred_region
    %739 = vsyncadd %s561, 8832
  $region380: #{vae_forward.1} parent=0 // pred_fallthru
    _
  %v740 = vld [vmem:[%s1] sm:$0xff]
  %v741 = vld [vmem:[%s1 + $0x8] sm:$0xff]
  %v742 = vld [vmem:[%s1 + $0x10] sm:$0xff]
  %v746 = vcombine.high %v740, %v740
  %v747 = vcombine.high %v741, %v741
  %v750 = vcombine.low %v740, %v740
  %v751 = vcombine.low %v741, %v741
  %v752 = vcombine.low %v742, %v742
  %753 = vrot.lane.b32.xlu0 %v750, 127
  %v754 = vpop.permute.xlu0 %753
  %755 = vrot.lane.b32.xlu0 %v740, 127
  %v756 = vpop.permute.xlu0 %755
  %757 = vrot.lane.b32.xlu0 %v751, 127
  %v758 = vpop.permute.xlu0 %757
  %759 = vrot.lane.b32.xlu0 %v741, 127
  %v760 = vpop.permute.xlu0 %759
  %761 = vrot.lane.b32.xlu0 %v752, 127
  %v762 = vpop.permute.xlu0 %761
  %vm763 = vcmask 1039360
  %v764 = vsel %vm763, %v754, %v756
  %v765 = vsel %vm763, %v756, %v758
  %v766 = vsel %vm763, %v758, %v760
  %v767 = vsel %vm763, %v760, %v762
  %773 = vrot.lane.b32.xlu0 %v740, 126
  %v774 = vpop.permute.xlu0 %773
  %775 = vrot.lane.b32.xlu0 %v746, 126
  %v776 = vpop.permute.xlu0 %775
  %777 = vrot.lane.b32.xlu0 %v741, 126
  %v778 = vpop.permute.xlu0 %777
  %779 = vrot.lane.b32.xlu0 %v747, 126
  %v780 = vpop.permute.xlu0 %779
  %781 = vrot.lane.b32.xlu0 %v742, 126
  %v782 = vpop.permute.xlu0 %781
  %vm783 = vcmask 1031168
  %v784 = vsel %vm783, %v774, %v776
  %v785 = vsel %vm783, %v776, %v778
  %v786 = vsel %vm783, %v778, %v780
  %v787 = vsel %vm783, %v780, %v782
  %793 = vrot.lane.b32.xlu0 %v750, 125
  %v794 = vpop.permute.xlu0 %793
  %795 = vrot.lane.b32.xlu0 %v740, 125
  %v796 = vpop.permute.xlu0 %795
  %797 = vrot.lane.b32.xlu0 %v751, 125
  %v798 = vpop.permute.xlu0 %797
  %799 = vrot.lane.b32.xlu0 %v741, 125
  %v800 = vpop.permute.xlu0 %799
  %801 = vrot.lane.b32.xlu0 %v752, 125
  %v802 = vpop.permute.xlu0 %801
  %vm803 = vcmask 1022976
  %v804 = vsel %vm803, %v794, %v796
  %v805 = vsel %vm803, %v796, %v798
  %v806 = vsel %vm803, %v798, %v800
  %v807 = vsel %vm803, %v800, %v802
  %813 = vrot.lane.b32.xlu0 %v740, 110
  %v814 = vpop.permute.xlu0 %813
  %815 = vrot.lane.b32.xlu0 %v746, 110
  %v816 = vpop.permute.xlu0 %815
  %817 = vrot.lane.b32.xlu0 %v741, 110
  %v818 = vpop.permute.xlu0 %817
  %819 = vrot.lane.b32.xlu0 %v747, 110
  %v820 = vpop.permute.xlu0 %819
  %821 = vrot.lane.b32.xlu0 %v742, 110
  %v822 = vpop.permute.xlu0 %821
  %vm823 = vcmask 900096
  %v824 = vsel %vm823, %v814, %v816
  %v825 = vsel %vm823, %v816, %v818
  %v826 = vsel %vm823, %v818, %v820
  %v827 = vsel %vm823, %v820, %v822
  %833 = vrot.lane.b32.xlu0 %v750, 109
  %v834 = vpop.permute.xlu0 %833
  %835 = vrot.lane.b32.xlu0 %v740, 109
  %v836 = vpop.permute.xlu0 %835
  %837 = vrot.lane.b32.xlu0 %v751, 109
  %v838 = vpop.permute.xlu0 %837
  %839 = vrot.lane.b32.xlu0 %v741, 109
  %v840 = vpop.permute.xlu0 %839
  %841 = vrot.lane.b32.xlu0 %v752, 109
  %v842 = vpop.permute.xlu0 %841
  %vm843 = vcmask 891904
  %v844 = vsel %vm843, %v834, %v836
  %v845 = vsel %vm843, %v836, %v838
  %v846 = vsel %vm843, %v838, %v840
  %v847 = vsel %vm843, %v840, %v842
  %853 = vrot.lane.b32.xlu0 %v740, 108
  %v854 = vpop.permute.xlu0 %853
  %855 = vrot.lane.b32.xlu0 %v746, 108
  %v856 = vpop.permute.xlu0 %855
  %857 = vrot.lane.b32.xlu0 %v741, 108
  %v858 = vpop.permute.xlu0 %857
  %859 = vrot.lane.b32.xlu0 %v747, 108
  %v860 = vpop.permute.xlu0 %859
  %861 = vrot.lane.b32.xlu0 %v742, 108
  %v862 = vpop.permute.xlu0 %861
  %vm863 = vcmask 883712
  %v864 = vsel %vm863, %v854, %v856
  %v865 = vsel %vm863, %v856, %v858
  %v866 = vsel %vm863, %v858, %v860
  %v867 = vsel %vm863, %v860, %v862
  %873 = vrot.lane.b32.xlu0 %v750, 107
  %v874 = vpop.permute.xlu0 %873
  %875 = vrot.lane.b32.xlu0 %v740, 107
  %v876 = vpop.permute.xlu0 %875
  %877 = vrot.lane.b32.xlu0 %v751, 107
  %v878 = vpop.permute.xlu0 %877
  %879 = vrot.lane.b32.xlu0 %v741, 107
  %v880 = vpop.permute.xlu0 %879
  %881 = vrot.lane.b32.xlu0 %v752, 107
  %v882 = vpop.permute.xlu0 %881
  %vm883 = vcmask 875520
  %v884 = vsel %vm883, %v874, %v876
  %v885 = vsel %vm883, %v876, %v878
  %v886 = vsel %vm883, %v878, %v880
  %v887 = vsel %vm883, %v880, %v882
  %893 = vrot.lane.b32.xlu0 %v740, 92
  %v894 = vpop.permute.xlu0 %893
  %895 = vrot.lane.b32.xlu0 %v746, 92
  %v896 = vpop.permute.xlu0 %895
  %897 = vrot.lane.b32.xlu0 %v741, 92
  %v898 = vpop.permute.xlu0 %897
  %899 = vrot.lane.b32.xlu0 %v747, 92
  %v900 = vpop.permute.xlu0 %899
  %901 = vrot.lane.b32.xlu0 %v742, 92
  %v902 = vpop.permute.xlu0 %901
  %vm903 = vcmask 752640
  %v904 = vsel %vm903, %v894, %v896
  %v905 = vsel %vm903, %v896, %v898
  %v906 = vsel %vm903, %v898, %v900
  %v907 = vsel %vm903, %v900, %v902
  %913 = vrot.lane.b32.xlu0 %v750, 91
  %v914 = vpop.permute.xlu0 %913
  %915 = vrot.lane.b32.xlu0 %v740, 91
  %v916 = vpop.permute.xlu0 %915
  %917 = vrot.lane.b32.xlu0 %v751, 91
  %v918 = vpop.permute.xlu0 %917
  %919 = vrot.lane.b32.xlu0 %v741, 91
  %v920 = vpop.permute.xlu0 %919
  %921 = vrot.lane.b32.xlu0 %v752, 91
  %v922 = vpop.permute.xlu0 %921
  %vm923 = vcmask 744448
  %v924 = vsel %vm923, %v914, %v916
  %v925 = vsel %vm923, %v916, %v918
  %v926 = vsel %vm923, %v918, %v920
  %v927 = vsel %vm923, %v920, %v922
  %933 = vrot.lane.b32.xlu0 %v740, 90
  %v934 = vpop.permute.xlu0 %933
  %935 = vrot.lane.b32.xlu0 %v746, 90
  %v936 = vpop.permute.xlu0 %935
  %937 = vrot.lane.b32.xlu0 %v741, 90
  %v938 = vpop.permute.xlu0 %937
  %939 = vrot.lane.b32.xlu0 %v747, 90
  %v940 = vpop.permute.xlu0 %939
  %941 = vrot.lane.b32.xlu0 %v742, 90
  %v942 = vpop.permute.xlu0 %941
  %vm943 = vcmask 736256
  %v944 = vsel %vm943, %v934, %v936
  %v945 = vsel %vm943, %v936, %v938
  %v946 = vsel %vm943, %v938, %v940
  %v947 = vsel %vm943, %v940, %v942
  %953 = vrot.lane.b32.xlu0 %v750, 89
  %v954 = vpop.permute.xlu0 %953
  %955 = vrot.lane.b32.xlu0 %v740, 89
  %v956 = vpop.permute.xlu0 %955
  %957 = vrot.lane.b32.xlu0 %v751, 89
  %v958 = vpop.permute.xlu0 %957
  %959 = vrot.lane.b32.xlu0 %v741, 89
  %v960 = vpop.permute.xlu0 %959
  %961 = vrot.lane.b32.xlu0 %v752, 89
  %v962 = vpop.permute.xlu0 %961
  %vm963 = vcmask 728064
  %v964 = vsel %vm963, %v954, %v956
  %v965 = vsel %vm963, %v956, %v958
  %v966 = vsel %vm963, %v958, %v960
  %v967 = vsel %vm963, %v960, %v962
  %v973 = vcombine.high %v742, %v742
  %974 = vrot.lane.b32.xlu0 %v740, 74
  %v975 = vpop.permute.xlu0 %974
  %976 = vrot.lane.b32.xlu0 %v746, 74
  %v977 = vpop.permute.xlu0 %976
  %978 = vrot.lane.b32.xlu0 %v741, 74
  %v979 = vpop.permute.xlu0 %978
  %980 = vrot.lane.b32.xlu0 %v747, 74
  %v981 = vpop.permute.xlu0 %980
  %982 = vrot.lane.b32.xlu0 %v742, 74
  %v983 = vpop.permute.xlu0 %982
  %984 = vrot.lane.b32.xlu0 %v973, 74
  %v985 = vpop.permute.xlu0 %984
  %vm986 = vcmask 605184
  %v987 = vsel %vm986, %v975, %v977
  %v988 = vsel %vm986, %v977, %v979
  %v989 = vsel %vm986, %v979, %v981
  %v990 = vsel %vm986, %v981, %v983
  %v991 = vsel %vm986, %v983, %v985
  %997 = vrot.lane.b32.xlu0 %v750, 73
  %v998 = vpop.permute.xlu0 %997
  %999 = vrot.lane.b32.xlu0 %v740, 73
  %v1000 = vpop.permute.xlu0 %999
  %1001 = vrot.lane.b32.xlu0 %v751, 73
  %v1002 = vpop.permute.xlu0 %1001
  %1003 = vrot.lane.b32.xlu0 %v741, 73
  %v1004 = vpop.permute.xlu0 %1003
  %1005 = vrot.lane.b32.xlu0 %v752, 73
  %v1006 = vpop.permute.xlu0 %1005
  %1007 = vrot.lane.b32.xlu0 %v742, 73
  %v1008 = vpop.permute.xlu0 %1007
  %vm1009 = vcmask 596992
  %v1010 = vsel %vm1009, %v998, %v1000
  %v1011 = vsel %vm1009, %v1000, %v1002
  %v1012 = vsel %vm1009, %v1002, %v1004
  %v1013 = vsel %vm1009, %v1004, %v1006
  %v1014 = vsel %vm1009, %v1006, %v1008
  %1020 = vrot.lane.b32.xlu0 %v740, 72
  %v1021 = vpop.permute.xlu0 %1020
  %1022 = vrot.lane.b32.xlu0 %v746, 72
  %v1023 = vpop.permute.xlu0 %1022
  %1024 = vrot.lane.b32.xlu0 %v741, 72
  %v1025 = vpop.permute.xlu0 %1024
  %1026 = vrot.lane.b32.xlu0 %v747, 72
  %v1027 = vpop.permute.xlu0 %1026
  %1028 = vrot.lane.b32.xlu0 %v742, 72
  %v1029 = vpop.permute.xlu0 %1028
  %1030 = vrot.lane.b32.xlu0 %v973, 72
  %v1031 = vpop.permute.xlu0 %1030
  %vm1032 = vcmask 588800
  %v1033 = vsel %vm1032, %v1021, %v1023
  %v1034 = vsel %vm1032, %v1023, %v1025
  %v1035 = vsel %vm1032, %v1025, %v1027
  %v1036 = vsel %vm1032, %v1027, %v1029
  %v1037 = vsel %vm1032, %v1029, %v1031
  %1043 = vrot.lane.b32.xlu0 %v750, 71
  %v1044 = vpop.permute.xlu0 %1043
  %1045 = vrot.lane.b32.xlu0 %v740, 71
  %v1046 = vpop.permute.xlu0 %1045
  %1047 = vrot.lane.b32.xlu0 %v751, 71
  %v1048 = vpop.permute.xlu0 %1047
  %1049 = vrot.lane.b32.xlu0 %v741, 71
  %v1050 = vpop.permute.xlu0 %1049
  %1051 = vrot.lane.b32.xlu0 %v752, 71
  %v1052 = vpop.permute.xlu0 %1051
  %1053 = vrot.lane.b32.xlu0 %v742, 71
  %v1054 = vpop.permute.xlu0 %1053
  %vm1055 = vcmask 580608
  %v1056 = vsel %vm1055, %v1044, %v1046
  %v1057 = vsel %vm1055, %v1046, %v1048
  %v1058 = vsel %vm1055, %v1048, %v1050
  %v1059 = vsel %vm1055, %v1050, %v1052
  %v1060 = vsel %vm1055, %v1052, %v1054
  %vm1066 = vcmask 1043456
  %v1067 = vsel %vm1066, %v740, %v764
  %v1068 = vsel %vm1066, %v746, %v765
  %v1069 = vsel %vm1066, %v741, %v766
  %v1070 = vsel %vm1066, %v747, %v767
  %v1071 = vsel %vm1066, %v742, %v762
  %v1072 = vsel %vm1066, %v784, %v804
  %v1073 = vsel %vm1066, %v785, %v805
  %v1074 = vsel %vm1066, %v786, %v806
  %v1075 = vsel %vm1066, %v787, %v807
  %v1076 = vsel %vm1066, %v782, %v802
  %v1077 = vsel %vm1066, %v824, %v844
  %v1078 = vsel %vm1066, %v825, %v845
  %v1079 = vsel %vm1066, %v826, %v846
  %v1080 = vsel %vm1066, %v827, %v847
  %v1081 = vsel %vm1066, %v822, %v842
  %v1082 = vsel %vm1066, %v864, %v884
  %v1083 = vsel %vm1066, %v865, %v885
  %v1084 = vsel %vm1066, %v866, %v886
  %v1085 = vsel %vm1066, %v867, %v887
  %v1086 = vsel %vm1066, %v862, %v882
  %v1087 = vsel %vm1066, %v904, %v924
  %v1088 = vsel %vm1066, %v905, %v925
  %v1089 = vsel %vm1066, %v906, %v926
  %v1090 = vsel %vm1066, %v907, %v927
  %v1091 = vsel %vm1066, %v902, %v922
  %v1092 = vsel %vm1066, %v944, %v964
  %v1093 = vsel %vm1066, %v945, %v965
  %v1094 = vsel %vm1066, %v946, %v966
  %v1095 = vsel %vm1066, %v947, %v967
  %v1096 = vsel %vm1066, %v942, %v962
  %v1097 = vsel %vm1066, %v987, %v1010
  %v1098 = vsel %vm1066, %v988, %v1011
  %v1099 = vsel %vm1066, %v989, %v1012
  %v1100 = vsel %vm1066, %v990, %v1013
  %v1101 = vsel %vm1066, %v991, %v1014
  %v1102 = vsel %vm1066, %v1033, %v1056
  %v1103 = vsel %vm1066, %v1034, %v1057
  %v1104 = vsel %vm1066, %v1035, %v1058
  %v1105 = vsel %vm1066, %v1036, %v1059
  %v1106 = vsel %vm1066, %v1037, %v1060
  %v1107 = vpack.c.bf16 %v1072, %v1067
  %v1108 = vpack.c.bf16 %v1073, %v1068
  %v1109 = vpack.c.bf16 %v1074, %v1069
  %v1110 = vpack.c.bf16 %v1075, %v1070
  %v1111 = vpack.c.bf16 %v1076, %v1071
  %v1112 = vpack.c.bf16 %v1082, %v1077
  %v1113 = vpack.c.bf16 %v1083, %v1078
  %v1114 = vpack.c.bf16 %v1084, %v1079
  %v1115 = vpack.c.bf16 %v1085, %v1080
  %v1116 = vpack.c.bf16 %v1086, %v1081
  %v1117 = vpack.c.bf16 %v1092, %v1087
  %v1118 = vpack.c.bf16 %v1093, %v1088
  %v1119 = vpack.c.bf16 %v1094, %v1089
  %v1120 = vpack.c.bf16 %v1095, %v1090
  %v1121 = vpack.c.bf16 %v1096, %v1091
  %v1122 = vpack.c.bf16 %v1102, %v1097
  %v1123 = vpack.c.bf16 %v1103, %v1098
  %v1124 = vpack.c.bf16 %v1104, %v1099
  %v1125 = vpack.c.bf16 %v1105, %v1100
  %v1126 = vpack.c.bf16 %v1106, %v1101
  %v1127 = vld [vmem:[%s5] sm:$0xf]
  %v1128 = vld [vmem:[%s7] sm:$0xff]
  %1130 = vset.pattern.permute.xlu0 0
  %1131 = vperm.xlu0 %1130, %v1128
  %v1132 = vpop.permute.xlu0 %1131
  %vm1134 = vcmask 523264
  %v1136 = vsel %vm1134, %v1127, 0
  %1138 = vmatprep.subr.bf16.mxu0 %v1108
  %1139 = vmatpush1.bf16.msra.mxu0 %v1107
  %1140 = vmatprep.subr.bf16.mxu0 %v1113
  %1141 = vmatpush1.bf16.msra.mxu0 %v1112
  %1142 = vmatprep.subr.bf16.mxu0 %v1118
  %1143 = vmatpush1.bf16.msra.mxu0 %v1117
  %1144 = vmatprep.subr.bf16.mxu0 %v1123
  %1145 = vmatpush1.bf16.msra.mxu0 %v1122
  %1146 = vmatprep.subr.bf16.mxu0 0
  %1147 = vmatpush1.bf16.msra.mxu0 0
  %1148 = vmatprep.subr.bf16.mxu0 0
  %1149 = vmatpush1.bf16.msra.mxu0 0
  %1150 = vmatprep.subr.bf16.mxu0 0
  %1151 = vmatpush1.bf16.msra.mxu0 0
  %1152 = vmatprep.subr.bf16.mxu0 0
  %1153 = vmatpush1.bf16.msra.mxu0 0
  %1154 = vmatprep.subr.bf16.mxu0 0
  %1155 = vmatpush1.bf16.msra.mxu0 0
  %1156 = vmatprep.subr.bf16.mxu0 0
  %1157 = vmatpush1.bf16.msra.mxu0 0
  %1158 = vmatprep.subr.bf16.mxu0 0
  %1159 = vmatpush1.bf16.msra.mxu0 0
  %1160 = vmatprep.subr.bf16.mxu0 0
  %1161 = vmatpush1.bf16.msra.mxu0 0
  %1162 = vmatprep.subr.bf16.mxu0 0
  %1163 = vmatpush1.bf16.msra.mxu0 0
  %1164 = vmatprep.subr.bf16.mxu0 0
  %1165 = vmatpush1.bf16.msra.mxu0 0
  %1166 = vmatprep.subr.bf16.mxu0 0
  %1167 = vmatpush1.bf16.msra.mxu0 0
  %1168 = vmatprep.subr.bf16.mxu0 0
  %1169 = vmatpush1.bf16.msra.mxu0 0
  %1170 = vmatprep.mubr.bf16.mxu0 0
  %1171 = vmatmul.mubr.bf16.gmra.mrb[0].mxu0 %v1136
  %v1172 = vpop.f32.mrb[0].mxu0
  %v1173 = vadd.f32 %v1132, %v1172
  %v1174 = vpop.f32.mrb[0].mxu0
  %v1175 = vadd.f32 %v1132, %v1174
  %v1176 = vpop.f32.mrb[0].mxu0
  %v1177 = vpop.f32.mrb[0].mxu0
  %1178 = vdwg.mxu0
  %1179 = vmatprep.subr.bf16.mxu0 %v1110
  %1180 = vmatpush1.bf16.msra.mxu0 %v1109
  %1181 = vmatprep.subr.bf16.mxu0 %v1115
  %1182 = vmatpush1.bf16.msra.mxu0 %v1114
  %1183 = vmatprep.subr.bf16.mxu0 %v1120
  %1184 = vmatpush1.bf16.msra.mxu0 %v1119
  %1185 = vmatprep.subr.bf16.mxu0 %v1125
  %1186 = vmatpush1.bf16.msra.mxu0 %v1124
  %1187 = vmatprep.subr.bf16.mxu0 0
  %1188 = vmatpush1.bf16.msra.mxu0 0
  %1189 = vmatprep.subr.bf16.mxu0 0
  %1190 = vmatpush1.bf16.msra.mxu0 0
  %1191 = vmatprep.subr.bf16.mxu0 0
  %1192 = vmatpush1.bf16.msra.mxu0 0
  %1193 = vmatprep.subr.bf16.mxu0 0
  %1194 = vmatpush1.bf16.msra.mxu0 0
  %1195 = vmatprep.subr.bf16.mxu0 0
  %1196 = vmatpush1.bf16.msra.mxu0 0
  %1197 = vmatprep.subr.bf16.mxu0 0
  %1198 = vmatpush1.bf16.msra.mxu0 0
  %1199 = vmatprep.subr.bf16.mxu0 0
  %1200 = vmatpush1.bf16.msra.mxu0 0
  %1201 = vmatprep.subr.bf16.mxu0 0
  %1202 = vmatpush1.bf16.msra.mxu0 0
  %1203 = vmatprep.subr.bf16.mxu0 0
  %1204 = vmatpush1.bf16.msra.mxu0 0
  %1205 = vmatprep.subr.bf16.mxu0 0
  %1206 = vmatpush1.bf16.msra.mxu0 0
  %1207 = vmatprep.subr.bf16.mxu0 0
  %1208 = vmatpush1.bf16.msra.mxu0 0
  %1209 = vmatprep.subr.bf16.mxu0 0
  %1210 = vmatpush1.bf16.msra.mxu0 0
  %1211 = vmatprep.mubr.bf16.mxu0 0
  %1212 = vmatmul.mubr.bf16.gmra.mrb[0].mxu0 %v1136
  %v1213 = vpop.f32.mrb[0].mxu0
  %v1214 = vadd.f32 %v1132, %v1213
  %v1215 = vpop.f32.mrb[0].mxu0
  %v1216 = vadd.f32 %v1132, %v1215
  %v1217 = vpop.f32.mrb[0].mxu0
  %v1218 = vpop.f32.mrb[0].mxu0
  %1219 = vdwg.mxu0
  %1220 = vmatprep.subr.bf16.mxu0 0
  %1221 = vmatpush1.bf16.msra.mxu0 %v1111
  %1222 = vmatprep.subr.bf16.mxu0 0
  %1223 = vmatpush1.bf16.msra.mxu0 %v1116
  %1224 = vmatprep.subr.bf16.mxu0 0
  %1225 = vmatpush1.bf16.msra.mxu0 %v1121
  %1226 = vmatprep.subr.bf16.mxu0 0
  %1227 = vmatpush1.bf16.msra.mxu0 %v1126
  %1228 = vmatprep.subr.bf16.mxu0 0
  %1229 = vmatpush1.bf16.msra.mxu0 0
  %1230 = vmatprep.subr.bf16.mxu0 0
  %1231 = vmatpush1.bf16.msra.mxu0 0
  %1232 = vmatprep.subr.bf16.mxu0 0
  %1233 = vmatpush1.bf16.msra.mxu0 0
  %1234 = vmatprep.subr.bf16.mxu0 0
  %1235 = vmatpush1.bf16.msra.mxu0 0
  %1236 = vmatprep.subr.bf16.mxu0 0
  %1237 = vmatpush1.bf16.msra.mxu0 0
  %1238 = vmatprep.subr.bf16.mxu0 0
  %1239 = vmatpush1.bf16.msra.mxu0 0
  %1240 = vmatprep.subr.bf16.mxu0 0
  %1241 = vmatpush1.bf16.msra.mxu0 0
  %1242 = vmatprep.subr.bf16.mxu0 0
  %1243 = vmatpush1.bf16.msra.mxu0 0
  %1244 = vmatprep.subr.bf16.mxu0 0
  %1245 = vmatpush1.bf16.msra.mxu0 0
  %1246 = vmatprep.subr.bf16.mxu0 0
  %1247 = vmatpush1.bf16.msra.mxu0 0
  %1248 = vmatprep.subr.bf16.mxu0 0
  %1249 = vmatpush1.bf16.msra.mxu0 0
  %1250 = vmatprep.subr.bf16.mxu0 0
  %1251 = vmatpush1.bf16.msra.mxu0 0
  %1252 = vmatprep.mubr.bf16.mxu0 0
  %1253 = vmatmul.mubr.bf16.gmra.mrb[0].mxu0 %v1136
  %v1254 = vpop.f32.mrb[0].mxu0
  %v1255 = vadd.f32 %v1132, %v1254
  %v1256 = vpop.f32.mrb[0].mxu0
  %v1257 = vpop.f32.mrb[0].mxu0
  %v1258 = vpop.f32.mrb[0].mxu0
  %1259 = vdwg.mxu0
  %vm1260 = vcmp.gt.f32.partialorder %v1173, 0.0
  %vm1261 = vcmp.gt.f32.partialorder %v1175, 0.0
  %vm1262 = vcmp.gt.f32.partialorder %v1214, 0.0
  %vm1263 = vcmp.gt.f32.partialorder %v1216, 0.0
  %vm1264 = vcmp.gt.f32.partialorder %v1255, 0.0
  %v1265 = vmul.f32 %v1173, 0.2
  %v1266 = vmul.f32 %v1175, 0.2
  %v1267 = vmul.f32 %v1214, 0.2
  %v1268 = vmul.f32 %v1216, 0.2
  %v1269 = vmul.f32 %v1255, 0.2
  %v1270 = vsel %vm1260, %v1173, %v1265
  %v1271 = vsel %vm1261, %v1175, %v1266
  %v1272 = vsel %vm1262, %v1214, %v1267
  %v1273 = vsel %vm1263, %v1216, %v1268
  %v1274 = vsel %vm1264, %v1255, %v1269
  %v1275 = vpack.c.bf16 %v1270, %v1270
  %v1276 = vpack.c.bf16 %v1271, %v1271
  %v1277 = vpack.c.bf16 %v1272, %v1272
  %v1278 = vpack.c.bf16 %v1273, %v1273
  %v1279 = vpack.c.bf16 %v1274, %v1274
  %v1280 = vld [vmem:[%s53] sm:$0xff]
  %v1281 = vld [vmem:[%s53 + $0x8] sm:$0xff]
  %v1282 = vld [vmem:[%s53 + $0x10] sm:$0xff]
  %v1283 = vld [vmem:[%s53 + $0x18] sm:$0xff]
  %v1284 = vld [vmem:[%s53 + $0x20] sm:$0xff]
  %v1285 = vld [vmem:[%s53 + $0x28] sm:$0xff]
  %v1286 = vld [vmem:[%s53 + $0x30] sm:$0xff]
  %v1287 = vld [vmem:[%s53 + $0x38] sm:$0xff]
  %v1288 = vld [vmem:[%s53 + $0x40] sm:$0xff]
  %v1289 = vld [vmem:[%s53 + $0x48] sm:$0xff]
  %v1290 = vld [vmem:[%s53 + $0x50] sm:$0xff]
  %v1291 = vld [vmem:[%s53 + $0x58] sm:$0xff]
  %v1292 = vld [vmem:[%s53 + $0x60] sm:$0xff]
  %v1293 = vld [vmem:[%s53 + $0x68] sm:$0xff]
  %v1294 = vld [vmem:[%s53 + $0x70] sm:$0xff]
  %v1295 = vld [vmem:[%s53 + $0x78] sm:$0xff]
  %v1296 = vld [vmem:[%s53 + $0x80] sm:$0xff]
  %v1297 = vld [vmem:[%s53 + $0x88] sm:$0xff]
  %v1298 = vld [vmem:[%s53 + $0x90] sm:$0xff]
  %v1299 = vld [vmem:[%s53 + $0x98] sm:$0xff]
  %v1300 = vld [vmem:[%s53 + $0xa0] sm:$0xff]
  %v1301 = vld [vmem:[%s53 + $0xa8] sm:$0xff]
  %v1302 = vld [vmem:[%s53 + $0xb0] sm:$0xff]
  %v1303 = vld [vmem:[%s53 + $0xb8] sm:$0xff]
  %v1304 = vld [vmem:[%s53 + $0xc0] sm:$0xff]
  %v1305 = vld [vmem:[%s53 + $0xc8] sm:$0xff]
  %v1306 = vld [vmem:[%s53 + $0xd0] sm:$0xff]
  %v1307 = vld [vmem:[%s53 + $0xd8] sm:$0xff]
  %v1308 = vld [vmem:[%s53 + $0xe0] sm:$0xff]
  %v1309 = vld [vmem:[%s53 + $0xe8] sm:$0xff]
  %v1310 = vld [vmem:[%s53 + $0xf0] sm:$0xff]
  %v1311 = vld [vmem:[%s53 + $0xf8] sm:$0xff]
  %v1312 = vld [vmem:[%s53 + $0x100] sm:$0xff]
  %v1313 = vld [vmem:[%s53 + $0x108] sm:$0xff]
  %v1314 = vld [vmem:[%s53 + $0x110] sm:$0xff]
  %v1315 = vld [vmem:[%s53 + $0x118] sm:$0xff]
  %v1316 = vld [vmem:[%s53 + $0x120] sm:$0xff]
  %v1317 = vld [vmem:[%s53 + $0x128] sm:$0xff]
  %v1318 = vld [vmem:[%s53 + $0x130] sm:$0xff]
  %v1319 = vld [vmem:[%s53 + $0x138] sm:$0xff]
  %v1320 = vld [vmem:[%s53 + $0x140] sm:$0xff]
  %v1321 = vld [vmem:[%s53 + $0x148] sm:$0xff]
  %v1322 = vld [vmem:[%s53 + $0x150] sm:$0xff]
  %v1323 = vld [vmem:[%s53 + $0x158] sm:$0xff]
  %v1324 = vld [vmem:[%s53 + $0x160] sm:$0xff]
  %v1325 = vld [vmem:[%s53 + $0x168] sm:$0xff]
  %v1326 = vld [vmem:[%s53 + $0x170] sm:$0xff]
  %v1327 = vld [vmem:[%s53 + $0x178] sm:$0xff]
  %v1328 = vld [vmem:[%s53 + $0x180] sm:$0xff]
  %v1329 = vld [vmem:[%s53 + $0x188] sm:$0xff]
  %v1330 = vld [vmem:[%s53 + $0x190] sm:$0xff]
  %v1331 = vld [vmem:[%s53 + $0x198] sm:$0xff]
  %v1332 = vld [vmem:[%s53 + $0x1a0] sm:$0xff]
  %v1333 = vld [vmem:[%s53 + $0x1a8] sm:$0xff]
  %v1334 = vld [vmem:[%s53 + $0x1b0] sm:$0xff]
  %v1335 = vld [vmem:[%s53 + $0x1b8] sm:$0xff]
  %v1336 = vld [vmem:[%s53 + $0x1c0] sm:$0xff]
  %v1337 = vld [vmem:[%s53 + $0x1c8] sm:$0xff]
  %v1338 = vld [vmem:[%s53 + $0x1d0] sm:$0xff]
  %v1339 = vld [vmem:[%s53 + $0x1d8] sm:$0xff]
  %v1340 = vld [vmem:[%s53 + $0x1e0] sm:$0xff]
  %v1341 = vld [vmem:[%s53 + $0x1e8] sm:$0xff]
  %v1342 = vld [vmem:[%s53 + $0x1f0] sm:$0xff]
  %v1343 = vld [vmem:[%s53 + $0x1f8] sm:$0xff]
  %v1344 = vld [vmem:[%s53 + $0x200] sm:$0xff]
  %v1345 = vld [vmem:[%s53 + $0x208] sm:$0xff]
  %v1346 = vld [vmem:[%s53 + $0x210] sm:$0xff]
  %v1347 = vld [vmem:[%s53 + $0x218] sm:$0xff]
  %v1348 = vld [vmem:[%s53 + $0x220] sm:$0xff]
  %v1349 = vld [vmem:[%s53 + $0x228] sm:$0xff]
  %v1350 = vld [vmem:[%s53 + $0x230] sm:$0xff]
  %v1351 = vld [vmem:[%s53 + $0x238] sm:$0xff]
  %v1352 = vld [vmem:[%s53 + $0x240] sm:$0xff]
  %v1353 = vld [vmem:[%s53 + $0x248] sm:$0xff]
  %v1428 = vunpack.c.l.b16 %v1280
  %v1429 = vunpack.c.h.b16 %v1280
  %v1430 = vunpack.c.l.b16 %v1281
  %v1431 = vunpack.c.h.b16 %v1281
  %v1432 = vunpack.c.l.b16 %v1282
  %v1433 = vunpack.c.h.b16 %v1282
  %v1434 = vunpack.c.l.b16 %v1283
  %v1435 = vunpack.c.h.b16 %v1283
  %v1436 = vunpack.c.l.b16 %v1284
  %v1437 = vunpack.c.h.b16 %v1284
  %v1438 = vunpack.c.l.b16 %v1285
  %v1439 = vunpack.c.h.b16 %v1285
  %v1440 = vunpack.c.l.b16 %v1286
  %v1441 = vunpack.c.h.b16 %v1286
  %v1442 = vunpack.c.l.b16 %v1287
  %v1443 = vunpack.c.h.b16 %v1287
  %v1444 = vunpack.c.l.b16 %v1288
  %v1445 = vunpack.c.h.b16 %v1288
  %v1446 = vunpack.c.l.b16 %v1289
  %v1447 = vunpack.c.h.b16 %v1289
  %v1448 = vunpack.c.l.b16 %v1290
  %v1449 = vunpack.c.h.b16 %v1290
  %v1450 = vunpack.c.l.b16 %v1291
  %v1451 = vunpack.c.h.b16 %v1291
  %v1452 = vunpack.c.l.b16 %v1292
  %v1453 = vunpack.c.h.b16 %v1292
  %v1454 = vunpack.c.l.b16 %v1293
  %v1455 = vunpack.c.h.b16 %v1293
  %v1456 = vunpack.c.l.b16 %v1294
  %v1457 = vunpack.c.h.b16 %v1294
  %v1458 = vunpack.c.l.b16 %v1295
  %v1459 = vunpack.c.h.b16 %v1295
  %v1460 = vunpack.c.l.b16 %v1296
  %v1461 = vunpack.c.h.b16 %v1296
  %v1462 = vunpack.c.l.b16 %v1297
  %v1463 = vunpack.c.h.b16 %v1297
  %v1464 = vunpack.c.l.b16 %v1298
  %v1465 = vunpack.c.h.b16 %v1298
  %v1466 = vunpack.c.l.b16 %v1299
  %v1467 = vunpack.c.h.b16 %v1299
  %v1468 = vunpack.c.l.b16 %v1300
  %v1469 = vunpack.c.h.b16 %v1300
  %v1470 = vunpack.c.l.b16 %v1301
  %v1471 = vunpack.c.h.b16 %v1301
  %v1472 = vunpack.c.l.b16 %v1302
  %v1473 = vunpack.c.h.b16 %v1302
  %v1474 = vunpack.c.l.b16 %v1303
  %v1475 = vunpack.c.h.b16 %v1303
  %v1476 = vunpack.c.l.b16 %v1304
  %v1477 = vunpack.c.h.b16 %v1304
  %v1478 = vunpack.c.l.b16 %v1305
  %v1479 = vunpack.c.h.b16 %v1305
  %v1480 = vunpack.c.l.b16 %v1306
  %v1481 = vunpack.c.h.b16 %v1306
  %v1482 = vunpack.c.l.b16 %v1307
  %v1483 = vunpack.c.h.b16 %v1307
  %v1484 = vunpack.c.l.b16 %v1308
  %v1485 = vunpack.c.h.b16 %v1308
  %v1486 = vunpack.c.l.b16 %v1309
  %v1487 = vunpack.c.h.b16 %v1309
  %v1488 = vunpack.c.l.b16 %v1310
  %v1489 = vunpack.c.h.b16 %v1310
  %v1490 = vunpack.c.l.b16 %v1311
  %v1491 = vunpack.c.h.b16 %v1311
  %v1492 = vunpack.c.l.b16 %v1312
  %v1493 = vunpack.c.h.b16 %v1312
  %v1494 = vunpack.c.l.b16 %v1313
  %v1495 = vunpack.c.h.b16 %v1313
  %v1496 = vunpack.c.l.b16 %v1314
  %v1497 = vunpack.c.h.b16 %v1314
  %v1498 = vunpack.c.l.b16 %v1315
  %v1499 = vunpack.c.h.b16 %v1315
  %v1500 = vunpack.c.l.b16 %v1316
  %v1501 = vunpack.c.h.b16 %v1316
  %v1502 = vunpack.c.l.b16 %v1317
  %v1503 = vunpack.c.h.b16 %v1317
  %v1504 = vunpack.c.l.b16 %v1318
  %v1505 = vunpack.c.h.b16 %v1318
  %v1506 = vunpack.c.l.b16 %v1319
  %v1507 = vunpack.c.h.b16 %v1319
  %v1508 = vunpack.c.l.b16 %v1320
  %v1509 = vunpack.c.h.b16 %v1320
  %v1510 = vunpack.c.l.b16 %v1321
  %v1511 = vunpack.c.h.b16 %v1321
  %v1512 = vunpack.c.l.b16 %v1322
  %v1513 = vunpack.c.h.b16 %v1322
  %v1514 = vunpack.c.l.b16 %v1323
  %v1515 = vunpack.c.h.b16 %v1323
  %v1516 = vunpack.c.l.b16 %v1324
  %v1517 = vunpack.c.h.b16 %v1324
  %v1518 = vunpack.c.l.b16 %v1325
  %v1519 = vunpack.c.h.b16 %v1325
  %v1520 = vunpack.c.l.b16 %v1326
  %v1521 = vunpack.c.h.b16 %v1326
  %v1522 = vunpack.c.l.b16 %v1327
  %v1523 = vunpack.c.h.b16 %v1327
  %v1524 = vunpack.c.l.b16 %v1328
  %v1525 = vunpack.c.h.b16 %v1328
  %v1526 = vunpack.c.l.b16 %v1329
  %v1527 = vunpack.c.h.b16 %v1329
  %v1528 = vunpack.c.l.b16 %v1330
  %v1529 = vunpack.c.h.b16 %v1330
  %v1530 = vunpack.c.l.b16 %v1331
  %v1531 = vunpack.c.h.b16 %v1331
  %v1532 = vunpack.c.l.b16 %v1332
  %v1533 = vunpack.c.h.b16 %v1332
  %v1534 = vunpack.c.l.b16 %v1333
  %v1535 = vunpack.c.h.b16 %v1333
  %v1536 = vunpack.c.l.b16 %v1334
  %v1537 = vunpack.c.h.b16 %v1334
  %v1538 = vunpack.c.l.b16 %v1335
  %v1539 = vunpack.c.h.b16 %v1335
  %v1540 = vunpack.c.l.b16 %v1336
  %v1541 = vunpack.c.h.b16 %v1336
  %v1542 = vunpack.c.l.b16 %v1337
  %v1543 = vunpack.c.h.b16 %v1337
  %v1544 = vunpack.c.l.b16 %v1338
  %v1545 = vunpack.c.h.b16 %v1338
  %v1546 = vunpack.c.l.b16 %v1339
  %v1547 = vunpack.c.h.b16 %v1339
  %v1548 = vunpack.c.l.b16 %v1340
  %v1549 = vunpack.c.h.b16 %v1340
  %v1550 = vunpack.c.l.b16 %v1341
  %v1551 = vunpack.c.h.b16 %v1341
  %v1552 = vunpack.c.l.b16 %v1342
  %v1553 = vunpack.c.h.b16 %v1342
  %v1554 = vunpack.c.l.b16 %v1343
  %v1555 = vunpack.c.h.b16 %v1343
  %v1556 = vunpack.c.l.b16 %v1344
  %v1557 = vunpack.c.h.b16 %v1344
  %v1558 = vunpack.c.l.b16 %v1345
  %v1559 = vunpack.c.h.b16 %v1345
  %v1560 = vunpack.c.l.b16 %v1346
  %v1561 = vunpack.c.h.b16 %v1346
  %v1562 = vunpack.c.l.b16 %v1347
  %v1563 = vunpack.c.h.b16 %v1347
  %v1564 = vunpack.c.l.b16 %v1348
  %v1565 = vunpack.c.h.b16 %v1348
  %v1566 = vunpack.c.l.b16 %v1349
  %v1567 = vunpack.c.h.b16 %v1349
  %v1568 = vunpack.c.l.b16 %v1350
  %v1569 = vunpack.c.h.b16 %v1350
  %v1570 = vunpack.c.l.b16 %v1351
  %v1571 = vunpack.c.h.b16 %v1351
  %v1572 = vunpack.c.l.b16 %v1352
  %v1573 = vunpack.c.h.b16 %v1352
  %v1574 = vunpack.c.l.b16 %v1353
  %v1575 = vunpack.c.h.b16 %v1353
  %v1576 = vpack.c.b16 %v1430, %v1428
  %v1577 = vpack.c.b16 %v1431, %v1429
  %v1578 = vpack.c.b16 %v1434, %v1432
  %v1579 = vpack.c.b16 %v1435, %v1433
  %v1580 = vpack.c.b16 %v1438, %v1436
  %v1581 = vpack.c.b16 %v1439, %v1437
  %v1582 = vpack.c.b16 %v1442, %v1440
  %v1583 = vpack.c.b16 %v1443, %v1441
  %v1584 = vpack.c.b16 %v1446, %v1444
  %v1585 = vpack.c.b16 %v1447, %v1445
  %v1586 = vpack.c.b16 %v1450, %v1448
  %v1587 = vpack.c.b16 %v1451, %v1449
  %v1588 = vpack.c.b16 %v1454, %v1452
  %v1589 = vpack.c.b16 %v1455, %v1453
  %v1590 = vpack.c.b16 %v1458, %v1456
  %v1591 = vpack.c.b16 %v1459, %v1457
  %v1592 = vpack.c.b16 %v1462, %v1460
  %v1593 = vpack.c.b16 %v1463, %v1461
  %v1594 = vpack.c.b16 %v1466, %v1464
  %v1595 = vpack.c.b16 %v1467, %v1465
  %v1596 = vpack.c.b16 %v1470, %v1468
  %v1597 = vpack.c.b16 %v1471, %v1469
  %v1598 = vpack.c.b16 %v1474, %v1472
  %v1599 = vpack.c.b16 %v1475, %v1473
  %v1600 = vpack.c.b16 %v1478, %v1476
  %v1601 = vpack.c.b16 %v1479, %v1477
  %v1602 = vpack.c.b16 %v1482, %v1480
  %v1603 = vpack.c.b16 %v1483, %v1481
  %v1604 = vpack.c.b16 %v1486, %v1484
  %v1605 = vpack.c.b16 %v1487, %v1485
  %v1606 = vpack.c.b16 %v1490, %v1488
  %v1607 = vpack.c.b16 %v1491, %v1489
  %v1608 = vpack.c.b16 %v1494, %v1492
  %v1609 = vpack.c.b16 %v1495, %v1493
  %v1610 = vpack.c.b16 %v1498, %v1496
  %v1611 = vpack.c.b16 %v1499, %v1497
  %v1612 = vpack.c.b16 %v1502, %v1500
  %v1613 = vpack.c.b16 %v1503, %v1501
  %v1614 = vpack.c.b16 %v1506, %v1504
  %v1615 = vpack.c.b16 %v1507, %v1505
  %v1616 = vpack.c.b16 %v1510, %v1508
  %v1617 = vpack.c.b16 %v1511, %v1509
  %v1618 = vpack.c.b16 %v1514, %v1512
  %v1619 = vpack.c.b16 %v1515, %v1513
  %v1620 = vpack.c.b16 %v1518, %v1516
  %v1621 = vpack.c.b16 %v1519, %v1517
  %v1622 = vpack.c.b16 %v1522, %v1520
  %v1623 = vpack.c.b16 %v1523, %v1521
  %v1624 = vpack.c.b16 %v1526, %v1524
  %v1625 = vpack.c.b16 %v1527, %v1525
  %v1626 = vpack.c.b16 %v1530, %v1528
  %v1627 = vpack.c.b16 %v1531, %v1529
  %v1628 = vpack.c.b16 %v1534, %v1532
  %v1629 = vpack.c.b16 %v1535, %v1533
  %v1630 = vpack.c.b16 %v1538, %v1536
  %v1631 = vpack.c.b16 %v1539, %v1537
  %v1632 = vpack.c.b16 %v1542, %v1540
  %v1633 = vpack.c.b16 %v1543, %v1541
  %v1634 = vpack.c.b16 %v1546, %v1544
  %v1635 = vpack.c.b16 %v1547, %v1545
  %v1636 = vpack.c.b16 %v1550, %v1548
  %v1637 = vpack.c.b16 %v1551, %v1549
  %v1638 = vpack.c.b16 %v1554, %v1552
  %v1639 = vpack.c.b16 %v1555, %v1553
  %v1640 = vpack.c.b16 %v1558, %v1556
  %v1641 = vpack.c.b16 %v1559, %v1557
  %v1642 = vpack.c.b16 %v1562, %v1560
  %v1643 = vpack.c.b16 %v1563, %v1561
  %v1644 = vpack.c.b16 %v1566, %v1564
  %v1645 = vpack.c.b16 %v1567, %v1565
  %v1646 = vpack.c.b16 %v1570, %v1568
  %v1647 = vpack.c.b16 %v1571, %v1569
  %v1648 = vpack.c.b16 %v1574, %v1572
  %v1649 = vpack.c.b16 %v1575, %v1573
  %vm1722 = vcmask 646144
  %v1724 = vsel %vm1722, %v1279, 0
  %vm1726 = vcmask 1046528
  %vm1727 = vcmask 1047552
  %v1728 = vsel %vm1726, 4294967295, 65535
  %v1729 = vsel %vm1727, %v1728, 0
  %v1731 = vand.u32 %v1648, %v1729
  %v1734 = vand.u32 %v1649, %v1729
  %1736 = vmatprep.subr.bf16.mxu0 %v1577
  %1737 = vmatpush1.bf16.msra.mxu0 %v1576
  %1738 = vmatprep.subr.bf16.mxu0 %v1579
  %1739 = vmatpush1.bf16.msra.mxu0 %v1578
  %1740 = vmatprep.subr.bf16.mxu0 %v1581
  %1741 = vmatpush1.bf16.msra.mxu0 %v1580
  %1742 = vmatprep.subr.bf16.mxu0 %v1583
  %1743 = vmatpush1.bf16.msra.mxu0 %v1582
  %1744 = vmatprep.subr.bf16.mxu0 %v1585
  %1745 = vmatpush1.bf16.msra.mxu0 %v1584
  %1746 = vmatprep.subr.bf16.mxu0 %v1587
  %1747 = vmatpush1.bf16.msra.mxu0 %v1586
  %1748 = vmatprep.subr.bf16.mxu0 %v1589
  %1749 = vmatpush1.bf16.msra.mxu0 %v1588
  %1750 = vmatprep.subr.bf16.mxu0 %v1591
  %1751 = vmatpush1.bf16.msra.mxu0 %v1590
  %1752 = vmatprep.subr.bf16.mxu0 %v1593
  %1753 = vmatpush1.bf16.msra.mxu0 %v1592
  %1754 = vmatprep.subr.bf16.mxu0 %v1595
  %1755 = vmatpush1.bf16.msra.mxu0 %v1594
  %1756 = vmatprep.subr.bf16.mxu0 %v1597
  %1757 = vmatpush1.bf16.msra.mxu0 %v1596
  %1758 = vmatprep.subr.bf16.mxu0 %v1599
  %1759 = vmatpush1.bf16.msra.mxu0 %v1598
  %1760 = vmatprep.subr.bf16.mxu0 %v1601
  %1761 = vmatpush1.bf16.msra.mxu0 %v1600
  %1762 = vmatprep.subr.bf16.mxu0 %v1603
  %1763 = vmatpush1.bf16.msra.mxu0 %v1602
  %1764 = vmatprep.subr.bf16.mxu0 %v1605
  %1765 = vmatpush1.bf16.msra.mxu0 %v1604
  %1766 = vmatprep.subr.bf16.mxu0 %v1607
  %1767 = vmatpush1.bf16.msra.mxu0 %v1606
  %1768 = vmatprep.mubr.bf16.mxu0 %v1276
  %1769 = vmatmul.mubr.bf16.gmra.mrb[0].mxu0 %v1275
  %v1770 = vpop.f32.mrb[0].mxu0
  %v1771 = vadd.f32 0.0, %v1770
  %v1772 = vpop.f32.mrb[0].mxu0
  %v1773 = vadd.f32 0.0, %v1772
  %v1774 = vpop.f32.mrb[0].mxu0
  %v1775 = vpop.f32.mrb[0].mxu0
  %1776 = vdwg.mxu0
  %1777 = vmatprep.subr.bf16.mxu0 %v1609
  %1778 = vmatpush1.bf16.msra.mxu0 %v1608
  %1779 = vmatprep.subr.bf16.mxu0 %v1611
  %1780 = vmatpush1.bf16.msra.mxu0 %v1610
  %1781 = vmatprep.subr.bf16.mxu0 %v1613
  %1782 = vmatpush1.bf16.msra.mxu0 %v1612
  %1783 = vmatprep.subr.bf16.mxu0 %v1615
  %1784 = vmatpush1.bf16.msra.mxu0 %v1614
  %1785 = vmatprep.subr.bf16.mxu0 %v1617
  %1786 = vmatpush1.bf16.msra.mxu0 %v1616
  %1787 = vmatprep.subr.bf16.mxu0 %v1619
  %1788 = vmatpush1.bf16.msra.mxu0 %v1618
  %1789 = vmatprep.subr.bf16.mxu0 %v1621
  %1790 = vmatpush1.bf16.msra.mxu0 %v1620
  %1791 = vmatprep.subr.bf16.mxu0 %v1623
  %1792 = vmatpush1.bf16.msra.mxu0 %v1622
  %1793 = vmatprep.subr.bf16.mxu0 %v1625
  %1794 = vmatpush1.bf16.msra.mxu0 %v1624
  %1795 = vmatprep.subr.bf16.mxu0 %v1627
  %1796 = vmatpush1.bf16.msra.mxu0 %v1626
  %1797 = vmatprep.subr.bf16.mxu0 %v1629
  %1798 = vmatpush1.bf16.msra.mxu0 %v1628
  %1799 = vmatprep.subr.bf16.mxu0 %v1631
  %1800 = vmatpush1.bf16.msra.mxu0 %v1630
  %1801 = vmatprep.subr.bf16.mxu0 %v1633
  %1802 = vmatpush1.bf16.msra.mxu0 %v1632
  %1803 = vmatprep.subr.bf16.mxu0 %v1635
  %1804 = vmatpush1.bf16.msra.mxu0 %v1634
  %1805 = vmatprep.subr.bf16.mxu0 %v1637
  %1806 = vmatpush1.bf16.msra.mxu0 %v1636
  %1807 = vmatprep.subr.bf16.mxu0 %v1639
  %1808 = vmatpush1.bf16.msra.mxu0 %v1638
  %1809 = vmatprep.mubr.bf16.mxu0 %v1278
  %1810 = vmatmul.mubr.bf16.gmra.mrb[0].mxu0 %v1277
  %v1811 = vpop.f32.mrb[0].mxu0
  %v1812 = vadd.f32 %v1771, %v1811
  %v1813 = vpop.f32.mrb[0].mxu0
  %v1814 = vadd.f32 %v1773, %v1813
  %v1815 = vpop.f32.mrb[0].mxu0
  %v1816 = vpop.f32.mrb[0].mxu0
  %1817 = vdwg.mxu0
  %1818 = vmatprep.subr.bf16.mxu0 %v1641
  %1819 = vmatpush1.bf16.msra.mxu0 %v1640
  %1820 = vmatprep.subr.bf16.mxu0 %v1643
  %1821 = vmatpush1.bf16.msra.mxu0 %v1642
  %1822 = vmatprep.subr.bf16.mxu0 %v1645
  %1823 = vmatpush1.bf16.msra.mxu0 %v1644
  %1824 = vmatprep.subr.bf16.mxu0 %v1647
  %1825 = vmatpush1.bf16.msra.mxu0 %v1646
  %1826 = vmatprep.subr.bf16.mxu0 %v1734
  %1827 = vmatpush1.bf16.msra.mxu0 %v1731
  %1828 = vmatprep.subr.bf16.mxu0 0
  %1829 = vmatpush1.bf16.msra.mxu0 0
  %1830 = vmatprep.subr.bf16.mxu0 0
  %1831 = vmatpush1.bf16.msra.mxu0 0
  %1832 = vmatprep.subr.bf16.mxu0 0
  %1833 = vmatpush1.bf16.msra.mxu0 0
  %1834 = vmatprep.subr.bf16.mxu0 0
  %1835 = vmatpush1.bf16.msra.mxu0 0
  %1836 = vmatprep.subr.bf16.mxu0 0
  %1837 = vmatpush1.bf16.msra.mxu0 0
  %1838 = vmatprep.subr.bf16.mxu0 0
  %1839 = vmatpush1.bf16.msra.mxu0 0
  %1840 = vmatprep.subr.bf16.mxu0 0
  %1841 = vmatpush1.bf16.msra.mxu0 0
  %1842 = vmatprep.subr.bf16.mxu0 0
  %1843 = vmatpush1.bf16.msra.mxu0 0
  %1844 = vmatprep.subr.bf16.mxu0 0
  %1845 = vmatpush1.bf16.msra.mxu0 0
  %1846 = vmatprep.subr.bf16.mxu0 0
  %1847 = vmatpush1.bf16.msra.mxu0 0
  %1848 = vmatprep.subr.bf16.mxu0 0
  %1849 = vmatpush1.bf16.msra.mxu0 0
  %1850 = vmatprep.mubr.bf16.mxu0 0
  %1851 = vmatmul.mubr.bf16.gmra.mrb[0].mxu0 %v1724
  %v1852 = vpop.f32.mrb[0].mxu0
  %v1853 = vadd.f32 %v1812, %v1852
  %v1854 = vpop.f32.mrb[0].mxu0
  %v1855 = vadd.f32 %v1814, %v1854
  %v1856 = vpop.f32.mrb[0].mxu0
  %v1857 = vpop.f32.mrb[0].mxu0
  %1858 = vdwg.mxu0
  %v1859 = vld [vmem:[%s55] sm:$0x3]
  %v1860 = vld [vmem:[%s9] sm:$0xff]
  %v1861 = vld [vmem:[%s11] sm:$0xff]
  %v1862 = vsel %vm1032, %v1855, 0.0
  %v1863 = vadd.f32 %v1853, %v1862
  %1864 = vadd.xlane.f32.xlu0 %v1863
  %v1865 = vpop.xlane.xlu0 %1864
  %v1866 = vmul.f32 %v1865, 0.0078125
  %v1867 = vsub.f32 %v1853, %v1866
  %v1868 = vsub.f32 %v1855, %v1866
  %v1870 = vlaneseq
  %v1871 = vshrl.u32 %v1870, 7
  %v1872 = vsub.s32 0, %v1871
  %v1873 = vrot.slane %v1859, %v1872
  %v1874 = vlaneseq
  %v1875 = vshrl.u32 %v1874, 7
  %v1876 = vsub.s32 1, %v1875
  %v1877 = vrot.slane %v1859, %v1876
  %v1880 = vmul.f32 %v1867, %v1873
  %v1881 = vmul.f32 %v1868, %v1877
  %v1882 = vmul.f32 %v1880, %v1880
  %v1883 = vmul.f32 %v1881, %v1881
  %v1884 = vsel %vm1032, %v1883, 0.0
  %v1885 = vadd.f32 %v1882, %v1884
  %1886 = vadd.xlane.f32.xlu0 %v1885
  %v1887 = vpop.xlane.xlu0 %1886
  %v1888 = vmul.f32 %v1887, 0.0078125
  %v1889 = vadd.f32 %v1888, 1e-05
  %v1890 = vrsqrt.pop %v1889
  %v1891 = vmul.f32 %v1880, %v1890
  %v1892 = vmul.f32 %v1881, %v1890
  %1894 = vset.pattern.permute.xlu0 0
  %1895 = vperm.xlu0 %1894, %v1860
  %v1896 = vpop.permute.xlu0 %1895
  %v1898 = vmul.f32 %v1891, %v1896
  %v1899 = vmul.f32 %v1892, %v1896
  %1901 = vset.pattern.permute.xlu0 0
  %1902 = vperm.xlu0 %1901, %v1861
  %v1903 = vpop.permute.xlu0 %1902
  %v1905 = vadd.f32 %v1898, %v1903
  %v1906 = vadd.f32 %v1899, %v1903
  %v1907 = vmul.f32 %v1905, %v1873
  %v1908 = vmul.f32 %v1906, %v1877
  %1911 = vrot.lane.b32.xlu0 %v1907, 127
  %v1912 = vpop.permute.xlu0 %1911
  %1913 = vrot.lane.b32.xlu0 %v1908, 127
  %v1914 = vpop.permute.xlu0 %1913
  %v1915 = vsel %vm763, %v1912, %v1914
  %1918 = vrot.lane.b32.xlu0 %v1907, 126
  %v1919 = vpop.permute.xlu0 %1918
  %1920 = vrot.lane.b32.xlu0 %v1908, 126
  %v1921 = vpop.permute.xlu0 %1920
  %v1922 = vsel %vm783, %v1919, %v1921
  %1925 = vrot.lane.b32.xlu0 %v1907, 125
  %v1926 = vpop.permute.xlu0 %1925
  %1927 = vrot.lane.b32.xlu0 %v1908, 125
  %v1928 = vpop.permute.xlu0 %1927
  %v1929 = vsel %vm803, %v1926, %v1928
  %1932 = vrot.lane.b32.xlu0 %v1907, 118
  %v1933 = vpop.permute.xlu0 %1932
  %1934 = vrot.lane.b32.xlu0 %v1908, 118
  %v1935 = vpop.permute.xlu0 %1934
  %vm1936 = vcmask 965632
  %v1937 = vsel %vm1936, %v1933, %v1935
  %1940 = vrot.lane.b32.xlu0 %v1907, 117
  %v1941 = vpop.permute.xlu0 %1940
  %1942 = vrot.lane.b32.xlu0 %v1908, 117
  %v1943 = vpop.permute.xlu0 %1942
  %vm1944 = vcmask 957440
  %v1945 = vsel %vm1944, %v1941, %v1943
  %1948 = vrot.lane.b32.xlu0 %v1907, 116
  %v1949 = vpop.permute.xlu0 %1948
  %1950 = vrot.lane.b32.xlu0 %v1908, 116
  %v1951 = vpop.permute.xlu0 %1950
  %vm1952 = vcmask 949248
  %v1953 = vsel %vm1952, %v1949, %v1951
  %1956 = vrot.lane.b32.xlu0 %v1907, 115
  %v1957 = vpop.permute.xlu0 %1956
  %1958 = vrot.lane.b32.xlu0 %v1908, 115
  %v1959 = vpop.permute.xlu0 %1958
  %vm1960 = vcmask 941056
  %v1961 = vsel %vm1960, %v1957, %v1959
  %1964 = vrot.lane.b32.xlu0 %v1907, 108
  %v1965 = vpop.permute.xlu0 %1964
  %1966 = vrot.lane.b32.xlu0 %v1908, 108
  %v1967 = vpop.permute.xlu0 %1966
  %v1968 = vsel %vm863, %v1965, %v1967
  %1971 = vrot.lane.b32.xlu0 %v1907, 107
  %v1972 = vpop.permute.xlu0 %1971
  %1973 = vrot.lane.b32.xlu0 %v1908, 107
  %v1974 = vpop.permute.xlu0 %1973
  %v1975 = vsel %vm883, %v1972, %v1974
  %1978 = vrot.lane.b32.xlu0 %v1907, 106
  %v1979 = vpop.permute.xlu0 %1978
  %1980 = vrot.lane.b32.xlu0 %v1908, 106
  %v1981 = vpop.permute.xlu0 %1980
  %vm1982 = vcmask 867328
  %v1983 = vsel %vm1982, %v1979, %v1981
  %1986 = vrot.lane.b32.xlu0 %v1907, 105
  %v1987 = vpop.permute.xlu0 %1986
  %1988 = vrot.lane.b32.xlu0 %v1908, 105
  %v1989 = vpop.permute.xlu0 %1988
  %vm1990 = vcmask 859136
  %v1991 = vsel %vm1990, %v1987, %v1989
  %1994 = vrot.lane.b32.xlu0 %v1907, 98
  %v1995 = vpop.permute.xlu0 %1994
  %1996 = vrot.lane.b32.xlu0 %v1908, 98
  %v1997 = vpop.permute.xlu0 %1996
  %vm1998 = vcmask 801792
  %v1999 = vsel %vm1998, %v1995, %v1997
  %2002 = vrot.lane.b32.xlu0 %v1907, 97
  %v2003 = vpop.permute.xlu0 %2002
  %2004 = vrot.lane.b32.xlu0 %v1908, 97
  %v2005 = vpop.permute.xlu0 %2004
  %vm2006 = vcmask 793600
  %v2007 = vsel %vm2006, %v2003, %v2005
  %2010 = vrot.lane.b32.xlu0 %v1907, 96
  %v2011 = vpop.permute.xlu0 %2010
  %2012 = vrot.lane.b32.xlu0 %v1908, 96
  %v2013 = vpop.permute.xlu0 %2012
  %vm2014 = vcmask 785408
  %v2015 = vsel %vm2014, %v2011, %v2013
  %2018 = vrot.lane.b32.xlu0 %v1907, 95
  %v2019 = vpop.permute.xlu0 %2018
  %2020 = vrot.lane.b32.xlu0 %v1908, 95
  %v2021 = vpop.permute.xlu0 %2020
  %vm2022 = vcmask 777216
  %v2023 = vsel %vm2022, %v2019, %v2021
  %v2026 = vpack.c.bf16 %v1915, %v1907
  %v2027 = vpack.c.bf16 %v1914, %v1908
  %v2028 = vpack.c.bf16 %v1929, %v1922
  %v2029 = vpack.c.bf16 %v1928, %v1921
  %v2030 = vpack.c.bf16 %v1945, %v1937
  %v2031 = vpack.c.bf16 %v1943, %v1935
  %v2032 = vpack.c.bf16 %v1961, %v1953
  %v2033 = vpack.c.bf16 %v1959, %v1951
  %v2034 = vpack.c.bf16 %v1975, %v1968
  %v2035 = vpack.c.bf16 %v1974, %v1967
  %v2036 = vpack.c.bf16 %v1991, %v1983
  %v2037 = vpack.c.bf16 %v1989, %v1981
  %v2038 = vpack.c.bf16 %v2007, %v1999
  %v2039 = vpack.c.bf16 %v2005, %v1997
  %v2040 = vpack.c.bf16 %v2023, %v2015
  %v2041 = vpack.c.bf16 %v2021, %v2013
  %v2042 = vld [vmem:[%s13] sm:$0xf]
  %v2043 = vld [vmem:[%s13 + $0x4] sm:$0xf]
  %v2044 = vld [vmem:[%s15] sm:$0xff]
  %v2045 = vld [vmem:[%s15 + $0x8] sm:$0xff]
  %2047 = vset.pattern.permute.xlu0 0
  %2048 = vperm.xlu0 %2047, %v2044
  %v2049 = vpop.permute.xlu0 %2048
  %2052 = vset.pattern.permute.xlu0 0
  %2053 = vperm.xlu0 %2052, %v2045
  %v2054 = vpop.permute.xlu0 %2053
  %v2058 = vunpack.c.l.b16 %v2042
  %v2059 = vunpack.c.l.b16 %v2043
  %v2060 = vpack.c.b16 %v2059, %v2058
  %2062 = vmatprep.subr.bf16.mxu0 %v2027
  %2063 = vmatpush1.bf16.msra.mxu0 %v2026
  %2064 = vmatprep.subr.bf16.mxu0 %v2029
  %2065 = vmatpush1.bf16.msra.mxu0 %v2028
  %2066 = vmatprep.subr.bf16.mxu0 %v2031
  %2067 = vmatpush1.bf16.msra.mxu0 %v2030
  %2068 = vmatprep.subr.bf16.mxu0 %v2033
  %2069 = vmatpush1.bf16.msra.mxu0 %v2032
  %2070 = vmatprep.subr.bf16.mxu0 %v2035
  %2071 = vmatpush1.bf16.msra.mxu0 %v2034
  %2072 = vmatprep.subr.bf16.mxu0 %v2037
  %2073 = vmatpush1.bf16.msra.mxu0 %v2036
  %2074 = vmatprep.subr.bf16.mxu0 %v2039
  %2075 = vmatpush1.bf16.msra.mxu0 %v2038
  %2076 = vmatprep.subr.bf16.mxu0 %v2041
  %2077 = vmatpush1.bf16.msra.mxu0 %v2040
  %2078 = vmatprep.subr.bf16.mxu0 0
  %2079 = vmatpush1.bf16.msra.mxu0 0
  %2080 = vmatprep.subr.bf16.mxu0 0
  %2081 = vmatpush1.bf16.msra.mxu0 0
  %2082 = vmatprep.subr.bf16.mxu0 0
  %2083 = vmatpush1.bf16.msra.mxu0 0
  %2084 = vmatprep.subr.bf16.mxu0 0
  %2085 = vmatpush1.bf16.msra.mxu0 0
  %2086 = vmatprep.subr.bf16.mxu0 0
  %2087 = vmatpush1.bf16.msra.mxu0 0
  %2088 = vmatprep.subr.bf16.mxu0 0
  %2089 = vmatpush1.bf16.msra.mxu0 0
  %2090 = vmatprep.subr.bf16.mxu0 0
  %2091 = vmatpush1.bf16.msra.mxu0 0
  %2092 = vmatprep.subr.bf16.mxu0 0
  %2093 = vmatpush1.bf16.msra.mxu0 0
  %2094 = vmatprep.mubr.bf16.mxu0 0
  %2095 = vmatmul.mubr.bf16.gmra.mrb[0].mxu0 %v2060
  %v2096 = vpop.f32.mrb[0].mxu0
  %v2097 = vadd.f32 %v2049, %v2096
  %v2098 = vpop.f32.mrb[0].mxu0
  %v2099 = vadd.f32 %v2049, %v2098
  %v2100 = vpop.f32.mrb[0].mxu0
  %v2101 = vadd.f32 %v2054, %v2100
  %v2102 = vpop.f32.mrb[0].mxu0
  %v2103 = vadd.f32 %v2054, %v2102
  %2104 = vdwg.mxu0
  %vm2105 = vcmp.gt.f32.partialorder %v2097, 0.0
  %vm2106 = vcmp.gt.f32.partialorder %v2099, 0.0
  %vm2107 = vcmp.gt.f32.partialorder %v2101, 0.0
  %vm2108 = vcmp.gt.f32.partialorder %v2103, 0.0
  %v2109 = vmul.f32 %v2097, 0.2
  %v2110 = vmul.f32 %v2099, 0.2
  %v2111 = vmul.f32 %v2101, 0.2
  %v2112 = vmul.f32 %v2103, 0.2
  %v2113 = vsel %vm2105, %v2097, %v2109
  %v2114 = vsel %vm2106, %v2099, %v2110
  %v2115 = vsel %vm2107, %v2101, %v2111
  %v2116 = vsel %vm2108, %v2103, %v2112
  %v2117 = vpack.c.bf16 %v2115, %v2113
  %v2118 = vpack.c.bf16 %v2116, %v2114
  %v2119 = vld [vmem:[%s57] sm:$0xf]
  %v2120 = vld [vmem:[%s57 + $0x4] sm:$0xf]
  %v2121 = vld [vmem:[%s57 + $0x8] sm:$0xf]
  %v2122 = vld [vmem:[%s57 + $0xc] sm:$0xf]
  %v2123 = vld [vmem:[%s57 + $0x10] sm:$0xf]
  %v2124 = vld [vmem:[%s57 + $0x14] sm:$0xf]
  %v2125 = vld [vmem:[%s57 + $0x18] sm:$0xf]
  %v2126 = vld [vmem:[%s57 + $0x1c] sm:$0xf]
  %v2127 = vld [vmem:[%s57 + $0x20] sm:$0xf]
  %v2128 = vld [vmem:[%s57 + $0x24] sm:$0xf]
  %v2129 = vld [vmem:[%s57 + $0x28] sm:$0xf]
  %v2130 = vld [vmem:[%s57 + $0x2c] sm:$0xf]
  %v2131 = vld [vmem:[%s57 + $0x30] sm:$0xf]
  %v2132 = vld [vmem:[%s57 + $0x34] sm:$0xf]
  %v2133 = vld [vmem:[%s57 + $0x38] sm:$0xf]
  %v2134 = vld [vmem:[%s57 + $0x3c] sm:$0xf]
  %v2135 = vld [vmem:[%s57 + $0x40] sm:$0xf]
  %v2136 = vld [vmem:[%s57 + $0x44] sm:$0xf]
  %v2137 = vld [vmem:[%s57 + $0x48] sm:$0xf]
  %v2138 = vld [vmem:[%s57 + $0x4c] sm:$0xf]
  %v2139 = vld [vmem:[%s57 + $0x50] sm:$0xf]
  %v2161 = vunpack.c.l.b16 %v2119
  %v2162 = vunpack.c.l.b16 %v2120
  %v2163 = vunpack.c.l.b16 %v2121
  %v2164 = vunpack.c.l.b16 %v2122
  %v2165 = vunpack.c.l.b16 %v2123
  %v2166 = vunpack.c.l.b16 %v2124
  %v2167 = vunpack.c.l.b16 %v2125
  %v2168 = vunpack.c.l.b16 %v2126
  %v2169 = vunpack.c.l.b16 %v2127
  %v2170 = vunpack.c.l.b16 %v2128
  %v2171 = vunpack.c.l.b16 %v2129
  %v2172 = vunpack.c.l.b16 %v2130
  %v2173 = vunpack.c.l.b16 %v2131
  %v2174 = vunpack.c.l.b16 %v2132
  %v2175 = vunpack.c.l.b16 %v2133
  %v2176 = vunpack.c.l.b16 %v2134
  %v2177 = vunpack.c.l.b16 %v2135
  %v2178 = vunpack.c.l.b16 %v2136
  %v2179 = vunpack.c.l.b16 %v2137
  %v2180 = vunpack.c.l.b16 %v2138
  %v2181 = vunpack.c.l.b16 %v2139
  %v2182 = vpack.c.b16 %v2162, %v2161
  %v2183 = vpack.c.b16 %v2164, %v2163
  %v2184 = vpack.c.b16 %v2166, %v2165
  %v2185 = vpack.c.b16 %v2168, %v2167
  %v2186 = vpack.c.b16 %v2170, %v2169
  %v2187 = vpack.c.b16 %v2172, %v2171
  %v2188 = vpack.c.b16 %v2174, %v2173
  %v2189 = vpack.c.b16 %v2176, %v2175
  %v2190 = vpack.c.b16 %v2178, %v2177
  %v2191 = vpack.c.b16 %v2180, %v2179
  %v2192 = vpack.c.b16 %v2181, %v2181
  %vm2203 = vcmask 318464
  %v2205 = vsel %vm2203, %v2118, 0
  %vm2207 = vcmask 1042432
  %v2208 = vsel %vm2207, 4294967295, 65535
  %v2209 = vsel %vm1066, %v2208, 0
  %v2211 = vand.u32 %v2192, %v2209
  %2213 = vmatprep.subr.bf16.mxu0 0
  %2214 = vmatpush1.bf16.msra.mxu0 %v2182
  %2215 = vmatprep.subr.bf16.mxu0 0
  %2216 = vmatpush1.bf16.msra.mxu0 %v2183
  %2217 = vmatprep.subr.bf16.mxu0 0
  %2218 = vmatpush1.bf16.msra.mxu0 %v2184
  %2219 = vmatprep.subr.bf16.mxu0 0
  %2220 = vmatpush1.bf16.msra.mxu0 %v2185
  %2221 = vmatprep.subr.bf16.mxu0 0
  %2222 = vmatpush1.bf16.msra.mxu0 %v2186
  %2223 = vmatprep.subr.bf16.mxu0 0
  %2224 = vmatpush1.bf16.msra.mxu0 %v2187
  %2225 = vmatprep.subr.bf16.mxu0 0
  %2226 = vmatpush1.bf16.msra.mxu0 %v2188
  %2227 = vmatprep.subr.bf16.mxu0 0
  %2228 = vmatpush1.bf16.msra.mxu0 %v2189
  %2229 = vmatprep.subr.bf16.mxu0 0
  %2230 = vmatpush1.bf16.msra.mxu0 %v2190
  %2231 = vmatprep.subr.bf16.mxu0 0
  %2232 = vmatpush1.bf16.msra.mxu0 %v2191
  %2233 = vmatprep.subr.bf16.mxu0 0
  %2234 = vmatpush1.bf16.msra.mxu0 %v2211
  %2235 = vmatprep.subr.bf16.mxu0 0
  %2236 = vmatpush1.bf16.msra.mxu0 0
  %2237 = vmatprep.subr.bf16.mxu0 0
  %2238 = vmatpush1.bf16.msra.mxu0 0
  %2239 = vmatprep.subr.bf16.mxu0 0
  %2240 = vmatpush1.bf16.msra.mxu0 0
  %2241 = vmatprep.subr.bf16.mxu0 0
  %2242 = vmatpush1.bf16.msra.mxu0 0
  %2243 = vmatprep.subr.bf16.mxu0 0
  %2244 = vmatpush1.bf16.msra.mxu0 0
  %2245 = vmatprep.mubr.bf16.mxu0 %v2205
  %2246 = vmatmul.mubr.bf16.gmra.mrb[0].mxu0 %v2117
  %v2247 = vpop.f32.mrb[0].mxu0
  %v2248 = vadd.f32 0.0, %v2247
  %v2249 = vpop.f32.mrb[0].mxu0
  %v2250 = vpop.f32.mrb[0].mxu0
  %v2251 = vadd.f32 0.0, %v2250
  %v2252 = vpop.f32.mrb[0].mxu0
  %2253 = vdwg.mxu0
  %v2254 = vld [vmem:[%s59] sm:$0x1]
  %v2255 = vld [vmem:[%s17] sm:$0xff]
  %v2256 = vld [vmem:[%s17 + $0x8] sm:$0xff]
  %v2257 = vld [vmem:[%s19] sm:$0xff]
  %v2258 = vld [vmem:[%s19 + $0x8] sm:$0xff]
  %v2259 = vsel %vm1032, %v2248, 0.0
  %2260 = vadd.xlane.f32.xlu0 %v2259
  %v2261 = vpop.xlane.xlu0 %2260
  %v2262 = vsel %vm1032, %v2251, 0.0
  %2263 = vadd.xlane.f32.xlu0 %v2262
  %v2264 = vpop.xlane.xlu0 %2263
  %v2265 = vmul.f32 %v2261, 0.03125
  %v2266 = vmul.f32 %v2264, 0.03125
  %v2267 = vsub.f32 %v2248, %v2265
  %v2268 = vsub.f32 %v2251, %v2266
  %v2270 = vlaneseq
  %v2271 = vshrl.u32 %v2270, 7
  %v2272 = vsub.s32 0, %v2271
  %v2273 = vrot.slane %v2254, %v2272
  %v2275 = vmul.f32 %v2267, %v2273
  %v2276 = vmul.f32 %v2268, %v2273
  %v2277 = vmul.f32 %v2275, %v2275
  %v2278 = vmul.f32 %v2276, %v2276
  %v2279 = vsel %vm1032, %v2277, 0.0
  %2280 = vadd.xlane.f32.xlu0 %v2279
  %v2281 = vpop.xlane.xlu0 %2280
  %v2282 = vsel %vm1032, %v2278, 0.0
  %2283 = vadd.xlane.f32.xlu0 %v2282
  %v2284 = vpop.xlane.xlu0 %2283
  %v2285 = vmul.f32 %v2281, 0.03125
  %v2286 = vmul.f32 %v2284, 0.03125
  %v2287 = vadd.f32 %v2285, 1e-05
  %v2288 = vadd.f32 %v2286, 1e-05
  %v2289 = vrsqrt.pop %v2287
  %v2290 = vrsqrt.pop %v2288
  %v2291 = vmul.f32 %v2275, %v2289
  %v2292 = vmul.f32 %v2276, %v2290
  %2294 = vset.pattern.permute.xlu0 0
  %2295 = vperm.xlu0 %2294, %v2255
  %v2296 = vpop.permute.xlu0 %2295
  %2299 = vset.pattern.permute.xlu0 0
  %2300 = vperm.xlu0 %2299, %v2256
  %v2301 = vpop.permute.xlu0 %2300
  %v2303 = vmul.f32 %v2291, %v2296
  %v2304 = vmul.f32 %v2292, %v2301
  %2306 = vset.pattern.permute.xlu0 0
  %2307 = vperm.xlu0 %2306, %v2257
  %v2308 = vpop.permute.xlu0 %2307
  %2311 = vset.pattern.permute.xlu0 0
  %2312 = vperm.xlu0 %2311, %v2258
  %v2313 = vpop.permute.xlu0 %2312
  %v2315 = vadd.f32 %v2303, %v2308
  %v2316 = vadd.f32 %v2304, %v2313
  %v2317 = vmul.f32 %v2315, %v2273
  %v2318 = vmul.f32 %v2316, %v2273
  %2321 = vrot.lane.b32.xlu0 %v2317, 127
  %v2322 = vpop.permute.xlu0 %2321
  %2323 = vrot.lane.b32.xlu0 %v2318, 127
  %v2324 = vpop.permute.xlu0 %2323
  %2327 = vrot.lane.b32.xlu0 %v2317, 126
  %v2328 = vpop.permute.xlu0 %2327
  %2329 = vrot.lane.b32.xlu0 %v2318, 126
  %v2330 = vpop.permute.xlu0 %2329
  %2333 = vrot.lane.b32.xlu0 %v2317, 125
  %v2334 = vpop.permute.xlu0 %2333
  %2335 = vrot.lane.b32.xlu0 %v2318, 125
  %v2336 = vpop.permute.xlu0 %2335
  %2339 = vrot.lane.b32.xlu0 %v2317, 122
  %v2340 = vpop.permute.xlu0 %2339
  %2341 = vrot.lane.b32.xlu0 %v2318, 122
  %v2342 = vpop.permute.xlu0 %2341
  %2345 = vrot.lane.b32.xlu0 %v2317, 121
  %v2346 = vpop.permute.xlu0 %2345
  %2347 = vrot.lane.b32.xlu0 %v2318, 121
  %v2348 = vpop.permute.xlu0 %2347
  %2351 = vrot.lane.b32.xlu0 %v2317, 120
  %v2352 = vpop.permute.xlu0 %2351
  %2353 = vrot.lane.b32.xlu0 %v2318, 120
  %v2354 = vpop.permute.xlu0 %2353
  %2357 = vrot.lane.b32.xlu0 %v2317, 119
  %v2358 = vpop.permute.xlu0 %2357
  %2359 = vrot.lane.b32.xlu0 %v2318, 119
  %v2360 = vpop.permute.xlu0 %2359
  %2363 = vrot.lane.b32.xlu0 %v2317, 116
  %v2364 = vpop.permute.xlu0 %2363
  %2365 = vrot.lane.b32.xlu0 %v2318, 116
  %v2366 = vpop.permute.xlu0 %2365
  %2369 = vrot.lane.b32.xlu0 %v2317, 115
  %v2370 = vpop.permute.xlu0 %2369
  %2371 = vrot.lane.b32.xlu0 %v2318, 115
  %v2372 = vpop.permute.xlu0 %2371
  %2375 = vrot.lane.b32.xlu0 %v2317, 114
  %v2376 = vpop.permute.xlu0 %2375
  %2377 = vrot.lane.b32.xlu0 %v2318, 114
  %v2378 = vpop.permute.xlu0 %2377
  %2381 = vrot.lane.b32.xlu0 %v2317, 113
  %v2382 = vpop.permute.xlu0 %2381
  %2383 = vrot.lane.b32.xlu0 %v2318, 113
  %v2384 = vpop.permute.xlu0 %2383
  %2387 = vrot.lane.b32.xlu0 %v2317, 110
  %v2388 = vpop.permute.xlu0 %2387
  %2389 = vrot.lane.b32.xlu0 %v2318, 110
  %v2390 = vpop.permute.xlu0 %2389
  %2393 = vrot.lane.b32.xlu0 %v2317, 109
  %v2394 = vpop.permute.xlu0 %2393
  %2395 = vrot.lane.b32.xlu0 %v2318, 109
  %v2396 = vpop.permute.xlu0 %2395
  %2399 = vrot.lane.b32.xlu0 %v2317, 108
  %v2400 = vpop.permute.xlu0 %2399
  %2401 = vrot.lane.b32.xlu0 %v2318, 108
  %v2402 = vpop.permute.xlu0 %2401
  %2405 = vrot.lane.b32.xlu0 %v2317, 107
  %v2406 = vpop.permute.xlu0 %2405
  %2407 = vrot.lane.b32.xlu0 %v2318, 107
  %v2408 = vpop.permute.xlu0 %2407
  %v2411 = vpack.c.bf16 %v2318, %v2317
  %v2412 = vpack.c.bf16 %v2324, %v2322
  %v2413 = vpack.c.bf16 %v2330, %v2328
  %v2414 = vpack.c.bf16 %v2336, %v2334
  %v2415 = vpack.c.bf16 %v2342, %v2340
  %v2416 = vpack.c.bf16 %v2348, %v2346
  %v2417 = vpack.c.bf16 %v2354, %v2352
  %v2418 = vpack.c.bf16 %v2360, %v2358
  %v2419 = vpack.c.bf16 %v2366, %v2364
  %v2420 = vpack.c.bf16 %v2372, %v2370
  %v2421 = vpack.c.bf16 %v2378, %v2376
  %v2422 = vpack.c.bf16 %v2384, %v2382
  %v2423 = vpack.c.bf16 %v2390, %v2388
  %v2424 = vpack.c.bf16 %v2396, %v2394
  %v2425 = vpack.c.bf16 %v2402, %v2400
  %v2426 = vpack.c.bf16 %v2408, %v2406
  %v2427 = vld [vmem:[%s21] sm:$0xff]
  %v2428 = vld [vmem:[%s21 + $0x8] sm:$0xff]
  %v2429 = vld [vmem:[%s21 + $0x10] sm:$0xff]
  %v2430 = vld [vmem:[%s21 + $0x18] sm:$0xff]
  %v2431 = vld [vmem:[%s23] sm:$0xff]
  %v2432 = vld [vmem:[%s23 + $0x8] sm:$0xff]
  %v2433 = vld [vmem:[%s23 + $0x10] sm:$0xff]
  %v2434 = vld [vmem:[%s23 + $0x18] sm:$0xff]
  %2436 = vset.pattern.permute.xlu0 0
  %2437 = vperm.xlu0 %2436, %v2431
  %v2438 = vpop.permute.xlu0 %2437
  %2441 = vset.pattern.permute.xlu0 0
  %2442 = vperm.xlu0 %2441, %v2432
  %v2443 = vpop.permute.xlu0 %2442
  %2446 = vset.pattern.permute.xlu0 0
  %2447 = vperm.xlu0 %2446, %v2433
  %v2448 = vpop.permute.xlu0 %2447
  %2451 = vset.pattern.permute.xlu0 0
  %2452 = vperm.xlu0 %2451, %v2434
  %v2453 = vpop.permute.xlu0 %2452
  %v2459 = vunpack.c.l.b16 %v2427
  %v2460 = vunpack.c.h.b16 %v2427
  %v2461 = vunpack.c.l.b16 %v2428
  %v2462 = vunpack.c.h.b16 %v2428
  %v2463 = vunpack.c.l.b16 %v2429
  %v2464 = vunpack.c.h.b16 %v2429
  %v2465 = vunpack.c.l.b16 %v2430
  %v2466 = vunpack.c.h.b16 %v2430
  %v2467 = vpack.c.b16 %v2461, %v2459
  %v2468 = vpack.c.b16 %v2462, %v2460
  %v2469 = vpack.c.b16 %v2465, %v2463
  %v2470 = vpack.c.b16 %v2466, %v2464
  %2475 = vmatprep.subr.bf16.mxu0 0
  %2476 = vmatpush1.bf16.msra.mxu0 %v2411
  %2477 = vmatprep.subr.bf16.mxu0 0
  %2478 = vmatpush1.bf16.msra.mxu0 %v2412
  %2479 = vmatprep.subr.bf16.mxu0 0
  %2480 = vmatpush1.bf16.msra.mxu0 %v2413
  %2481 = vmatprep.subr.bf16.mxu0 0
  %2482 = vmatpush1.bf16.msra.mxu0 %v2414
  %2483 = vmatprep.subr.bf16.mxu0 0
  %2484 = vmatpush1.bf16.msra.mxu0 %v2415
  %2485 = vmatprep.subr.bf16.mxu0 0
  %2486 = vmatpush1.bf16.msra.mxu0 %v2416
  %2487 = vmatprep.subr.bf16.mxu0 0
  %2488 = vmatpush1.bf16.msra.mxu0 %v2417
  %2489 = vmatprep.subr.bf16.mxu0 0
  %2490 = vmatpush1.bf16.msra.mxu0 %v2418
  %2491 = vmatprep.subr.bf16.mxu0 0
  %2492 = vmatpush1.bf16.msra.mxu0 %v2419
  %2493 = vmatprep.subr.bf16.mxu0 0
  %2494 = vmatpush1.bf16.msra.mxu0 %v2420
  %2495 = vmatprep.subr.bf16.mxu0 0
  %2496 = vmatpush1.bf16.msra.mxu0 %v2421
  %2497 = vmatprep.subr.bf16.mxu0 0
  %2498 = vmatpush1.bf16.msra.mxu0 %v2422
  %2499 = vmatprep.subr.bf16.mxu0 0
  %2500 = vmatpush1.bf16.msra.mxu0 %v2423
  %2501 = vmatprep.subr.bf16.mxu0 0
  %2502 = vmatpush1.bf16.msra.mxu0 %v2424
  %2503 = vmatprep.subr.bf16.mxu0 0
  %2504 = vmatpush1.bf16.msra.mxu0 %v2425
  %2505 = vmatprep.subr.bf16.mxu0 0
  %2506 = vmatpush1.bf16.msra.mxu0 %v2426
  %2507 = vmatprep.mubr.bf16.mxu0 %v2468
  %2508 = vmatmul.mubr.bf16.gmra.mrb[0].mxu0 %v2467
  %v2509 = vpop.f32.mrb[0].mxu0
  %v2510 = vadd.f32 %v2438, %v2509
  %v2511 = vpop.f32.mrb[0].mxu0
  %v2512 = vpop.f32.mrb[0].mxu0
  %v2513 = vadd.f32 %v2443, %v2512
  %v2514 = vpop.f32.mrb[0].mxu0
  %2515 = vmatprep.mubr.bf16.mxu0 %v2470
  %2516 = vmatmul.mubr.bf16.gmra.mrb[0].mxu0 %v2469
  %v2517 = vpop.f32.mrb[0].mxu0
  %v2518 = vadd.f32 %v2448, %v2517
  %v2519 = vpop.f32.mrb[0].mxu0
  %v2520 = vpop.f32.mrb[0].mxu0
  %v2521 = vadd.f32 %v2453, %v2520
  %v2522 = vpop.f32.mrb[0].mxu0
  %2523 = vdwg.mxu0
  %vm2524 = vcmp.gt.f32.partialorder %v2510, 0.0
  %vm2525 = vcmp.gt.f32.partialorder %v2513, 0.0
  %vm2526 = vcmp.gt.f32.partialorder %v2518, 0.0
  %vm2527 = vcmp.gt.f32.partialorder %v2521, 0.0
  %v2528 = vmul.f32 %v2510, 0.2
  %v2529 = vmul.f32 %v2513, 0.2
  %v2530 = vmul.f32 %v2518, 0.2
  %v2531 = vmul.f32 %v2521, 0.2
  %v2532 = vsel %vm2524, %v2510, %v2528
  %v2533 = vsel %vm2525, %v2513, %v2529
  %v2534 = vsel %vm2526, %v2518, %v2530
  %v2535 = vsel %vm2527, %v2521, %v2531
  %v2536 = vpack.c.bf16 %v2533, %v2532
  %v2537 = vpack.c.bf16 %v2535, %v2534
  %v2538 = vld [vmem:[%s61] sm:$0xf]
  %v2539 = vld [vmem:[%s61 + $0x4] sm:$0xf]
  %v2540 = vld [vmem:[%s61 + $0x8] sm:$0xf]
  %v2541 = vld [vmem:[%s61 + $0xc] sm:$0xf]
  %v2542 = vld [vmem:[%s61 + $0x10] sm:$0xf]
  %v2543 = vld [vmem:[%s61 + $0x14] sm:$0xf]
  %v2544 = vld [vmem:[%s61 + $0x18] sm:$0x3]
  %v2552 = vunpack.c.l.b16 %v2538
  %v2553 = vunpack.c.l.b16 %v2539
  %v2554 = vunpack.c.l.b16 %v2540
  %v2555 = vunpack.c.l.b16 %v2541
  %v2556 = vunpack.c.l.b16 %v2542
  %v2557 = vunpack.c.l.b16 %v2543
  %v2558 = vunpack.c.l.b16 %v2544
  %v2559 = vpack.c.b16 %v2553, %v2552
  %v2560 = vpack.c.b16 %v2555, %v2554
  %v2561 = vpack.c.b16 %v2557, %v2556
  %v2562 = vpack.c.b16 %v2558, %v2558
  %vm2566 = vcmask 416768
  %v2568 = vsel %vm2566, %v2536, 0
  %v2571 = vsel %vm2566, %v2537, 0
  %vm2573 = vcmask 1040384
  %vm2574 = vcmask 1041408
  %v2575 = vsel %vm2573, 4294967295, 65535
  %v2576 = vsel %vm2574, %v2575, 0
  %v2578 = vand.u32 %v2562, %v2576
  %2580 = vmatprep.subr.bf16.mxu0 0
  %2581 = vmatpush1.bf16.msra.mxu0 %v2559
  %2582 = vmatprep.subr.bf16.mxu0 0
  %2583 = vmatpush1.bf16.msra.mxu0 %v2560
  %2584 = vmatprep.subr.bf16.mxu0 0
  %2585 = vmatpush1.bf16.msra.mxu0 %v2561
  %2586 = vmatprep.subr.bf16.mxu0 0
  %2587 = vmatpush1.bf16.msra.mxu0 %v2578
  %2588 = vmatprep.subr.bf16.mxu0 0
  %2589 = vmatpush1.bf16.msra.mxu0 0
  %2590 = vmatprep.subr.bf16.mxu0 0
  %2591 = vmatpush1.bf16.msra.mxu0 0
  %2592 = vmatprep.subr.bf16.mxu0 0
  %2593 = vmatpush1.bf16.msra.mxu0 0
  %2594 = vmatprep.subr.bf16.mxu0 0
  %2595 = vmatpush1.bf16.msra.mxu0 0
  %2596 = vmatprep.subr.bf16.mxu0 0
  %2597 = vmatpush1.bf16.msra.mxu0 0
  %2598 = vmatprep.subr.bf16.mxu0 0
  %2599 = vmatpush1.bf16.msra.mxu0 0
  %2600 = vmatprep.subr.bf16.mxu0 0
  %2601 = vmatpush1.bf16.msra.mxu0 0
  %2602 = vmatprep.subr.bf16.mxu0 0
  %2603 = vmatpush1.bf16.msra.mxu0 0
  %2604 = vmatprep.subr.bf16.mxu0 0
  %2605 = vmatpush1.bf16.msra.mxu0 0
  %2606 = vmatprep.subr.bf16.mxu0 0
  %2607 = vmatpush1.bf16.msra.mxu0 0
  %2608 = vmatprep.subr.bf16.mxu0 0
  %2609 = vmatpush1.bf16.msra.mxu0 0
  %2610 = vmatprep.subr.bf16.mxu0 0
  %2611 = vmatpush1.bf16.msra.mxu0 0
  %2612 = vmatprep.mubr.bf16.mxu0 0
  %2613 = vmatmul.mubr.bf16.gmra.mrb[0].mxu0 %v2568
  %v2614 = vpop.f32.mrb[0].mxu0
  %v2615 = vadd.f32 0.0, %v2614
  %v2616 = vpop.f32.mrb[0].mxu0
  %v2617 = vpop.f32.mrb[0].mxu0
  %v2618 = vadd.f32 0.0, %v2617
  %v2619 = vpop.f32.mrb[0].mxu0
  %2620 = vmatprep.mubr.bf16.mxu0 0
  %2621 = vmatmul.mubr.bf16.gmra.mrb[0].mxu0 %v2571
  %v2622 = vpop.f32.mrb[0].mxu0
  %v2623 = vadd.f32 0.0, %v2622
  %v2624 = vpop.f32.mrb[0].mxu0
  %v2625 = vpop.f32.mrb[0].mxu0
  %v2626 = vadd.f32 0.0, %v2625
  %v2627 = vpop.f32.mrb[0].mxu0
  %2628 = vdwg.mxu0
  %v2629 = vld [vmem:[%s63] sm:$0x1]
  %v2630 = vld [vmem:[%s25] sm:$0xff]
  %v2631 = vld [vmem:[%s25 + $0x8] sm:$0xff]
  %v2632 = vld [vmem:[%s25 + $0x10] sm:$0xff]
  %v2633 = vld [vmem:[%s25 + $0x18] sm:$0xff]
  %v2634 = vld [vmem:[%s27] sm:$0xff]
  %v2635 = vld [vmem:[%s27 + $0x8] sm:$0xff]
  %v2636 = vld [vmem:[%s27 + $0x10] sm:$0xff]
  %v2637 = vld [vmem:[%s27 + $0x18] sm:$0xff]
  %vm2638 = vcmask 261120
  %v2639 = vsel %vm2638, %v2615, 0.0
  %2640 = vadd.xlane.f32.xlu0 %v2639
  %v2641 = vpop.xlane.xlu0 %2640
  %v2642 = vsel %vm2638, %v2618, 0.0
  %2643 = vadd.xlane.f32.xlu0 %v2642
  %v2644 = vpop.xlane.xlu0 %2643
  %v2645 = vsel %vm2638, %v2623, 0.0
  %2646 = vadd.xlane.f32.xlu0 %v2645
  %v2647 = vpop.xlane.xlu0 %2646
  %v2648 = vsel %vm2638, %v2626, 0.0
  %2649 = vadd.xlane.f32.xlu0 %v2648
  %v2650 = vpop.xlane.xlu0 %2649
  %v2651 = vmul.f32 %v2641, 0.125
  %v2652 = vmul.f32 %v2644, 0.125
  %v2653 = vmul.f32 %v2647, 0.125
  %v2654 = vmul.f32 %v2650, 0.125
  %v2655 = vsub.f32 %v2615, %v2651
  %v2656 = vsub.f32 %v2618, %v2652
  %v2657 = vsub.f32 %v2623, %v2653
  %v2658 = vsub.f32 %v2626, %v2654
  %v2660 = vlaneseq
  %v2661 = vshrl.u32 %v2660, 7
  %v2662 = vsub.s32 0, %v2661
  %v2663 = vrot.slane %v2629, %v2662
  %v2665 = vmul.f32 %v2655, %v2663
  %v2666 = vmul.f32 %v2656, %v2663
  %v2667 = vmul.f32 %v2657, %v2663
  %v2668 = vmul.f32 %v2658, %v2663
  %v2669 = vmul.f32 %v2665, %v2665
  %v2670 = vmul.f32 %v2666, %v2666
  %v2671 = vmul.f32 %v2667, %v2667
  %v2672 = vmul.f32 %v2668, %v2668
  %v2673 = vsel %vm2638, %v2669, 0.0
  %2674 = vadd.xlane.f32.xlu0 %v2673
  %v2675 = vpop.xlane.xlu0 %2674
  %v2676 = vsel %vm2638, %v2670, 0.0
  %2677 = vadd.xlane.f32.xlu0 %v2676
  %v2678 = vpop.xlane.xlu0 %2677
  %v2679 = vsel %vm2638, %v2671, 0.0
  %2680 = vadd.xlane.f32.xlu0 %v2679
  %v2681 = vpop.xlane.xlu0 %2680
  %v2682 = vsel %vm2638, %v2672, 0.0
  %2683 = vadd.xlane.f32.xlu0 %v2682
  %v2684 = vpop.xlane.xlu0 %2683
  %v2685 = vmul.f32 %v2675, 0.125
  %v2686 = vmul.f32 %v2678, 0.125
  %v2687 = vmul.f32 %v2681, 0.125
  %v2688 = vmul.f32 %v2684, 0.125
  %v2689 = vadd.f32 %v2685, 1e-05
  %v2690 = vadd.f32 %v2686, 1e-05
  %v2691 = vadd.f32 %v2687, 1e-05
  %v2692 = vadd.f32 %v2688, 1e-05
  %v2693 = vrsqrt.pop %v2689
  %v2694 = vrsqrt.pop %v2690
  %v2695 = vrsqrt.pop %v2691
  %v2696 = vrsqrt.pop %v2692
  %v2697 = vmul.f32 %v2665, %v2693
  %v2698 = vmul.f32 %v2666, %v2694
  %v2699 = vmul.f32 %v2667, %v2695
  %v2700 = vmul.f32 %v2668, %v2696
  %2702 = vset.pattern.permute.xlu0 0
  %2703 = vperm.xlu0 %2702, %v2630
  %v2704 = vpop.permute.xlu0 %2703
  %2707 = vset.pattern.permute.xlu0 0
  %2708 = vperm.xlu0 %2707, %v2631
  %v2709 = vpop.permute.xlu0 %2708
  %2712 = vset.pattern.permute.xlu0 0
  %2713 = vperm.xlu0 %2712, %v2632
  %v2714 = vpop.permute.xlu0 %2713
  %2717 = vset.pattern.permute.xlu0 0
  %2718 = vperm.xlu0 %2717, %v2633
  %v2719 = vpop.permute.xlu0 %2718
  %v2721 = vmul.f32 %v2697, %v2704
  %v2722 = vmul.f32 %v2698, %v2709
  %v2723 = vmul.f32 %v2699, %v2714
  %v2724 = vmul.f32 %v2700, %v2719
  %2726 = vset.pattern.permute.xlu0 0
  %2727 = vperm.xlu0 %2726, %v2634
  %v2728 = vpop.permute.xlu0 %2727
  %2731 = vset.pattern.permute.xlu0 0
  %2732 = vperm.xlu0 %2731, %v2635
  %v2733 = vpop.permute.xlu0 %2732
  %2736 = vset.pattern.permute.xlu0 0
  %2737 = vperm.xlu0 %2736, %v2636
  %v2738 = vpop.permute.xlu0 %2737
  %2741 = vset.pattern.permute.xlu0 0
  %2742 = vperm.xlu0 %2741, %v2637
  %v2743 = vpop.permute.xlu0 %2742
  %v2745 = vadd.f32 %v2721, %v2728
  %v2746 = vadd.f32 %v2722, %v2733
  %v2747 = vadd.f32 %v2723, %v2738
  %v2748 = vadd.f32 %v2724, %v2743
  %v2749 = vmul.f32 %v2745, %v2663
  %v2750 = vmul.f32 %v2746, %v2663
  %v2751 = vmul.f32 %v2747, %v2663
  %v2752 = vmul.f32 %v2748, %v2663
  %2757 = vrot.lane.b32.xlu0 %v2749, 127
  %v2758 = vpop.permute.xlu0 %2757
  %2759 = vrot.lane.b32.xlu0 %v2750, 127
  %v2760 = vpop.permute.xlu0 %2759
  %2761 = vrot.lane.b32.xlu0 %v2751, 127
  %v2762 = vpop.permute.xlu0 %2761
  %2763 = vrot.lane.b32.xlu0 %v2752, 127
  %v2764 = vpop.permute.xlu0 %2763
  %2769 = vrot.lane.b32.xlu0 %v2749, 126
  %v2770 = vpop.permute.xlu0 %2769
  %2771 = vrot.lane.b32.xlu0 %v2750, 126
  %v2772 = vpop.permute.xlu0 %2771
  %2773 = vrot.lane.b32.xlu0 %v2751, 126
  %v2774 = vpop.permute.xlu0 %2773
  %2775 = vrot.lane.b32.xlu0 %v2752, 126
  %v2776 = vpop.permute.xlu0 %2775
  %2781 = vrot.lane.b32.xlu0 %v2749, 125
  %v2782 = vpop.permute.xlu0 %2781
  %2783 = vrot.lane.b32.xlu0 %v2750, 125
  %v2784 = vpop.permute.xlu0 %2783
  %2785 = vrot.lane.b32.xlu0 %v2751, 125
  %v2786 = vpop.permute.xlu0 %2785
  %2787 = vrot.lane.b32.xlu0 %v2752, 125
  %v2788 = vpop.permute.xlu0 %2787
  %2793 = vrot.lane.b32.xlu0 %v2749, 124
  %v2794 = vpop.permute.xlu0 %2793
  %2795 = vrot.lane.b32.xlu0 %v2750, 124
  %v2796 = vpop.permute.xlu0 %2795
  %2797 = vrot.lane.b32.xlu0 %v2751, 124
  %v2798 = vpop.permute.xlu0 %2797
  %2799 = vrot.lane.b32.xlu0 %v2752, 124
  %v2800 = vpop.permute.xlu0 %2799
  %2805 = vrot.lane.b32.xlu0 %v2749, 123
  %v2806 = vpop.permute.xlu0 %2805
  %2807 = vrot.lane.b32.xlu0 %v2750, 123
  %v2808 = vpop.permute.xlu0 %2807
  %2809 = vrot.lane.b32.xlu0 %v2751, 123
  %v2810 = vpop.permute.xlu0 %2809
  %2811 = vrot.lane.b32.xlu0 %v2752, 123
  %v2812 = vpop.permute.xlu0 %2811
  %2817 = vrot.lane.b32.xlu0 %v2749, 122
  %v2818 = vpop.permute.xlu0 %2817
  %2819 = vrot.lane.b32.xlu0 %v2750, 122
  %v2820 = vpop.permute.xlu0 %2819
  %2821 = vrot.lane.b32.xlu0 %v2751, 122
  %v2822 = vpop.permute.xlu0 %2821
  %2823 = vrot.lane.b32.xlu0 %v2752, 122
  %v2824 = vpop.permute.xlu0 %2823
  %2829 = vrot.lane.b32.xlu0 %v2749, 121
  %v2830 = vpop.permute.xlu0 %2829
  %2831 = vrot.lane.b32.xlu0 %v2750, 121
  %v2832 = vpop.permute.xlu0 %2831
  %2833 = vrot.lane.b32.xlu0 %v2751, 121
  %v2834 = vpop.permute.xlu0 %2833
  %2835 = vrot.lane.b32.xlu0 %v2752, 121
  %v2836 = vpop.permute.xlu0 %2835
  %2841 = vrot.lane.b32.xlu0 %v2749, 120
  %v2842 = vpop.permute.xlu0 %2841
  %2843 = vrot.lane.b32.xlu0 %v2750, 120
  %v2844 = vpop.permute.xlu0 %2843
  %2845 = vrot.lane.b32.xlu0 %v2751, 120
  %v2846 = vpop.permute.xlu0 %2845
  %2847 = vrot.lane.b32.xlu0 %v2752, 120
  %v2848 = vpop.permute.xlu0 %2847
  %2853 = vrot.lane.b32.xlu0 %v2749, 119
  %v2854 = vpop.permute.xlu0 %2853
  %2855 = vrot.lane.b32.xlu0 %v2750, 119
  %v2856 = vpop.permute.xlu0 %2855
  %2857 = vrot.lane.b32.xlu0 %v2751, 119
  %v2858 = vpop.permute.xlu0 %2857
  %2859 = vrot.lane.b32.xlu0 %v2752, 119
  %v2860 = vpop.permute.xlu0 %2859
  %2865 = vrot.lane.b32.xlu0 %v2749, 118
  %v2866 = vpop.permute.xlu0 %2865
  %2867 = vrot.lane.b32.xlu0 %v2750, 118
  %v2868 = vpop.permute.xlu0 %2867
  %2869 = vrot.lane.b32.xlu0 %v2751, 118
  %v2870 = vpop.permute.xlu0 %2869
  %2871 = vrot.lane.b32.xlu0 %v2752, 118
  %v2872 = vpop.permute.xlu0 %2871
  %2877 = vrot.lane.b32.xlu0 %v2749, 117
  %v2878 = vpop.permute.xlu0 %2877
  %2879 = vrot.lane.b32.xlu0 %v2750, 117
  %v2880 = vpop.permute.xlu0 %2879
  %2881 = vrot.lane.b32.xlu0 %v2751, 117
  %v2882 = vpop.permute.xlu0 %2881
  %2883 = vrot.lane.b32.xlu0 %v2752, 117
  %v2884 = vpop.permute.xlu0 %2883
  %2889 = vrot.lane.b32.xlu0 %v2749, 116
  %v2890 = vpop.permute.xlu0 %2889
  %2891 = vrot.lane.b32.xlu0 %v2750, 116
  %v2892 = vpop.permute.xlu0 %2891
  %2893 = vrot.lane.b32.xlu0 %v2751, 116
  %v2894 = vpop.permute.xlu0 %2893
  %2895 = vrot.lane.b32.xlu0 %v2752, 116
  %v2896 = vpop.permute.xlu0 %2895
  %2901 = vrot.lane.b32.xlu0 %v2749, 115
  %v2902 = vpop.permute.xlu0 %2901
  %2903 = vrot.lane.b32.xlu0 %v2750, 115
  %v2904 = vpop.permute.xlu0 %2903
  %2905 = vrot.lane.b32.xlu0 %v2751, 115
  %v2906 = vpop.permute.xlu0 %2905
  %2907 = vrot.lane.b32.xlu0 %v2752, 115
  %v2908 = vpop.permute.xlu0 %2907
  %2913 = vrot.lane.b32.xlu0 %v2749, 114
  %v2914 = vpop.permute.xlu0 %2913
  %2915 = vrot.lane.b32.xlu0 %v2750, 114
  %v2916 = vpop.permute.xlu0 %2915
  %2917 = vrot.lane.b32.xlu0 %v2751, 114
  %v2918 = vpop.permute.xlu0 %2917
  %2919 = vrot.lane.b32.xlu0 %v2752, 114
  %v2920 = vpop.permute.xlu0 %2919
  %2925 = vrot.lane.b32.xlu0 %v2749, 113
  %v2926 = vpop.permute.xlu0 %2925
  %2927 = vrot.lane.b32.xlu0 %v2750, 113
  %v2928 = vpop.permute.xlu0 %2927
  %2929 = vrot.lane.b32.xlu0 %v2751, 113
  %v2930 = vpop.permute.xlu0 %2929
  %2931 = vrot.lane.b32.xlu0 %v2752, 113
  %v2932 = vpop.permute.xlu0 %2931
  %v2937 = vpack.c.bf16 %v2750, %v2749
  %v2938 = vpack.c.bf16 %v2752, %v2751
  %v2939 = vpack.c.bf16 %v2760, %v2758
  %v2940 = vpack.c.bf16 %v2764, %v2762
  %v2941 = vpack.c.bf16 %v2772, %v2770
  %v2942 = vpack.c.bf16 %v2776, %v2774
  %v2943 = vpack.c.bf16 %v2784, %v2782
  %v2944 = vpack.c.bf16 %v2788, %v2786
  %v2945 = vpack.c.bf16 %v2796, %v2794
  %v2946 = vpack.c.bf16 %v2800, %v2798
  %v2947 = vpack.c.bf16 %v2808, %v2806
  %v2948 = vpack.c.bf16 %v2812, %v2810
  %v2949 = vpack.c.bf16 %v2820, %v2818
  %v2950 = vpack.c.bf16 %v2824, %v2822
  %v2951 = vpack.c.bf16 %v2832, %v2830
  %v2952 = vpack.c.bf16 %v2836, %v2834
  %v2953 = vpack.c.bf16 %v2844, %v2842
  %v2954 = vpack.c.bf16 %v2848, %v2846
  %v2955 = vpack.c.bf16 %v2856, %v2854
  %v2956 = vpack.c.bf16 %v2860, %v2858
  %v2957 = vpack.c.bf16 %v2868, %v2866
  %v2958 = vpack.c.bf16 %v2872, %v2870
  %v2959 = vpack.c.bf16 %v2880, %v2878
  %v2960 = vpack.c.bf16 %v2884, %v2882
  %v2961 = vpack.c.bf16 %v2892, %v2890
  %v2962 = vpack.c.bf16 %v2896, %v2894
  %v2963 = vpack.c.bf16 %v2904, %v2902
  %v2964 = vpack.c.bf16 %v2908, %v2906
  %v2965 = vpack.c.bf16 %v2916, %v2914
  %v2966 = vpack.c.bf16 %v2920, %v2918
  %v2967 = vpack.c.bf16 %v2928, %v2926
  %v2968 = vpack.c.bf16 %v2932, %v2930
  %v2969 = vld [vmem:[%s29] sm:$0xff]
  %v2970 = vld [vmem:[%s29 + $0x8] sm:$0xff]
  %v2971 = vld [vmem:[%s29 + $0x10] sm:$0xff]
  %v2972 = vld [vmem:[%s29 + $0x18] sm:$0xff]
  %v2973 = vld [vmem:[%s29 + $0x20] sm:$0xff]
  %v2974 = vld [vmem:[%s29 + $0x28] sm:$0xff]
  %v2975 = vld [vmem:[%s29 + $0x30] sm:$0xff]
  %v2976 = vld [vmem:[%s29 + $0x38] sm:$0xff]
  %v2977 = vld [vmem:[%s29 + $0x40] sm:$0xff]
  %v2978 = vld [vmem:[%s29 + $0x48] sm:$0xff]
  %v2979 = vld [vmem:[%s29 + $0x50] sm:$0xff]
  %v2980 = vld [vmem:[%s29 + $0x58] sm:$0xff]
  %v2981 = vld [vmem:[%s29 + $0x60] sm:$0xff]
  %v2982 = vld [vmem:[%s29 + $0x68] sm:$0xff]
  %v2983 = vld [vmem:[%s29 + $0x70] sm:$0xff]
  %v2984 = vld [vmem:[%s29 + $0x78] sm:$0xff]
  %v2985 = vld [vmem:[%s31] sm:$0xff]
  %v2986 = vld [vmem:[%s31 + $0x8] sm:$0xff]
  %v2987 = vld [vmem:[%s31 + $0x10] sm:$0xff]
  %v2988 = vld [vmem:[%s31 + $0x18] sm:$0xff]
  %v2989 = vld [vmem:[%s31 + $0x20] sm:$0xff]
  %v2990 = vld [vmem:[%s31 + $0x28] sm:$0xff]
  %v2991 = vld [vmem:[%s31 + $0x30] sm:$0xff]
  %v2992 = vld [vmem:[%s31 + $0x38] sm:$0xff]
  %2994 = vset.pattern.permute.xlu0 0
  %2995 = vperm.xlu0 %2994, %v2985
  %v2996 = vpop.permute.xlu0 %2995
  %2999 = vset.pattern.permute.xlu0 0
  %3000 = vperm.xlu0 %2999, %v2986
  %v3001 = vpop.permute.xlu0 %3000
  %3004 = vset.pattern.permute.xlu0 0
  %3005 = vperm.xlu0 %3004, %v2987
  %v3006 = vpop.permute.xlu0 %3005
  %3009 = vset.pattern.permute.xlu0 0
  %3010 = vperm.xlu0 %3009, %v2988
  %v3011 = vpop.permute.xlu0 %3010
  %3014 = vset.pattern.permute.xlu0 0
  %3015 = vperm.xlu0 %3014, %v2989
  %v3016 = vpop.permute.xlu0 %3015
  %3019 = vset.pattern.permute.xlu0 0
  %3020 = vperm.xlu0 %3019, %v2990
  %v3021 = vpop.permute.xlu0 %3020
  %3024 = vset.pattern.permute.xlu0 0
  %3025 = vperm.xlu0 %3024, %v2991
  %v3026 = vpop.permute.xlu0 %3025
  %3029 = vset.pattern.permute.xlu0 0
  %3030 = vperm.xlu0 %3029, %v2992
  %v3031 = vpop.permute.xlu0 %3030
  %v3049 = vunpack.c.l.b16 %v2969
  %v3050 = vunpack.c.h.b16 %v2969
  %v3051 = vunpack.c.l.b16 %v2970
  %v3052 = vunpack.c.h.b16 %v2970
  %v3053 = vunpack.c.l.b16 %v2971
  %v3054 = vunpack.c.h.b16 %v2971
  %v3055 = vunpack.c.l.b16 %v2972
  %v3056 = vunpack.c.h.b16 %v2972
  %v3057 = vunpack.c.l.b16 %v2973
  %v3058 = vunpack.c.h.b16 %v2973
  %v3059 = vunpack.c.l.b16 %v2974
  %v3060 = vunpack.c.h.b16 %v2974
  %v3061 = vunpack.c.l.b16 %v2975
  %v3062 = vunpack.c.h.b16 %v2975
  %v3063 = vunpack.c.l.b16 %v2976
  %v3064 = vunpack.c.h.b16 %v2976
  %v3065 = vunpack.c.l.b16 %v2977
  %v3066 = vunpack.c.h.b16 %v2977
  %v3067 = vunpack.c.l.b16 %v2978
  %v3068 = vunpack.c.h.b16 %v2978
  %v3069 = vunpack.c.l.b16 %v2979
  %v3070 = vunpack.c.h.b16 %v2979
  %v3071 = vunpack.c.l.b16 %v2980
  %v3072 = vunpack.c.h.b16 %v2980
  %v3073 = vunpack.c.l.b16 %v2981
  %v3074 = vunpack.c.h.b16 %v2981
  %v3075 = vunpack.c.l.b16 %v2982
  %v3076 = vunpack.c.h.b16 %v2982
  %v3077 = vunpack.c.l.b16 %v2983
  %v3078 = vunpack.c.h.b16 %v2983
  %v3079 = vunpack.c.l.b16 %v2984
  %v3080 = vunpack.c.h.b16 %v2984
  %v3081 = vpack.c.b16 %v3053, %v3049
  %v3082 = vpack.c.b16 %v3054, %v3050
  %v3083 = vpack.c.b16 %v3055, %v3051
  %v3084 = vpack.c.b16 %v3056, %v3052
  %v3085 = vpack.c.b16 %v3061, %v3057
  %v3086 = vpack.c.b16 %v3062, %v3058
  %v3087 = vpack.c.b16 %v3063, %v3059
  %v3088 = vpack.c.b16 %v3064, %v3060
  %v3089 = vpack.c.b16 %v3069, %v3065
  %v3090 = vpack.c.b16 %v3070, %v3066
  %v3091 = vpack.c.b16 %v3071, %v3067
  %v3092 = vpack.c.b16 %v3072, %v3068
  %v3093 = vpack.c.b16 %v3077, %v3073
  %v3094 = vpack.c.b16 %v3078, %v3074
  %v3095 = vpack.c.b16 %v3079, %v3075
  %v3096 = vpack.c.b16 %v3080, %v3076
  %3113 = vmatprep.subr.bf16.mxu0 0
  %3114 = vmatpush1.bf16.msra.mxu0 %v2937
  %3115 = vmatprep.subr.bf16.mxu0 0
  %3116 = vmatpush1.bf16.msra.mxu0 %v2938
  %3117 = vmatprep.subr.bf16.mxu0 0
  %3118 = vmatpush1.bf16.msra.mxu0 %v2939
  %3119 = vmatprep.subr.bf16.mxu0 0
  %3120 = vmatpush1.bf16.msra.mxu0 %v2940
  %3121 = vmatprep.subr.bf16.mxu0 0
  %3122 = vmatpush1.bf16.msra.mxu0 %v2941
  %3123 = vmatprep.subr.bf16.mxu0 0
  %3124 = vmatpush1.bf16.msra.mxu0 %v2942
  %3125 = vmatprep.subr.bf16.mxu0 0
  %3126 = vmatpush1.bf16.msra.mxu0 %v2943
  %3127 = vmatprep.subr.bf16.mxu0 0
  %3128 = vmatpush1.bf16.msra.mxu0 %v2944
  %3129 = vmatprep.subr.bf16.mxu0 0
  %3130 = vmatpush1.bf16.msra.mxu0 %v2945
  %3131 = vmatprep.subr.bf16.mxu0 0
  %3132 = vmatpush1.bf16.msra.mxu0 %v2946
  %3133 = vmatprep.subr.bf16.mxu0 0
  %3134 = vmatpush1.bf16.msra.mxu0 %v2947
  %3135 = vmatprep.subr.bf16.mxu0 0
  %3136 = vmatpush1.bf16.msra.mxu0 %v2948
  %3137 = vmatprep.subr.bf16.mxu0 0
  %3138 = vmatpush1.bf16.msra.mxu0 %v2949
  %3139 = vmatprep.subr.bf16.mxu0 0
  %3140 = vmatpush1.bf16.msra.mxu0 %v2950
  %3141 = vmatprep.subr.bf16.mxu0 0
  %3142 = vmatpush1.bf16.msra.mxu0 %v2951
  %3143 = vmatprep.subr.bf16.mxu0 0
  %3144 = vmatpush1.bf16.msra.mxu0 %v2952
  %3145 = vmatprep.mubr.bf16.mxu0 %v3082
  %3146 = vmatmul.mubr.bf16.gmra.mrb[0].mxu0 %v3081
  %v3147 = vpop.f32.mrb[0].mxu0
  %v3148 = vadd.f32 %v2996, %v3147
  %v3149 = vpop.f32.mrb[0].mxu0
  %v3150 = vpop.f32.mrb[0].mxu0
  %v3151 = vadd.f32 %v3001, %v3150
  %v3152 = vpop.f32.mrb[0].mxu0
  %3153 = vmatprep.mubr.bf16.mxu0 %v3086
  %3154 = vmatmul.mubr.bf16.gmra.mrb[0].mxu0 %v3085
  %v3155 = vpop.f32.mrb[0].mxu0
  %v3156 = vadd.f32 %v3006, %v3155
  %v3157 = vpop.f32.mrb[0].mxu0
  %v3158 = vpop.f32.mrb[0].mxu0
  %v3159 = vadd.f32 %v3011, %v3158
  %v3160 = vpop.f32.mrb[0].mxu0
  %3161 = vmatprep.mubr.bf16.mxu0 %v3090
  %3162 = vmatmul.mubr.bf16.gmra.mrb[0].mxu0 %v3089
  %v3163 = vpop.f32.mrb[0].mxu0
  %v3164 = vadd.f32 %v3016, %v3163
  %v3165 = vpop.f32.mrb[0].mxu0
  %v3166 = vpop.f32.mrb[0].mxu0
  %v3167 = vadd.f32 %v3021, %v3166
  %v3168 = vpop.f32.mrb[0].mxu0
  %3169 = vmatprep.mubr.bf16.mxu0 %v3094
  %3170 = vmatmul.mubr.bf16.gmra.mrb[0].mxu0 %v3093
  %v3171 = vpop.f32.mrb[0].mxu0
  %v3172 = vadd.f32 %v3026, %v3171
  %v3173 = vpop.f32.mrb[0].mxu0
  %v3174 = vpop.f32.mrb[0].mxu0
  %v3175 = vadd.f32 %v3031, %v3174
  %v3176 = vpop.f32.mrb[0].mxu0
  %3177 = vdwg.mxu0
  %3178 = vmatprep.subr.bf16.mxu0 0
  %3179 = vmatpush1.bf16.msra.mxu0 %v2953
  %3180 = vmatprep.subr.bf16.mxu0 0
  %3181 = vmatpush1.bf16.msra.mxu0 %v2954
  %3182 = vmatprep.subr.bf16.mxu0 0
  %3183 = vmatpush1.bf16.msra.mxu0 %v2955
  %3184 = vmatprep.subr.bf16.mxu0 0
  %3185 = vmatpush1.bf16.msra.mxu0 %v2956
  %3186 = vmatprep.subr.bf16.mxu0 0
  %3187 = vmatpush1.bf16.msra.mxu0 %v2957
  %3188 = vmatprep.subr.bf16.mxu0 0
  %3189 = vmatpush1.bf16.msra.mxu0 %v2958
  %3190 = vmatprep.subr.bf16.mxu0 0
  %3191 = vmatpush1.bf16.msra.mxu0 %v2959
  %3192 = vmatprep.subr.bf16.mxu0 0
  %3193 = vmatpush1.bf16.msra.mxu0 %v2960
  %3194 = vmatprep.subr.bf16.mxu0 0
  %3195 = vmatpush1.bf16.msra.mxu0 %v2961
  %3196 = vmatprep.subr.bf16.mxu0 0
  %3197 = vmatpush1.bf16.msra.mxu0 %v2962
  %3198 = vmatprep.subr.bf16.mxu0 0
  %3199 = vmatpush1.bf16.msra.mxu0 %v2963
  %3200 = vmatprep.subr.bf16.mxu0 0
  %3201 = vmatpush1.bf16.msra.mxu0 %v2964
  %3202 = vmatprep.subr.bf16.mxu0 0
  %3203 = vmatpush1.bf16.msra.mxu0 %v2965
  %3204 = vmatprep.subr.bf16.mxu0 0
  %3205 = vmatpush1.bf16.msra.mxu0 %v2966
  %3206 = vmatprep.subr.bf16.mxu0 0
  %3207 = vmatpush1.bf16.msra.mxu0 %v2967
  %3208 = vmatprep.subr.bf16.mxu0 0
  %3209 = vmatpush1.bf16.msra.mxu0 %v2968
  %3210 = vmatprep.mubr.bf16.mxu0 %v3084
  %3211 = vmatmul.mubr.bf16.gmra.mrb[0].mxu0 %v3083
  %v3212 = vpop.f32.mrb[0].mxu0
  %v3213 = vadd.f32 %v3148, %v3212
  %v3214 = vpop.f32.mrb[0].mxu0
  %v3215 = vpop.f32.mrb[0].mxu0
  %v3216 = vadd.f32 %v3151, %v3215
  %v3217 = vpop.f32.mrb[0].mxu0
  %3218 = vmatprep.mubr.bf16.mxu0 %v3088
  %3219 = vmatmul.mubr.bf16.gmra.mrb[0].mxu0 %v3087
  %v3220 = vpop.f32.mrb[0].mxu0
  %v3221 = vadd.f32 %v3156, %v3220
  %v3222 = vpop.f32.mrb[0].mxu0
  %v3223 = vpop.f32.mrb[0].mxu0
  %v3224 = vadd.f32 %v3159, %v3223
  %v3225 = vpop.f32.mrb[0].mxu0
  %3226 = vmatprep.mubr.bf16.mxu0 %v3092
  %3227 = vmatmul.mubr.bf16.gmra.mrb[0].mxu0 %v3091
  %v3228 = vpop.f32.mrb[0].mxu0
  %v3229 = vadd.f32 %v3164, %v3228
  %v3230 = vpop.f32.mrb[0].mxu0
  %v3231 = vpop.f32.mrb[0].mxu0
  %v3232 = vadd.f32 %v3167, %v3231
  %v3233 = vpop.f32.mrb[0].mxu0
  %3234 = vmatprep.mubr.bf16.mxu0 %v3096
  %3235 = vmatmul.mubr.bf16.gmra.mrb[0].mxu0 %v3095
  %v3236 = vpop.f32.mrb[0].mxu0
  %v3237 = vadd.f32 %v3172, %v3236
  %v3238 = vpop.f32.mrb[0].mxu0
  %v3239 = vpop.f32.mrb[0].mxu0
  %v3240 = vadd.f32 %v3175, %v3239
  %v3241 = vpop.f32.mrb[0].mxu0
  %3242 = vdwg.mxu0
  %vm3243 = vcmp.gt.f32.partialorder %v3213, 0.0
  %vm3244 = vcmp.gt.f32.partialorder %v3216, 0.0
  %vm3245 = vcmp.gt.f32.partialorder %v3221, 0.0
  %vm3246 = vcmp.gt.f32.partialorder %v3224, 0.0
  %vm3247 = vcmp.gt.f32.partialorder %v3229, 0.0
  %vm3248 = vcmp.gt.f32.partialorder %v3232, 0.0
  %vm3249 = vcmp.gt.f32.partialorder %v3237, 0.0
  %vm3250 = vcmp.gt.f32.partialorder %v3240, 0.0
  %v3251 = vmul.f32 %v3213, 0.2
  %v3252 = vmul.f32 %v3216, 0.2
  %v3253 = vmul.f32 %v3221, 0.2
  %v3254 = vmul.f32 %v3224, 0.2
  %v3255 = vmul.f32 %v3229, 0.2
  %v3256 = vmul.f32 %v3232, 0.2
  %v3257 = vmul.f32 %v3237, 0.2
  %v3258 = vmul.f32 %v3240, 0.2
  %v3259 = vsel %vm3243, %v3213, %v3251
  %v3260 = vsel %vm3244, %v3216, %v3252
  %v3261 = vsel %vm3245, %v3221, %v3253
  %v3262 = vsel %vm3246, %v3224, %v3254
  %v3263 = vsel %vm3247, %v3229, %v3255
  %v3264 = vsel %vm3248, %v3232, %v3256
  %v3265 = vsel %vm3249, %v3237, %v3257
  %v3266 = vsel %vm3250, %v3240, %v3258
  %3275 = vrot.lane.b32.xlu0 %v3259, 113
  %v3276 = vpop.permute.xlu0 %3275
  %3277 = vrot.lane.b32.xlu0 %v3260, 113
  %v3278 = vpop.permute.xlu0 %3277
  %3279 = vrot.lane.b32.xlu0 %v3261, 113
  %v3280 = vpop.permute.xlu0 %3279
  %3281 = vrot.lane.b32.xlu0 %v3262, 113
  %v3282 = vpop.permute.xlu0 %3281
  %3283 = vrot.lane.b32.xlu0 %v3263, 113
  %v3284 = vpop.permute.xlu0 %3283
  %3285 = vrot.lane.b32.xlu0 %v3264, 113
  %v3286 = vpop.permute.xlu0 %3285
  %3287 = vrot.lane.b32.xlu0 %v3265, 113
  %v3288 = vpop.permute.xlu0 %3287
  %3289 = vrot.lane.b32.xlu0 %v3266, 113
  %v3290 = vpop.permute.xlu0 %3289
  %vm3299 = vcmask 7168
  %v3300 = vsel %vm3299, %v3259, %v3276
  %v3301 = vsel %vm3299, %v3260, %v3278
  %v3302 = vsel %vm3299, %v3261, %v3280
  %v3303 = vsel %vm3299, %v3262, %v3282
  %v3304 = vsel %vm3299, %v3263, %v3284
  %v3305 = vsel %vm3299, %v3264, %v3286
  %v3306 = vsel %vm3299, %v3265, %v3288
  %v3307 = vsel %vm3299, %v3266, %v3290
  %vm3308 = vcmask 15360
  %v3309 = vsel %vm3308, %v3300, 0.0
  %3310 = vadd.xlane.f32.xlu0 %v3309
  %v3311 = vpop.xlane.xlu0 %3310
  %v3312 = vsel %vm3308, %v3301, 0.0
  %3313 = vadd.xlane.f32.xlu0 %v3312
  %v3314 = vpop.xlane.xlu0 %3313
  %v3315 = vsel %vm3308, %v3302, 0.0
  %3316 = vadd.xlane.f32.xlu0 %v3315
  %v3317 = vpop.xlane.xlu0 %3316
  %v3318 = vsel %vm3308, %v3303, 0.0
  %3319 = vadd.xlane.f32.xlu0 %v3318
  %v3320 = vpop.xlane.xlu0 %3319
  %v3321 = vsel %vm3308, %v3304, 0.0
  %3322 = vadd.xlane.f32.xlu0 %v3321
  %v3323 = vpop.xlane.xlu0 %3322
  %v3324 = vsel %vm3308, %v3305, 0.0
  %3325 = vadd.xlane.f32.xlu0 %v3324
  %v3326 = vpop.xlane.xlu0 %3325
  %v3327 = vsel %vm3308, %v3306, 0.0
  %3328 = vadd.xlane.f32.xlu0 %v3327
  %v3329 = vpop.xlane.xlu0 %3328
  %v3330 = vsel %vm3308, %v3307, 0.0
  %3331 = vadd.xlane.f32.xlu0 %v3330
  %v3332 = vpop.xlane.xlu0 %3331
  %v3333 = vmul.f32 %v3311, 0.5
  %v3334 = vmul.f32 %v3314, 0.5
  %v3335 = vmul.f32 %v3317, 0.5
  %v3336 = vmul.f32 %v3320, 0.5
  %v3337 = vmul.f32 %v3323, 0.5
  %v3338 = vmul.f32 %v3326, 0.5
  %v3339 = vmul.f32 %v3329, 0.5
  %v3340 = vmul.f32 %v3332, 0.5
  %v3341 = vsub.f32 %v3300, %v3333
  %v3342 = vsub.f32 %v3301, %v3334
  %v3343 = vsub.f32 %v3302, %v3335
  %v3344 = vsub.f32 %v3303, %v3336
  %v3345 = vsub.f32 %v3304, %v3337
  %v3346 = vsub.f32 %v3305, %v3338
  %v3347 = vsub.f32 %v3306, %v3339
  %v3348 = vsub.f32 %v3307, %v3340
  %v3349 = vmul.f32 %v3341, %v3341
  %v3350 = vmul.f32 %v3342, %v3342
  %v3351 = vmul.f32 %v3343, %v3343
  %v3352 = vmul.f32 %v3344, %v3344
  %v3353 = vmul.f32 %v3345, %v3345
  %v3354 = vmul.f32 %v3346, %v3346
  %v3355 = vmul.f32 %v3347, %v3347
  %v3356 = vmul.f32 %v3348, %v3348
  %v3357 = vsel %vm3308, %v3349, 0.0
  %3358 = vadd.xlane.f32.xlu0 %v3357
  %v3359 = vpop.xlane.xlu0 %3358
  %v3360 = vsel %vm3308, %v3350, 0.0
  %3361 = vadd.xlane.f32.xlu0 %v3360
  %v3362 = vpop.xlane.xlu0 %3361
  %v3363 = vsel %vm3308, %v3351, 0.0
  %3364 = vadd.xlane.f32.xlu0 %v3363
  %v3365 = vpop.xlane.xlu0 %3364
  %v3366 = vsel %vm3308, %v3352, 0.0
  %3367 = vadd.xlane.f32.xlu0 %v3366
  %v3368 = vpop.xlane.xlu0 %3367
  %v3369 = vsel %vm3308, %v3353, 0.0
  %3370 = vadd.xlane.f32.xlu0 %v3369
  %v3371 = vpop.xlane.xlu0 %3370
  %v3372 = vsel %vm3308, %v3354, 0.0
  %3373 = vadd.xlane.f32.xlu0 %v3372
  %v3374 = vpop.xlane.xlu0 %3373
  %v3375 = vsel %vm3308, %v3355, 0.0
  %3376 = vadd.xlane.f32.xlu0 %v3375
  %v3377 = vpop.xlane.xlu0 %3376
  %v3378 = vsel %vm3308, %v3356, 0.0
  %3379 = vadd.xlane.f32.xlu0 %v3378
  %v3380 = vpop.xlane.xlu0 %3379
  %v3381 = vmul.f32 %v3359, 0.5
  %v3382 = vmul.f32 %v3362, 0.5
  %v3383 = vmul.f32 %v3365, 0.5
  %v3384 = vmul.f32 %v3368, 0.5
  %v3385 = vmul.f32 %v3371, 0.5
  %v3386 = vmul.f32 %v3374, 0.5
  %v3387 = vmul.f32 %v3377, 0.5
  %v3388 = vmul.f32 %v3380, 0.5
  %v3389 = vadd.f32 %v3381, 1e-05
  %v3390 = vadd.f32 %v3382, 1e-05
  %v3391 = vadd.f32 %v3383, 1e-05
  %v3392 = vadd.f32 %v3384, 1e-05
  %v3393 = vadd.f32 %v3385, 1e-05
  %v3394 = vadd.f32 %v3386, 1e-05
  %v3395 = vadd.f32 %v3387, 1e-05
  %v3396 = vadd.f32 %v3388, 1e-05
  %v3397 = vrsqrt.pop %v3389
  %v3398 = vrsqrt.pop %v3390
  %v3399 = vrsqrt.pop %v3391
  %v3400 = vrsqrt.pop %v3392
  %v3401 = vrsqrt.pop %v3393
  %v3402 = vrsqrt.pop %v3394
  %v3403 = vrsqrt.pop %v3395
  %v3404 = vrsqrt.pop %v3396
  %v3405 = vmul.f32 %v3341, %v3397
  %v3406 = vmul.f32 %v3342, %v3398
  %v3407 = vmul.f32 %v3343, %v3399
  %v3408 = vmul.f32 %v3344, %v3400
  %v3409 = vmul.f32 %v3345, %v3401
  %v3410 = vmul.f32 %v3346, %v3402
  %v3411 = vmul.f32 %v3347, %v3403
  %v3412 = vmul.f32 %v3348, %v3404
  %v3413 = vld [vmem:[%s33] sm:$0xff]
  %v3414 = vld [vmem:[%s33 + $0x8] sm:$0xff]
  %v3415 = vld [vmem:[%s33 + $0x10] sm:$0xff]
  %v3416 = vld [vmem:[%s33 + $0x18] sm:$0xff]
  %v3417 = vld [vmem:[%s33 + $0x20] sm:$0xff]
  %v3418 = vld [vmem:[%s33 + $0x28] sm:$0xff]
  %v3419 = vld [vmem:[%s33 + $0x30] sm:$0xff]
  %v3420 = vld [vmem:[%s33 + $0x38] sm:$0xff]
  %3422 = vset.pattern.permute.xlu0 0
  %3423 = vperm.xlu0 %3422, %v3413
  %v3424 = vpop.permute.xlu0 %3423
  %3427 = vset.pattern.permute.xlu0 0
  %3428 = vperm.xlu0 %3427, %v3414
  %v3429 = vpop.permute.xlu0 %3428
  %3432 = vset.pattern.permute.xlu0 0
  %3433 = vperm.xlu0 %3432, %v3415
  %v3434 = vpop.permute.xlu0 %3433
  %3437 = vset.pattern.permute.xlu0 0
  %3438 = vperm.xlu0 %3437, %v3416
  %v3439 = vpop.permute.xlu0 %3438
  %3442 = vset.pattern.permute.xlu0 0
  %3443 = vperm.xlu0 %3442, %v3417
  %v3444 = vpop.permute.xlu0 %3443
  %3447 = vset.pattern.permute.xlu0 0
  %3448 = vperm.xlu0 %3447, %v3418
  %v3449 = vpop.permute.xlu0 %3448
  %3452 = vset.pattern.permute.xlu0 0
  %3453 = vperm.xlu0 %3452, %v3419
  %v3454 = vpop.permute.xlu0 %3453
  %3457 = vset.pattern.permute.xlu0 0
  %3458 = vperm.xlu0 %3457, %v3420
  %v3459 = vpop.permute.xlu0 %3458
  %v3461 = vmul.f32 %v3405, %v3424
  %v3462 = vmul.f32 %v3406, %v3429
  %v3463 = vmul.f32 %v3407, %v3434
  %v3464 = vmul.f32 %v3408, %v3439
  %v3465 = vmul.f32 %v3409, %v3444
  %v3466 = vmul.f32 %v3410, %v3449
  %v3467 = vmul.f32 %v3411, %v3454
  %v3468 = vmul.f32 %v3412, %v3459
  %v3469 = vld [vmem:[%s35] sm:$0xff]
  %v3470 = vld [vmem:[%s35 + $0x8] sm:$0xff]
  %v3471 = vld [vmem:[%s35 + $0x10] sm:$0xff]
  %v3472 = vld [vmem:[%s35 + $0x18] sm:$0xff]
  %v3473 = vld [vmem:[%s35 + $0x20] sm:$0xff]
  %v3474 = vld [vmem:[%s35 + $0x28] sm:$0xff]
  %v3475 = vld [vmem:[%s35 + $0x30] sm:$0xff]
  %v3476 = vld [vmem:[%s35 + $0x38] sm:$0xff]
  %3478 = vset.pattern.permute.xlu0 0
  %3479 = vperm.xlu0 %3478, %v3469
  %v3480 = vpop.permute.xlu0 %3479
  %3483 = vset.pattern.permute.xlu0 0
  %3484 = vperm.xlu0 %3483, %v3470
  %v3485 = vpop.permute.xlu0 %3484
  %3488 = vset.pattern.permute.xlu0 0
  %3489 = vperm.xlu0 %3488, %v3471
  %v3490 = vpop.permute.xlu0 %3489
  %3493 = vset.pattern.permute.xlu0 0
  %3494 = vperm.xlu0 %3493, %v3472
  %v3495 = vpop.permute.xlu0 %3494
  %3498 = vset.pattern.permute.xlu0 0
  %3499 = vperm.xlu0 %3498, %v3473
  %v3500 = vpop.permute.xlu0 %3499
  %3503 = vset.pattern.permute.xlu0 0
  %3504 = vperm.xlu0 %3503, %v3474
  %v3505 = vpop.permute.xlu0 %3504
  %3508 = vset.pattern.permute.xlu0 0
  %3509 = vperm.xlu0 %3508, %v3475
  %v3510 = vpop.permute.xlu0 %3509
  %3513 = vset.pattern.permute.xlu0 0
  %3514 = vperm.xlu0 %3513, %v3476
  %v3515 = vpop.permute.xlu0 %3514
  %v3517 = vadd.f32 %v3461, %v3480
  %v3518 = vadd.f32 %v3462, %v3485
  %v3519 = vadd.f32 %v3463, %v3490
  %v3520 = vadd.f32 %v3464, %v3495
  %v3521 = vadd.f32 %v3465, %v3500
  %v3522 = vadd.f32 %v3466, %v3505
  %v3523 = vadd.f32 %v3467, %v3510
  %v3524 = vadd.f32 %v3468, %v3515
  %v3525 = vld [vmem:[%s37] sm:$0xf]
  %v3526 = vld [vmem:[%s37 + $0x4] sm:$0xf]
  %v3527 = vld [vmem:[%s37 + $0x8] sm:$0xf]
  %v3528 = vld [vmem:[%s37 + $0xc] sm:$0xf]
  %v3529 = vpack.c.bf16 %v3518, %v3517
  %v3530 = vpack.c.bf16 %v3520, %v3519
  %v3531 = vpack.c.bf16 %v3522, %v3521
  %v3532 = vpack.c.bf16 %v3524, %v3523
  %v3533 = vld [vmem:[%s39] sm:$0xff]
  %v3534 = vld [vmem:[%s39 + $0x8] sm:$0xff]
  %v3535 = vld [vmem:[%s39 + $0x10] sm:$0xff]
  %v3536 = vld [vmem:[%s39 + $0x18] sm:$0xff]
  %3538 = vset.pattern.permute.xlu0 0
  %3539 = vperm.xlu0 %3538, %v3533
  %v3540 = vpop.permute.xlu0 %3539
  %3543 = vset.pattern.permute.xlu0 0
  %3544 = vperm.xlu0 %3543, %v3534
  %v3545 = vpop.permute.xlu0 %3544
  %3548 = vset.pattern.permute.xlu0 0
  %3549 = vperm.xlu0 %3548, %v3535
  %v3550 = vpop.permute.xlu0 %3549
  %3553 = vset.pattern.permute.xlu0 0
  %3554 = vperm.xlu0 %3553, %v3536
  %v3555 = vpop.permute.xlu0 %3554
  %v3561 = vunpack.c.l.b16 %v3525
  %v3562 = vunpack.c.l.b16 %v3526
  %v3563 = vunpack.c.l.b16 %v3527
  %v3564 = vunpack.c.l.b16 %v3528
  %v3565 = vpack.c.b16 %v3562, %v3561
  %v3566 = vpack.c.b16 %v3564, %v3563
  %v3568 = vsel %vm1134, %v3565, 0
  %v3571 = vsel %vm1134, %v3566, 0
  %3573 = vmatprep.subr.bf16.mxu0 0
  %3574 = vmatpush1.bf16.msra.mxu0 %v3529
  %3575 = vmatprep.subr.bf16.mxu0 0
  %3576 = vmatpush1.bf16.msra.mxu0 %v3530
  %3577 = vmatprep.subr.bf16.mxu0 0
  %3578 = vmatpush1.bf16.msra.mxu0 %v3531
  %3579 = vmatprep.subr.bf16.mxu0 0
  %3580 = vmatpush1.bf16.msra.mxu0 %v3532
  %3581 = vmatprep.subr.bf16.mxu0 0
  %3582 = vmatpush1.bf16.msra.mxu0 0
  %3583 = vmatprep.subr.bf16.mxu0 0
  %3584 = vmatpush1.bf16.msra.mxu0 0
  %3585 = vmatprep.subr.bf16.mxu0 0
  %3586 = vmatpush1.bf16.msra.mxu0 0
  %3587 = vmatprep.subr.bf16.mxu0 0
  %3588 = vmatpush1.bf16.msra.mxu0 0
  %3589 = vmatprep.subr.bf16.mxu0 0
  %3590 = vmatpush1.bf16.msra.mxu0 0
  %3591 = vmatprep.subr.bf16.mxu0 0
  %3592 = vmatpush1.bf16.msra.mxu0 0
  %3593 = vmatprep.subr.bf16.mxu0 0
  %3594 = vmatpush1.bf16.msra.mxu0 0
  %3595 = vmatprep.subr.bf16.mxu0 0
  %3596 = vmatpush1.bf16.msra.mxu0 0
  %3597 = vmatprep.subr.bf16.mxu0 0
  %3598 = vmatpush1.bf16.msra.mxu0 0
  %3599 = vmatprep.subr.bf16.mxu0 0
  %3600 = vmatpush1.bf16.msra.mxu0 0
  %3601 = vmatprep.subr.bf16.mxu0 0
  %3602 = vmatpush1.bf16.msra.mxu0 0
  %3603 = vmatprep.subr.bf16.mxu0 0
  %3604 = vmatpush1.bf16.msra.mxu0 0
  %3605 = vmatprep.mubr.bf16.mxu0 0
  %3606 = vmatmul.mubr.bf16.gmra.mrb[0].mxu0 %v3568
  %v3607 = vpop.f32.mrb[0].mxu0
  %v3608 = vadd.f32 %v3540, %v3607
  %v3609 = vpop.f32.mrb[0].mxu0
  %v3610 = vpop.f32.mrb[0].mxu0
  %v3611 = vadd.f32 %v3545, %v3610
  %v3612 = vpop.f32.mrb[0].mxu0
  %3613 = vmatprep.mubr.bf16.mxu0 0
  %3614 = vmatmul.mubr.bf16.gmra.mrb[0].mxu0 %v3571
  %v3615 = vpop.f32.mrb[0].mxu0
  %v3616 = vadd.f32 %v3550, %v3615
  %v3617 = vpop.f32.mrb[0].mxu0
  %v3618 = vpop.f32.mrb[0].mxu0
  %v3619 = vadd.f32 %v3555, %v3618
  %v3620 = vpop.f32.mrb[0].mxu0
  %3621 = vdwg.mxu0
  %v3622 = vmax.f32 %v3616, -30.0
  %v3623 = vmax.f32 %v3619, -30.0
  %v3624 = vmin.f32 %v3622, 20.0
  %v3625 = vmin.f32 %v3623, 20.0
  %v3626 = vmul.f32 %v3624, 0.5
  %v3627 = vmul.f32 %v3625, 0.5
  %v3628 = vmul.f32 %v3626, 1.442695
  %v3629 = vpow.pop %v3628
  %v3630 = vmul.f32 %v3627, 1.442695
  %v3631 = vpow.pop %v3630
  %v3632 = vmul.f32 %v3624, 1.442695
  %v3633 = vpow.pop %v3632
  %v3634 = vmul.f32 %v3625, 1.442695
  %v3635 = vpow.pop %v3634
  %v3636 = vld [vmem:[%s3] sm:$0xff]
  %v3637 = vld [vmem:[%s3 + $0x8] sm:$0xff]
  %v3638 = vmul.f32 %v3629, %v3636
  %v3639 = vmul.f32 %v3631, %v3637
  %v3640 = vadd.f32 %v3608, %v3638
  %v3641 = vadd.f32 %v3611, %v3639
  %v3642 = vadd.f32 %v3624, 1.0
  %v3643 = vadd.f32 %v3625, 1.0
  %v3644 = vmul.f32 %v3608, %v3608
  %v3645 = vmul.f32 %v3611, %v3611
  %v3646 = vsub.f32 %v3642, %v3644
  %v3647 = vsub.f32 %v3643, %v3645
  %v3648 = vsub.f32 %v3646, %v3633
  %v3649 = vsub.f32 %v3647, %v3635
  %v3650 = vsel %vm3308, %v3648, 0.0
  %v3651 = vsel %vm3308, %v3649, 0.0
  %v3652 = vadd.f32 %v3650, %v3651
  %v3653 = vrot.slane %v3652, 4
  %v3654 = vadd.f32 %v3652, %v3653
  %v3655 = vrot.slane %v3654, 2
  %v3656 = vadd.f32 %v3654, %v3655
  %v3657 = vrot.slane %v3656, 1
  %v3658 = vadd.f32 %v3656, %v3657
  %v3659 = vmul.f32 %v3658, -0.5
  %v3660 = vld [vmem:[%s41] sm:$0xf]
  %v3661 = vld [vmem:[%s41 + $0x4] sm:$0xf]
  %v3662 = vld [vmem:[%s41 + $0x8] sm:$0xf]
  %v3663 = vld [vmem:[%s41 + $0xc] sm:$0xf]
  %v3664 = vld [vmem:[%s41 + $0x10] sm:$0xf]
  %v3665 = vld [vmem:[%s41 + $0x14] sm:$0xf]
  %v3666 = vld [vmem:[%s41 + $0x18] sm:$0xf]
  %v3667 = vld [vmem:[%s41 + $0x1c] sm:$0xf]
  %v3668 = vpack.c.bf16 %v3641, %v3640
  %v3669 = vld [vmem:[%s43] sm:$0xff]
  %v3670 = vld [vmem:[%s43 + $0x8] sm:$0xff]
  %v3671 = vld [vmem:[%s43 + $0x10] sm:$0xff]
  %v3672 = vld [vmem:[%s43 + $0x18] sm:$0xff]
  %v3673 = vld [vmem:[%s43 + $0x20] sm:$0xff]
  %v3674 = vld [vmem:[%s43 + $0x28] sm:$0xff]
  %v3675 = vld [vmem:[%s43 + $0x30] sm:$0xff]
  %v3676 = vld [vmem:[%s43 + $0x38] sm:$0xff]
  %3678 = vset.pattern.permute.xlu0 0
  %3679 = vperm.xlu0 %3678, %v3669
  %v3680 = vpop.permute.xlu0 %3679
  %3683 = vset.pattern.permute.xlu0 0
  %3684 = vperm.xlu0 %3683, %v3670
  %v3685 = vpop.permute.xlu0 %3684
  %3688 = vset.pattern.permute.xlu0 0
  %3689 = vperm.xlu0 %3688, %v3671
  %v3690 = vpop.permute.xlu0 %3689
  %3693 = vset.pattern.permute.xlu0 0
  %3694 = vperm.xlu0 %3693, %v3672
  %v3695 = vpop.permute.xlu0 %3694
  %3698 = vset.pattern.permute.xlu0 0
  %3699 = vperm.xlu0 %3698, %v3673
  %v3700 = vpop.permute.xlu0 %3699
  %3703 = vset.pattern.permute.xlu0 0
  %3704 = vperm.xlu0 %3703, %v3674
  %v3705 = vpop.permute.xlu0 %3704
  %3708 = vset.pattern.permute.xlu0 0
  %3709 = vperm.xlu0 %3708, %v3675
  %v3710 = vpop.permute.xlu0 %3709
  %3713 = vset.pattern.permute.xlu0 0
  %3714 = vperm.xlu0 %3713, %v3676
  %v3715 = vpop.permute.xlu0 %3714
  %v3725 = vunpack.c.l.b16 %v3660
  %v3726 = vunpack.c.l.b16 %v3661
  %v3727 = vunpack.c.l.b16 %v3662
  %v3728 = vunpack.c.l.b16 %v3663
  %v3729 = vunpack.c.l.b16 %v3664
  %v3730 = vunpack.c.l.b16 %v3665
  %v3731 = vunpack.c.l.b16 %v3666
  %v3732 = vunpack.c.l.b16 %v3667
  %v3733 = vpack.c.b16 %v3726, %v3725
  %v3734 = vpack.c.b16 %v3728, %v3727
  %v3735 = vpack.c.b16 %v3730, %v3729
  %v3736 = vpack.c.b16 %v3732, %v3731
  %vm3737 = vcmask 130048
  %v3739 = vsel %vm3737, %v3733, 0
  %v3742 = vsel %vm3737, %v3734, 0
  %v3745 = vsel %vm3737, %v3735, 0
  %v3748 = vsel %vm3737, %v3736, 0
  %3750 = vmatprep.subr.bf16.mxu0 0
  %3751 = vmatpush1.bf16.msra.mxu0 %v3668
  %3752 = vmatprep.subr.bf16.mxu0 0
  %3753 = vmatpush1.bf16.msra.mxu0 0
  %3754 = vmatprep.subr.bf16.mxu0 0
  %3755 = vmatpush1.bf16.msra.mxu0 0
  %3756 = vmatprep.subr.bf16.mxu0 0
  %3757 = vmatpush1.bf16.msra.mxu0 0
  %3758 = vmatprep.subr.bf16.mxu0 0
  %3759 = vmatpush1.bf16.msra.mxu0 0
  %3760 = vmatprep.subr.bf16.mxu0 0
  %3761 = vmatpush1.bf16.msra.mxu0 0
  %3762 = vmatprep.subr.bf16.mxu0 0
  %3763 = vmatpush1.bf16.msra.mxu0 0
  %3764 = vmatprep.subr.bf16.mxu0 0
  %3765 = vmatpush1.bf16.msra.mxu0 0
  %3766 = vmatprep.subr.bf16.mxu0 0
  %3767 = vmatpush1.bf16.msra.mxu0 0
  %3768 = vmatprep.subr.bf16.mxu0 0
  %3769 = vmatpush1.bf16.msra.mxu0 0
  %3770 = vmatprep.subr.bf16.mxu0 0
  %3771 = vmatpush1.bf16.msra.mxu0 0
  %3772 = vmatprep.subr.bf16.mxu0 0
  %3773 = vmatpush1.bf16.msra.mxu0 0
  %3774 = vmatprep.subr.bf16.mxu0 0
  %3775 = vmatpush1.bf16.msra.mxu0 0
  %3776 = vmatprep.subr.bf16.mxu0 0
  %3777 = vmatpush1.bf16.msra.mxu0 0
  %3778 = vmatprep.subr.bf16.mxu0 0
  %3779 = vmatpush1.bf16.msra.mxu0 0
  %3780 = vmatprep.subr.bf16.mxu0 0
  %3781 = vmatpush1.bf16.msra.mxu0 0
  %3782 = vmatprep.mubr.bf16.mxu0 0
  %3783 = vmatmul.mubr.bf16.gmra.mrb[0].mxu0 %v3739
  %v3784 = vpop.f32.mrb[0].mxu0
  %v3785 = vadd.f32 %v3680, %v3784
  %v3786 = vpop.f32.mrb[0].mxu0
  %v3787 = vpop.f32.mrb[0].mxu0
  %v3788 = vadd.f32 %v3685, %v3787
  %v3789 = vpop.f32.mrb[0].mxu0
  %3790 = vmatprep.mubr.bf16.mxu0 0
  %3791 = vmatmul.mubr.bf16.gmra.mrb[0].mxu0 %v3742
  %v3792 = vpop.f32.mrb[0].mxu0
  %v3793 = vadd.f32 %v3690, %v3792
  %v3794 = vpop.f32.mrb[0].mxu0
  %v3795 = vpop.f32.mrb[0].mxu0
  %v3796 = vadd.f32 %v3695, %v3795
  %v3797 = vpop.f32.mrb[0].mxu0
  %3798 = vmatprep.mubr.bf16.mxu0 0
  %3799 = vmatmul.mubr.bf16.gmra.mrb[0].mxu0 %v3745
  %v3800 = vpop.f32.mrb[0].mxu0
  %v3801 = vadd.f32 %v3700, %v3800
  %v3802 = vpop.f32.mrb[0].mxu0
  %v3803 = vpop.f32.mrb[0].mxu0
  %v3804 = vadd.f32 %v3705, %v3803
  %v3805 = vpop.f32.mrb[0].mxu0
  %3806 = vmatprep.mubr.bf16.mxu0 0
  %3807 = vmatmul.mubr.bf16.gmra.mrb[0].mxu0 %v3748
  %v3808 = vpop.f32.mrb[0].mxu0
  %v3809 = vadd.f32 %v3710, %v3808
  %v3810 = vpop.f32.mrb[0].mxu0
  %v3811 = vpop.f32.mrb[0].mxu0
  %v3812 = vadd.f32 %v3715, %v3811
  %v3813 = vpop.f32.mrb[0].mxu0
  %3814 = vdwg.mxu0
  %v3815 = vmax.f32 %v3785, 0.0
  %v3816 = vmax.f32 %v3788, 0.0
  %v3817 = vmax.f32 %v3793, 0.0
  %v3818 = vmax.f32 %v3796, 0.0
  %v3819 = vmax.f32 %v3801, 0.0
  %v3820 = vmax.f32 %v3804, 0.0
  %v3821 = vmax.f32 %v3809, 0.0
  %v3822 = vmax.f32 %v3812, 0.0
  %v3823 = vpack.c.bf16 %v3816, %v3815
  %v3824 = vpack.c.bf16 %v3818, %v3817
  %v3825 = vpack.c.bf16 %v3820, %v3819
  %v3826 = vpack.c.bf16 %v3822, %v3821
  %v3827 = vld [vmem:[%s65] sm:$0x1]
  %v3829 = vsel %vm3308, %v3823, 0
  %v3832 = vsel %vm3308, %v3824, 0
  %v3835 = vsel %vm3308, %v3825, 0
  %v3838 = vsel %vm3308, %v3826, 0
  %v3841 = vsel %vm2573, %v3827, 0
  %3843 = vmatprep.subr.bf16.mxu0 0
  %3844 = vmatpush1.bf16.msra.mxu0 %v3841
  %3845 = vmatprep.subr.bf16.mxu0 0
  %3846 = vmatpush1.bf16.msra.mxu0 0
  %3847 = vmatprep.subr.bf16.mxu0 0
  %3848 = vmatpush1.bf16.msra.mxu0 0
  %3849 = vmatprep.subr.bf16.mxu0 0
  %3850 = vmatpush1.bf16.msra.mxu0 0
  %3851 = vmatprep.subr.bf16.mxu0 0
  %3852 = vmatpush1.bf16.msra.mxu0 0
  %3853 = vmatprep.subr.bf16.mxu0 0
  %3854 = vmatpush1.bf16.msra.mxu0 0
  %3855 = vmatprep.subr.bf16.mxu0 0
  %3856 = vmatpush1.bf16.msra.mxu0 0
  %3857 = vmatprep.subr.bf16.mxu0 0
  %3858 = vmatpush1.bf16.msra.mxu0 0
  %3859 = vmatprep.subr.bf16.mxu0 0
  %3860 = vmatpush1.bf16.msra.mxu0 0
  %3861 = vmatprep.subr.bf16.mxu0 0
  %3862 = vmatpush1.bf16.msra.mxu0 0
  %3863 = vmatprep.subr.bf16.mxu0 0
  %3864 = vmatpush1.bf16.msra.mxu0 0
  %3865 = vmatprep.subr.bf16.mxu0 0
  %3866 = vmatpush1.bf16.msra.mxu0 0
  %3867 = vmatprep.subr.bf16.mxu0 0
  %3868 = vmatpush1.bf16.msra.mxu0 0
  %3869 = vmatprep.subr.bf16.mxu0 0
  %3870 = vmatpush1.bf16.msra.mxu0 0
  %3871 = vmatprep.subr.bf16.mxu0 0
  %3872 = vmatpush1.bf16.msra.mxu0 0
  %3873 = vmatprep.subr.bf16.mxu0 0
  %3874 = vmatpush1.bf16.msra.mxu0 0
  %3875 = vmatprep.mubr.bf16.mxu0 0
  %3876 = vmatmul.mubr.bf16.gmra.mrb[0].mxu0 %v3829
  %v3877 = vpop.f32.mrb[0].mxu0
  %v3878 = vadd.f32 0.0, %v3877
  %v3879 = vpop.f32.mrb[0].mxu0
  %v3880 = vpop.f32.mrb[0].mxu0
  %v3881 = vadd.f32 0.0, %v3880
  %v3882 = vpop.f32.mrb[0].mxu0
  %3883 = vmatprep.mubr.bf16.mxu0 0
  %3884 = vmatmul.mubr.bf16.gmra.mrb[0].mxu0 %v3832
  %v3885 = vpop.f32.mrb[0].mxu0
  %v3886 = vadd.f32 0.0, %v3885
  %v3887 = vpop.f32.mrb[0].mxu0
  %v3888 = vpop.f32.mrb[0].mxu0
  %v3889 = vadd.f32 0.0, %v3888
  %v3890 = vpop.f32.mrb[0].mxu0
  %3891 = vmatprep.mubr.bf16.mxu0 0
  %3892 = vmatmul.mubr.bf16.gmra.mrb[0].mxu0 %v3835
  %v3893 = vpop.f32.mrb[0].mxu0
  %v3894 = vadd.f32 0.0, %v3893
  %v3895 = vpop.f32.mrb[0].mxu0
  %v3896 = vpop.f32.mrb[0].mxu0
  %v3897 = vadd.f32 0.0, %v3896
  %v3898 = vpop.f32.mrb[0].mxu0
  %3899 = vmatprep.mubr.bf16.mxu0 0
  %3900 = vmatmul.mubr.bf16.gmra.mrb[0].mxu0 %v3838
  %v3901 = vpop.f32.mrb[0].mxu0
  %v3902 = vadd.f32 0.0, %v3901
  %v3903 = vpop.f32.mrb[0].mxu0
  %v3904 = vpop.f32.mrb[0].mxu0
  %v3905 = vadd.f32 0.0, %v3904
  %v3906 = vpop.f32.mrb[0].mxu0
  %3907 = vdwg.mxu0
  %s3908 = smul.u32 4, 4
  %s3909 = smul.u32 %s3908, 5
  %s3910 = sshll.u32 %s3909, 4
  %3911 = dma.done [#allocation9], %s3910
  %s3912 = smul.u32 4, 2
  %s3913 = smul.u32 %s3912, 3
  %s3914 = sshll.u32 %s3913, 4
  %3915 = dma.done %s288, %s3914
  %s3916 = smul.u32 4, 1
  %s3917 = smul.u32 %s3916, 2
  %s3918 = sshll.u32 %s3917, 4
  %3919 = dma.done %s361, %s3918
  %s3920 = smul.u32 2, 1
  %s3921 = smul.u32 %s3920, 1
  %s3922 = sshll.u32 %s3921, 4
  %3923 = dma.done %s404, %s3922
  %s3924 = smul.u32 4, 3
  %s3925 = smul.u32 %s3924, 1
  %s3926 = sshll.u32 %s3925, 4
  %3927 = dma.done %s449, %s3926
  %s3928 = smul.u32 4, 8
  %s3929 = smul.u32 %s3928, 2
  %s3930 = sshll.u32 %s3929, 4
  %3931 = dma.done %s504, %s3930
  %s3932 = smul.u32 4, 23
  %s3933 = smul.u32 %s3932, 6
  %s3934 = sshll.u32 %s3933, 4
  %3935 = dma.done %s561, %s3934
  %3944 = vrot.lane.b32.xlu0 %v3878, 127
  %v3945 = vpop.permute.xlu0 %3944
  %3946 = vrot.lane.b32.xlu0 %v3881, 127
  %v3947 = vpop.permute.xlu0 %3946
  %3948 = vrot.lane.b32.xlu0 %v3886, 127
  %v3949 = vpop.permute.xlu0 %3948
  %3950 = vrot.lane.b32.xlu0 %v3889, 127
  %v3951 = vpop.permute.xlu0 %3950
  %3952 = vrot.lane.b32.xlu0 %v3894, 127
  %v3953 = vpop.permute.xlu0 %3952
  %3954 = vrot.lane.b32.xlu0 %v3897, 127
  %v3955 = vpop.permute.xlu0 %3954
  %3956 = vrot.lane.b32.xlu0 %v3902, 127
  %v3957 = vpop.permute.xlu0 %3956
  %3958 = vrot.lane.b32.xlu0 %v3905, 127
  %v3959 = vpop.permute.xlu0 %3958
  %3968 = vrot.lane.b32.xlu0 %v3878, 126
  %v3969 = vpop.permute.xlu0 %3968
  %3970 = vrot.lane.b32.xlu0 %v3881, 126
  %v3971 = vpop.permute.xlu0 %3970
  %3972 = vrot.lane.b32.xlu0 %v3886, 126
  %v3973 = vpop.permute.xlu0 %3972
  %3974 = vrot.lane.b32.xlu0 %v3889, 126
  %v3975 = vpop.permute.xlu0 %3974
  %3976 = vrot.lane.b32.xlu0 %v3894, 126
  %v3977 = vpop.permute.xlu0 %3976
  %3978 = vrot.lane.b32.xlu0 %v3897, 126
  %v3979 = vpop.permute.xlu0 %3978
  %3980 = vrot.lane.b32.xlu0 %v3902, 126
  %v3981 = vpop.permute.xlu0 %3980
  %3982 = vrot.lane.b32.xlu0 %v3905, 126
  %v3983 = vpop.permute.xlu0 %3982
  %3992 = vrot.lane.b32.xlu0 %v3878, 124
  %v3993 = vpop.permute.xlu0 %3992
  %3994 = vrot.lane.b32.xlu0 %v3881, 124
  %v3995 = vpop.permute.xlu0 %3994
  %3996 = vrot.lane.b32.xlu0 %v3886, 124
  %v3997 = vpop.permute.xlu0 %3996
  %3998 = vrot.lane.b32.xlu0 %v3889, 124
  %v3999 = vpop.permute.xlu0 %3998
  %4000 = vrot.lane.b32.xlu0 %v3894, 124
  %v4001 = vpop.permute.xlu0 %4000
  %4002 = vrot.lane.b32.xlu0 %v3897, 124
  %v4003 = vpop.permute.xlu0 %4002
  %4004 = vrot.lane.b32.xlu0 %v3902, 124
  %v4005 = vpop.permute.xlu0 %4004
  %4006 = vrot.lane.b32.xlu0 %v3905, 124
  %v4007 = vpop.permute.xlu0 %4006
  %4016 = vrot.lane.b32.xlu0 %v3878, 123
  %v4017 = vpop.permute.xlu0 %4016
  %4018 = vrot.lane.b32.xlu0 %v3881, 123
  %v4019 = vpop.permute.xlu0 %4018
  %4020 = vrot.lane.b32.xlu0 %v3886, 123
  %v4021 = vpop.permute.xlu0 %4020
  %4022 = vrot.lane.b32.xlu0 %v3889, 123
  %v4023 = vpop.permute.xlu0 %4022
  %4024 = vrot.lane.b32.xlu0 %v3894, 123
  %v4025 = vpop.permute.xlu0 %4024
  %4026 = vrot.lane.b32.xlu0 %v3897, 123
  %v4027 = vpop.permute.xlu0 %4026
  %4028 = vrot.lane.b32.xlu0 %v3902, 123
  %v4029 = vpop.permute.xlu0 %4028
  %4030 = vrot.lane.b32.xlu0 %v3905, 123
  %v4031 = vpop.permute.xlu0 %4030
  %4040 = vrot.lane.b32.xlu0 %v3878, 122
  %v4041 = vpop.permute.xlu0 %4040
  %4042 = vrot.lane.b32.xlu0 %v3881, 122
  %v4043 = vpop.permute.xlu0 %4042
  %4044 = vrot.lane.b32.xlu0 %v3886, 122
  %v4045 = vpop.permute.xlu0 %4044
  %4046 = vrot.lane.b32.xlu0 %v3889, 122
  %v4047 = vpop.permute.xlu0 %4046
  %4048 = vrot.lane.b32.xlu0 %v3894, 122
  %v4049 = vpop.permute.xlu0 %4048
  %4050 = vrot.lane.b32.xlu0 %v3897, 122
  %v4051 = vpop.permute.xlu0 %4050
  %4052 = vrot.lane.b32.xlu0 %v3902, 122
  %v4053 = vpop.permute.xlu0 %4052
  %4054 = vrot.lane.b32.xlu0 %v3905, 122
  %v4055 = vpop.permute.xlu0 %4054
  %4064 = vrot.lane.b32.xlu0 %v3878, 120
  %v4065 = vpop.permute.xlu0 %4064
  %4066 = vrot.lane.b32.xlu0 %v3881, 120
  %v4067 = vpop.permute.xlu0 %4066
  %4068 = vrot.lane.b32.xlu0 %v3886, 120
  %v4069 = vpop.permute.xlu0 %4068
  %4070 = vrot.lane.b32.xlu0 %v3889, 120
  %v4071 = vpop.permute.xlu0 %4070
  %4072 = vrot.lane.b32.xlu0 %v3894, 120
  %v4073 = vpop.permute.xlu0 %4072
  %4074 = vrot.lane.b32.xlu0 %v3897, 120
  %v4075 = vpop.permute.xlu0 %4074
  %4076 = vrot.lane.b32.xlu0 %v3902, 120
  %v4077 = vpop.permute.xlu0 %4076
  %4078 = vrot.lane.b32.xlu0 %v3905, 120
  %v4079 = vpop.permute.xlu0 %4078
  %4088 = vrot.lane.b32.xlu0 %v3878, 119
  %v4089 = vpop.permute.xlu0 %4088
  %4090 = vrot.lane.b32.xlu0 %v3881, 119
  %v4091 = vpop.permute.xlu0 %4090
  %4092 = vrot.lane.b32.xlu0 %v3886, 119
  %v4093 = vpop.permute.xlu0 %4092
  %4094 = vrot.lane.b32.xlu0 %v3889, 119
  %v4095 = vpop.permute.xlu0 %4094
  %4096 = vrot.lane.b32.xlu0 %v3894, 119
  %v4097 = vpop.permute.xlu0 %4096
  %4098 = vrot.lane.b32.xlu0 %v3897, 119
  %v4099 = vpop.permute.xlu0 %4098
  %4100 = vrot.lane.b32.xlu0 %v3902, 119
  %v4101 = vpop.permute.xlu0 %4100
  %4102 = vrot.lane.b32.xlu0 %v3905, 119
  %v4103 = vpop.permute.xlu0 %4102
  %4112 = vrot.lane.b32.xlu0 %v3878, 118
  %v4113 = vpop.permute.xlu0 %4112
  %4114 = vrot.lane.b32.xlu0 %v3881, 118
  %v4115 = vpop.permute.xlu0 %4114
  %4116 = vrot.lane.b32.xlu0 %v3886, 118
  %v4117 = vpop.permute.xlu0 %4116
  %4118 = vrot.lane.b32.xlu0 %v3889, 118
  %v4119 = vpop.permute.xlu0 %4118
  %4120 = vrot.lane.b32.xlu0 %v3894, 118
  %v4121 = vpop.permute.xlu0 %4120
  %4122 = vrot.lane.b32.xlu0 %v3897, 118
  %v4123 = vpop.permute.xlu0 %4122
  %4124 = vrot.lane.b32.xlu0 %v3902, 118
  %v4125 = vpop.permute.xlu0 %4124
  %4126 = vrot.lane.b32.xlu0 %v3905, 118
  %v4127 = vpop.permute.xlu0 %4126
  %v4136 = vpack.c.bf16 %v3881, %v3878
  %v4137 = vpack.c.bf16 %v3889, %v3886
  %v4138 = vpack.c.bf16 %v3897, %v3894
  %v4139 = vpack.c.bf16 %v3905, %v3902
  %v4140 = vpack.c.bf16 %v3947, %v3945
  %v4141 = vpack.c.bf16 %v3951, %v3949
  %v4142 = vpack.c.bf16 %v3955, %v3953
  %v4143 = vpack.c.bf16 %v3959, %v3957
  %v4144 = vpack.c.bf16 %v3971, %v3969
  %v4145 = vpack.c.bf16 %v3975, %v3973
  %v4146 = vpack.c.bf16 %v3979, %v3977
  %v4147 = vpack.c.bf16 %v3983, %v3981
  %v4148 = vpack.c.bf16 %v3995, %v3993
  %v4149 = vpack.c.bf16 %v3999, %v3997
  %v4150 = vpack.c.bf16 %v4003, %v4001
  %v4151 = vpack.c.bf16 %v4007, %v4005
  %v4152 = vpack.c.bf16 %v4019, %v4017
  %v4153 = vpack.c.bf16 %v4023, %v4021
  %v4154 = vpack.c.bf16 %v4027, %v4025
  %v4155 = vpack.c.bf16 %v4031, %v4029
  %v4156 = vpack.c.bf16 %v4043, %v4041
  %v4157 = vpack.c.bf16 %v4047, %v4045
  %v4158 = vpack.c.bf16 %v4051, %v4049
  %v4159 = vpack.c.bf16 %v4055, %v4053
  %v4160 = vpack.c.bf16 %v4067, %v4065
  %v4161 = vpack.c.bf16 %v4071, %v4069
  %v4162 = vpack.c.bf16 %v4075, %v4073
  %v4163 = vpack.c.bf16 %v4079, %v4077
  %v4164 = vpack.c.bf16 %v4091, %v4089
  %v4165 = vpack.c.bf16 %v4095, %v4093
  %v4166 = vpack.c.bf16 %v4099, %v4097
  %v4167 = vpack.c.bf16 %v4103, %v4101
  %v4168 = vpack.c.bf16 %v4115, %v4113
  %v4169 = vpack.c.bf16 %v4119, %v4117
  %v4170 = vpack.c.bf16 %v4123, %v4121
  %v4171 = vpack.c.bf16 %v4127, %v4125
  %v4172 = vld [vmem:[#allocation2] sm:$0xff]
  %v4173 = vld [vmem:[#allocation2 + $0x8] sm:$0xff]
  %v4174 = vld [vmem:[#allocation2 + $0x10] sm:$0xff]
  %v4175 = vld [vmem:[#allocation2 + $0x18] sm:$0xff]
  %v4176 = vld [vmem:[#allocation2 + $0x20] sm:$0xff]
  %v4177 = vld [vmem:[#allocation2 + $0x28] sm:$0xff]
  %v4178 = vld [vmem:[#allocation2 + $0x30] sm:$0xff]
  %v4179 = vld [vmem:[#allocation2 + $0x38] sm:$0xff]
  %v4180 = vld [vmem:[#allocation2 + $0x40] sm:$0xff]
  %v4181 = vld [vmem:[#allocation2 + $0x48] sm:$0xff]
  %v4182 = vld [vmem:[%s45] sm:$0xff]
  %v4183 = vld [vmem:[%s45 + $0x8] sm:$0xff]
  %v4184 = vld [vmem:[%s45 + $0x10] sm:$0xff]
  %v4185 = vld [vmem:[%s45 + $0x18] sm:$0xff]
  %4187 = vset.pattern.permute.xlu0 0
  %4188 = vperm.xlu0 %4187, %v4182
  %v4189 = vpop.permute.xlu0 %4188
  %4192 = vset.pattern.permute.xlu0 0
  %4193 = vperm.xlu0 %4192, %v4183
  %v4194 = vpop.permute.xlu0 %4193
  %4197 = vset.pattern.permute.xlu0 0
  %4198 = vperm.xlu0 %4197, %v4184
  %v4199 = vpop.permute.xlu0 %4198
  %4202 = vset.pattern.permute.xlu0 0
  %4203 = vperm.xlu0 %4202, %v4185
  %v4204 = vpop.permute.xlu0 %4203
  %v4207 = vsel %vm1134, %v4176, 0
  %v4210 = vsel %vm1134, %v4181, 0
  %4212 = vmatprep.subr.bf16.mxu0 0
  %4213 = vmatpush1.bf16.msra.mxu0 %v4136
  %4214 = vmatprep.subr.bf16.mxu0 0
  %4215 = vmatpush1.bf16.msra.mxu0 %v4137
  %4216 = vmatprep.subr.bf16.mxu0 0
  %4217 = vmatpush1.bf16.msra.mxu0 %v4138
  %4218 = vmatprep.subr.bf16.mxu0 0
  %4219 = vmatpush1.bf16.msra.mxu0 %v4139
  %4220 = vmatprep.subr.bf16.mxu0 0
  %4221 = vmatpush1.bf16.msra.mxu0 %v4140
  %4222 = vmatprep.subr.bf16.mxu0 0
  %4223 = vmatpush1.bf16.msra.mxu0 %v4141
  %4224 = vmatprep.subr.bf16.mxu0 0
  %4225 = vmatpush1.bf16.msra.mxu0 %v4142
  %4226 = vmatprep.subr.bf16.mxu0 0
  %4227 = vmatpush1.bf16.msra.mxu0 %v4143
  %4228 = vmatprep.subr.bf16.mxu0 0
  %4229 = vmatpush1.bf16.msra.mxu0 %v4144
  %4230 = vmatprep.subr.bf16.mxu0 0
  %4231 = vmatpush1.bf16.msra.mxu0 %v4145
  %4232 = vmatprep.subr.bf16.mxu0 0
  %4233 = vmatpush1.bf16.msra.mxu0 %v4146
  %4234 = vmatprep.subr.bf16.mxu0 0
  %4235 = vmatpush1.bf16.msra.mxu0 %v4147
  %4236 = vmatprep.subr.bf16.mxu0 0
  %4237 = vmatpush1.bf16.msra.mxu0 %v4148
  %4238 = vmatprep.subr.bf16.mxu0 0
  %4239 = vmatpush1.bf16.msra.mxu0 %v4149
  %4240 = vmatprep.subr.bf16.mxu0 0
  %4241 = vmatpush1.bf16.msra.mxu0 %v4150
  %4242 = vmatprep.subr.bf16.mxu0 0
  %4243 = vmatpush1.bf16.msra.mxu0 %v4151
  %4244 = vmatprep.mubr.bf16.mxu0 %v4173
  %4245 = vmatmul.mubr.bf16.gmra.mrb[0].mxu0 %v4172
  %v4246 = vpop.f32.mrb[0].mxu0
  %v4247 = vadd.f32 %v4189, %v4246
  %v4248 = vpop.f32.mrb[0].mxu0
  %v4249 = vpop.f32.mrb[0].mxu0
  %v4250 = vadd.f32 %v4194, %v4249
  %v4251 = vpop.f32.mrb[0].mxu0
  %4252 = vmatprep.mubr.bf16.mxu0 %v4178
  %4253 = vmatmul.mubr.bf16.gmra.mrb[0].mxu0 %v4177
  %v4254 = vpop.f32.mrb[0].mxu0
  %v4255 = vadd.f32 %v4199, %v4254
  %v4256 = vpop.f32.mrb[0].mxu0
  %v4257 = vpop.f32.mrb[0].mxu0
  %v4258 = vadd.f32 %v4204, %v4257
  %v4259 = vpop.f32.mrb[0].mxu0
  %4260 = vdwg.mxu0
  %4261 = vmatprep.subr.bf16.mxu0 0
  %4262 = vmatpush1.bf16.msra.mxu0 %v4152
  %4263 = vmatprep.subr.bf16.mxu0 0
  %4264 = vmatpush1.bf16.msra.mxu0 %v4153
  %4265 = vmatprep.subr.bf16.mxu0 0
  %4266 = vmatpush1.bf16.msra.mxu0 %v4154
  %4267 = vmatprep.subr.bf16.mxu0 0
  %4268 = vmatpush1.bf16.msra.mxu0 %v4155
  %4269 = vmatprep.subr.bf16.mxu0 0
  %4270 = vmatpush1.bf16.msra.mxu0 %v4156
  %4271 = vmatprep.subr.bf16.mxu0 0
  %4272 = vmatpush1.bf16.msra.mxu0 %v4157
  %4273 = vmatprep.subr.bf16.mxu0 0
  %4274 = vmatpush1.bf16.msra.mxu0 %v4158
  %4275 = vmatprep.subr.bf16.mxu0 0
  %4276 = vmatpush1.bf16.msra.mxu0 %v4159
  %4277 = vmatprep.subr.bf16.mxu0 0
  %4278 = vmatpush1.bf16.msra.mxu0 %v4160
  %4279 = vmatprep.subr.bf16.mxu0 0
  %4280 = vmatpush1.bf16.msra.mxu0 %v4161
  %4281 = vmatprep.subr.bf16.mxu0 0
  %4282 = vmatpush1.bf16.msra.mxu0 %v4162
  %4283 = vmatprep.subr.bf16.mxu0 0
  %4284 = vmatpush1.bf16.msra.mxu0 %v4163
  %4285 = vmatprep.subr.bf16.mxu0 0
  %4286 = vmatpush1.bf16.msra.mxu0 %v4164
  %4287 = vmatprep.subr.bf16.mxu0 0
  %4288 = vmatpush1.bf16.msra.mxu0 %v4165
  %4289 = vmatprep.subr.bf16.mxu0 0
  %4290 = vmatpush1.bf16.msra.mxu0 %v4166
  %4291 = vmatprep.subr.bf16.mxu0 0
  %4292 = vmatpush1.bf16.msra.mxu0 %v4167
  %4293 = vmatprep.mubr.bf16.mxu0 %v4175
  %4294 = vmatmul.mubr.bf16.gmra.mrb[0].mxu0 %v4174
  %v4295 = vpop.f32.mrb[0].mxu0
  %v4296 = vadd.f32 %v4247, %v4295
  %v4297 = vpop.f32.mrb[0].mxu0
  %v4298 = vpop.f32.mrb[0].mxu0
  %v4299 = vadd.f32 %v4250, %v4298
  %v4300 = vpop.f32.mrb[0].mxu0
  %4301 = vmatprep.mubr.bf16.mxu0 %v4180
  %4302 = vmatmul.mubr.bf16.gmra.mrb[0].mxu0 %v4179
  %v4303 = vpop.f32.mrb[0].mxu0
  %v4304 = vadd.f32 %v4255, %v4303
  %v4305 = vpop.f32.mrb[0].mxu0
  %v4306 = vpop.f32.mrb[0].mxu0
  %v4307 = vadd.f32 %v4258, %v4306
  %v4308 = vpop.f32.mrb[0].mxu0
  %4309 = vdwg.mxu0
  %4310 = vmatprep.subr.bf16.mxu0 0
  %4311 = vmatpush1.bf16.msra.mxu0 %v4168
  %4312 = vmatprep.subr.bf16.mxu0 0
  %4313 = vmatpush1.bf16.msra.mxu0 %v4169
  %4314 = vmatprep.subr.bf16.mxu0 0
  %4315 = vmatpush1.bf16.msra.mxu0 %v4170
  %4316 = vmatprep.subr.bf16.mxu0 0
  %4317 = vmatpush1.bf16.msra.mxu0 %v4171
  %4318 = vmatprep.subr.bf16.mxu0 0
  %4319 = vmatpush1.bf16.msra.mxu0 0
  %4320 = vmatprep.subr.bf16.mxu0 0
  %4321 = vmatpush1.bf16.msra.mxu0 0
  %4322 = vmatprep.subr.bf16.mxu0 0
  %4323 = vmatpush1.bf16.msra.mxu0 0
  %4324 = vmatprep.subr.bf16.mxu0 0
  %4325 = vmatpush1.bf16.msra.mxu0 0
  %4326 = vmatprep.subr.bf16.mxu0 0
  %4327 = vmatpush1.bf16.msra.mxu0 0
  %4328 = vmatprep.subr.bf16.mxu0 0
  %4329 = vmatpush1.bf16.msra.mxu0 0
  %4330 = vmatprep.subr.bf16.mxu0 0
  %4331 = vmatpush1.bf16.msra.mxu0 0
  %4332 = vmatprep.subr.bf16.mxu0 0
  %4333 = vmatpush1.bf16.msra.mxu0 0
  %4334 = vmatprep.subr.bf16.mxu0 0
  %4335 = vmatpush1.bf16.msra.mxu0 0
  %4336 = vmatprep.subr.bf16.mxu0 0
  %4337 = vmatpush1.bf16.msra.mxu0 0
  %4338 = vmatprep.subr.bf16.mxu0 0
  %4339 = vmatpush1.bf16.msra.mxu0 0
  %4340 = vmatprep.subr.bf16.mxu0 0
  %4341 = vmatpush1.bf16.msra.mxu0 0
  %4342 = vmatprep.mubr.bf16.mxu0 0
  %4343 = vmatmul.mubr.bf16.gmra.mrb[0].mxu0 %v4207
  %v4344 = vpop.f32.mrb[0].mxu0
  %v4345 = vadd.f32 %v4296, %v4344
  %v4346 = vpop.f32.mrb[0].mxu0
  %v4347 = vpop.f32.mrb[0].mxu0
  %v4348 = vadd.f32 %v4299, %v4347
  %v4349 = vpop.f32.mrb[0].mxu0
  %4350 = vmatprep.mubr.bf16.mxu0 0
  %4351 = vmatmul.mubr.bf16.gmra.mrb[0].mxu0 %v4210
  %v4352 = vpop.f32.mrb[0].mxu0
  %v4353 = vadd.f32 %v4304, %v4352
  %v4354 = vpop.f32.mrb[0].mxu0
  %v4355 = vpop.f32.mrb[0].mxu0
  %v4356 = vadd.f32 %v4307, %v4355
  %v4357 = vpop.f32.mrb[0].mxu0
  %4358 = vdwg.mxu0
  %vm4359 = vcmp.gt.f32.partialorder %v4345, 0.0
  %vm4360 = vcmp.gt.f32.partialorder %v4348, 0.0
  %vm4361 = vcmp.gt.f32.partialorder %v4353, 0.0
  %vm4362 = vcmp.gt.f32.partialorder %v4356, 0.0
  %v4363 = vmul.f32 %v4345, 0.2
  %v4364 = vmul.f32 %v4348, 0.2
  %v4365 = vmul.f32 %v4353, 0.2
  %v4366 = vmul.f32 %v4356, 0.2
  %v4367 = vsel %vm4359, %v4345, %v4363
  %v4368 = vsel %vm4360, %v4348, %v4364
  %v4369 = vsel %vm4361, %v4353, %v4365
  %v4370 = vsel %vm4362, %v4356, %v4366
  %v4371 = vpack.c.bf16 %v4368, %v4367
  %v4372 = vpack.c.bf16 %v4370, %v4369
  %v4373 = vld [vmem:[#allocation6] sm:$0xf]
  %v4374 = vld [vmem:[#allocation6 + $0x4] sm:$0xf]
  %v4375 = vld [vmem:[#allocation6 + $0x8] sm:$0x7]
  %v4379 = vunpack.c.l.b16 %v4373
  %v4380 = vunpack.c.l.b16 %v4374
  %v4381 = vunpack.c.l.b16 %v4375
  %v4382 = vpack.c.b16 %v4380, %v4379
  %v4383 = vpack.c.b16 %v4381, %v4381
  %vm4385 = vcmask 179200
  %v4387 = vsel %vm4385, %v4371, 0
  %v4390 = vsel %vm4385, %v4372, 0
  %v4393 = vsel %vm2207, %v4383, 0
  %4395 = vmatprep.subr.bf16.mxu0 0
  %4396 = vmatpush1.bf16.msra.mxu0 %v4382
  %4397 = vmatprep.subr.bf16.mxu0 0
  %4398 = vmatpush1.bf16.msra.mxu0 %v4393
  %4399 = vmatprep.subr.bf16.mxu0 0
  %4400 = vmatpush1.bf16.msra.mxu0 0
  %4401 = vmatprep.subr.bf16.mxu0 0
  %4402 = vmatpush1.bf16.msra.mxu0 0
  %4403 = vmatprep.subr.bf16.mxu0 0
  %4404 = vmatpush1.bf16.msra.mxu0 0
  %4405 = vmatprep.subr.bf16.mxu0 0
  %4406 = vmatpush1.bf16.msra.mxu0 0
  %4407 = vmatprep.subr.bf16.mxu0 0
  %4408 = vmatpush1.bf16.msra.mxu0 0
  %4409 = vmatprep.subr.bf16.mxu0 0
  %4410 = vmatpush1.bf16.msra.mxu0 0
  %4411 = vmatprep.subr.bf16.mxu0 0
  %4412 = vmatpush1.bf16.msra.mxu0 0
  %4413 = vmatprep.subr.bf16.mxu0 0
  %4414 = vmatpush1.bf16.msra.mxu0 0
  %4415 = vmatprep.subr.bf16.mxu0 0
  %4416 = vmatpush1.bf16.msra.mxu0 0
  %4417 = vmatprep.subr.bf16.mxu0 0
  %4418 = vmatpush1.bf16.msra.mxu0 0
  %4419 = vmatprep.subr.bf16.mxu0 0
  %4420 = vmatpush1.bf16.msra.mxu0 0
  %4421 = vmatprep.subr.bf16.mxu0 0
  %4422 = vmatpush1.bf16.msra.mxu0 0
  %4423 = vmatprep.subr.bf16.mxu0 0
  %4424 = vmatpush1.bf16.msra.mxu0 0
  %4425 = vmatprep.subr.bf16.mxu0 0
  %4426 = vmatpush1.bf16.msra.mxu0 0
  %4427 = vmatprep.mubr.bf16.mxu0 0
  %4428 = vmatmul.mubr.bf16.gmra.mrb[0].mxu0 %v4387
  %v4429 = vpop.f32.mrb[0].mxu0
  %v4430 = vadd.f32 0.0, %v4429
  %v4431 = vpop.f32.mrb[0].mxu0
  %v4432 = vpop.f32.mrb[0].mxu0
  %v4433 = vadd.f32 0.0, %v4432
  %v4434 = vpop.f32.mrb[0].mxu0
  %4435 = vmatprep.mubr.bf16.mxu0 0
  %4436 = vmatmul.mubr.bf16.gmra.mrb[0].mxu0 %v4390
  %v4437 = vpop.f32.mrb[0].mxu0
  %v4438 = vadd.f32 0.0, %v4437
  %v4439 = vpop.f32.mrb[0].mxu0
  %v4440 = vpop.f32.mrb[0].mxu0
  %v4441 = vadd.f32 0.0, %v4440
  %v4442 = vpop.f32.mrb[0].mxu0
  %4443 = vdwg.mxu0
  %4448 = vrot.lane.b32.xlu0 %v4430, 127
  %v4449 = vpop.permute.xlu0 %4448
  %4450 = vrot.lane.b32.xlu0 %v4433, 127
  %v4451 = vpop.permute.xlu0 %4450
  %4452 = vrot.lane.b32.xlu0 %v4438, 127
  %v4453 = vpop.permute.xlu0 %4452
  %4454 = vrot.lane.b32.xlu0 %v4441, 127
  %v4455 = vpop.permute.xlu0 %4454
  %4460 = vrot.lane.b32.xlu0 %v4430, 126
  %v4461 = vpop.permute.xlu0 %4460
  %4462 = vrot.lane.b32.xlu0 %v4433, 126
  %v4463 = vpop.permute.xlu0 %4462
  %4464 = vrot.lane.b32.xlu0 %v4438, 126
  %v4465 = vpop.permute.xlu0 %4464
  %4466 = vrot.lane.b32.xlu0 %v4441, 126
  %v4467 = vpop.permute.xlu0 %4466
  %4472 = vrot.lane.b32.xlu0 %v4430, 122
  %v4473 = vpop.permute.xlu0 %4472
  %4474 = vrot.lane.b32.xlu0 %v4433, 122
  %v4475 = vpop.permute.xlu0 %4474
  %4476 = vrot.lane.b32.xlu0 %v4438, 122
  %v4477 = vpop.permute.xlu0 %4476
  %4478 = vrot.lane.b32.xlu0 %v4441, 122
  %v4479 = vpop.permute.xlu0 %4478
  %4484 = vrot.lane.b32.xlu0 %v4430, 121
  %v4485 = vpop.permute.xlu0 %4484
  %4486 = vrot.lane.b32.xlu0 %v4433, 121
  %v4487 = vpop.permute.xlu0 %4486
  %4488 = vrot.lane.b32.xlu0 %v4438, 121
  %v4489 = vpop.permute.xlu0 %4488
  %4490 = vrot.lane.b32.xlu0 %v4441, 121
  %v4491 = vpop.permute.xlu0 %4490
  %4496 = vrot.lane.b32.xlu0 %v4430, 120
  %v4497 = vpop.permute.xlu0 %4496
  %4498 = vrot.lane.b32.xlu0 %v4433, 120
  %v4499 = vpop.permute.xlu0 %4498
  %4500 = vrot.lane.b32.xlu0 %v4438, 120
  %v4501 = vpop.permute.xlu0 %4500
  %4502 = vrot.lane.b32.xlu0 %v4441, 120
  %v4503 = vpop.permute.xlu0 %4502
  %4508 = vrot.lane.b32.xlu0 %v4430, 116
  %v4509 = vpop.permute.xlu0 %4508
  %4510 = vrot.lane.b32.xlu0 %v4433, 116
  %v4511 = vpop.permute.xlu0 %4510
  %4512 = vrot.lane.b32.xlu0 %v4438, 116
  %v4513 = vpop.permute.xlu0 %4512
  %4514 = vrot.lane.b32.xlu0 %v4441, 116
  %v4515 = vpop.permute.xlu0 %4514
  %4520 = vrot.lane.b32.xlu0 %v4430, 115
  %v4521 = vpop.permute.xlu0 %4520
  %4522 = vrot.lane.b32.xlu0 %v4433, 115
  %v4523 = vpop.permute.xlu0 %4522
  %4524 = vrot.lane.b32.xlu0 %v4438, 115
  %v4525 = vpop.permute.xlu0 %4524
  %4526 = vrot.lane.b32.xlu0 %v4441, 115
  %v4527 = vpop.permute.xlu0 %4526
  %4532 = vrot.lane.b32.xlu0 %v4430, 114
  %v4533 = vpop.permute.xlu0 %4532
  %4534 = vrot.lane.b32.xlu0 %v4433, 114
  %v4535 = vpop.permute.xlu0 %4534
  %4536 = vrot.lane.b32.xlu0 %v4438, 114
  %v4537 = vpop.permute.xlu0 %4536
  %4538 = vrot.lane.b32.xlu0 %v4441, 114
  %v4539 = vpop.permute.xlu0 %4538
  %v4544 = vpack.c.bf16 %v4433, %v4430
  %v4545 = vpack.c.bf16 %v4441, %v4438
  %v4546 = vpack.c.bf16 %v4451, %v4449
  %v4547 = vpack.c.bf16 %v4455, %v4453
  %v4548 = vpack.c.bf16 %v4463, %v4461
  %v4549 = vpack.c.bf16 %v4467, %v4465
  %v4550 = vpack.c.bf16 %v4475, %v4473
  %v4551 = vpack.c.bf16 %v4479, %v4477
  %v4552 = vpack.c.bf16 %v4487, %v4485
  %v4553 = vpack.c.bf16 %v4491, %v4489
  %v4554 = vpack.c.bf16 %v4499, %v4497
  %v4555 = vpack.c.bf16 %v4503, %v4501
  %v4556 = vpack.c.bf16 %v4511, %v4509
  %v4557 = vpack.c.bf16 %v4515, %v4513
  %v4558 = vpack.c.bf16 %v4523, %v4521
  %v4559 = vpack.c.bf16 %v4527, %v4525
  %v4560 = vpack.c.bf16 %v4535, %v4533
  %v4561 = vpack.c.bf16 %v4539, %v4537
  %v4562 = vld [vmem:[#allocation3] sm:$0xff]
  %v4563 = vld [vmem:[#allocation3 + $0x8] sm:$0xff]
  %v4564 = vld [vmem:[#allocation3 + $0x10] sm:$0xff]
  %v4565 = vld [vmem:[%s47] sm:$0xff]
  %v4566 = vld [vmem:[%s47 + $0x8] sm:$0xff]
  %4568 = vset.pattern.permute.xlu0 0
  %4569 = vperm.xlu0 %4568, %v4565
  %v4570 = vpop.permute.xlu0 %4569
  %4573 = vset.pattern.permute.xlu0 0
  %4574 = vperm.xlu0 %4573, %v4566
  %v4575 = vpop.permute.xlu0 %4574
  %v4578 = vsel %vm2638, %v4564, 0
  %4580 = vmatprep.subr.bf16.mxu0 0
  %4581 = vmatpush1.bf16.msra.mxu0 %v4544
  %4582 = vmatprep.subr.bf16.mxu0 0
  %4583 = vmatpush1.bf16.msra.mxu0 %v4545
  %4584 = vmatprep.subr.bf16.mxu0 0
  %4585 = vmatpush1.bf16.msra.mxu0 %v4546
  %4586 = vmatprep.subr.bf16.mxu0 0
  %4587 = vmatpush1.bf16.msra.mxu0 %v4547
  %4588 = vmatprep.subr.bf16.mxu0 0
  %4589 = vmatpush1.bf16.msra.mxu0 %v4548
  %4590 = vmatprep.subr.bf16.mxu0 0
  %4591 = vmatpush1.bf16.msra.mxu0 %v4549
  %4592 = vmatprep.subr.bf16.mxu0 0
  %4593 = vmatpush1.bf16.msra.mxu0 %v4550
  %4594 = vmatprep.subr.bf16.mxu0 0
  %4595 = vmatpush1.bf16.msra.mxu0 %v4551
  %4596 = vmatprep.subr.bf16.mxu0 0
  %4597 = vmatpush1.bf16.msra.mxu0 %v4552
  %4598 = vmatprep.subr.bf16.mxu0 0
  %4599 = vmatpush1.bf16.msra.mxu0 %v4553
  %4600 = vmatprep.subr.bf16.mxu0 0
  %4601 = vmatpush1.bf16.msra.mxu0 %v4554
  %4602 = vmatprep.subr.bf16.mxu0 0
  %4603 = vmatpush1.bf16.msra.mxu0 %v4555
  %4604 = vmatprep.subr.bf16.mxu0 0
  %4605 = vmatpush1.bf16.msra.mxu0 %v4556
  %4606 = vmatprep.subr.bf16.mxu0 0
  %4607 = vmatpush1.bf16.msra.mxu0 %v4557
  %4608 = vmatprep.subr.bf16.mxu0 0
  %4609 = vmatpush1.bf16.msra.mxu0 %v4558
  %4610 = vmatprep.subr.bf16.mxu0 0
  %4611 = vmatpush1.bf16.msra.mxu0 %v4559
  %4612 = vmatprep.mubr.bf16.mxu0 %v4563
  %4613 = vmatmul.mubr.bf16.gmra.mrb[0].mxu0 %v4562
  %v4614 = vpop.f32.mrb[0].mxu0
  %v4615 = vadd.f32 %v4570, %v4614
  %v4616 = vpop.f32.mrb[0].mxu0
  %v4617 = vpop.f32.mrb[0].mxu0
  %v4618 = vadd.f32 %v4575, %v4617
  %v4619 = vpop.f32.mrb[0].mxu0
  %4620 = vdwg.mxu0
  %4621 = vmatprep.subr.bf16.mxu0 0
  %4622 = vmatpush1.bf16.msra.mxu0 %v4560
  %4623 = vmatprep.subr.bf16.mxu0 0
  %4624 = vmatpush1.bf16.msra.mxu0 %v4561
  %4625 = vmatprep.subr.bf16.mxu0 0
  %4626 = vmatpush1.bf16.msra.mxu0 0
  %4627 = vmatprep.subr.bf16.mxu0 0
  %4628 = vmatpush1.bf16.msra.mxu0 0
  %4629 = vmatprep.subr.bf16.mxu0 0
  %4630 = vmatpush1.bf16.msra.mxu0 0
  %4631 = vmatprep.subr.bf16.mxu0 0
  %4632 = vmatpush1.bf16.msra.mxu0 0
  %4633 = vmatprep.subr.bf16.mxu0 0
  %4634 = vmatpush1.bf16.msra.mxu0 0
  %4635 = vmatprep.subr.bf16.mxu0 0
  %4636 = vmatpush1.bf16.msra.mxu0 0
  %4637 = vmatprep.subr.bf16.mxu0 0
  %4638 = vmatpush1.bf16.msra.mxu0 0
  %4639 = vmatprep.subr.bf16.mxu0 0
  %4640 = vmatpush1.bf16.msra.mxu0 0
  %4641 = vmatprep.subr.bf16.mxu0 0
  %4642 = vmatpush1.bf16.msra.mxu0 0
  %4643 = vmatprep.subr.bf16.mxu0 0
  %4644 = vmatpush1.bf16.msra.mxu0 0
  %4645 = vmatprep.subr.bf16.mxu0 0
  %4646 = vmatpush1.bf16.msra.mxu0 0
  %4647 = vmatprep.subr.bf16.mxu0 0
  %4648 = vmatpush1.bf16.msra.mxu0 0
  %4649 = vmatprep.subr.bf16.mxu0 0
  %4650 = vmatpush1.bf16.msra.mxu0 0
  %4651 = vmatprep.subr.bf16.mxu0 0
  %4652 = vmatpush1.bf16.msra.mxu0 0
  %4653 = vmatprep.mubr.bf16.mxu0 0
  %4654 = vmatmul.mubr.bf16.gmra.mrb[0].mxu0 %v4578
  %v4655 = vpop.f32.mrb[0].mxu0
  %v4656 = vadd.f32 %v4615, %v4655
  %v4657 = vpop.f32.mrb[0].mxu0
  %v4658 = vpop.f32.mrb[0].mxu0
  %v4659 = vadd.f32 %v4618, %v4658
  %v4660 = vpop.f32.mrb[0].mxu0
  %4661 = vdwg.mxu0
  %vm4662 = vcmp.gt.f32.partialorder %v4656, 0.0
  %vm4663 = vcmp.gt.f32.partialorder %v4659, 0.0
  %v4664 = vmul.f32 %v4656, 0.2
  %v4665 = vmul.f32 %v4659, 0.2
  %v4666 = vsel %vm4662, %v4656, %v4664
  %v4667 = vsel %vm4663, %v4659, %v4665
  %v4668 = vpack.c.bf16 %v4667, %v4666
  %v4669 = vld [vmem:[#allocation7] sm:$0xff]
  %v4670 = vld [vmem:[#allocation7 + $0x8] sm:$0xff]
  %v4671 = vld [vmem:[#allocation7 + $0x10] sm:$0xff]
  %v4672 = vld [vmem:[#allocation7 + $0x18] sm:$0xff]
  %v4673 = vld [vmem:[#allocation7 + $0x20] sm:$0xff]
  %v4674 = vld [vmem:[#allocation7 + $0x28] sm:$0xff]
  %v4675 = vld [vmem:[#allocation7 + $0x30] sm:$0xff]
  %v4676 = vld [vmem:[#allocation7 + $0x38] sm:$0x11]
  %v4685 = vunpack.c.l.b16 %v4669
  %v4686 = vunpack.c.h.b16 %v4669
  %v4687 = vunpack.c.l.b16 %v4670
  %v4688 = vunpack.c.h.b16 %v4670
  %v4689 = vunpack.c.l.b16 %v4671
  %v4690 = vunpack.c.h.b16 %v4671
  %v4691 = vunpack.c.l.b16 %v4672
  %v4692 = vunpack.c.h.b16 %v4672
  %v4693 = vunpack.c.l.b16 %v4673
  %v4694 = vunpack.c.h.b16 %v4673
  %v4695 = vunpack.c.l.b16 %v4674
  %v4696 = vunpack.c.h.b16 %v4674
  %v4697 = vunpack.c.l.b16 %v4675
  %v4698 = vunpack.c.h.b16 %v4675
  %v4699 = vunpack.c.l.b16 %v4676
  %v4700 = vunpack.c.h.b16 %v4676
  %v4701 = vpack.c.b16 %v4687, %v4685
  %v4702 = vpack.c.b16 %v4688, %v4686
  %v4703 = vpack.c.b16 %v4691, %v4689
  %v4704 = vpack.c.b16 %v4692, %v4690
  %v4705 = vpack.c.b16 %v4695, %v4693
  %v4706 = vpack.c.b16 %v4696, %v4694
  %v4707 = vpack.c.b16 %v4699, %v4697
  %v4708 = vpack.c.b16 %v4700, %v4698
  %vm4715 = vcmask 474112
  %v4717 = vsel %vm4715, %v4668, 0
  %vm4719 = vcmask 1044480
  %v4721 = vsel %vm4719, %v4707, 0
  %v4724 = vsel %vm4719, %v4708, 0
  %4726 = vmatprep.subr.bf16.mxu0 %v4702
  %4727 = vmatpush1.bf16.msra.mxu0 %v4701
  %4728 = vmatprep.subr.bf16.mxu0 %v4704
  %4729 = vmatpush1.bf16.msra.mxu0 %v4703
  %4730 = vmatprep.subr.bf16.mxu0 %v4706
  %4731 = vmatpush1.bf16.msra.mxu0 %v4705
  %4732 = vmatprep.subr.bf16.mxu0 %v4724
  %4733 = vmatpush1.bf16.msra.mxu0 %v4721
  %4734 = vmatprep.subr.bf16.mxu0 0
  %4735 = vmatpush1.bf16.msra.mxu0 0
  %4736 = vmatprep.subr.bf16.mxu0 0
  %4737 = vmatpush1.bf16.msra.mxu0 0
  %4738 = vmatprep.subr.bf16.mxu0 0
  %4739 = vmatpush1.bf16.msra.mxu0 0
  %4740 = vmatprep.subr.bf16.mxu0 0
  %4741 = vmatpush1.bf16.msra.mxu0 0
  %4742 = vmatprep.subr.bf16.mxu0 0
  %4743 = vmatpush1.bf16.msra.mxu0 0
  %4744 = vmatprep.subr.bf16.mxu0 0
  %4745 = vmatpush1.bf16.msra.mxu0 0
  %4746 = vmatprep.subr.bf16.mxu0 0
  %4747 = vmatpush1.bf16.msra.mxu0 0
  %4748 = vmatprep.subr.bf16.mxu0 0
  %4749 = vmatpush1.bf16.msra.mxu0 0
  %4750 = vmatprep.subr.bf16.mxu0 0
  %4751 = vmatpush1.bf16.msra.mxu0 0
  %4752 = vmatprep.subr.bf16.mxu0 0
  %4753 = vmatpush1.bf16.msra.mxu0 0
  %4754 = vmatprep.subr.bf16.mxu0 0
  %4755 = vmatpush1.bf16.msra.mxu0 0
  %4756 = vmatprep.subr.bf16.mxu0 0
  %4757 = vmatpush1.bf16.msra.mxu0 0
  %4758 = vmatprep.mubr.bf16.mxu0 0
  %4759 = vmatmul.mubr.bf16.gmra.mrb[0].mxu0 %v4717
  %v4760 = vpop.f32.mrb[0].mxu0
  %v4761 = vadd.f32 0.0, %v4760
  %v4762 = vpop.f32.mrb[0].mxu0
  %v4763 = vadd.f32 0.0, %v4762
  %v4764 = vpop.f32.mrb[0].mxu0
  %v4765 = vadd.f32 0.0, %v4764
  %v4766 = vpop.f32.mrb[0].mxu0
  %v4767 = vadd.f32 0.0, %v4766
  %4768 = vdwg.mxu0
  %4773 = vrot.lane.b32.xlu0 %v4761, 127
  %v4774 = vpop.permute.xlu0 %4773
  %4775 = vrot.lane.b32.xlu0 %v4763, 127
  %v4776 = vpop.permute.xlu0 %4775
  %4777 = vrot.lane.b32.xlu0 %v4765, 127
  %v4778 = vpop.permute.xlu0 %4777
  %4779 = vrot.lane.b32.xlu0 %v4767, 127
  %v4780 = vpop.permute.xlu0 %4779
  %v4781 = vsel %vm763, %v4774, %v4776
  %v4782 = vsel %vm763, %v4778, %v4780
  %4787 = vrot.lane.b32.xlu0 %v4761, 126
  %v4788 = vpop.permute.xlu0 %4787
  %4789 = vrot.lane.b32.xlu0 %v4763, 126
  %v4790 = vpop.permute.xlu0 %4789
  %4791 = vrot.lane.b32.xlu0 %v4765, 126
  %v4792 = vpop.permute.xlu0 %4791
  %4793 = vrot.lane.b32.xlu0 %v4767, 126
  %v4794 = vpop.permute.xlu0 %4793
  %v4795 = vsel %vm783, %v4788, %v4790
  %v4796 = vsel %vm783, %v4792, %v4794
  %4801 = vrot.lane.b32.xlu0 %v4761, 118
  %v4802 = vpop.permute.xlu0 %4801
  %4803 = vrot.lane.b32.xlu0 %v4763, 118
  %v4804 = vpop.permute.xlu0 %4803
  %4805 = vrot.lane.b32.xlu0 %v4765, 118
  %v4806 = vpop.permute.xlu0 %4805
  %4807 = vrot.lane.b32.xlu0 %v4767, 118
  %v4808 = vpop.permute.xlu0 %4807
  %v4809 = vsel %vm1936, %v4802, %v4804
  %v4810 = vsel %vm1936, %v4806, %v4808
  %4815 = vrot.lane.b32.xlu0 %v4761, 117
  %v4816 = vpop.permute.xlu0 %4815
  %4817 = vrot.lane.b32.xlu0 %v4763, 117
  %v4818 = vpop.permute.xlu0 %4817
  %4819 = vrot.lane.b32.xlu0 %v4765, 117
  %v4820 = vpop.permute.xlu0 %4819
  %4821 = vrot.lane.b32.xlu0 %v4767, 117
  %v4822 = vpop.permute.xlu0 %4821
  %v4823 = vsel %vm1944, %v4816, %v4818
  %v4824 = vsel %vm1944, %v4820, %v4822
  %4829 = vrot.lane.b32.xlu0 %v4761, 116
  %v4830 = vpop.permute.xlu0 %4829
  %4831 = vrot.lane.b32.xlu0 %v4763, 116
  %v4832 = vpop.permute.xlu0 %4831
  %4833 = vrot.lane.b32.xlu0 %v4765, 116
  %v4834 = vpop.permute.xlu0 %4833
  %4835 = vrot.lane.b32.xlu0 %v4767, 116
  %v4836 = vpop.permute.xlu0 %4835
  %v4837 = vsel %vm1952, %v4830, %v4832
  %v4838 = vsel %vm1952, %v4834, %v4836
  %4843 = vrot.lane.b32.xlu0 %v4761, 108
  %v4844 = vpop.permute.xlu0 %4843
  %4845 = vrot.lane.b32.xlu0 %v4763, 108
  %v4846 = vpop.permute.xlu0 %4845
  %4847 = vrot.lane.b32.xlu0 %v4765, 108
  %v4848 = vpop.permute.xlu0 %4847
  %4849 = vrot.lane.b32.xlu0 %v4767, 108
  %v4850 = vpop.permute.xlu0 %4849
  %v4851 = vsel %vm863, %v4844, %v4846
  %v4852 = vsel %vm863, %v4848, %v4850
  %4857 = vrot.lane.b32.xlu0 %v4761, 107
  %v4858 = vpop.permute.xlu0 %4857
  %4859 = vrot.lane.b32.xlu0 %v4763, 107
  %v4860 = vpop.permute.xlu0 %4859
  %4861 = vrot.lane.b32.xlu0 %v4765, 107
  %v4862 = vpop.permute.xlu0 %4861
  %4863 = vrot.lane.b32.xlu0 %v4767, 107
  %v4864 = vpop.permute.xlu0 %4863
  %v4865 = vsel %vm883, %v4858, %v4860
  %v4866 = vsel %vm883, %v4862, %v4864
  %4871 = vrot.lane.b32.xlu0 %v4761, 106
  %v4872 = vpop.permute.xlu0 %4871
  %4873 = vrot.lane.b32.xlu0 %v4763, 106
  %v4874 = vpop.permute.xlu0 %4873
  %4875 = vrot.lane.b32.xlu0 %v4765, 106
  %v4876 = vpop.permute.xlu0 %4875
  %4877 = vrot.lane.b32.xlu0 %v4767, 106
  %v4878 = vpop.permute.xlu0 %4877
  %v4879 = vsel %vm1982, %v4872, %v4874
  %v4880 = vsel %vm1982, %v4876, %v4878
  %v4885 = vpack.c.bf16 %v4765, %v4761
  %v4886 = vpack.c.bf16 %v4767, %v4763
  %v4887 = vpack.c.bf16 %v4782, %v4781
  %v4888 = vpack.c.bf16 %v4780, %v4776
  %v4889 = vpack.c.bf16 %v4796, %v4795
  %v4890 = vpack.c.bf16 %v4794, %v4790
  %v4891 = vpack.c.bf16 %v4810, %v4809
  %v4892 = vpack.c.bf16 %v4808, %v4804
  %v4893 = vpack.c.bf16 %v4824, %v4823
  %v4894 = vpack.c.bf16 %v4822, %v4818
  %v4895 = vpack.c.bf16 %v4838, %v4837
  %v4896 = vpack.c.bf16 %v4836, %v4832
  %v4897 = vpack.c.bf16 %v4852, %v4851
  %v4898 = vpack.c.bf16 %v4850, %v4846
  %v4899 = vpack.c.bf16 %v4866, %v4865
  %v4900 = vpack.c.bf16 %v4864, %v4860
  %v4901 = vpack.c.bf16 %v4880, %v4879
  %v4902 = vpack.c.bf16 %v4878, %v4874
  %v4903 = vld [vmem:[#allocation4] sm:$0xff]
  %v4904 = vld [vmem:[%s49] sm:$0xff]
  %4906 = vset.pattern.permute.xlu0 0
  %4907 = vperm.xlu0 %4906, %v4904
  %v4908 = vpop.permute.xlu0 %4907
  %v4911 = vunpack.c.l.b16 %v4903
  %v4912 = vunpack.c.h.b16 %v4903
  %v4913 = vpack.c.b16 %v4911, %v4911
  %v4914 = vpack.c.b16 %v4912, %v4912
  %v4917 = vsel %vm3737, %v4914, 0
  %4919 = vmatprep.subr.bf16.mxu0 %v4886
  %4920 = vmatpush1.bf16.msra.mxu0 %v4885
  %4921 = vmatprep.subr.bf16.mxu0 %v4888
  %4922 = vmatpush1.bf16.msra.mxu0 %v4887
  %4923 = vmatprep.subr.bf16.mxu0 %v4890
  %4924 = vmatpush1.bf16.msra.mxu0 %v4889
  %4925 = vmatprep.subr.bf16.mxu0 %v4892
  %4926 = vmatpush1.bf16.msra.mxu0 %v4891
  %4927 = vmatprep.subr.bf16.mxu0 %v4894
  %4928 = vmatpush1.bf16.msra.mxu0 %v4893
  %4929 = vmatprep.subr.bf16.mxu0 %v4896
  %4930 = vmatpush1.bf16.msra.mxu0 %v4895
  %4931 = vmatprep.subr.bf16.mxu0 %v4898
  %4932 = vmatpush1.bf16.msra.mxu0 %v4897
  %4933 = vmatprep.subr.bf16.mxu0 %v4900
  %4934 = vmatpush1.bf16.msra.mxu0 %v4899
  %4935 = vmatprep.subr.bf16.mxu0 %v4902
  %4936 = vmatpush1.bf16.msra.mxu0 %v4901
  %4937 = vmatprep.subr.bf16.mxu0 0
  %4938 = vmatpush1.bf16.msra.mxu0 0
  %4939 = vmatprep.subr.bf16.mxu0 0
  %4940 = vmatpush1.bf16.msra.mxu0 0
  %4941 = vmatprep.subr.bf16.mxu0 0
  %4942 = vmatpush1.bf16.msra.mxu0 0
  %4943 = vmatprep.subr.bf16.mxu0 0
  %4944 = vmatpush1.bf16.msra.mxu0 0
  %4945 = vmatprep.subr.bf16.mxu0 0
  %4946 = vmatpush1.bf16.msra.mxu0 0
  %4947 = vmatprep.subr.bf16.mxu0 0
  %4948 = vmatpush1.bf16.msra.mxu0 0
  %4949 = vmatprep.subr.bf16.mxu0 0
  %4950 = vmatpush1.bf16.msra.mxu0 0
  %4951 = vmatprep.mubr.bf16.mxu0 %v4917
  %4952 = vmatmul.mubr.bf16.gmra.mrb[0].mxu0 %v4913
  %v4953 = vpop.f32.mrb[0].mxu0
  %v4954 = vadd.f32 %v4908, %v4953
  %v4955 = vpop.f32.mrb[0].mxu0
  %v4956 = vadd.f32 %v4908, %v4955
  %v4957 = vpop.f32.mrb[0].mxu0
  %v4958 = vpop.f32.mrb[0].mxu0
  %4959 = vdwg.mxu0
  %vm4960 = vcmp.gt.f32.partialorder %v4954, 0.0
  %vm4961 = vcmp.gt.f32.partialorder %v4956, 0.0
  %v4962 = vmul.f32 %v4954, 0.2
  %v4963 = vmul.f32 %v4956, 0.2
  %v4964 = vsel %vm4960, %v4954, %v4962
  %v4965 = vsel %vm4961, %v4956, %v4963
  %v4966 = vpack.c.bf16 %v4964, %v4964
  %v4967 = vpack.c.bf16 %v4965, %v4965
  %v4968 = vld [vmem:[#allocation8] sm:$0xff]
  %v4969 = vld [vmem:[#allocation8 + $0x8] sm:$0xff]
  %v4970 = vld [vmem:[#allocation8 + $0x10] sm:$0xff]
  %v4971 = vld [vmem:[#allocation8 + $0x18] sm:$0xff]
  %v4972 = vld [vmem:[#allocation8 + $0x20] sm:$0xff]
  %v4973 = vld [vmem:[#allocation8 + $0x28] sm:$0xff]
  %v4974 = vld [vmem:[#allocation8 + $0x30] sm:$0xff]
  %v4975 = vld [vmem:[#allocation8 + $0x38] sm:$0xff]
  %v4976 = vld [vmem:[#allocation8 + $0x40] sm:$0xff]
  %v4977 = vld [vmem:[#allocation8 + $0x48] sm:$0xff]
  %v4978 = vld [vmem:[#allocation8 + $0x50] sm:$0xff]
  %v4979 = vld [vmem:[#allocation8 + $0x58] sm:$0xff]
  %v4980 = vld [vmem:[#allocation8 + $0x60] sm:$0xff]
  %v4981 = vld [vmem:[#allocation8 + $0x68] sm:$0xff]
  %v4982 = vld [vmem:[#allocation8 + $0x70] sm:$0xff]
  %v4983 = vld [vmem:[#allocation8 + $0x78] sm:$0xff]
  %v4984 = vld [vmem:[#allocation8 + $0x80] sm:$0xff]
  %v4985 = vld [vmem:[#allocation8 + $0x88] sm:$0xff]
  %v4986 = vld [vmem:[#allocation8 + $0x90] sm:$0xff]
  %v4987 = vld [vmem:[#allocation8 + $0x98] sm:$0xff]
  %v4988 = vld [vmem:[#allocation8 + $0xa0] sm:$0xff]
  %v4989 = vld [vmem:[#allocation8 + $0xa8] sm:$0xff]
  %v4990 = vld [vmem:[#allocation8 + $0xb0] sm:$0xff]
  %v4991 = vld [vmem:[#allocation8 + $0xb8] sm:$0xff]
  %v4992 = vld [vmem:[#allocation8 + $0xc0] sm:$0xff]
  %v4993 = vld [vmem:[#allocation8 + $0xc8] sm:$0xff]
  %v4994 = vld [vmem:[#allocation8 + $0xd0] sm:$0xff]
  %v4995 = vld [vmem:[#allocation8 + $0xd8] sm:$0xff]
  %v4996 = vld [vmem:[#allocation8 + $0xe0] sm:$0xff]
  %v4997 = vld [vmem:[#allocation8 + $0xe8] sm:$0xff]
  %v4998 = vld [vmem:[#allocation8 + $0xf0] sm:$0xff]
  %v4999 = vld [vmem:[#allocation8 + $0xf8] sm:$0xff]
  %v5000 = vld [vmem:[#allocation8 + $0x100] sm:$0xff]
  %v5001 = vld [vmem:[#allocation8 + $0x108] sm:$0xff]
  %v5002 = vld [vmem:[#allocation8 + $0x110] sm:$0xff]
  %v5003 = vld [vmem:[#allocation8 + $0x118] sm:$0xff]
  %v5004 = vld [vmem:[#allocation8 + $0x120] sm:$0xff]
  %v5005 = vld [vmem:[#allocation8 + $0x128] sm:$0xff]
  %v5006 = vld [vmem:[#allocation8 + $0x130] sm:$0xff]
  %v5007 = vld [vmem:[#allocation8 + $0x138] sm:$0xff]
  %v5008 = vld [vmem:[#allocation8 + $0x140] sm:$0xff]
  %v5009 = vld [vmem:[#allocation8 + $0x148] sm:$0xff]
  %v5010 = vld [vmem:[#allocation8 + $0x150] sm:$0xff]
  %v5011 = vld [vmem:[#allocation8 + $0x158] sm:$0xff]
  %v5012 = vld [vmem:[#allocation8 + $0x160] sm:$0xff]
  %v5013 = vld [vmem:[#allocation8 + $0x168] sm:$0xff]
  %v5014 = vld [vmem:[#allocation8 + $0x170] sm:$0xff]
  %v5015 = vld [vmem:[#allocation8 + $0x178] sm:$0xff]
  %v5016 = vld [vmem:[#allocation8 + $0x180] sm:$0xff]
  %v5017 = vld [vmem:[#allocation8 + $0x188] sm:$0xff]
  %v5018 = vld [vmem:[#allocation8 + $0x190] sm:$0xff]
  %v5019 = vld [vmem:[#allocation8 + $0x198] sm:$0xff]
  %v5020 = vld [vmem:[#allocation8 + $0x1a0] sm:$0xff]
  %v5021 = vld [vmem:[#allocation8 + $0x1a8] sm:$0xff]
  %v5022 = vld [vmem:[#allocation8 + $0x1b0] sm:$0xff]
  %v5023 = vld [vmem:[#allocation8 + $0x1b8] sm:$0xff]
  %v5024 = vld [vmem:[#allocation8 + $0x1c0] sm:$0xff]
  %v5025 = vld [vmem:[#allocation8 + $0x1c8] sm:$0xff]
  %v5026 = vld [vmem:[#allocation8 + $0x1d0] sm:$0xff]
  %v5027 = vld [vmem:[#allocation8 + $0x1d8] sm:$0xff]
  %v5028 = vld [vmem:[#allocation8 + $0x1e0] sm:$0xff]
  %v5029 = vld [vmem:[#allocation8 + $0x1e8] sm:$0xff]
  %v5030 = vld [vmem:[#allocation8 + $0x1f0] sm:$0xff]
  %v5031 = vld [vmem:[#allocation8 + $0x1f8] sm:$0xff]
  %v5032 = vld [vmem:[#allocation8 + $0x200] sm:$0xff]
  %v5033 = vld [vmem:[#allocation8 + $0x208] sm:$0xff]
  %v5034 = vld [vmem:[#allocation8 + $0x210] sm:$0x11]
  %v5035 = vld [vmem:[#allocation8 + $0x218] sm:$0x11]
  %v5036 = vld [vmem:[#allocation8 + $0x220] sm:$0x11]
  %v5106 = vunpack.c.l.b16 %v4968
  %v5107 = vunpack.c.h.b16 %v4968
  %v5108 = vunpack.c.l.b16 %v4969
  %v5109 = vunpack.c.h.b16 %v4969
  %v5110 = vunpack.c.l.b16 %v4970
  %v5111 = vunpack.c.h.b16 %v4970
  %v5112 = vunpack.c.l.b16 %v4971
  %v5113 = vunpack.c.h.b16 %v4971
  %v5114 = vunpack.c.l.b16 %v4972
  %v5115 = vunpack.c.h.b16 %v4972
  %v5116 = vunpack.c.l.b16 %v4973
  %v5117 = vunpack.c.h.b16 %v4973
  %v5118 = vunpack.c.l.b16 %v4974
  %v5119 = vunpack.c.h.b16 %v4974
  %v5120 = vunpack.c.l.b16 %v4975
  %v5121 = vunpack.c.h.b16 %v4975
  %v5122 = vunpack.c.l.b16 %v4976
  %v5123 = vunpack.c.h.b16 %v4976
  %v5124 = vunpack.c.l.b16 %v4977
  %v5125 = vunpack.c.h.b16 %v4977
  %v5126 = vunpack.c.l.b16 %v4978
  %v5127 = vunpack.c.h.b16 %v4978
  %v5128 = vunpack.c.l.b16 %v4979
  %v5129 = vunpack.c.h.b16 %v4979
  %v5130 = vunpack.c.l.b16 %v4980
  %v5131 = vunpack.c.h.b16 %v4980
  %v5132 = vunpack.c.l.b16 %v4981
  %v5133 = vunpack.c.h.b16 %v4981
  %v5134 = vunpack.c.l.b16 %v4982
  %v5135 = vunpack.c.h.b16 %v4982
  %v5136 = vunpack.c.l.b16 %v4983
  %v5137 = vunpack.c.h.b16 %v4983
  %v5138 = vunpack.c.l.b16 %v4984
  %v5139 = vunpack.c.h.b16 %v4984
  %v5140 = vunpack.c.l.b16 %v4985
  %v5141 = vunpack.c.h.b16 %v4985
  %v5142 = vunpack.c.l.b16 %v4986
  %v5143 = vunpack.c.h.b16 %v4986
  %v5144 = vunpack.c.l.b16 %v4987
  %v5145 = vunpack.c.h.b16 %v4987
  %v5146 = vunpack.c.l.b16 %v4988
  %v5147 = vunpack.c.h.b16 %v4988
  %v5148 = vunpack.c.l.b16 %v4989
  %v5149 = vunpack.c.h.b16 %v4989
  %v5150 = vunpack.c.l.b16 %v4990
  %v5151 = vunpack.c.h.b16 %v4990
  %v5152 = vunpack.c.l.b16 %v4991
  %v5153 = vunpack.c.h.b16 %v4991
  %v5154 = vunpack.c.l.b16 %v4992
  %v5155 = vunpack.c.h.b16 %v4992
  %v5156 = vunpack.c.l.b16 %v4993
  %v5157 = vunpack.c.h.b16 %v4993
  %v5158 = vunpack.c.l.b16 %v4994
  %v5159 = vunpack.c.h.b16 %v4994
  %v5160 = vunpack.c.l.b16 %v4995
  %v5161 = vunpack.c.h.b16 %v4995
  %v5162 = vunpack.c.l.b16 %v4996
  %v5163 = vunpack.c.h.b16 %v4996
  %v5164 = vunpack.c.l.b16 %v4997
  %v5165 = vunpack.c.h.b16 %v4997
  %v5166 = vunpack.c.l.b16 %v4998
  %v5167 = vunpack.c.h.b16 %v4998
  %v5168 = vunpack.c.l.b16 %v4999
  %v5169 = vunpack.c.h.b16 %v4999
  %v5170 = vunpack.c.l.b16 %v5000
  %v5171 = vunpack.c.h.b16 %v5000
  %v5172 = vunpack.c.l.b16 %v5001
  %v5173 = vunpack.c.h.b16 %v5001
  %v5174 = vunpack.c.l.b16 %v5002
  %v5175 = vunpack.c.h.b16 %v5002
  %v5176 = vunpack.c.l.b16 %v5003
  %v5177 = vunpack.c.h.b16 %v5003
  %v5178 = vunpack.c.l.b16 %v5004
  %v5179 = vunpack.c.h.b16 %v5004
  %v5180 = vunpack.c.l.b16 %v5005
  %v5181 = vunpack.c.h.b16 %v5005
  %v5182 = vunpack.c.l.b16 %v5006
  %v5183 = vunpack.c.h.b16 %v5006
  %v5184 = vunpack.c.l.b16 %v5007
  %v5185 = vunpack.c.h.b16 %v5007
  %v5186 = vunpack.c.l.b16 %v5008
  %v5187 = vunpack.c.h.b16 %v5008
  %v5188 = vunpack.c.l.b16 %v5009
  %v5189 = vunpack.c.h.b16 %v5009
  %v5190 = vunpack.c.l.b16 %v5010
  %v5191 = vunpack.c.h.b16 %v5010
  %v5192 = vunpack.c.l.b16 %v5011
  %v5193 = vunpack.c.h.b16 %v5011
  %v5194 = vunpack.c.l.b16 %v5012
  %v5195 = vunpack.c.h.b16 %v5012
  %v5196 = vunpack.c.l.b16 %v5013
  %v5197 = vunpack.c.h.b16 %v5013
  %v5198 = vunpack.c.l.b16 %v5014
  %v5199 = vunpack.c.h.b16 %v5014
  %v5200 = vunpack.c.l.b16 %v5015
  %v5201 = vunpack.c.h.b16 %v5015
  %v5202 = vunpack.c.l.b16 %v5016
  %v5203 = vunpack.c.h.b16 %v5016
  %v5204 = vunpack.c.l.b16 %v5017
  %v5205 = vunpack.c.h.b16 %v5017
  %v5206 = vunpack.c.l.b16 %v5018
  %v5207 = vunpack.c.h.b16 %v5018
  %v5208 = vunpack.c.l.b16 %v5019
  %v5209 = vunpack.c.h.b16 %v5019
  %v5210 = vunpack.c.l.b16 %v5020
  %v5211 = vunpack.c.h.b16 %v5020
  %v5212 = vunpack.c.l.b16 %v5021
  %v5213 = vunpack.c.h.b16 %v5021
  %v5214 = vunpack.c.l.b16 %v5022
  %v5215 = vunpack.c.h.b16 %v5022
  %v5216 = vunpack.c.l.b16 %v5023
  %v5217 = vunpack.c.h.b16 %v5023
  %v5218 = vunpack.c.l.b16 %v5024
  %v5219 = vunpack.c.h.b16 %v5024
  %v5220 = vunpack.c.l.b16 %v5025
  %v5221 = vunpack.c.h.b16 %v5025
  %v5222 = vunpack.c.l.b16 %v5026
  %v5223 = vunpack.c.h.b16 %v5026
  %v5224 = vunpack.c.l.b16 %v5027
  %v5225 = vunpack.c.h.b16 %v5027
  %v5226 = vunpack.c.l.b16 %v5028
  %v5227 = vunpack.c.h.b16 %v5028
  %v5228 = vunpack.c.l.b16 %v5029
  %v5229 = vunpack.c.h.b16 %v5029
  %v5230 = vunpack.c.l.b16 %v5030
  %v5231 = vunpack.c.h.b16 %v5030
  %v5232 = vunpack.c.l.b16 %v5031
  %v5233 = vunpack.c.h.b16 %v5031
  %v5234 = vunpack.c.l.b16 %v5032
  %v5235 = vunpack.c.h.b16 %v5032
  %v5236 = vunpack.c.l.b16 %v5033
  %v5237 = vunpack.c.h.b16 %v5033
  %v5238 = vunpack.c.l.b16 %v5034
  %v5239 = vunpack.c.h.b16 %v5034
  %v5240 = vunpack.c.l.b16 %v5035
  %v5241 = vunpack.c.h.b16 %v5035
  %v5242 = vunpack.c.l.b16 %v5036
  %v5243 = vunpack.c.h.b16 %v5036
  %v5244 = vpack.c.b16 %v5112, %v5106
  %v5245 = vpack.c.b16 %v5113, %v5107
  %v5246 = vpack.c.b16 %v5114, %v5108
  %v5247 = vpack.c.b16 %v5115, %v5109
  %v5248 = vpack.c.b16 %v5116, %v5110
  %v5249 = vpack.c.b16 %v5117, %v5111
  %v5250 = vpack.c.b16 %v5124, %v5118
  %v5251 = vpack.c.b16 %v5125, %v5119
  %v5252 = vpack.c.b16 %v5126, %v5120
  %v5253 = vpack.c.b16 %v5127, %v5121
  %v5254 = vpack.c.b16 %v5128, %v5122
  %v5255 = vpack.c.b16 %v5129, %v5123
  %v5256 = vpack.c.b16 %v5136, %v5130
  %v5257 = vpack.c.b16 %v5137, %v5131
  %v5258 = vpack.c.b16 %v5138, %v5132
  %v5259 = vpack.c.b16 %v5139, %v5133
  %v5260 = vpack.c.b16 %v5140, %v5134
  %v5261 = vpack.c.b16 %v5141, %v5135
  %v5262 = vpack.c.b16 %v5148, %v5142
  %v5263 = vpack.c.b16 %v5149, %v5143
  %v5264 = vpack.c.b16 %v5150, %v5144
  %v5265 = vpack.c.b16 %v5151, %v5145
  %v5266 = vpack.c.b16 %v5152, %v5146
  %v5267 = vpack.c.b16 %v5153, %v5147
  %v5268 = vpack.c.b16 %v5160, %v5154
  %v5269 = vpack.c.b16 %v5161, %v5155
  %v5270 = vpack.c.b16 %v5162, %v5156
  %v5271 = vpack.c.b16 %v5163, %v5157
  %v5272 = vpack.c.b16 %v5164, %v5158
  %v5273 = vpack.c.b16 %v5165, %v5159
  %v5274 = vpack.c.b16 %v5172, %v5166
  %v5275 = vpack.c.b16 %v5173, %v5167
  %v5276 = vpack.c.b16 %v5174, %v5168
  %v5277 = vpack.c.b16 %v5175, %v5169
  %v5278 = vpack.c.b16 %v5176, %v5170
  %v5279 = vpack.c.b16 %v5177, %v5171
  %v5280 = vpack.c.b16 %v5184, %v5178
  %v5281 = vpack.c.b16 %v5185, %v5179
  %v5282 = vpack.c.b16 %v5186, %v5180
  %v5283 = vpack.c.b16 %v5187, %v5181
  %v5284 = vpack.c.b16 %v5188, %v5182
  %v5285 = vpack.c.b16 %v5189, %v5183
  %v5286 = vpack.c.b16 %v5196, %v5190
  %v5287 = vpack.c.b16 %v5197, %v5191
  %v5288 = vpack.c.b16 %v5198, %v5192
  %v5289 = vpack.c.b16 %v5199, %v5193
  %v5290 = vpack.c.b16 %v5200, %v5194
  %v5291 = vpack.c.b16 %v5201, %v5195
  %v5292 = vpack.c.b16 %v5208, %v5202
  %v5293 = vpack.c.b16 %v5209, %v5203
  %v5294 = vpack.c.b16 %v5210, %v5204
  %v5295 = vpack.c.b16 %v5211, %v5205
  %v5296 = vpack.c.b16 %v5212, %v5206
  %v5297 = vpack.c.b16 %v5213, %v5207
  %v5298 = vpack.c.b16 %v5220, %v5214
  %v5299 = vpack.c.b16 %v5221, %v5215
  %v5300 = vpack.c.b16 %v5222, %v5216
  %v5301 = vpack.c.b16 %v5223, %v5217
  %v5302 = vpack.c.b16 %v5224, %v5218
  %v5303 = vpack.c.b16 %v5225, %v5219
  %v5304 = vpack.c.b16 %v5232, %v5226
  %v5305 = vpack.c.b16 %v5233, %v5227
  %v5306 = vpack.c.b16 %v5234, %v5228
  %v5307 = vpack.c.b16 %v5235, %v5229
  %v5308 = vpack.c.b16 %v5236, %v5230
  %v5309 = vpack.c.b16 %v5237, %v5231
  %v5310 = vpack.c.b16 %v5238, %v5238
  %v5311 = vpack.c.b16 %v5239, %v5239
  %v5312 = vpack.c.b16 %v5240, %v5240
  %v5313 = vpack.c.b16 %v5241, %v5241
  %v5314 = vpack.c.b16 %v5242, %v5242
  %v5315 = vpack.c.b16 %v5243, %v5243
  %vm5382 = vcmask 408576
  %v5384 = vsel %vm5382, %v4967, 0
  %v5387 = vsel %vm2573, %v5310, 0
  %v5390 = vsel %vm2573, %v5311, 0
  %v5393 = vsel %vm2573, %v5312, 0
  %v5396 = vsel %vm2573, %v5313, 0
  %v5399 = vsel %vm2573, %v5314, 0
  %v5402 = vsel %vm2573, %v5315, 0
  %5404 = vmatprep.subr.bf16.mxu0 %v5245
  %5405 = vmatpush1.bf16.msra.mxu0 %v5244
  %5406 = vmatprep.subr.bf16.mxu0 %v5251
  %5407 = vmatpush1.bf16.msra.mxu0 %v5250
  %5408 = vmatprep.subr.bf16.mxu0 %v5257
  %5409 = vmatpush1.bf16.msra.mxu0 %v5256
  %5410 = vmatprep.subr.bf16.mxu0 %v5263
  %5411 = vmatpush1.bf16.msra.mxu0 %v5262
  %5412 = vmatprep.subr.bf16.mxu0 %v5269
  %5413 = vmatpush1.bf16.msra.mxu0 %v5268
  %5414 = vmatprep.subr.bf16.mxu0 %v5275
  %5415 = vmatpush1.bf16.msra.mxu0 %v5274
  %5416 = vmatprep.subr.bf16.mxu0 %v5281
  %5417 = vmatpush1.bf16.msra.mxu0 %v5280
  %5418 = vmatprep.subr.bf16.mxu0 %v5287
  %5419 = vmatpush1.bf16.msra.mxu0 %v5286
  %5420 = vmatprep.subr.bf16.mxu0 %v5293
  %5421 = vmatpush1.bf16.msra.mxu0 %v5292
  %5422 = vmatprep.subr.bf16.mxu0 %v5299
  %5423 = vmatpush1.bf16.msra.mxu0 %v5298
  %5424 = vmatprep.subr.bf16.mxu0 %v5305
  %5425 = vmatpush1.bf16.msra.mxu0 %v5304
  %5426 = vmatprep.subr.bf16.mxu0 %v5390
  %5427 = vmatpush1.bf16.msra.mxu0 %v5387
  %5428 = vmatprep.subr.bf16.mxu0 0
  %5429 = vmatpush1.bf16.msra.mxu0 0
  %5430 = vmatprep.subr.bf16.mxu0 0
  %5431 = vmatpush1.bf16.msra.mxu0 0
  %5432 = vmatprep.subr.bf16.mxu0 0
  %5433 = vmatpush1.bf16.msra.mxu0 0
  %5434 = vmatprep.subr.bf16.mxu0 0
  %5435 = vmatpush1.bf16.msra.mxu0 0
  %5436 = vmatprep.mubr.bf16.mxu0 %v5384
  %5437 = vmatmul.mubr.bf16.gmra.mrb[0].mxu0 %v4966
  %v5438 = vpop.f32.mrb[0].mxu0
  %v5439 = vadd.f32 0.0, %v5438
  %v5440 = vpop.f32.mrb[0].mxu0
  %v5441 = vadd.f32 0.0, %v5440
  %v5442 = vpop.f32.mrb[0].mxu0
  %v5443 = vpop.f32.mrb[0].mxu0
  %5444 = vdwg.mxu0
  %5445 = vmatprep.subr.bf16.mxu0 %v5247
  %5446 = vmatpush1.bf16.msra.mxu0 %v5246
  %5447 = vmatprep.subr.bf16.mxu0 %v5253
  %5448 = vmatpush1.bf16.msra.mxu0 %v5252
  %5449 = vmatprep.subr.bf16.mxu0 %v5259
  %5450 = vmatpush1.bf16.msra.mxu0 %v5258
  %5451 = vmatprep.subr.bf16.mxu0 %v5265
  %5452 = vmatpush1.bf16.msra.mxu0 %v5264
  %5453 = vmatprep.subr.bf16.mxu0 %v5271
  %5454 = vmatpush1.bf16.msra.mxu0 %v5270
  %5455 = vmatprep.subr.bf16.mxu0 %v5277
  %5456 = vmatpush1.bf16.msra.mxu0 %v5276
  %5457 = vmatprep.subr.bf16.mxu0 %v5283
  %5458 = vmatpush1.bf16.msra.mxu0 %v5282
  %5459 = vmatprep.subr.bf16.mxu0 %v5289
  %5460 = vmatpush1.bf16.msra.mxu0 %v5288
  %5461 = vmatprep.subr.bf16.mxu0 %v5295
  %5462 = vmatpush1.bf16.msra.mxu0 %v5294
  %5463 = vmatprep.subr.bf16.mxu0 %v5301
  %5464 = vmatpush1.bf16.msra.mxu0 %v5300
  %5465 = vmatprep.subr.bf16.mxu0 %v5307
  %5466 = vmatpush1.bf16.msra.mxu0 %v5306
  %5467 = vmatprep.subr.bf16.mxu0 %v5396
  %5468 = vmatpush1.bf16.msra.mxu0 %v5393
  %5469 = vmatprep.subr.bf16.mxu0 0
  %5470 = vmatpush1.bf16.msra.mxu0 0
  %5471 = vmatprep.subr.bf16.mxu0 0
  %5472 = vmatpush1.bf16.msra.mxu0 0
  %5473 = vmatprep.subr.bf16.mxu0 0
  %5474 = vmatpush1.bf16.msra.mxu0 0
  %5475 = vmatprep.subr.bf16.mxu0 0
  %5476 = vmatpush1.bf16.msra.mxu0 0
  %5477 = vmatprep.mubr.bf16.mxu0 %v5384
  %5478 = vmatmul.mubr.bf16.gmra.mrb[0].mxu0 %v4966
  %v5479 = vpop.f32.mrb[0].mxu0
  %v5480 = vadd.f32 0.0, %v5479
  %v5481 = vpop.f32.mrb[0].mxu0
  %v5482 = vadd.f32 0.0, %v5481
  %v5483 = vpop.f32.mrb[0].mxu0
  %v5484 = vpop.f32.mrb[0].mxu0
  %5485 = vdwg.mxu0
  %5486 = vmatprep.subr.bf16.mxu0 %v5249
  %5487 = vmatpush1.bf16.msra.mxu0 %v5248
  %5488 = vmatprep.subr.bf16.mxu0 %v5255
  %5489 = vmatpush1.bf16.msra.mxu0 %v5254
  %5490 = vmatprep.subr.bf16.mxu0 %v5261
  %5491 = vmatpush1.bf16.msra.mxu0 %v5260
  %5492 = vmatprep.subr.bf16.mxu0 %v5267
  %5493 = vmatpush1.bf16.msra.mxu0 %v5266
  %5494 = vmatprep.subr.bf16.mxu0 %v5273
  %5495 = vmatpush1.bf16.msra.mxu0 %v5272
  %5496 = vmatprep.subr.bf16.mxu0 %v5279
  %5497 = vmatpush1.bf16.msra.mxu0 %v5278
  %5498 = vmatprep.subr.bf16.mxu0 %v5285
  %5499 = vmatpush1.bf16.msra.mxu0 %v5284
  %5500 = vmatprep.subr.bf16.mxu0 %v5291
  %5501 = vmatpush1.bf16.msra.mxu0 %v5290
  %5502 = vmatprep.subr.bf16.mxu0 %v5297
  %5503 = vmatpush1.bf16.msra.mxu0 %v5296
  %5504 = vmatprep.subr.bf16.mxu0 %v5303
  %5505 = vmatpush1.bf16.msra.mxu0 %v5302
  %5506 = vmatprep.subr.bf16.mxu0 %v5309
  %5507 = vmatpush1.bf16.msra.mxu0 %v5308
  %5508 = vmatprep.subr.bf16.mxu0 %v5402
  %5509 = vmatpush1.bf16.msra.mxu0 %v5399
  %5510 = vmatprep.subr.bf16.mxu0 0
  %5511 = vmatpush1.bf16.msra.mxu0 0
  %5512 = vmatprep.subr.bf16.mxu0 0
  %5513 = vmatpush1.bf16.msra.mxu0 0
  %5514 = vmatprep.subr.bf16.mxu0 0
  %5515 = vmatpush1.bf16.msra.mxu0 0
  %5516 = vmatprep.subr.bf16.mxu0 0
  %5517 = vmatpush1.bf16.msra.mxu0 0
  %5518 = vmatprep.mubr.bf16.mxu0 %v5384
  %5519 = vmatmul.mubr.bf16.gmra.mrb[0].mxu0 %v4966
  %v5520 = vpop.f32.mrb[0].mxu0
  %v5521 = vadd.f32 0.0, %v5520
  %v5522 = vpop.f32.mrb[0].mxu0
  %v5523 = vadd.f32 0.0, %v5522
  %v5524 = vpop.f32.mrb[0].mxu0
  %v5525 = vpop.f32.mrb[0].mxu0
  %5526 = vdwg.mxu0
  %5533 = vrot.lane.b32.xlu0 %v5439, 127
  %v5534 = vpop.permute.xlu0 %5533
  %5535 = vrot.lane.b32.xlu0 %v5441, 127
  %v5536 = vpop.permute.xlu0 %5535
  %5537 = vrot.lane.b32.xlu0 %v5480, 127
  %v5538 = vpop.permute.xlu0 %5537
  %5539 = vrot.lane.b32.xlu0 %v5482, 127
  %v5540 = vpop.permute.xlu0 %5539
  %5541 = vrot.lane.b32.xlu0 %v5521, 127
  %v5542 = vpop.permute.xlu0 %5541
  %5543 = vrot.lane.b32.xlu0 %v5523, 127
  %v5544 = vpop.permute.xlu0 %5543
  %v5545 = vsel %vm763, %v5534, %v5536
  %v5546 = vsel %vm763, %v5536, %v5538
  %v5547 = vsel %vm763, %v5538, %v5540
  %v5548 = vsel %vm763, %v5540, %v5542
  %v5549 = vsel %vm763, %v5542, %v5544
  %5556 = vrot.lane.b32.xlu0 %v5439, 126
  %v5557 = vpop.permute.xlu0 %5556
  %5558 = vrot.lane.b32.xlu0 %v5441, 126
  %v5559 = vpop.permute.xlu0 %5558
  %5560 = vrot.lane.b32.xlu0 %v5480, 126
  %v5561 = vpop.permute.xlu0 %5560
  %5562 = vrot.lane.b32.xlu0 %v5482, 126
  %v5563 = vpop.permute.xlu0 %5562
  %5564 = vrot.lane.b32.xlu0 %v5521, 126
  %v5565 = vpop.permute.xlu0 %5564
  %5566 = vrot.lane.b32.xlu0 %v5523, 126
  %v5567 = vpop.permute.xlu0 %5566
  %v5568 = vsel %vm783, %v5557, %v5559
  %v5569 = vsel %vm783, %v5559, %v5561
  %v5570 = vsel %vm783, %v5561, %v5563
  %v5571 = vsel %vm783, %v5563, %v5565
  %v5572 = vsel %vm783, %v5565, %v5567
  %5579 = vrot.lane.b32.xlu0 %v5439, 110
  %v5580 = vpop.permute.xlu0 %5579
  %5581 = vrot.lane.b32.xlu0 %v5441, 110
  %v5582 = vpop.permute.xlu0 %5581
  %5583 = vrot.lane.b32.xlu0 %v5480, 110
  %v5584 = vpop.permute.xlu0 %5583
  %5585 = vrot.lane.b32.xlu0 %v5482, 110
  %v5586 = vpop.permute.xlu0 %5585
  %5587 = vrot.lane.b32.xlu0 %v5521, 110
  %v5588 = vpop.permute.xlu0 %5587
  %5589 = vrot.lane.b32.xlu0 %v5523, 110
  %v5590 = vpop.permute.xlu0 %5589
  %v5591 = vsel %vm823, %v5580, %v5582
  %v5592 = vsel %vm823, %v5582, %v5584
  %v5593 = vsel %vm823, %v5584, %v5586
  %v5594 = vsel %vm823, %v5586, %v5588
  %v5595 = vsel %vm823, %v5588, %v5590
  %5602 = vrot.lane.b32.xlu0 %v5439, 109
  %v5603 = vpop.permute.xlu0 %5602
  %5604 = vrot.lane.b32.xlu0 %v5441, 109
  %v5605 = vpop.permute.xlu0 %5604
  %5606 = vrot.lane.b32.xlu0 %v5480, 109
  %v5607 = vpop.permute.xlu0 %5606
  %5608 = vrot.lane.b32.xlu0 %v5482, 109
  %v5609 = vpop.permute.xlu0 %5608
  %5610 = vrot.lane.b32.xlu0 %v5521, 109
  %v5611 = vpop.permute.xlu0 %5610
  %5612 = vrot.lane.b32.xlu0 %v5523, 109
  %v5613 = vpop.permute.xlu0 %5612
  %v5614 = vsel %vm843, %v5603, %v5605
  %v5615 = vsel %vm843, %v5605, %v5607
  %v5616 = vsel %vm843, %v5607, %v5609
  %v5617 = vsel %vm843, %v5609, %v5611
  %v5618 = vsel %vm843, %v5611, %v5613
  %5625 = vrot.lane.b32.xlu0 %v5439, 108
  %v5626 = vpop.permute.xlu0 %5625
  %5627 = vrot.lane.b32.xlu0 %v5441, 108
  %v5628 = vpop.permute.xlu0 %5627
  %5629 = vrot.lane.b32.xlu0 %v5480, 108
  %v5630 = vpop.permute.xlu0 %5629
  %5631 = vrot.lane.b32.xlu0 %v5482, 108
  %v5632 = vpop.permute.xlu0 %5631
  %5633 = vrot.lane.b32.xlu0 %v5521, 108
  %v5634 = vpop.permute.xlu0 %5633
  %5635 = vrot.lane.b32.xlu0 %v5523, 108
  %v5636 = vpop.permute.xlu0 %5635
  %v5637 = vsel %vm863, %v5626, %v5628
  %v5638 = vsel %vm863, %v5628, %v5630
  %v5639 = vsel %vm863, %v5630, %v5632
  %v5640 = vsel %vm863, %v5632, %v5634
  %v5641 = vsel %vm863, %v5634, %v5636
  %5648 = vrot.lane.b32.xlu0 %v5439, 92
  %v5649 = vpop.permute.xlu0 %5648
  %5650 = vrot.lane.b32.xlu0 %v5441, 92
  %v5651 = vpop.permute.xlu0 %5650
  %5652 = vrot.lane.b32.xlu0 %v5480, 92
  %v5653 = vpop.permute.xlu0 %5652
  %5654 = vrot.lane.b32.xlu0 %v5482, 92
  %v5655 = vpop.permute.xlu0 %5654
  %5656 = vrot.lane.b32.xlu0 %v5521, 92
  %v5657 = vpop.permute.xlu0 %5656
  %5658 = vrot.lane.b32.xlu0 %v5523, 92
  %v5659 = vpop.permute.xlu0 %5658
  %v5660 = vsel %vm903, %v5649, %v5651
  %v5661 = vsel %vm903, %v5651, %v5653
  %v5662 = vsel %vm903, %v5653, %v5655
  %v5663 = vsel %vm903, %v5655, %v5657
  %v5664 = vsel %vm903, %v5657, %v5659
  %5671 = vrot.lane.b32.xlu0 %v5439, 91
  %v5672 = vpop.permute.xlu0 %5671
  %5673 = vrot.lane.b32.xlu0 %v5441, 91
  %v5674 = vpop.permute.xlu0 %5673
  %5675 = vrot.lane.b32.xlu0 %v5480, 91
  %v5676 = vpop.permute.xlu0 %5675
  %5677 = vrot.lane.b32.xlu0 %v5482, 91
  %v5678 = vpop.permute.xlu0 %5677
  %5679 = vrot.lane.b32.xlu0 %v5521, 91
  %v5680 = vpop.permute.xlu0 %5679
  %5681 = vrot.lane.b32.xlu0 %v5523, 91
  %v5682 = vpop.permute.xlu0 %5681
  %v5683 = vsel %vm923, %v5672, %v5674
  %v5684 = vsel %vm923, %v5674, %v5676
  %v5685 = vsel %vm923, %v5676, %v5678
  %v5686 = vsel %vm923, %v5678, %v5680
  %v5687 = vsel %vm923, %v5680, %v5682
  %5694 = vrot.lane.b32.xlu0 %v5439, 90
  %v5695 = vpop.permute.xlu0 %5694
  %5696 = vrot.lane.b32.xlu0 %v5441, 90
  %v5697 = vpop.permute.xlu0 %5696
  %5698 = vrot.lane.b32.xlu0 %v5480, 90
  %v5699 = vpop.permute.xlu0 %5698
  %5700 = vrot.lane.b32.xlu0 %v5482, 90
  %v5701 = vpop.permute.xlu0 %5700
  %5702 = vrot.lane.b32.xlu0 %v5521, 90
  %v5703 = vpop.permute.xlu0 %5702
  %5704 = vrot.lane.b32.xlu0 %v5523, 90
  %v5705 = vpop.permute.xlu0 %5704
  %v5706 = vsel %vm943, %v5695, %v5697
  %v5707 = vsel %vm943, %v5697, %v5699
  %v5708 = vsel %vm943, %v5699, %v5701
  %v5709 = vsel %vm943, %v5701, %v5703
  %v5710 = vsel %vm943, %v5703, %v5705
  %v5717 = vpack.c.bf16 %v5545, %v5439
  %v5718 = vpack.c.bf16 %v5546, %v5441
  %v5719 = vpack.c.bf16 %v5547, %v5480
  %v5720 = vpack.c.bf16 %v5548, %v5482
  %v5721 = vpack.c.bf16 %v5549, %v5521
  %v5722 = vpack.c.bf16 %v5544, %v5523
  %v5723 = vpack.c.bf16 %v5591, %v5568
  %v5724 = vpack.c.bf16 %v5592, %v5569
  %v5725 = vpack.c.bf16 %v5593, %v5570
  %v5726 = vpack.c.bf16 %v5594, %v5571
  %v5727 = vpack.c.bf16 %v5595, %v5572
  %v5728 = vpack.c.bf16 %v5590, %v5567
  %v5729 = vpack.c.bf16 %v5637, %v5614
  %v5730 = vpack.c.bf16 %v5638, %v5615
  %v5731 = vpack.c.bf16 %v5639, %v5616
  %v5732 = vpack.c.bf16 %v5640, %v5617
  %v5733 = vpack.c.bf16 %v5641, %v5618
  %v5734 = vpack.c.bf16 %v5636, %v5613
  %v5735 = vpack.c.bf16 %v5683, %v5660
  %v5736 = vpack.c.bf16 %v5684, %v5661
  %v5737 = vpack.c.bf16 %v5685, %v5662
  %v5738 = vpack.c.bf16 %v5686, %v5663
  %v5739 = vpack.c.bf16 %v5687, %v5664
  %v5740 = vpack.c.bf16 %v5682, %v5659
  %v5741 = vpack.c.bf16 %v5706, %v5706
  %v5742 = vpack.c.bf16 %v5707, %v5707
  %v5743 = vpack.c.bf16 %v5708, %v5708
  %v5744 = vpack.c.bf16 %v5709, %v5709
  %v5745 = vpack.c.bf16 %v5710, %v5710
  %v5746 = vpack.c.bf16 %v5705, %v5705
  %v5747 = vld [vmem:[#allocation5] sm:$0x3]
  %v5748 = vld [vmem:[%s51] sm:$0xf]
  %5750 = vset.pattern.permute.xlu0 0
  %5751 = vperm.xlu0 %5750, %v5748
  %v5752 = vpop.permute.xlu0 %5751
  %v5755 = vsel %vm1032, %v5747, 0
  %v5758 = vsel %vm1066, %v5741, 0
  %v5761 = vsel %vm1066, %v5742, 0
  %v5764 = vsel %vm1066, %v5743, 0
  %v5767 = vsel %vm1066, %v5744, 0
  %v5770 = vsel %vm1066, %v5745, 0
  %v5773 = vsel %vm1066, %v5746, 0
  %5775 = vmatprep.subr.bf16.mxu0 %v5718
  %5776 = vmatpush1.bf16.msra.mxu0 %v5717
  %5777 = vmatprep.subr.bf16.mxu0 %v5724
  %5778 = vmatpush1.bf16.msra.mxu0 %v5723
  %5779 = vmatprep.subr.bf16.mxu0 %v5730
  %5780 = vmatpush1.bf16.msra.mxu0 %v5729
  %5781 = vmatprep.subr.bf16.mxu0 %v5736
  %5782 = vmatpush1.bf16.msra.mxu0 %v5735
  %5783 = vmatprep.subr.bf16.mxu0 %v5761
  %5784 = vmatpush1.bf16.msra.mxu0 %v5758
  %5785 = vmatprep.subr.bf16.mxu0 0
  %5786 = vmatpush1.bf16.msra.mxu0 0
  %5787 = vmatprep.subr.bf16.mxu0 0
  %5788 = vmatpush1.bf16.msra.mxu0 0
  %5789 = vmatprep.subr.bf16.mxu0 0
  %5790 = vmatpush1.bf16.msra.mxu0 0
  %5791 = vmatprep.subr.bf16.mxu0 0
  %5792 = vmatpush1.bf16.msra.mxu0 0
  %5793 = vmatprep.subr.bf16.mxu0 0
  %5794 = vmatpush1.bf16.msra.mxu0 0
  %5795 = vmatprep.subr.bf16.mxu0 0
  %5796 = vmatpush1.bf16.msra.mxu0 0
  %5797 = vmatprep.subr.bf16.mxu0 0
  %5798 = vmatpush1.bf16.msra.mxu0 0
  %5799 = vmatprep.subr.bf16.mxu0 0
  %5800 = vmatpush1.bf16.msra.mxu0 0
  %5801 = vmatprep.subr.bf16.mxu0 0
  %5802 = vmatpush1.bf16.msra.mxu0 0
  %5803 = vmatprep.subr.bf16.mxu0 0
  %5804 = vmatpush1.bf16.msra.mxu0 0
  %5805 = vmatprep.subr.bf16.mxu0 0
  %5806 = vmatpush1.bf16.msra.mxu0 0
  %5807 = vmatprep.mubr.bf16.mxu0 0
  %5808 = vmatmul.mubr.bf16.gmra.mrb[0].mxu0 %v5755
  %v5809 = vpop.f32.mrb[0].mxu0
  %v5810 = vadd.f32 %v5752, %v5809
  %v5811 = vpop.f32.mrb[0].mxu0
  %v5812 = vadd.f32 %v5752, %v5811
  %v5813 = vpop.f32.mrb[0].mxu0
  %v5814 = vpop.f32.mrb[0].mxu0
  %5815 = vdwg.mxu0
  %5816 = vmatprep.subr.bf16.mxu0 %v5720
  %5817 = vmatpush1.bf16.msra.mxu0 %v5719
  %5818 = vmatprep.subr.bf16.mxu0 %v5726
  %5819 = vmatpush1.bf16.msra.mxu0 %v5725
  %5820 = vmatprep.subr.bf16.mxu0 %v5732
  %5821 = vmatpush1.bf16.msra.mxu0 %v5731
  %5822 = vmatprep.subr.bf16.mxu0 %v5738
  %5823 = vmatpush1.bf16.msra.mxu0 %v5737
  %5824 = vmatprep.subr.bf16.mxu0 %v5767
  %5825 = vmatpush1.bf16.msra.mxu0 %v5764
  %5826 = vmatprep.subr.bf16.mxu0 0
  %5827 = vmatpush1.bf16.msra.mxu0 0
  %5828 = vmatprep.subr.bf16.mxu0 0
  %5829 = vmatpush1.bf16.msra.mxu0 0
  %5830 = vmatprep.subr.bf16.mxu0 0
  %5831 = vmatpush1.bf16.msra.mxu0 0
  %5832 = vmatprep.subr.bf16.mxu0 0
  %5833 = vmatpush1.bf16.msra.mxu0 0
  %5834 = vmatprep.subr.bf16.mxu0 0
  %5835 = vmatpush1.bf16.msra.mxu0 0
  %5836 = vmatprep.subr.bf16.mxu0 0
  %5837 = vmatpush1.bf16.msra.mxu0 0
  %5838 = vmatprep.subr.bf16.mxu0 0
  %5839 = vmatpush1.bf16.msra.mxu0 0
  %5840 = vmatprep.subr.bf16.mxu0 0
  %5841 = vmatpush1.bf16.msra.mxu0 0
  %5842 = vmatprep.subr.bf16.mxu0 0
  %5843 = vmatpush1.bf16.msra.mxu0 0
  %5844 = vmatprep.subr.bf16.mxu0 0
  %5845 = vmatpush1.bf16.msra.mxu0 0
  %5846 = vmatprep.subr.bf16.mxu0 0
  %5847 = vmatpush1.bf16.msra.mxu0 0
  %5848 = vmatprep.mubr.bf16.mxu0 0
  %5849 = vmatmul.mubr.bf16.gmra.mrb[0].mxu0 %v5755
  %v5850 = vpop.f32.mrb[0].mxu0
  %v5851 = vadd.f32 %v5752, %v5850
  %v5852 = vpop.f32.mrb[0].mxu0
  %v5853 = vadd.f32 %v5752, %v5852
  %v5854 = vpop.f32.mrb[0].mxu0
  %v5855 = vpop.f32.mrb[0].mxu0
  %5856 = vdwg.mxu0
  %5857 = vmatprep.subr.bf16.mxu0 %v5722
  %5858 = vmatpush1.bf16.msra.mxu0 %v5721
  %5859 = vmatprep.subr.bf16.mxu0 %v5728
  %5860 = vmatpush1.bf16.msra.mxu0 %v5727
  %5861 = vmatprep.subr.bf16.mxu0 %v5734
  %5862 = vmatpush1.bf16.msra.mxu0 %v5733
  %5863 = vmatprep.subr.bf16.mxu0 %v5740
  %5864 = vmatpush1.bf16.msra.mxu0 %v5739
  %5865 = vmatprep.subr.bf16.mxu0 %v5773
  %5866 = vmatpush1.bf16.msra.mxu0 %v5770
  %5867 = vmatprep.subr.bf16.mxu0 0
  %5868 = vmatpush1.bf16.msra.mxu0 0
  %5869 = vmatprep.subr.bf16.mxu0 0
  %5870 = vmatpush1.bf16.msra.mxu0 0
  %5871 = vmatprep.subr.bf16.mxu0 0
  %5872 = vmatpush1.bf16.msra.mxu0 0
  %5873 = vmatprep.subr.bf16.mxu0 0
  %5874 = vmatpush1.bf16.msra.mxu0 0
  %5875 = vmatprep.subr.bf16.mxu0 0
  %5876 = vmatpush1.bf16.msra.mxu0 0
  %5877 = vmatprep.subr.bf16.mxu0 0
  %5878 = vmatpush1.bf16.msra.mxu0 0
  %5879 = vmatprep.subr.bf16.mxu0 0
  %5880 = vmatpush1.bf16.msra.mxu0 0
  %5881 = vmatprep.subr.bf16.mxu0 0
  %5882 = vmatpush1.bf16.msra.mxu0 0
  %5883 = vmatprep.subr.bf16.mxu0 0
  %5884 = vmatpush1.bf16.msra.mxu0 0
  %5885 = vmatprep.subr.bf16.mxu0 0
  %5886 = vmatpush1.bf16.msra.mxu0 0
  %5887 = vmatprep.subr.bf16.mxu0 0
  %5888 = vmatpush1.bf16.msra.mxu0 0
  %5889 = vmatprep.mubr.bf16.mxu0 0
  %5890 = vmatmul.mubr.bf16.gmra.mrb[0].mxu0 %v5755
  %v5891 = vpop.f32.mrb[0].mxu0
  %v5892 = vadd.f32 %v5752, %v5891
  %v5893 = vpop.f32.mrb[0].mxu0
  %v5894 = vadd.f32 %v5752, %v5893
  %v5895 = vpop.f32.mrb[0].mxu0
  %v5896 = vpop.f32.mrb[0].mxu0
  %5897 = vdwg.mxu0
  %v5904 = vcombine.low %v5810, %v5812
  %v5905 = vcombine.low %v5851, %v5853
  %v5906 = vcombine.low %v5892, %v5894
  %5910 = vst [vmem:[%s83] sm:$0xff] %v5904
  %5911 = vst [vmem:[%s83 + $0x8] sm:$0xff] %v5905
  %vm5912 = vcmask 64516
  %vm5913 = vmor %vm5912, %vm1066
  %5914 = vst.msk [vmem:[%s83 + $0x10] sm:$0xff] %vm5913, %v5906
  %5915 = vrot.lane.b32.xlu0 %v5904, 19
  %v5916 = vpop.permute.xlu0 %5915
  %5917 = vrot.lane.b32.xlu0 %v5905, 19
  %v5918 = vpop.permute.xlu0 %5917
  %5919 = vrot.lane.b32.xlu0 %v5892, 19
  %v5920 = vpop.permute.xlu0 %5919
  %v5921 = vrot.slane %v5916, 4
  %v5922 = vrot.slane %v5918, 4
  %vm5923 = vcmask 154624
  %v5924 = vsel %vm5923, %v5921, %v5916
  %v5925 = vsel %vm1066, %v5921, %v5922
  %v5926 = vsel %vm5923, %v5925, %v5918
  %v5927 = vsel %vm5923, %v5922, %v5920
  %v5931 = vsub.f32 %v740, %v5924
  %v5932 = vsub.f32 %v741, %v5926
  %v5933 = vsub.f32 %v742, %v5927
  %v5934 = vmul.f32 %v5931, %v5931
  %v5935 = vmul.f32 %v5932, %v5932
  %v5936 = vmul.f32 %v5933, %v5933
  %v5939 = vcombine.high %v5934, %v5934
  %v5940 = vcombine.high %v5935, %v5935
  %vm5943 = vcmask 1043608
  %v5944 = vsel %vm5943, %v5934, 0.0
  %v5945 = vrot.slane %v5944, 4
  %v5946 = vadd.f32 %v5944, %v5945
  %v5947 = vrot.slane %v5946, 2
  %v5948 = vadd.f32 %v5946, %v5947
  %v5949 = vrot.slane %v5948, 1
  %v5950 = vadd.f32 %v5948, %v5949
  %v5951 = vsel %vm1066, %v5939, 0.0
  %v5952 = vrot.slane %v5951, 4
  %v5953 = vadd.f32 %v5951, %v5952
  %v5954 = vrot.slane %v5953, 2
  %v5955 = vadd.f32 %v5953, %v5954
  %v5956 = vrot.slane %v5955, 1
  %v5957 = vadd.f32 %v5955, %v5956
  %v5958 = vsel %vm1066, %v5935, 0.0
  %v5959 = vrot.slane %v5958, 4
  %v5960 = vadd.f32 %v5958, %v5959
  %v5961 = vrot.slane %v5960, 2
  %v5962 = vadd.f32 %v5960, %v5961
  %v5963 = vrot.slane %v5962, 1
  %v5964 = vadd.f32 %v5962, %v5963
  %v5965 = vsel %vm1066, %v5940, 0.0
  %v5966 = vrot.slane %v5965, 4
  %v5967 = vadd.f32 %v5965, %v5966
  %v5968 = vrot.slane %v5967, 2
  %v5969 = vadd.f32 %v5967, %v5968
  %v5970 = vrot.slane %v5969, 1
  %v5971 = vadd.f32 %v5969, %v5970
  %vm5972 = vcmask 953344
  %v5973 = vsel %vm5972, %v5936, 0.0
  %v5974 = vrot.slane %v5973, 4
  %v5975 = vadd.f32 %v5973, %v5974
  %v5976 = vrot.slane %v5975, 2
  %v5977 = vadd.f32 %v5975, %v5976
  %v5978 = vrot.slane %v5977, 1
  %v5979 = vadd.f32 %v5977, %v5978
  %v5980 = vld [vmem:[%s67] sm:$0x1f]
  %v5982 = vlaneseq
  %v5983 = vshrl.u32 %v5982, 7
  %v5984 = vsub.s32 0, %v5983
  %v5985 = vrot.slane %v5980, %v5984
  %v5986 = vlaneseq
  %v5987 = vshrl.u32 %v5986, 7
  %v5988 = vsub.s32 1, %v5987
  %v5989 = vrot.slane %v5980, %v5988
  %v5990 = vlaneseq
  %v5991 = vshrl.u32 %v5990, 7
  %v5992 = vsub.s32 2, %v5991
  %v5993 = vrot.slane %v5980, %v5992
  %v5994 = vlaneseq
  %v5995 = vshrl.u32 %v5994, 7
  %v5996 = vsub.s32 3, %v5995
  %v5997 = vrot.slane %v5980, %v5996
  %v5998 = vlaneseq
  %v5999 = vshrl.u32 %v5998, 7
  %v6000 = vsub.s32 4, %v5999
  %v6001 = vrot.slane %v5980, %v6000
  %6002 = vrot.lane.b32.xlu0 %v5985, 19
  %v6003 = vpop.permute.xlu0 %6002
  %6004 = vrot.lane.b32.xlu0 %v5989, 19
  %v6005 = vpop.permute.xlu0 %6004
  %6006 = vrot.lane.b32.xlu0 %v5993, 19
  %v6007 = vpop.permute.xlu0 %6006
  %6008 = vrot.lane.b32.xlu0 %v5997, 19
  %v6009 = vpop.permute.xlu0 %6008
  %6010 = vrot.lane.b32.xlu0 %v6001, 19
  %v6011 = vpop.permute.xlu0 %6010
  %v6012 = vsel %vm5923, %v6003, %v6005
  %v6013 = vsel %vm5923, %v6005, %v6007
  %v6014 = vsel %vm5923, %v6007, %v6009
  %v6015 = vsel %vm5923, %v6009, %v6011
  %v6021 = vmul.f32 %v5950, %v6003
  %v6022 = vmul.f32 %v5957, %v6012
  %v6023 = vmul.f32 %v5964, %v6013
  %v6024 = vmul.f32 %v5971, %v6014
  %v6025 = vmul.f32 %v5979, %v6015
  %6029 = vrot.lane.b32.xlu0 %v6021, 109
  %v6030 = vpop.permute.xlu0 %6029
  %6031 = vrot.lane.b32.xlu0 %v6022, 109
  %v6032 = vpop.permute.xlu0 %6031
  %6033 = vrot.lane.b32.xlu0 %v6023, 109
  %v6034 = vpop.permute.xlu0 %6033
  %v6035 = vsel %vm843, %v6030, %v6032
  %v6036 = vsel %vm843, %v6032, %v6034
  %v6040 = vsel %vm2573, %v6035, 0.0
  %v6041 = vsel %vm2573, %v6036, 0.0
  %v6042 = vadd.f32 %v6040, %v6041
  %vm6043 = vcmask 548864
  %v6044 = vsel %vm6043, %v6034, 0.0
  %v6045 = vadd.f32 %v6042, %v6044
  %6046 = vadd.xlane.f32.xlu0 %v6045
  %v6047 = vpop.xlane.xlu0 %6046
  %6050 = vrot.lane.b32.xlu0 %v6023, 41
  %v6051 = vpop.permute.xlu0 %6050
  %6052 = vrot.lane.b32.xlu0 %v6024, 41
  %v6053 = vpop.permute.xlu0 %6052
  %6054 = vrot.lane.b32.xlu0 %v6025, 41
  %v6055 = vpop.permute.xlu0 %6054
  %vm6056 = vcmask 334848
  %v6057 = vsel %vm6056, %v6051, %v6053
  %v6058 = vsel %vm6056, %v6053, %v6055
  %v6062 = vsel %vm2573, %v6057, 0.0
  %v6063 = vsel %vm2573, %v6058, 0.0
  %v6064 = vadd.f32 %v6062, %v6063
  %vm6065 = vcmask 237568
  %v6066 = vsel %vm6065, %v6055, 0.0
  %v6067 = vadd.f32 %v6064, %v6066
  %6068 = vadd.xlane.f32.xlu0 %v6067
  %v6069 = vpop.xlane.xlu0 %6068
  %v6070 = vsel %vm3299, %v6047, %v6069
  %v6071 = vadd.f32 %v6070, 1881.9861
  %v6072 = vmul.f32 %v6071, 0.5
  %v6073 = vsel %vm2573, %v6072, %v3659
  %vm6074 = vcmask 9216
  %6075 = vst.msk [vmem:[%s85] sm:$0x3] %vm6074, %v6073
  // Predicated region
  $region381: #{vae_forward.1} parent=0 // pred_check
    _
  $region382: #{vae_forward.1} parent=0 // pred_check_branch
    %6077 = sbr.rel (0) target = $region384
  $region383: #{vae_forward.1} parent=0 // pred_region
    _
  $region384: #{vae_forward.1} parent=0 // pred_fallthru
    _
  // Predicated region
  $region385: #{vae_forward.1} parent=0 // pred_check
    _
  $region386: #{vae_forward.1} parent=0 // pred_check_branch
    %6079 = sbr.rel (0) target = $region388
  $region387: #{vae_forward.1} parent=0 // pred_region
    _
  $region388: #{vae_forward.1} parent=0 // pred_fallthru
    _
  // Predicated region
  $region389: #{vae_forward.1} parent=0 // pred_check
    _
  $region390: #{vae_forward.1} parent=0 // pred_check_branch
    %6081 = sbr.rel (0) target = $region392
  $region391: #{vae_forward.1} parent=0 // pred_region
    _
  $region392: #{vae_forward.1} parent=0 // pred_fallthru
    _
  // Predicated region
  $region393: #{vae_forward.1} parent=0 // pred_check
    _
  $region394: #{vae_forward.1} parent=0 // pred_check_branch
    %6083 = sbr.rel (0) target = $region396
  $region395: #{vae_forward.1} parent=0 // pred_region
    _
  $region396: #{vae_forward.1} parent=0 // pred_fallthru
    _
  %6084 = vsyncmov [#allocation9]
  %s6085 = vpop.sfrf %6084
  %p6086 = scmp.eq.s32.totalorder %s6085, 0
  %p6087 = pneg %p6086
  %6089 = shalt.err (%p6087)
  %s6090 = scalar_lea.sflag [#allocation9], 1
  %6091 = vsyncmov %s6090
  %s6092 = vpop.sfrf %6091
  %p6093 = scmp.eq.s32.totalorder %s6092, 0
  %p6094 = pneg %p6093
  %6096 = shalt.err (%p6094)
  %s6097 = scalar_lea.sflag [#allocation9], 2
  %6098 = vsyncmov %s6097
  %s6099 = vpop.sfrf %6098
  %p6100 = scmp.eq.s32.totalorder %s6099, 0
  %p6101 = pneg %p6100
  %6103 = shalt.err (%p6101)
  %s6104 = scalar_lea.sflag [#allocation9], 3
  %6105 = vsyncmov %s6104
  %s6106 = vpop.sfrf %6105
  %p6107 = scmp.eq.s32.totalorder %s6106, 0
  %p6108 = pneg %p6107
  %6110 = shalt.err (%p6108)
  %s6111 = scalar_lea.sflag [#allocation9], 4
  %6112 = vsyncmov %s6111
  %s6113 = vpop.sfrf %6112
  %p6114 = scmp.eq.s32.totalorder %s6113, 0
  %p6115 = pneg %p6114
  %6117 = shalt.err (%p6115)
  %s6118 = scalar_lea.sflag [#allocation9], 5
  %6119 = vsyncmov %s6118
  %s6120 = vpop.sfrf %6119
  %p6121 = scmp.eq.s32.totalorder %s6120, 0
  %p6122 = pneg %p6121
  %6124 = shalt.err (%p6122)
  %s6125 = scalar_lea.sflag [#allocation9], 6
  %6126 = vsyncmov %s6125
  %s6127 = vpop.sfrf %6126
  %p6128 = scmp.eq.s32.totalorder %s6127, 0
  %p6129 = pneg %p6128
  %6131 = shalt.err (%p6129)

</llo_original>
